<compile_context>
chip_gen: v6e
topology: v6e:2x2x1
jax: 0.10.0
libtpu: 0.0.40
codegen_flags: <defaults>
</compile_context>

<pallas_src>
import functools

import jax
import jax.numpy as jnp
from jax.experimental import pallas as pl
from jax.experimental.pallas import tpu as pltpu


# ----------------------------- fused conv+BN kernel -----------------------------

def _conv3x3_bn_kernel(x_ref, w_ref, g_ref, b_ref, *rest, stride, oh, ow, cin,
                       inv_m, eps, relu, has_residual):
    """Fused 3x3 conv + BatchNorm(train) [+ residual add] [+ ReLU].

    Grid: (cout_tiles,)  ["parallel"].  The whole Cin reduction happens in one
    step, so there is no accumulator scratch and no init/finalize phase.

    x_ref : stride==1 -> (N, Hp, Wp, Cin) padded input (bf16)
            stride==2 -> (4, N, Hh, Wh, Cin) 2x2 spatial phases of padded input
    w_ref : (9*Cin, tn) bf16, K laid out as (tap_i, tap_j, cin)
    g_ref/b_ref : (1, tn) f32 BN affine params
    res_ref : optional (M, tn) bf16 residual (added after BN, before ReLU)
    out_ref : (M, tn) bf16
    """
    if has_residual:
        res_ref, out_ref = rest
    else:
        (out_ref,) = rest
    m, tn = out_ref.shape

    def tap_window(i, j):
        if stride == 1:
            win = x_ref[:, i:i + oh, j:j + ow, :]
        else:  # stride == 2: pick the (i%2, j%2) spatial phase -> contiguous slice
            win = x_ref[2 * (i % 2) + (j % 2), :,
                        i // 2:i // 2 + oh, j // 2:j // 2 + ow, :]
        return win.reshape(m, cin)

    if cin % 128 == 0:
        # In-VMEM im2col: one big-K (=9*Cin) MXU matmul, single accumulate pass.
        taps = [tap_window(i, j) for i in range(3) for j in range(3)]
        a = jnp.concatenate(taps, axis=-1)                      # (m, 9*Cin) bf16
        acc = jnp.dot(a, w_ref[...], preferred_element_type=jnp.float32)
    else:
        # Lane-unaligned Cin: 9 per-tap dots, accumulated in a local f32 value
        # (no VMEM accumulator round trips, single output store).
        acc = jnp.zeros((m, tn), jnp.float32)
        t = 0
        for i in range(3):
            for j in range(3):
                acc = acc + jnp.dot(tap_window(i, j),
                                    w_ref[t * cin:(t + 1) * cin, :],
                                    preferred_element_type=jnp.float32)
                t += 1

    # Training-mode BatchNorm over M (= N*OH*OW), per output channel, in f32.
    mean = jnp.sum(acc, axis=0, keepdims=True) * inv_m
    cen = acc - mean
    var = jnp.sum(cen * cen, axis=0, keepdims=True) * inv_m     # two-pass, >= 0
    y = cen * jax.lax.rsqrt(var + eps) * g_ref[...] + b_ref[...]
    if has_residual:
        y = y + res_ref[...].astype(jnp.float32)
    if relu:
        y = jnp.maximum(y, 0.0)
    out_ref[...] = y.astype(out_ref.dtype)


# ----------------------------- wrappers (plain-JAX glue) -----------------------------

def _pick_tile(c):
    for t in (256, 128):          # lane-dense tiles preferred
        if c % t == 0:
            return t
    return c


def prep_conv_input(x_bf16, stride, padding):
    """Pad; for stride 2, re-layout into 2x2 spatial phases (no 9x expansion).

    Returns (xk, n, oh, ow, cin, stride).  Computed ONCE per activation so the
    projection block shares it between conv1 and conv3.
    """
    n, h, w, c = x_bf16.shape
    xp = jnp.pad(x_bf16, ((0, 0), (padding, padding), (padding, padding), (0, 0)))
    hp, wp = h + 2 * padding, w + 2 * padding
    oh = (hp - 3) // stride + 1
    ow = (wp - 3) // stride + 1
    if stride == 1:
        return xp, n, oh, ow, c, 1
    assert stride == 2, "only stride 1 or 2 supported"
    hp2, wp2 = hp + (hp % 2), wp + (wp % 2)
    xp = jnp.pad(xp, ((0, 0), (0, hp2 - hp), (0, wp2 - wp), (0, 0)))
    ph = xp.reshape(n, hp2 // 2, 2, wp2 // 2, 2, c)
    ph = jnp.transpose(ph, (2, 4, 0, 1, 3, 5))            # (2, 2, N, Hh, Wh, C)
    ph = ph.reshape(4, n, hp2 // 2, wp2 // 2, c)          # phase = 2*(i%2)+(j%2)
    return ph, n, oh, ow, c, 2


def conv3x3_bn_act(prepped, w_oihw, gamma, beta, *, relu, residual=None, eps=1e-5):
    """prepped from prep_conv_input. w: (O,I,3,3) PyTorch layout.
    Returns (N, OH, OW, O) bf16."""
    xk, n, oh, ow, cin, stride = prepped
    cout = w_oihw.shape[0]
    assert w_oihw.shape == (cout, cin, 3, 3)
    m = n * oh * ow

    # Weight laid out as (9*Cin, Cout), K ordered (tap_i, tap_j, cin) to match
    # the in-kernel im2col concatenation order.
    w_flat = jnp.transpose(w_oihw, (2, 3, 1, 0)).reshape(9 * cin, cout)
    w_flat = w_flat.astype(jnp.bfloat16)

    tn = _pick_tile(cout)                 # output-channel tile ("parallel")
    grid = (cout // tn,)

    if stride == 1:
        x_spec = pl.BlockSpec(xk.shape, lambda co: (0, 0, 0, 0))
    else:
        x_spec = pl.BlockSpec(xk.shape, lambda co: (0, 0, 0, 0, 0))

    in_specs = [
        x_spec,
        pl.BlockSpec((9 * cin, tn), lambda co: (0, co)),
        pl.BlockSpec((1, tn), lambda co: (0, co)),
        pl.BlockSpec((1, tn), lambda co: (0, co)),
    ]
    inputs = [xk, w_flat,
              gamma.reshape(1, cout).astype(jnp.float32),
              beta.reshape(1, cout).astype(jnp.float32)]

    has_residual = residual is not None
    if has_residual:
        assert residual.shape == (n, oh, ow, cout), (residual.shape, (n, oh, ow, cout))
        in_specs.append(pl.BlockSpec((m, tn), lambda co: (0, co)))
        inputs.append(residual.reshape(m, cout).astype(jnp.bfloat16))

    # Explicit VMEM budget (review: re-derive for v7x's 64 MiB physical VMEM).
    bytes_x = xk.size * 2
    bytes_w = w_flat.size * 2
    bytes_res = m * cout * 2 if has_residual else 0
    bytes_out = m * tn * 2
    bytes_tmp = m * 9 * cin * 2 + 3 * m * tn * 4      # im2col + f32 temporaries
    vmem_limit = int(min(64 * 1024 * 1024,
                         2 * (bytes_x + bytes_w + bytes_res + bytes_out)
                         + bytes_tmp + (8 << 20)))

    kernel = functools.partial(
        _conv3x3_bn_kernel, stride=stride, oh=oh, ow=ow, cin=cin,
        inv_m=1.0 / m, eps=eps, relu=relu, has_residual=has_residual)

    out = pl.pallas_call(
        kernel,
        grid=grid,
        in_specs=in_specs,
        out_specs=pl.BlockSpec((m, tn), lambda co: (0, co)),
        out_shape=jax.ShapeDtypeStruct((m, cout), jnp.bfloat16),
        compiler_params=pltpu.CompilerParams(
            dimension_semantics=("parallel",),
            vmem_limit_bytes=vmem_limit),
    )(*inputs)
    return out.reshape(n, oh, ow, cout)


# ----------------------------- ResidualBlock forward -----------------------------

def residual_block_forward(x, params, *, stride, padding):
    """Matches ResidualBlock.forward: conv1-bn1-relu, conv2-bn2, [conv3-bn3], add, relu.

    Inter-layer activations are bf16; the result is returned as bf16.
    """
    skip = stride > 1
    x_bf16 = x.astype(jnp.bfloat16)
    # Shared pad + (stride-2) phase-split between conv1 and conv3.
    px = prep_conv_input(x_bf16, stride, padding)

    z = conv3x3_bn_act(px, params["conv1"], params["bn1_g"], params["bn1_b"],
                       relu=True)
    if skip:
        y = conv3x3_bn_act(px, params["conv3"], params["bn3_g"], params["bn3_b"],
                           relu=False)
    else:
        y = x_bf16
    # conv2 + bn2 + residual add + final relu fused into one kernel.
    pz = prep_conv_input(z, 1, padding)
    return conv3x3_bn_act(pz, params["conv2"], params["bn2_g"], params["bn2_b"],
                          relu=True, residual=y)


# ----------------------------- pure-JAX reference -----------------------------

def residual_block_reference(x, params, *, stride, padding, eps=1e-5):
    """Mirrors the kernel's numerics: bf16 conv operands and bf16 inter-layer
    activations, f32 conv accumulation and BN math."""
    def conv(inp16, w, s):
        return jax.lax.conv_general_dilated(
            inp16, jnp.transpose(w, (2, 3, 1, 0)).astype(jnp.bfloat16),
            window_strides=(s, s), padding=[(padding, padding)] * 2,
            dimension_numbers=("NHWC", "HWIO", "NHWC"),
            preferred_element_type=jnp.float32)

    def bn(v, g, b):
        mean = jnp.mean(v, axis=(0, 1, 2), keepdims=True)
        var = jnp.mean((v - mean) ** 2, axis=(0, 1, 2), keepdims=True)
        return (v - mean) * jax.lax.rsqrt(var + eps) * g + b

    x16 = x.astype(jnp.bfloat16)
    z = jnp.maximum(bn(conv(x16, params["conv1"], stride),
                       params["bn1_g"], params["bn1_b"]), 0.0)
    z16 = z.astype(jnp.bfloat16)
    z2 = bn(conv(z16, params["conv2"], 1), params["bn2_g"], params["bn2_b"])
    if stride > 1:
        y = bn(conv(x16, params["conv3"], stride), params["bn3_g"], params["bn3_b"])
        y = y.astype(jnp.bfloat16).astype(jnp.float32)
    else:
        y = x16.astype(jnp.float32)
    out = jnp.maximum(y + z2, 0.0)
    return out.astype(jnp.bfloat16).astype(jnp.float32)


# ----------------------------- driver -----------------------------

def init_block_params(key, cin, cout, skip):
    keys = jax.random.split(key, 6)

    def conv_init(k, o, i):
        return jax.random.normal(k, (o, i, 3, 3), jnp.float32) * (2.0 / (i * 9)) ** 0.5

    def bn_init(k, c):
        kg, kb = jax.random.split(k)
        return (1.0 + 0.1 * jax.random.normal(kg, (c,), jnp.float32),
                0.1 * jax.random.normal(kb, (c,), jnp.float32))

    p = {"conv1": conv_init(keys[0], cout, cin)}
    p["bn1_g"], p["bn1_b"] = bn_init(keys[1], cout)
    p["conv2"] = conv_init(keys[2], cout, cout)
    p["bn2_g"], p["bn2_b"] = bn_init(keys[3], cout)
    if skip:
        p["conv3"] = conv_init(keys[4], cout, cin)
        p["bn3_g"], p["bn3_b"] = bn_init(keys[5], cout)
    return p


if __name__ == "__main__":
    key = jax.random.PRNGKey(0)
    k1, k2, k3, k4 = jax.random.split(key, 4)

    # Case 1: downsampling block with projection skip (stride=2), 64 -> 128 channels.
    x1_nchw = jax.random.normal(k1, (2, 64, 16, 16), jnp.float32)    # PyTorch NCHW
    p1 = init_block_params(k2, 64, 128, skip=True)
    # Case 2: identity block (stride=1), 128 -> 128 channels (lane-dense Cout).
    x2_nchw = jax.random.normal(k3, (2, 128, 16, 16), jnp.float32)
    p2 = init_block_params(k4, 128, 128, skip=False)

    def run(x_nchw, params, stride, padding):
        x = jnp.transpose(x_nchw, (0, 2, 3, 1))                      # NCHW -> NHWC
        fwd = jax.jit(functools.partial(residual_block_forward,
                                        stride=stride, padding=padding))
        out = fwd(x, params).astype(jnp.float32)
        ref = residual_block_reference(x, params, stride=stride, padding=padding)
        return out, ref

    out1, ref1 = run(x1_nchw, p1, stride=2, padding=1)
    out2, ref2 = run(x2_nchw, p2, stride=1, padding=1)
    jax.block_until_ready((out1, out2))

    assert out1.shape == (2, 8, 8, 128), out1.shape
    assert out2.shape == (2, 16, 16, 128), out2.shape
    for out, ref in ((out1, ref1), (out2, ref2)):
        assert bool(jnp.all(jnp.isfinite(out)))
        max_err = float(jnp.max(jnp.abs(out - ref)))
        assert max_err < 3e-2, f"mismatch vs reference: {max_err}"
    print("KERNEL_OK")
</pallas_src>

<mosaic_0001>
module attributes {stable_mosaic.version = 11 : i64} {
  func.func @_conv3x3_bn_kernel(%arg0: i32, %arg1: memref<4x2x9x9x64xbf16, #tpu.memory_space<vmem>>, %arg2: memref<576x128xbf16, #tpu.memory_space<vmem>>, %arg3: memref<1x128xf32, #tpu.memory_space<vmem>>, %arg4: memref<1x128xf32, #tpu.memory_space<vmem>>, %arg5: memref<128x128xbf16, #tpu.memory_space<vmem>>) attributes {dimension_semantics = [#tpu.dimension_semantics<parallel>], iteration_bounds = array<i64: 1>, scalar_prefetch = 0 : i64, scratch_operands = 0 : i64, tpu.core_type = #tpu.core_type<tc>, window_params = [{pipeline_mode = #tpu.pipeline_mode<synchronous>, transform_indices = @transform_0, window_bounds = array<i64: 4, 2, 9, 9, 64>}, {transform_indices = @transform_1, window_bounds = array<i64: 576, 128>}, {transform_indices = @transform_2, window_bounds = array<i64: 1, 128>}, {transform_indices = @transform_3, window_bounds = array<i64: 1, 128>}, {transform_indices = @transform_4, window_bounds = array<i64: 128, 128>}]} {
    %cst = arith.constant 0.000000e+00 : f32
    %0 = vector.broadcast %cst : f32 to vector<128x128xf32>
    %c0 = arith.constant 0 : index
    %c0_0 = arith.constant 0 : index
    %c0_1 = arith.constant 0 : index
    %c0_2 = arith.constant 0 : index
    %c0_3 = arith.constant 0 : index
    %1 = vector.load %arg1[%c0, %c0_0, %c0_1, %c0_2, %c0_3] : memref<4x2x9x9x64xbf16, #tpu.memory_space<vmem>>, vector<1x2x8x8x64xbf16>
    %2 = vector.shape_cast %1 : vector<1x2x8x8x64xbf16> to vector<2x8x8x64xbf16>
    %3 = vector.shape_cast %2 : vector<2x8x8x64xbf16> to vector<128x64xbf16>
    %c0_4 = arith.constant 0 : index
    %c0_5 = arith.constant 0 : index
    %4 = vector.load %arg2[%c0_4, %c0_5] : memref<576x128xbf16, #tpu.memory_space<vmem>>, vector<64x128xbf16>
    %cst_6 = arith.constant dense<0.000000e+00> : vector<128x128xf32>
    %5 = tpu.matmul %3, %4, %cst_6 {dimension_numbers = #tpu.dot_dimension_numbers<[1], [0], [0], [1], [0, 0, 1, 1], [], []>} : vector<128x64xbf16>, vector<64x128xbf16>, vector<128x128xf32> -> vector<128x128xf32>
    %6 = arith.addf %0, %5 : vector<128x128xf32>
    %c1 = arith.constant 1 : index
    %c0_7 = arith.constant 0 : index
    %c0_8 = arith.constant 0 : index
    %c0_9 = arith.constant 0 : index
    %c0_10 = arith.constant 0 : index
    %7 = vector.load %arg1[%c1, %c0_7, %c0_8, %c0_9, %c0_10] : memref<4x2x9x9x64xbf16, #tpu.memory_space<vmem>>, vector<1x2x8x8x64xbf16>
    %8 = vector.shape_cast %7 : vector<1x2x8x8x64xbf16> to vector<2x8x8x64xbf16>
    %9 = vector.shape_cast %8 : vector<2x8x8x64xbf16> to vector<128x64xbf16>
    %c64 = arith.constant 64 : index
    %c0_11 = arith.constant 0 : index
    %10 = vector.load %arg2[%c64, %c0_11] : memref<576x128xbf16, #tpu.memory_space<vmem>>, vector<64x128xbf16>
    %cst_12 = arith.constant dense<0.000000e+00> : vector<128x128xf32>
    %11 = tpu.matmul %9, %10, %cst_12 {dimension_numbers = #tpu.dot_dimension_numbers<[1], [0], [0], [1], [0, 0, 1, 1], [], []>} : vector<128x64xbf16>, vector<64x128xbf16>, vector<128x128xf32> -> vector<128x128xf32>
    %12 = arith.addf %6, %11 : vector<128x128xf32>
    %c0_13 = arith.constant 0 : index
    %c0_14 = arith.constant 0 : index
    %c0_15 = arith.constant 0 : index
    %c1_16 = arith.constant 1 : index
    %c0_17 = arith.constant 0 : index
    %13 = vector.load %arg1[%c0_13, %c0_14, %c0_15, %c1_16, %c0_17] : memref<4x2x9x9x64xbf16, #tpu.memory_space<vmem>>, vector<1x2x8x8x64xbf16>
    %14 = vector.shape_cast %13 : vector<1x2x8x8x64xbf16> to vector<2x8x8x64xbf16>
    %15 = vector.shape_cast %14 : vector<2x8x8x64xbf16> to vector<128x64xbf16>
    %c128 = arith.constant 128 : index
    %c0_18 = arith.constant 0 : index
    %16 = vector.load %arg2[%c128, %c0_18] : memref<576x128xbf16, #tpu.memory_space<vmem>>, vector<64x128xbf16>
    %cst_19 = arith.constant dense<0.000000e+00> : vector<128x128xf32>
    %17 = tpu.matmul %15, %16, %cst_19 {dimension_numbers = #tpu.dot_dimension_numbers<[1], [0], [0], [1], [0, 0, 1, 1], [], []>} : vector<128x64xbf16>, vector<64x128xbf16>, vector<128x128xf32> -> vector<128x128xf32>
    %18 = arith.addf %12, %17 : vector<128x128xf32>
    %c2 = arith.constant 2 : index
    %c0_20 = arith.constant 0 : index
    %c0_21 = arith.constant 0 : index
    %c0_22 = arith.constant 0 : index
    %c0_23 = arith.constant 0 : index
    %19 = vector.load %arg1[%c2, %c0_20, %c0_21, %c0_22, %c0_23] : memref<4x2x9x9x64xbf16, #tpu.memory_space<vmem>>, vector<1x2x8x8x64xbf16>
    %20 = vector.shape_cast %19 : vector<1x2x8x8x64xbf16> to vector<2x8x8x64xbf16>
    %21 = vector.shape_cast %20 : vector<2x8x8x64xbf16> to vector<128x64xbf16>
    %c192 = arith.constant 192 : index
    %c0_24 = arith.constant 0 : index
    %22 = vector.load %arg2[%c192, %c0_24] : memref<576x128xbf16, #tpu.memory_space<vmem>>, vector<64x128xbf16>
    %cst_25 = arith.constant dense<0.000000e+00> : vector<128x128xf32>
    %23 = tpu.matmul %21, %22, %cst_25 {dimension_numbers = #tpu.dot_dimension_numbers<[1], [0], [0], [1], [0, 0, 1, 1], [], []>} : vector<128x64xbf16>, vector<64x128xbf16>, vector<128x128xf32> -> vector<128x128xf32>
    %24 = arith.addf %18, %23 : vector<128x128xf32>
    %c3 = arith.constant 3 : index
    %c0_26 = arith.constant 0 : index
    %c0_27 = arith.constant 0 : index
    %c0_28 = arith.constant 0 : index
    %c0_29 = arith.constant 0 : index
    %25 = vector.load %arg1[%c3, %c0_26, %c0_27, %c0_28, %c0_29] : memref<4x2x9x9x64xbf16, #tpu.memory_space<vmem>>, vector<1x2x8x8x64xbf16>
    %26 = vector.shape_cast %25 : vector<1x2x8x8x64xbf16> to vector<2x8x8x64xbf16>
    %27 = vector.shape_cast %26 : vector<2x8x8x64xbf16> to vector<128x64xbf16>
    %c256 = arith.constant 256 : index
    %c0_30 = arith.constant 0 : index
    %28 = vector.load %arg2[%c256, %c0_30] : memref<576x128xbf16, #tpu.memory_space<vmem>>, vector<64x128xbf16>
    %cst_31 = arith.constant dense<0.000000e+00> : vector<128x128xf32>
    %29 = tpu.matmul %27, %28, %cst_31 {dimension_numbers = #tpu.dot_dimension_numbers<[1], [0], [0], [1], [0, 0, 1, 1], [], []>} : vector<128x64xbf16>, vector<64x128xbf16>, vector<128x128xf32> -> vector<128x128xf32>
    %30 = arith.addf %24, %29 : vector<128x128xf32>
    %c2_32 = arith.constant 2 : index
    %c0_33 = arith.constant 0 : index
    %c0_34 = arith.constant 0 : index
    %c1_35 = arith.constant 1 : index
    %c0_36 = arith.constant 0 : index
    %31 = vector.load %arg1[%c2_32, %c0_33, %c0_34, %c1_35, %c0_36] : memref<4x2x9x9x64xbf16, #tpu.memory_space<vmem>>, vector<1x2x8x8x64xbf16>
    %32 = vector.shape_cast %31 : vector<1x2x8x8x64xbf16> to vector<2x8x8x64xbf16>
    %33 = vector.shape_cast %32 : vector<2x8x8x64xbf16> to vector<128x64xbf16>
    %c320 = arith.constant 320 : index
    %c0_37 = arith.constant 0 : index
    %34 = vector.load %arg2[%c320, %c0_37] : memref<576x128xbf16, #tpu.memory_space<vmem>>, vector<64x128xbf16>
    %cst_38 = arith.constant dense<0.000000e+00> : vector<128x128xf32>
    %35 = tpu.matmul %33, %34, %cst_38 {dimension_numbers = #tpu.dot_dimension_numbers<[1], [0], [0], [1], [0, 0, 1, 1], [], []>} : vector<128x64xbf16>, vector<64x128xbf16>, vector<128x128xf32> -> vector<128x128xf32>
    %36 = arith.addf %30, %35 : vector<128x128xf32>
    %c0_39 = arith.constant 0 : index
    %c0_40 = arith.constant 0 : index
    %c1_41 = arith.constant 1 : index
    %c0_42 = arith.constant 0 : index
    %c0_43 = arith.constant 0 : index
    %37 = vector.load %arg1[%c0_39, %c0_40, %c1_41, %c0_42, %c0_43] : memref<4x2x9x9x64xbf16, #tpu.memory_space<vmem>>, vector<1x2x8x8x64xbf16>
    %38 = vector.shape_cast %37 : vector<1x2x8x8x64xbf16> to vector<2x8x8x64xbf16>
    %39 = vector.shape_cast %38 : vector<2x8x8x64xbf16> to vector<128x64xbf16>
    %c384 = arith.constant 384 : index
    %c0_44 = arith.constant 0 : index
    %40 = vector.load %arg2[%c384, %c0_44] : memref<576x128xbf16, #tpu.memory_space<vmem>>, vector<64x128xbf16>
    %cst_45 = arith.constant dense<0.000000e+00> : vector<128x128xf32>
    %41 = tpu.matmul %39, %40, %cst_45 {dimension_numbers = #tpu.dot_dimension_numbers<[1], [0], [0], [1], [0, 0, 1, 1], [], []>} : vector<128x64xbf16>, vector<64x128xbf16>, vector<128x128xf32> -> vector<128x128xf32>
    %42 = arith.addf %36, %41 : vector<128x128xf32>
    %c1_46 = arith.constant 1 : index
    %c0_47 = arith.constant 0 : index
    %c1_48 = arith.constant 1 : index
    %c0_49 = arith.constant 0 : index
    %c0_50 = arith.constant 0 : index
    %43 = vector.load %arg1[%c1_46, %c0_47, %c1_48, %c0_49, %c0_50] : memref<4x2x9x9x64xbf16, #tpu.memory_space<vmem>>, vector<1x2x8x8x64xbf16>
    %44 = vector.shape_cast %43 : vector<1x2x8x8x64xbf16> to vector<2x8x8x64xbf16>
    %45 = vector.shape_cast %44 : vector<2x8x8x64xbf16> to vector<128x64xbf16>
    %c448 = arith.constant 448 : index
    %c0_51 = arith.constant 0 : index
    %46 = vector.load %arg2[%c448, %c0_51] : memref<576x128xbf16, #tpu.memory_space<vmem>>, vector<64x128xbf16>
    %cst_52 = arith.constant dense<0.000000e+00> : vector<128x128xf32>
    %47 = tpu.matmul %45, %46, %cst_52 {dimension_numbers = #tpu.dot_dimension_numbers<[1], [0], [0], [1], [0, 0, 1, 1], [], []>} : vector<128x64xbf16>, vector<64x128xbf16>, vector<128x128xf32> -> vector<128x128xf32>
    %48 = arith.addf %42, %47 : vector<128x128xf32>
    %c0_53 = arith.constant 0 : index
    %c0_54 = arith.constant 0 : index
    %c1_55 = arith.constant 1 : index
    %c1_56 = arith.constant 1 : index
    %c0_57 = arith.constant 0 : index
    %49 = vector.load %arg1[%c0_53, %c0_54, %c1_55, %c1_56, %c0_57] : memref<4x2x9x9x64xbf16, #tpu.memory_space<vmem>>, vector<1x2x8x8x64xbf16>
    %50 = vector.shape_cast %49 : vector<1x2x8x8x64xbf16> to vector<2x8x8x64xbf16>
    %51 = vector.shape_cast %50 : vector<2x8x8x64xbf16> to vector<128x64xbf16>
    %c512 = arith.constant 512 : index
    %c0_58 = arith.constant 0 : index
    %52 = vector.load %arg2[%c512, %c0_58] : memref<576x128xbf16, #tpu.memory_space<vmem>>, vector<64x128xbf16>
    %cst_59 = arith.constant dense<0.000000e+00> : vector<128x128xf32>
    %53 = tpu.matmul %51, %52, %cst_59 {dimension_numbers = #tpu.dot_dimension_numbers<[1], [0], [0], [1], [0, 0, 1, 1], [], []>} : vector<128x64xbf16>, vector<64x128xbf16>, vector<128x128xf32> -> vector<128x128xf32>
    %54 = arith.addf %48, %53 : vector<128x128xf32>
    %cst_60 = arith.constant dense<0.000000e+00> : vector<128xf32>
    %55 = vector.multi_reduction <add>, %54, %cst_60 [0] : vector<128x128xf32> to vector<128xf32>
    %56 = vector.shape_cast %55 : vector<128xf32> to vector<1x128xf32>
    %cst_61 = arith.constant 7.812500e-03 : f32
    %57 = vector.broadcast %cst_61 : f32 to vector<1x128xf32>
    %58 = arith.mulf %56, %57 : vector<1x128xf32>
    %59 = vector.broadcast %58 : vector<1x128xf32> to vector<128x128xf32>
    %60 = arith.subf %54, %59 : vector<128x128xf32>
    %61 = arith.mulf %60, %60 : vector<128x128xf32>
    %cst_62 = arith.constant dense<0.000000e+00> : vector<128xf32>
    %62 = vector.multi_reduction <add>, %61, %cst_62 [0] : vector<128x128xf32> to vector<128xf32>
    %63 = vector.shape_cast %62 : vector<128xf32> to vector<1x128xf32>
    %cst_63 = arith.constant 7.812500e-03 : f32
    %64 = vector.broadcast %cst_63 : f32 to vector<1x128xf32>
    %65 = arith.mulf %63, %64 : vector<1x128xf32>
    %cst_64 = arith.constant 9.99999974E-6 : f32
    %66 = vector.broadcast %cst_64 : f32 to vector<1x128xf32>
    %67 = arith.addf %65, %66 : vector<1x128xf32>
    %68 = math.rsqrt %67 : vector<1x128xf32>
    %69 = vector.broadcast %68 : vector<1x128xf32> to vector<128x128xf32>
    %70 = arith.mulf %60, %69 : vector<128x128xf32>
    %c0_65 = arith.constant 0 : index
    %c0_66 = arith.constant 0 : index
    %71 = vector.load %arg3[%c0_65, %c0_66] : memref<1x128xf32, #tpu.memory_space<vmem>>, vector<1x128xf32>
    %72 = vector.broadcast %71 : vector<1x128xf32> to vector<128x128xf32>
    %73 = arith.mulf %70, %72 : vector<128x128xf32>
    %c0_67 = arith.constant 0 : index
    %c0_68 = arith.constant 0 : index
    %74 = vector.load %arg4[%c0_67, %c0_68] : memref<1x128xf32, #tpu.memory_space<vmem>>, vector<1x128xf32>
    %75 = vector.broadcast %74 : vector<1x128xf32> to vector<128x128xf32>
    %76 = arith.addf %73, %75 : vector<128x128xf32>
    %cst_69 = arith.constant 0.000000e+00 : f32
    %77 = vector.broadcast %cst_69 : f32 to vector<128x128xf32>
    %78 = arith.maximumf %76, %77 : vector<128x128xf32>
    %79 = arith.truncf %78 : vector<128x128xf32> to vector<128x128xbf16>
    %c0_70 = arith.constant 0 : index
    %c0_71 = arith.constant 0 : index
    %80 = vector.load %arg5[%c0_70, %c0_71] : memref<128x128xbf16, #tpu.memory_space<vmem>>, vector<128x128xbf16>
    tpu.vector_store %arg5[%c0_70, %c0_71], %79 {strides = array<i32>} : memref<128x128xbf16, #tpu.memory_space<vmem>>, vector<128x128xbf16>,
    return
  }
  func.func @transform_0(%arg0: i32) -> (i32, i32, i32, i32, i32) {
    %c0_i32 = arith.constant 0 : i32
    %c0_i32_0 = arith.constant 0 : i32
    %c0_i32_1 = arith.constant 0 : i32
    %c0_i32_2 = arith.constant 0 : i32
    %c0_i32_3 = arith.constant 0 : i32
    %c0_i32_4 = arith.constant 0 : i32
    return %c0_i32, %c0_i32_0, %c0_i32_1, %c0_i32_2, %c0_i32_3 : i32, i32, i32, i32, i32
  }
  func.func @transform_1(%arg0: i32) -> (i32, i32) {
    %c0_i32 = arith.constant 0 : i32
    %c0_i32_0 = arith.constant 0 : i32
    return %c0_i32, %arg0 : i32, i32
  }
  func.func @transform_2(%arg0: i32) -> (i32, i32) {
    %c0_i32 = arith.constant 0 : i32
    %c0_i32_0 = arith.constant 0 : i32
    return %c0_i32, %arg0 : i32, i32
  }
  func.func @transform_3(%arg0: i32) -> (i32, i32) {
    %c0_i32 = arith.constant 0 : i32
    %c0_i32_0 = arith.constant 0 : i32
    return %c0_i32, %arg0 : i32, i32
  }
  func.func @transform_4(%arg0: i32) -> (i32, i32) {
    %c0_i32 = arith.constant 0 : i32
    %c0_i32_0 = arith.constant 0 : i32
    return %c0_i32, %arg0 : i32, i32
  }
}

module attributes {stable_mosaic.version = 11 : i64} {
  func.func @_conv3x3_bn_kernel(%arg0: i32, %arg1: memref<4x2x9x9x64xbf16, #tpu.memory_space<vmem>>, %arg2: memref<576x128xbf16, #tpu.memory_space<vmem>>, %arg3: memref<1x128xf32, #tpu.memory_space<vmem>>, %arg4: memref<1x128xf32, #tpu.memory_space<vmem>>, %arg5: memref<128x128xbf16, #tpu.memory_space<vmem>>) attributes {dimension_semantics = [#tpu.dimension_semantics<parallel>], iteration_bounds = array<i64: 1>, scalar_prefetch = 0 : i64, scratch_operands = 0 : i64, tpu.core_type = #tpu.core_type<tc>, window_params = [{pipeline_mode = #tpu.pipeline_mode<synchronous>, transform_indices = @transform_0, window_bounds = array<i64: 4, 2, 9, 9, 64>}, {transform_indices = @transform_1, window_bounds = array<i64: 576, 128>}, {transform_indices = @transform_2, window_bounds = array<i64: 1, 128>}, {transform_indices = @transform_3, window_bounds = array<i64: 1, 128>}, {transform_indices = @transform_4, window_bounds = array<i64: 128, 128>}]} {
    %cst = arith.constant 0.000000e+00 : f32
    %0 = vector.broadcast %cst : f32 to vector<128x128xf32>
    %c0 = arith.constant 0 : index
    %c0_0 = arith.constant 0 : index
    %c0_1 = arith.constant 0 : index
    %c0_2 = arith.constant 0 : index
    %c0_3 = arith.constant 0 : index
    %1 = vector.load %arg1[%c0, %c0_0, %c0_1, %c0_2, %c0_3] : memref<4x2x9x9x64xbf16, #tpu.memory_space<vmem>>, vector<1x2x8x8x64xbf16>
    %2 = vector.shape_cast %1 : vector<1x2x8x8x64xbf16> to vector<2x8x8x64xbf16>
    %3 = vector.shape_cast %2 : vector<2x8x8x64xbf16> to vector<128x64xbf16>
    %c0_4 = arith.constant 0 : index
    %c0_5 = arith.constant 0 : index
    %4 = vector.load %arg2[%c0_4, %c0_5] : memref<576x128xbf16, #tpu.memory_space<vmem>>, vector<64x128xbf16>
    %cst_6 = arith.constant dense<0.000000e+00> : vector<128x128xf32>
    %5 = tpu.matmul %3, %4, %cst_6 {dimension_numbers = #tpu.dot_dimension_numbers<[1], [0], [0], [1], [0, 0, 1, 1], [], []>} : vector<128x64xbf16>, vector<64x128xbf16>, vector<128x128xf32> -> vector<128x128xf32>
    %6 = arith.addf %0, %5 : vector<128x128xf32>
    %c1 = arith.constant 1 : index
    %c0_7 = arith.constant 0 : index
    %c0_8 = arith.constant 0 : index
    %c0_9 = arith.constant 0 : index
    %c0_10 = arith.constant 0 : index
    %7 = vector.load %arg1[%c1, %c0_7, %c0_8, %c0_9, %c0_10] : memref<4x2x9x9x64xbf16, #tpu.memory_space<vmem>>, vector<1x2x8x8x64xbf16>
    %8 = vector.shape_cast %7 : vector<1x2x8x8x64xbf16> to vector<2x8x8x64xbf16>
    %9 = vector.shape_cast %8 : vector<2x8x8x64xbf16> to vector<128x64xbf16>
    %c64 = arith.constant 64 : index
    %c0_11 = arith.constant 0 : index
    %10 = vector.load %arg2[%c64, %c0_11] : memref<576x128xbf16, #tpu.memory_space<vmem>>, vector<64x128xbf16>
    %cst_12 = arith.constant dense<0.000000e+00> : vector<128x128xf32>
    %11 = tpu.matmul %9, %10, %cst_12 {dimension_numbers = #tpu.dot_dimension_numbers<[1], [0], [0], [1], [0, 0, 1, 1], [], []>} : vector<128x64xbf16>, vector<64x128xbf16>, vector<128x128xf32> -> vector<128x128xf32>
    %12 = arith.addf %6, %11 : vector<128x128xf32>
    %c0_13 = arith.constant 0 : index
    %c0_14 = arith.constant 0 : index
    %c0_15 = arith.constant 0 : index
    %c1_16 = arith.constant 1 : index
    %c0_17 = arith.constant 0 : index
    %13 = vector.load %arg1[%c0_13, %c0_14, %c0_15, %c1_16, %c0_17] : memref<4x2x9x9x64xbf16, #tpu.memory_space<vmem>>, vector<1x2x8x8x64xbf16>
    %14 = vector.shape_cast %13 : vector<1x2x8x8x64xbf16> to vector<2x8x8x64xbf16>
    %15 = vector.shape_cast %14 : vector<2x8x8x64xbf16> to vector<128x64xbf16>
    %c128 = arith.constant 128 : index
    %c0_18 = arith.constant 0 : index
    %16 = vector.load %arg2[%c128, %c0_18] : memref<576x128xbf16, #tpu.memory_space<vmem>>, vector<64x128xbf16>
    %cst_19 = arith.constant dense<0.000000e+00> : vector<128x128xf32>
    %17 = tpu.matmul %15, %16, %cst_19 {dimension_numbers = #tpu.dot_dimension_numbers<[1], [0], [0], [1], [0, 0, 1, 1], [], []>} : vector<128x64xbf16>, vector<64x128xbf16>, vector<128x128xf32> -> vector<128x128xf32>
    %18 = arith.addf %12, %17 : vector<128x128xf32>
    %c2 = arith.constant 2 : index
    %c0_20 = arith.constant 0 : index
    %c0_21 = arith.constant 0 : index
    %c0_22 = arith.constant 0 : index
    %c0_23 = arith.constant 0 : index
    %19 = vector.load %arg1[%c2, %c0_20, %c0_21, %c0_22, %c0_23] : memref<4x2x9x9x64xbf16, #tpu.memory_space<vmem>>, vector<1x2x8x8x64xbf16>
    %20 = vector.shape_cast %19 : vector<1x2x8x8x64xbf16> to vector<2x8x8x64xbf16>
    %21 = vector.shape_cast %20 : vector<2x8x8x64xbf16> to vector<128x64xbf16>
    %c192 = arith.constant 192 : index
    %c0_24 = arith.constant 0 : index
    %22 = vector.load %arg2[%c192, %c0_24] : memref<576x128xbf16, #tpu.memory_space<vmem>>, vector<64x128xbf16>
    %cst_25 = arith.constant dense<0.000000e+00> : vector<128x128xf32>
    %23 = tpu.matmul %21, %22, %cst_25 {dimension_numbers = #tpu.dot_dimension_numbers<[1], [0], [0], [1], [0, 0, 1, 1], [], []>} : vector<128x64xbf16>, vector<64x128xbf16>, vector<128x128xf32> -> vector<128x128xf32>
    %24 = arith.addf %18, %23 : vector<128x128xf32>
    %c3 = arith.constant 3 : index
    %c0_26 = arith.constant 0 : index
    %c0_27 = arith.constant 0 : index
    %c0_28 = arith.constant 0 : index
    %c0_29 = arith.constant 0 : index
    %25 = vector.load %arg1[%c3, %c0_26, %c0_27, %c0_28, %c0_29] : memref<4x2x9x9x64xbf16, #tpu.memory_space<vmem>>, vector<1x2x8x8x64xbf16>
    %26 = vector.shape_cast %25 : vector<1x2x8x8x64xbf16> to vector<2x8x8x64xbf16>
    %27 = vector.shape_cast %26 : vector<2x8x8x64xbf16> to vector<128x64xbf16>
    %c256 = arith.constant 256 : index
    %c0_30 = arith.constant 0 : index
    %28 = vector.load %arg2[%c256, %c0_30] : memref<576x128xbf16, #tpu.memory_space<vmem>>, vector<64x128xbf16>
    %cst_31 = arith.constant dense<0.000000e+00> : vector<128x128xf32>
    %29 = tpu.matmul %27, %28, %cst_31 {dimension_numbers = #tpu.dot_dimension_numbers<[1], [0], [0], [1], [0, 0, 1, 1], [], []>} : vector<128x64xbf16>, vector<64x128xbf16>, vector<128x128xf32> -> vector<128x128xf32>
    %30 = arith.addf %24, %29 : vector<128x128xf32>
    %c2_32 = arith.constant 2 : index
    %c0_33 = arith.constant 0 : index
    %c0_34 = arith.constant 0 : index
    %c1_35 = arith.constant 1 : index
    %c0_36 = arith.constant 0 : index
    %31 = vector.load %arg1[%c2_32, %c0_33, %c0_34, %c1_35, %c0_36] : memref<4x2x9x9x64xbf16, #tpu.memory_space<vmem>>, vector<1x2x8x8x64xbf16>
    %32 = vector.shape_cast %31 : vector<1x2x8x8x64xbf16> to vector<2x8x8x64xbf16>
    %33 = vector.shape_cast %32 : vector<2x8x8x64xbf16> to vector<128x64xbf16>
    %c320 = arith.constant 320 : index
    %c0_37 = arith.constant 0 : index
    %34 = vector.load %arg2[%c320, %c0_37] : memref<576x128xbf16, #tpu.memory_space<vmem>>, vector<64x128xbf16>
    %cst_38 = arith.constant dense<0.000000e+00> : vector<128x128xf32>
    %35 = tpu.matmul %33, %34, %cst_38 {dimension_numbers = #tpu.dot_dimension_numbers<[1], [0], [0], [1], [0, 0, 1, 1], [], []>} : vector<128x64xbf16>, vector<64x128xbf16>, vector<128x128xf32> -> vector<128x128xf32>
    %36 = arith.addf %30, %35 : vector<128x128xf32>
    %c0_39 = arith.constant 0 : index
    %c0_40 = arith.constant 0 : index
    %c1_41 = arith.constant 1 : index
    %c0_42 = arith.constant 0 : index
    %c0_43 = arith.constant 0 : index
    %37 = vector.load %arg1[%c0_39, %c0_40, %c1_41, %c0_42, %c0_43] : memref<4x2x9x9x64xbf16, #tpu.memory_space<vmem>>, vector<1x2x8x8x64xbf16>
    %38 = vector.shape_cast %37 : vector<1x2x8x8x64xbf16> to vector<2x8x8x64xbf16>
    %39 = vector.shape_cast %38 : vector<2x8x8x64xbf16> to vector<128x64xbf16>
    %c384 = arith.constant 384 : index
    %c0_44 = arith.constant 0 : index
    %40 = vector.load %arg2[%c384, %c0_44] : memref<576x128xbf16, #tpu.memory_space<vmem>>, vector<64x128xbf16>
    %cst_45 = arith.constant dense<0.000000e+00> : vector<128x128xf32>
    %41 = tpu.matmul %39, %40, %cst_45 {dimension_numbers = #tpu.dot_dimension_numbers<[1], [0], [0], [1], [0, 0, 1, 1], [], []>} : vector<128x64xbf16>, vector<64x128xbf16>, vector<128x128xf32> -> vector<128x128xf32>
    %42 = arith.addf %36, %41 : vector<128x128xf32>
    %c1_46 = arith.constant 1 : index
    %c0_47 = arith.constant 0 : index
    %c1_48 = arith.constant 1 : index
    %c0_49 = arith.constant 0 : index
    %c0_50 = arith.constant 0 : index
    %43 = vector.load %arg1[%c1_46, %c0_47, %c1_48, %c0_49, %c0_50] : memref<4x2x9x9x64xbf16, #tpu.memory_space<vmem>>, vector<1x2x8x8x64xbf16>
    %44 = vector.shape_cast %43 : vector<1x2x8x8x64xbf16> to vector<2x8x8x64xbf16>
    %45 = vector.shape_cast %44 : vector<2x8x8x64xbf16> to vector<128x64xbf16>
    %c448 = arith.constant 448 : index
    %c0_51 = arith.constant 0 : index
    %46 = vector.load %arg2[%c448, %c0_51] : memref<576x128xbf16, #tpu.memory_space<vmem>>, vector<64x128xbf16>
    %cst_52 = arith.constant dense<0.000000e+00> : vector<128x128xf32>
    %47 = tpu.matmul %45, %46, %cst_52 {dimension_numbers = #tpu.dot_dimension_numbers<[1], [0], [0], [1], [0, 0, 1, 1], [], []>} : vector<128x64xbf16>, vector<64x128xbf16>, vector<128x128xf32> -> vector<128x128xf32>
    %48 = arith.addf %42, %47 : vector<128x128xf32>
    %c0_53 = arith.constant 0 : index
    %c0_54 = arith.constant 0 : index
    %c1_55 = arith.constant 1 : index
    %c1_56 = arith.constant 1 : index
    %c0_57 = arith.constant 0 : index
    %49 = vector.load %arg1[%c0_53, %c0_54, %c1_55, %c1_56, %c0_57] : memref<4x2x9x9x64xbf16, #tpu.memory_space<vmem>>, vector<1x2x8x8x64xbf16>
    %50 = vector.shape_cast %49 : vector<1x2x8x8x64xbf16> to vector<2x8x8x64xbf16>
    %51 = vector.shape_cast %50 : vector<2x8x8x64xbf16> to vector<128x64xbf16>
    %c512 = arith.constant 512 : index
    %c0_58 = arith.constant 0 : index
    %52 = vector.load %arg2[%c512, %c0_58] : memref<576x128xbf16, #tpu.memory_space<vmem>>, vector<64x128xbf16>
    %cst_59 = arith.constant dense<0.000000e+00> : vector<128x128xf32>
    %53 = tpu.matmul %51, %52, %cst_59 {dimension_numbers = #tpu.dot_dimension_numbers<[1], [0], [0], [1], [0, 0, 1, 1], [], []>} : vector<128x64xbf16>, vector<64x128xbf16>, vector<128x128xf32> -> vector<128x128xf32>
    %54 = arith.addf %48, %53 : vector<128x128xf32>
    %cst_60 = arith.constant dense<0.000000e+00> : vector<128xf32>
    %55 = vector.multi_reduction <add>, %54, %cst_60 [0] : vector<128x128xf32> to vector<128xf32>
    %56 = vector.shape_cast %55 : vector<128xf32> to vector<1x128xf32>
    %cst_61 = arith.constant 7.812500e-03 : f32
    %57 = vector.broadcast %cst_61 : f32 to vector<1x128xf32>
    %58 = arith.mulf %56, %57 : vector<1x128xf32>
    %59 = vector.broadcast %58 : vector<1x128xf32> to vector<128x128xf32>
    %60 = arith.subf %54, %59 : vector<128x128xf32>
    %61 = arith.mulf %60, %60 : vector<128x128xf32>
    %cst_62 = arith.constant dense<0.000000e+00> : vector<128xf32>
    %62 = vector.multi_reduction <add>, %61, %cst_62 [0] : vector<128x128xf32> to vector<128xf32>
    %63 = vector.shape_cast %62 : vector<128xf32> to vector<1x128xf32>
    %cst_63 = arith.constant 7.812500e-03 : f32
    %64 = vector.broadcast %cst_63 : f32 to vector<1x128xf32>
    %65 = arith.mulf %63, %64 : vector<1x128xf32>
    %cst_64 = arith.constant 9.99999974E-6 : f32
    %66 = vector.broadcast %cst_64 : f32 to vector<1x128xf32>
    %67 = arith.addf %65, %66 : vector<1x128xf32>
    %68 = math.rsqrt %67 : vector<1x128xf32>
    %69 = vector.broadcast %68 : vector<1x128xf32> to vector<128x128xf32>
    %70 = arith.mulf %60, %69 : vector<128x128xf32>
    %c0_65 = arith.constant 0 : index
    %c0_66 = arith.constant 0 : index
    %71 = vector.load %arg3[%c0_65, %c0_66] : memref<1x128xf32, #tpu.memory_space<vmem>>, vector<1x128xf32>
    %72 = vector.broadcast %71 : vector<1x128xf32> to vector<128x128xf32>
    %73 = arith.mulf %70, %72 : vector<128x128xf32>
    %c0_67 = arith.constant 0 : index
    %c0_68 = arith.constant 0 : index
    %74 = vector.load %arg4[%c0_67, %c0_68] : memref<1x128xf32, #tpu.memory_space<vmem>>, vector<1x128xf32>
    %75 = vector.broadcast %74 : vector<1x128xf32> to vector<128x128xf32>
    %76 = arith.addf %73, %75 : vector<128x128xf32>
    %77 = arith.truncf %76 : vector<128x128xf32> to vector<128x128xbf16>
    %c0_69 = arith.constant 0 : index
    %c0_70 = arith.constant 0 : index
    %78 = vector.load %arg5[%c0_69, %c0_70] : memref<128x128xbf16, #tpu.memory_space<vmem>>, vector<128x128xbf16>
    tpu.vector_store %arg5[%c0_69, %c0_70], %77 {strides = array<i32>} : memref<128x128xbf16, #tpu.memory_space<vmem>>, vector<128x128xbf16>,
    return
  }
  func.func @transform_0(%arg0: i32) -> (i32, i32, i32, i32, i32) {
    %c0_i32 = arith.constant 0 : i32
    %c0_i32_0 = arith.constant 0 : i32
    %c0_i32_1 = arith.constant 0 : i32
    %c0_i32_2 = arith.constant 0 : i32
    %c0_i32_3 = arith.constant 0 : i32
    %c0_i32_4 = arith.constant 0 : i32
    return %c0_i32, %c0_i32_0, %c0_i32_1, %c0_i32_2, %c0_i32_3 : i32, i32, i32, i32, i32
  }
  func.func @transform_1(%arg0: i32) -> (i32, i32) {
    %c0_i32 = arith.constant 0 : i32
    %c0_i32_0 = arith.constant 0 : i32
    return %c0_i32, %arg0 : i32, i32
  }
  func.func @transform_2(%arg0: i32) -> (i32, i32) {
    %c0_i32 = arith.constant 0 : i32
    %c0_i32_0 = arith.constant 0 : i32
    return %c0_i32, %arg0 : i32, i32
  }
  func.func @transform_3(%arg0: i32) -> (i32, i32) {
    %c0_i32 = arith.constant 0 : i32
    %c0_i32_0 = arith.constant 0 : i32
    return %c0_i32, %arg0 : i32, i32
  }
  func.func @transform_4(%arg0: i32) -> (i32, i32) {
    %c0_i32 = arith.constant 0 : i32
    %c0_i32_0 = arith.constant 0 : i32
    return %c0_i32, %arg0 : i32, i32
  }
}

module attributes {stable_mosaic.version = 11 : i64} {
  func.func @_conv3x3_bn_kernel(%arg0: i32, %arg1: memref<2x10x10x128xbf16, #tpu.memory_space<vmem>>, %arg2: memref<1152x128xbf16, #tpu.memory_space<vmem>>, %arg3: memref<1x128xf32, #tpu.memory_space<vmem>>, %arg4: memref<1x128xf32, #tpu.memory_space<vmem>>, %arg5: memref<128x128xbf16, #tpu.memory_space<vmem>>, %arg6: memref<128x128xbf16, #tpu.memory_space<vmem>>) attributes {dimension_semantics = [#tpu.dimension_semantics<parallel>], iteration_bounds = array<i64: 1>, scalar_prefetch = 0 : i64, scratch_operands = 0 : i64, tpu.core_type = #tpu.core_type<tc>, window_params = [{pipeline_mode = #tpu.pipeline_mode<synchronous>, transform_indices = @transform_0, window_bounds = array<i64: 2, 10, 10, 128>}, {transform_indices = @transform_1, window_bounds = array<i64: 1152, 128>}, {transform_indices = @transform_2, window_bounds = array<i64: 1, 128>}, {transform_indices = @transform_3, window_bounds = array<i64: 1, 128>}, {transform_indices = @transform_4, window_bounds = array<i64: 128, 128>}, {transform_indices = @transform_5, window_bounds = array<i64: 128, 128>}]} {
    %c0 = arith.constant 0 : index
    %c0_0 = arith.constant 0 : index
    %c0_1 = arith.constant 0 : index
    %c0_2 = arith.constant 0 : index
    %0 = vector.load %arg1[%c0, %c0_0, %c0_1, %c0_2] : memref<2x10x10x128xbf16, #tpu.memory_space<vmem>>, vector<2x8x8x128xbf16>
    %1 = vector.shape_cast %0 : vector<2x8x8x128xbf16> to vector<128x128xbf16>
    %c0_3 = arith.constant 0 : index
    %c0_4 = arith.constant 0 : index
    %c1 = arith.constant 1 : index
    %c0_5 = arith.constant 0 : index
    %2 = vector.load %arg1[%c0_3, %c0_4, %c1, %c0_5] : memref<2x10x10x128xbf16, #tpu.memory_space<vmem>>, vector<2x8x8x128xbf16>
    %3 = vector.shape_cast %2 : vector<2x8x8x128xbf16> to vector<128x128xbf16>
    %c0_6 = arith.constant 0 : index
    %c0_7 = arith.constant 0 : index
    %c2 = arith.constant 2 : index
    %c0_8 = arith.constant 0 : index
    %4 = vector.load %arg1[%c0_6, %c0_7, %c2, %c0_8] : memref<2x10x10x128xbf16, #tpu.memory_space<vmem>>, vector<2x8x8x128xbf16>
    %5 = vector.shape_cast %4 : vector<2x8x8x128xbf16> to vector<128x128xbf16>
    %c0_9 = arith.constant 0 : index
    %c1_10 = arith.constant 1 : index
    %c0_11 = arith.constant 0 : index
    %c0_12 = arith.constant 0 : index
    %6 = vector.load %arg1[%c0_9, %c1_10, %c0_11, %c0_12] : memref<2x10x10x128xbf16, #tpu.memory_space<vmem>>, vector<2x8x8x128xbf16>
    %7 = vector.shape_cast %6 : vector<2x8x8x128xbf16> to vector<128x128xbf16>
    %c0_13 = arith.constant 0 : index
    %c1_14 = arith.constant 1 : index
    %c1_15 = arith.constant 1 : index
    %c0_16 = arith.constant 0 : index
    %8 = vector.load %arg1[%c0_13, %c1_14, %c1_15, %c0_16] : memref<2x10x10x128xbf16, #tpu.memory_space<vmem>>, vector<2x8x8x128xbf16>
    %9 = vector.shape_cast %8 : vector<2x8x8x128xbf16> to vector<128x128xbf16>
    %c0_17 = arith.constant 0 : index
    %c1_18 = arith.constant 1 : index
    %c2_19 = arith.constant 2 : index
    %c0_20 = arith.constant 0 : index
    %10 = vector.load %arg1[%c0_17, %c1_18, %c2_19, %c0_20] : memref<2x10x10x128xbf16, #tpu.memory_space<vmem>>, vector<2x8x8x128xbf16>
    %11 = vector.shape_cast %10 : vector<2x8x8x128xbf16> to vector<128x128xbf16>
    %c0_21 = arith.constant 0 : index
    %c2_22 = arith.constant 2 : index
    %c0_23 = arith.constant 0 : index
    %c0_24 = arith.constant 0 : index
    %12 = vector.load %arg1[%c0_21, %c2_22, %c0_23, %c0_24] : memref<2x10x10x128xbf16, #tpu.memory_space<vmem>>, vector<2x8x8x128xbf16>
    %13 = vector.shape_cast %12 : vector<2x8x8x128xbf16> to vector<128x128xbf16>
    %c0_25 = arith.constant 0 : index
    %c2_26 = arith.constant 2 : index
    %c1_27 = arith.constant 1 : index
    %c0_28 = arith.constant 0 : index
    %14 = vector.load %arg1[%c0_25, %c2_26, %c1_27, %c0_28] : memref<2x10x10x128xbf16, #tpu.memory_space<vmem>>, vector<2x8x8x128xbf16>
    %15 = vector.shape_cast %14 : vector<2x8x8x128xbf16> to vector<128x128xbf16>
    %c0_29 = arith.constant 0 : index
    %c2_30 = arith.constant 2 : index
    %c2_31 = arith.constant 2 : index
    %c0_32 = arith.constant 0 : index
    %16 = vector.load %arg1[%c0_29, %c2_30, %c2_31, %c0_32] : memref<2x10x10x128xbf16, #tpu.memory_space<vmem>>, vector<2x8x8x128xbf16>
    %17 = vector.shape_cast %16 : vector<2x8x8x128xbf16> to vector<128x128xbf16>
    %18 = tpu.concatenate %1, %3, %5, %7, %9, %11, %13, %15, %17 in 1 : vector<128x128xbf16>, vector<128x128xbf16>, vector<128x128xbf16>, vector<128x128xbf16>, vector<128x128xbf16>, vector<128x128xbf16>, vector<128x128xbf16>, vector<128x128xbf16>, vector<128x128xbf16> -> vector<128x1152xbf16>
    %c0_33 = arith.constant 0 : index
    %c0_34 = arith.constant 0 : index
    %19 = vector.load %arg2[%c0_33, %c0_34] : memref<1152x128xbf16, #tpu.memory_space<vmem>>, vector<1152x128xbf16>
    %cst = arith.constant dense<0.000000e+00> : vector<128x128xf32>
    %20 = tpu.matmul %18, %19, %cst {dimension_numbers = #tpu.dot_dimension_numbers<[1], [0], [0], [1], [0, 0, 1, 1], [], []>} : vector<128x1152xbf16>, vector<1152x128xbf16>, vector<128x128xf32> -> vector<128x128xf32>
    %cst_35 = arith.constant dense<0.000000e+00> : vector<128xf32>
    %21 = vector.multi_reduction <add>, %20, %cst_35 [0] : vector<128x128xf32> to vector<128xf32>
    %22 = vector.shape_cast %21 : vector<128xf32> to vector<1x128xf32>
    %cst_36 = arith.constant 7.812500e-03 : f32
    %23 = vector.broadcast %cst_36 : f32 to vector<1x128xf32>
    %24 = arith.mulf %22, %23 : vector<1x128xf32>
    %25 = vector.broadcast %24 : vector<1x128xf32> to vector<128x128xf32>
    %26 = arith.subf %20, %25 : vector<128x128xf32>
    %27 = arith.mulf %26, %26 : vector<128x128xf32>
    %cst_37 = arith.constant dense<0.000000e+00> : vector<128xf32>
    %28 = vector.multi_reduction <add>, %27, %cst_37 [0] : vector<128x128xf32> to vector<128xf32>
    %29 = vector.shape_cast %28 : vector<128xf32> to vector<1x128xf32>
    %cst_38 = arith.constant 7.812500e-03 : f32
    %30 = vector.broadcast %cst_38 : f32 to vector<1x128xf32>
    %31 = arith.mulf %29, %30 : vector<1x128xf32>
    %cst_39 = arith.constant 9.99999974E-6 : f32
    %32 = vector.broadcast %cst_39 : f32 to vector<1x128xf32>
    %33 = arith.addf %31, %32 : vector<1x128xf32>
    %34 = math.rsqrt %33 : vector<1x128xf32>
    %35 = vector.broadcast %34 : vector<1x128xf32> to vector<128x128xf32>
    %36 = arith.mulf %26, %35 : vector<128x128xf32>
    %c0_40 = arith.constant 0 : index
    %c0_41 = arith.constant 0 : index
    %37 = vector.load %arg3[%c0_40, %c0_41] : memref<1x128xf32, #tpu.memory_space<vmem>>, vector<1x128xf32>
    %38 = vector.broadcast %37 : vector<1x128xf32> to vector<128x128xf32>
    %39 = arith.mulf %36, %38 : vector<128x128xf32>
    %c0_42 = arith.constant 0 : index
    %c0_43 = arith.constant 0 : index
    %40 = vector.load %arg4[%c0_42, %c0_43] : memref<1x128xf32, #tpu.memory_space<vmem>>, vector<1x128xf32>
    %41 = vector.broadcast %40 : vector<1x128xf32> to vector<128x128xf32>
    %42 = arith.addf %39, %41 : vector<128x128xf32>
    %c0_44 = arith.constant 0 : index
    %c0_45 = arith.constant 0 : index
    %43 = vector.load %arg5[%c0_44, %c0_45] : memref<128x128xbf16, #tpu.memory_space<vmem>>, vector<128x128xbf16>
    %44 = arith.extf %43 : vector<128x128xbf16> to vector<128x128xf32>
    %45 = arith.addf %42, %44 : vector<128x128xf32>
    %cst_46 = arith.constant 0.000000e+00 : f32
    %46 = vector.broadcast %cst_46 : f32 to vector<128x128xf32>
    %47 = arith.maximumf %45, %46 : vector<128x128xf32>
    %48 = arith.truncf %47 : vector<128x128xf32> to vector<128x128xbf16>
    %c0_47 = arith.constant 0 : index
    %c0_48 = arith.constant 0 : index
    %49 = vector.load %arg6[%c0_47, %c0_48] : memref<128x128xbf16, #tpu.memory_space<vmem>>, vector<128x128xbf16>
    tpu.vector_store %arg6[%c0_47, %c0_48], %48 {strides = array<i32>} : memref<128x128xbf16, #tpu.memory_space<vmem>>, vector<128x128xbf16>,
    return
  }
  func.func @transform_0(%arg0: i32) -> (i32, i32, i32, i32) {
    %c0_i32 = arith.constant 0 : i32
    %c0_i32_0 = arith.constant 0 : i32
    %c0_i32_1 = arith.constant 0 : i32
    %c0_i32_2 = arith.constant 0 : i32
    %c0_i32_3 = arith.constant 0 : i32
    return %c0_i32, %c0_i32_0, %c0_i32_1, %c0_i32_2 : i32, i32, i32, i32
  }
  func.func @transform_1(%arg0: i32) -> (i32, i32) {
    %c0_i32 = arith.constant 0 : i32
    %c0_i32_0 = arith.constant 0 : i32
    return %c0_i32, %arg0 : i32, i32
  }
  func.func @transform_2(%arg0: i32) -> (i32, i32) {
    %c0_i32 = arith.constant 0 : i32
    %c0_i32_0 = arith.constant 0 : i32
    return %c0_i32, %arg0 : i32, i32
  }
  func.func @transform_3(%arg0: i32) -> (i32, i32) {
    %c0_i32 = arith.constant 0 : i32
    %c0_i32_0 = arith.constant 0 : i32
    return %c0_i32, %arg0 : i32, i32
  }
  func.func @transform_4(%arg0: i32) -> (i32, i32) {
    %c0_i32 = arith.constant 0 : i32
    %c0_i32_0 = arith.constant 0 : i32
    return %c0_i32, %arg0 : i32, i32
  }
  func.func @transform_5(%arg0: i32) -> (i32, i32) {
    %c0_i32 = arith.constant 0 : i32
    %c0_i32_0 = arith.constant 0 : i32
    return %c0_i32, %arg0 : i32, i32
  }
}

</mosaic_0001>

<llo_original>
// kernel: residual_block_forward.3
$region0: #{residual_block_forward.3}
  #allocation0 [shape = 'u32[]', space=smem, size = 0x4, offset = 0x4, fixed_abs, tag = 'smem constant byte address 0x4 - core index']
  #allocation1 [shape = 'u32[144,128]{1,0:T(1,128)}', space=vmem, size = 0x12000, scoped, tag = 'internal scratch']
  %s0 = inlined_call_operand.vmem [shape: bf16[4,2,9,9,64], index: 0, kind: input, shape index: {}]
  %s1 = inlined_call_operand.vmem [shape: bf16[576,128], index: 1, kind: input, shape index: {}]
  %s2 = inlined_call_operand.vmem [shape: f32[1,128], index: 2, kind: input, shape index: {}]
  %s3 = inlined_call_operand.vmem [shape: f32[1,128], index: 3, kind: input, shape index: {}]
  %s4 = inlined_call_operand.vmem [shape: bf16[128,128], index: 4, kind: output, shape index: {}]
  %s5 = sld [smem:[#allocation0]]
  $region26: #{residual_block_forward.3} parent=0
    _
  %s7 = ssub.s32 1, %s5
  %s8 = scalar_select 0, %s7, %s5
  // Predicated region
  $region2: #{residual_block_forward.3} parent=0 // pred_check
    _
  $region3: #{residual_block_forward.3} parent=0 // pred_check_branch
    %10 = sbr.rel (0) target = $region5
  $region4: #{residual_block_forward.3} parent=0 // pred_region
    _
  $region5: #{residual_block_forward.3} parent=0 // pred_fallthru
    _
  // Predicated region
  $region6: #{residual_block_forward.3} parent=0 // pred_check
    _
  $region7: #{residual_block_forward.3} parent=0 // pred_check_branch
    %12 = sbr.rel (0) target = $region9
  $region8: #{residual_block_forward.3} parent=0 // pred_region
    _
  $region9: #{residual_block_forward.3} parent=0 // pred_fallthru
    _
  // Predicated region
  $region10: #{residual_block_forward.3} parent=0 // pred_check
    _
  $region11: #{residual_block_forward.3} parent=0 // pred_check_branch
    %14 = sbr.rel (0) target = $region13
  $region12: #{residual_block_forward.3} parent=0 // pred_region
    _
  $region13: #{residual_block_forward.3} parent=0 // pred_fallthru
    _
  // Predicated region
  $region14: #{residual_block_forward.3} parent=0 // pred_check
    _
  $region15: #{residual_block_forward.3} parent=0 // pred_check_branch
    %16 = sbr.rel (0) target = $region17
  $region16: #{residual_block_forward.3} parent=0 // pred_region
    _
  $region17: #{residual_block_forward.3} parent=0 // pred_fallthru
    _
  %v18 = vld [vmem:[%s0] sm:$0xf]
  %v19 = vld [vmem:[%s0 + $0x8] sm:$0xf]
  %v20 = vld [vmem:[%s0 + $0x10] sm:$0xf]
  %v21 = vld [vmem:[%s0 + $0x18] sm:$0xf]
  %v22 = vld [vmem:[%s0 + $0x20] sm:$0xf]
  %v23 = vld [vmem:[%s0 + $0x28] sm:$0xf]
  %v24 = vld [vmem:[%s0 + $0x30] sm:$0xf]
  %v25 = vld [vmem:[%s0 + $0x38] sm:$0xf]
  %v26 = vld [vmem:[%s0 + $0x48] sm:$0xf]
  %v27 = vld [vmem:[%s0 + $0x50] sm:$0xf]
  %v28 = vld [vmem:[%s0 + $0x58] sm:$0xf]
  %v29 = vld [vmem:[%s0 + $0x60] sm:$0xf]
  %v30 = vld [vmem:[%s0 + $0x68] sm:$0xf]
  %v31 = vld [vmem:[%s0 + $0x70] sm:$0xf]
  %v32 = vld [vmem:[%s0 + $0x78] sm:$0xf]
  %v33 = vld [vmem:[%s0 + $0x80] sm:$0xf]
  %v34 = vld [vmem:[%s1] sm:$0xf]
  %v35 = vld [vmem:[%s1 + $0x4] sm:$0xf]
  %v36 = vld [vmem:[%s1 + $0x8] sm:$0xf]
  %v37 = vld [vmem:[%s1 + $0xc] sm:$0xf]
  %v38 = vld [vmem:[%s1 + $0x10] sm:$0xf]
  %v39 = vld [vmem:[%s1 + $0x14] sm:$0xf]
  %v40 = vld [vmem:[%s1 + $0x18] sm:$0xf]
  %v41 = vld [vmem:[%s1 + $0x1c] sm:$0xf]
  %s42 = scalar_lea.vmem %s0, 144
  %v43 = vld [vmem:[%s42] sm:$0xf]
  %v44 = vld [vmem:[%s42 + $0x8] sm:$0xf]
  %v45 = vld [vmem:[%s42 + $0x10] sm:$0xf]
  %v46 = vld [vmem:[%s42 + $0x18] sm:$0xf]
  %v47 = vld [vmem:[%s42 + $0x20] sm:$0xf]
  %v48 = vld [vmem:[%s42 + $0x28] sm:$0xf]
  %v49 = vld [vmem:[%s42 + $0x30] sm:$0xf]
  %v50 = vld [vmem:[%s42 + $0x38] sm:$0xf]
  %v51 = vld [vmem:[%s42 + $0x48] sm:$0xf]
  %v52 = vld [vmem:[%s42 + $0x50] sm:$0xf]
  %v53 = vld [vmem:[%s42 + $0x58] sm:$0xf]
  %v54 = vld [vmem:[%s42 + $0x60] sm:$0xf]
  %v55 = vld [vmem:[%s42 + $0x68] sm:$0xf]
  %v56 = vld [vmem:[%s42 + $0x70] sm:$0xf]
  %v57 = vld [vmem:[%s42 + $0x78] sm:$0xf]
  %v58 = vld [vmem:[%s42 + $0x80] sm:$0xf]
  %v59 = vld [vmem:[%s1 + $0x20] sm:$0xf]
  %v60 = vld [vmem:[%s1 + $0x24] sm:$0xf]
  %v61 = vld [vmem:[%s1 + $0x28] sm:$0xf]
  %v62 = vld [vmem:[%s1 + $0x2c] sm:$0xf]
  %v63 = vld [vmem:[%s1 + $0x30] sm:$0xf]
  %v64 = vld [vmem:[%s1 + $0x34] sm:$0xf]
  %v65 = vld [vmem:[%s1 + $0x38] sm:$0xf]
  %v66 = vld [vmem:[%s1 + $0x3c] sm:$0xf]
  %v83 = vunpack.c.l.b16 %v43
  %v84 = vunpack.c.l.b16 %v44
  %v85 = vunpack.c.l.b16 %v45
  %v86 = vunpack.c.l.b16 %v46
  %v87 = vunpack.c.l.b16 %v47
  %v88 = vunpack.c.l.b16 %v48
  %v89 = vunpack.c.l.b16 %v49
  %v90 = vunpack.c.l.b16 %v50
  %v91 = vunpack.c.l.b16 %v51
  %v92 = vunpack.c.l.b16 %v52
  %v93 = vunpack.c.l.b16 %v53
  %v94 = vunpack.c.l.b16 %v54
  %v95 = vunpack.c.l.b16 %v55
  %v96 = vunpack.c.l.b16 %v56
  %v97 = vunpack.c.l.b16 %v57
  %v98 = vunpack.c.l.b16 %v58
  %v99 = vpack.c.b16 %v84, %v83
  %v100 = vpack.c.b16 %v86, %v85
  %v101 = vpack.c.b16 %v88, %v87
  %v102 = vpack.c.b16 %v90, %v89
  %v103 = vpack.c.b16 %v92, %v91
  %v104 = vpack.c.b16 %v94, %v93
  %v105 = vpack.c.b16 %v96, %v95
  %v106 = vpack.c.b16 %v98, %v97
  %v115 = vunpack.c.l.b16 %v59
  %v116 = vunpack.c.l.b16 %v60
  %v117 = vunpack.c.l.b16 %v61
  %v118 = vunpack.c.l.b16 %v62
  %v119 = vunpack.c.l.b16 %v63
  %v120 = vunpack.c.l.b16 %v64
  %v121 = vunpack.c.l.b16 %v65
  %v122 = vunpack.c.l.b16 %v66
  %v123 = vpack.c.b16 %v116, %v115
  %v124 = vpack.c.b16 %v118, %v117
  %v125 = vpack.c.b16 %v120, %v119
  %v126 = vpack.c.b16 %v122, %v121
  %vm131 = vcmask 523264
  %v133 = vsel %vm131, %v99, 0
  %v136 = vsel %vm131, %v100, 0
  %v139 = vsel %vm131, %v101, 0
  %v142 = vsel %vm131, %v102, 0
  %v145 = vsel %vm131, %v103, 0
  %v148 = vsel %vm131, %v104, 0
  %v151 = vsel %vm131, %v105, 0
  %v154 = vsel %vm131, %v106, 0
  %156 = vmatprep.subr.bf16.mxu0 0
  %157 = vmatpush1.bf16.msra.mxu0 0
  %158 = vmatprep.subr.bf16.mxu0 0
  %159 = vmatpush1.bf16.msra.mxu0 0
  %160 = vmatprep.subr.bf16.mxu0 0
  %161 = vmatpush1.bf16.msra.mxu0 0
  %162 = vmatprep.subr.bf16.mxu0 0
  %163 = vmatpush1.bf16.msra.mxu0 0
  %164 = vmatprep.subr.bf16.mxu0 0
  %165 = vmatpush1.bf16.msra.mxu0 %v126
  %166 = vmatprep.subr.bf16.mxu0 0
  %167 = vmatpush1.bf16.msra.mxu0 %v125
  %168 = vmatprep.subr.bf16.mxu0 0
  %169 = vmatpush1.bf16.msra.mxu0 %v124
  %170 = vmatprep.subr.bf16.mxu0 0
  %171 = vmatpush1.bf16.msra.mxu0 %v123
  %172 = vmatprep.subr.bf16.mxu0 0
  %173 = vmatpush2.bf16.msra.mxu0 0
  %174 = vmatprep.subr.bf16.mxu0 0
  %175 = vmatpush2.bf16.msra.mxu0 0
  %176 = vmatprep.subr.bf16.mxu0 0
  %177 = vmatpush2.bf16.msra.mxu0 0
  %178 = vmatprep.subr.bf16.mxu0 0
  %179 = vmatpush2.bf16.msra.mxu0 0
  %180 = vmatprep.subr.bf16.mxu0 0
  %181 = vmatpush2.bf16.msra.mxu0 0
  %182 = vmatprep.subr.bf16.mxu0 0
  %183 = vmatpush2.bf16.msra.mxu0 0
  %184 = vmatprep.subr.bf16.mxu0 0
  %185 = vmatpush2.bf16.msra.mxu0 0
  %186 = vmatprep.subr.bf16.mxu0 0
  %187 = vmatpush2.bf16.msra.mxu0 0
  %188 = vmatprep.mubr.bf16.mxu0 0
  %189 = vmatmul.mubr.bf16.gmra.mxu0 %v133
  %v190 = vpop.f32.mrf.mxu0
  %v191 = vadd.f32 0.0, %v190
  %v192 = vpop.f32.mrf.mxu0
  %v193 = vpop.f32.mrf.mxu0
  %v194 = vadd.f32 0.0, %v193
  %v195 = vpop.f32.mrf.mxu0
  %196 = vmatprep.mubr.bf16.mxu0 0
  %197 = vmatmul.mubr.bf16.gmra.mxu0 %v136
  %v198 = vpop.f32.mrf.mxu0
  %v199 = vadd.f32 0.0, %v198
  %v200 = vpop.f32.mrf.mxu0
  %v201 = vpop.f32.mrf.mxu0
  %v202 = vadd.f32 0.0, %v201
  %v203 = vpop.f32.mrf.mxu0
  %204 = vmatprep.mubr.bf16.mxu0 0
  %205 = vmatmul.mubr.bf16.gmra.mxu0 %v139
  %v206 = vpop.f32.mrf.mxu0
  %v207 = vadd.f32 0.0, %v206
  %v208 = vpop.f32.mrf.mxu0
  %v209 = vpop.f32.mrf.mxu0
  %v210 = vadd.f32 0.0, %v209
  %v211 = vpop.f32.mrf.mxu0
  %212 = vmatprep.mubr.bf16.mxu0 0
  %213 = vmatmul.mubr.bf16.gmra.mxu0 %v142
  %v214 = vpop.f32.mrf.mxu0
  %v215 = vadd.f32 0.0, %v214
  %v216 = vpop.f32.mrf.mxu0
  %v217 = vpop.f32.mrf.mxu0
  %v218 = vadd.f32 0.0, %v217
  %v219 = vpop.f32.mrf.mxu0
  %220 = vmatprep.mubr.bf16.mxu0 0
  %221 = vmatmul.mubr.bf16.gmra.mxu0 %v145
  %v222 = vpop.f32.mrf.mxu0
  %v223 = vadd.f32 0.0, %v222
  %v224 = vpop.f32.mrf.mxu0
  %v225 = vpop.f32.mrf.mxu0
  %v226 = vadd.f32 0.0, %v225
  %v227 = vpop.f32.mrf.mxu0
  %228 = vmatprep.mubr.bf16.mxu0 0
  %229 = vmatmul.mubr.bf16.gmra.mxu0 %v148
  %v230 = vpop.f32.mrf.mxu0
  %v231 = vadd.f32 0.0, %v230
  %v232 = vpop.f32.mrf.mxu0
  %v233 = vpop.f32.mrf.mxu0
  %v234 = vadd.f32 0.0, %v233
  %v235 = vpop.f32.mrf.mxu0
  %236 = vmatprep.mubr.bf16.mxu0 0
  %237 = vmatmul.mubr.bf16.gmra.mxu0 %v151
  %v238 = vpop.f32.mrf.mxu0
  %v239 = vadd.f32 0.0, %v238
  %v240 = vpop.f32.mrf.mxu0
  %v241 = vpop.f32.mrf.mxu0
  %v242 = vadd.f32 0.0, %v241
  %v243 = vpop.f32.mrf.mxu0
  %244 = vmatprep.mubr.bf16.mxu0 0
  %245 = vmatmul.mubr.bf16.gmra.mxu0 %v154
  %v246 = vpop.f32.mrf.mxu0
  %v247 = vadd.f32 0.0, %v246
  %v248 = vpop.f32.mrf.mxu0
  %v249 = vpop.f32.mrf.mxu0
  %v250 = vadd.f32 0.0, %v249
  %v251 = vpop.f32.mrf.mxu0
  %252 = vdwg.mxu0
  %v269 = vunpack.c.l.b16 %v18
  %v270 = vunpack.c.l.b16 %v19
  %v271 = vunpack.c.l.b16 %v20
  %v272 = vunpack.c.l.b16 %v21
  %v273 = vunpack.c.l.b16 %v22
  %v274 = vunpack.c.l.b16 %v23
  %v275 = vunpack.c.l.b16 %v24
  %v276 = vunpack.c.l.b16 %v25
  %v277 = vunpack.c.l.b16 %v26
  %v278 = vunpack.c.l.b16 %v27
  %v279 = vunpack.c.l.b16 %v28
  %v280 = vunpack.c.l.b16 %v29
  %v281 = vunpack.c.l.b16 %v30
  %v282 = vunpack.c.l.b16 %v31
  %v283 = vunpack.c.l.b16 %v32
  %v284 = vunpack.c.l.b16 %v33
  %v285 = vpack.c.b16 %v270, %v269
  %v286 = vpack.c.b16 %v272, %v271
  %v287 = vpack.c.b16 %v274, %v273
  %v288 = vpack.c.b16 %v276, %v275
  %v289 = vpack.c.b16 %v278, %v277
  %v290 = vpack.c.b16 %v280, %v279
  %v291 = vpack.c.b16 %v282, %v281
  %v292 = vpack.c.b16 %v284, %v283
  %v301 = vunpack.c.l.b16 %v34
  %v302 = vunpack.c.l.b16 %v35
  %v303 = vunpack.c.l.b16 %v36
  %v304 = vunpack.c.l.b16 %v37
  %v305 = vunpack.c.l.b16 %v38
  %v306 = vunpack.c.l.b16 %v39
  %v307 = vunpack.c.l.b16 %v40
  %v308 = vunpack.c.l.b16 %v41
  %v309 = vpack.c.b16 %v302, %v301
  %v310 = vpack.c.b16 %v304, %v303
  %v311 = vpack.c.b16 %v306, %v305
  %v312 = vpack.c.b16 %v308, %v307
  %v318 = vsel %vm131, %v285, 0
  %v321 = vsel %vm131, %v286, 0
  %v324 = vsel %vm131, %v287, 0
  %v327 = vsel %vm131, %v288, 0
  %v330 = vsel %vm131, %v289, 0
  %v333 = vsel %vm131, %v290, 0
  %v336 = vsel %vm131, %v291, 0
  %v339 = vsel %vm131, %v292, 0
  %341 = vmatprep.subr.bf16.mxu0 0
  %342 = vmatpush1.bf16.msra.mxu0 0
  %343 = vmatprep.subr.bf16.mxu0 0
  %344 = vmatpush1.bf16.msra.mxu0 0
  %345 = vmatprep.subr.bf16.mxu0 0
  %346 = vmatpush1.bf16.msra.mxu0 0
  %347 = vmatprep.subr.bf16.mxu0 0
  %348 = vmatpush1.bf16.msra.mxu0 0
  %349 = vmatprep.subr.bf16.mxu0 0
  %350 = vmatpush1.bf16.msra.mxu0 %v312
  %351 = vmatprep.subr.bf16.mxu0 0
  %352 = vmatpush1.bf16.msra.mxu0 %v311
  %353 = vmatprep.subr.bf16.mxu0 0
  %354 = vmatpush1.bf16.msra.mxu0 %v310
  %355 = vmatprep.subr.bf16.mxu0 0
  %356 = vmatpush1.bf16.msra.mxu0 %v309
  %357 = vmatprep.subr.bf16.mxu0 0
  %358 = vmatpush2.bf16.msra.mxu0 0
  %359 = vmatprep.subr.bf16.mxu0 0
  %360 = vmatpush2.bf16.msra.mxu0 0
  %361 = vmatprep.subr.bf16.mxu0 0
  %362 = vmatpush2.bf16.msra.mxu0 0
  %363 = vmatprep.subr.bf16.mxu0 0
  %364 = vmatpush2.bf16.msra.mxu0 0
  %365 = vmatprep.subr.bf16.mxu0 0
  %366 = vmatpush2.bf16.msra.mxu0 0
  %367 = vmatprep.subr.bf16.mxu0 0
  %368 = vmatpush2.bf16.msra.mxu0 0
  %369 = vmatprep.subr.bf16.mxu0 0
  %370 = vmatpush2.bf16.msra.mxu0 0
  %371 = vmatprep.subr.bf16.mxu0 0
  %372 = vmatpush2.bf16.msra.mxu0 0
  %373 = vmatprep.mubr.bf16.mxu0 0
  %374 = vmatmul.mubr.bf16.gmra.mxu0 %v318
  %v375 = vpop.f32.mrf.mxu0
  %v376 = vadd.f32 %v191, %v375
  %v377 = vpop.f32.mrf.mxu0
  %v378 = vpop.f32.mrf.mxu0
  %v379 = vadd.f32 %v194, %v378
  %v380 = vpop.f32.mrf.mxu0
  %381 = vmatprep.mubr.bf16.mxu0 0
  %382 = vmatmul.mubr.bf16.gmra.mxu0 %v321
  %v383 = vpop.f32.mrf.mxu0
  %v384 = vadd.f32 %v199, %v383
  %v385 = vpop.f32.mrf.mxu0
  %v386 = vpop.f32.mrf.mxu0
  %v387 = vadd.f32 %v202, %v386
  %v388 = vpop.f32.mrf.mxu0
  %389 = vmatprep.mubr.bf16.mxu0 0
  %390 = vmatmul.mubr.bf16.gmra.mxu0 %v324
  %v391 = vpop.f32.mrf.mxu0
  %v392 = vadd.f32 %v207, %v391
  %v393 = vpop.f32.mrf.mxu0
  %v394 = vpop.f32.mrf.mxu0
  %v395 = vadd.f32 %v210, %v394
  %v396 = vpop.f32.mrf.mxu0
  %397 = vmatprep.mubr.bf16.mxu0 0
  %398 = vmatmul.mubr.bf16.gmra.mxu0 %v327
  %v399 = vpop.f32.mrf.mxu0
  %v400 = vadd.f32 %v215, %v399
  %v401 = vpop.f32.mrf.mxu0
  %v402 = vpop.f32.mrf.mxu0
  %v403 = vadd.f32 %v218, %v402
  %v404 = vpop.f32.mrf.mxu0
  %405 = vmatprep.mubr.bf16.mxu0 0
  %406 = vmatmul.mubr.bf16.gmra.mxu0 %v330
  %v407 = vpop.f32.mrf.mxu0
  %v408 = vadd.f32 %v223, %v407
  %v409 = vpop.f32.mrf.mxu0
  %v410 = vpop.f32.mrf.mxu0
  %v411 = vadd.f32 %v226, %v410
  %v412 = vpop.f32.mrf.mxu0
  %413 = vmatprep.mubr.bf16.mxu0 0
  %414 = vmatmul.mubr.bf16.gmra.mxu0 %v333
  %v415 = vpop.f32.mrf.mxu0
  %v416 = vadd.f32 %v231, %v415
  %v417 = vpop.f32.mrf.mxu0
  %v418 = vpop.f32.mrf.mxu0
  %v419 = vadd.f32 %v234, %v418
  %v420 = vpop.f32.mrf.mxu0
  %421 = vmatprep.mubr.bf16.mxu0 0
  %422 = vmatmul.mubr.bf16.gmra.mxu0 %v336
  %v423 = vpop.f32.mrf.mxu0
  %v424 = vadd.f32 %v239, %v423
  %v425 = vpop.f32.mrf.mxu0
  %v426 = vpop.f32.mrf.mxu0
  %v427 = vadd.f32 %v242, %v426
  %v428 = vpop.f32.mrf.mxu0
  %429 = vmatprep.mubr.bf16.mxu0 0
  %430 = vmatmul.mubr.bf16.gmra.mxu0 %v339
  %v431 = vpop.f32.mrf.mxu0
  %v432 = vadd.f32 %v247, %v431
  %v433 = vpop.f32.mrf.mxu0
  %v434 = vpop.f32.mrf.mxu0
  %v435 = vadd.f32 %v250, %v434
  %v436 = vpop.f32.mrf.mxu0
  %437 = vdwg.mxu0
  %v438 = vld [vmem:[%s0] sm:$0xf]
  %v439 = vld [vmem:[%s0 + $0x4] sm:$0x1]
  %v440 = vld [vmem:[%s0 + $0x8] sm:$0xf]
  %v441 = vld [vmem:[%s0 + $0xc] sm:$0x1]
  %v442 = vld [vmem:[%s0 + $0x10] sm:$0xf]
  %v443 = vld [vmem:[%s0 + $0x14] sm:$0x1]
  %v444 = vld [vmem:[%s0 + $0x18] sm:$0xf]
  %v445 = vld [vmem:[%s0 + $0x1c] sm:$0x1]
  %v446 = vld [vmem:[%s0 + $0x20] sm:$0xf]
  %v447 = vld [vmem:[%s0 + $0x24] sm:$0x1]
  %v448 = vld [vmem:[%s0 + $0x28] sm:$0xf]
  %v449 = vld [vmem:[%s0 + $0x2c] sm:$0x1]
  %v450 = vld [vmem:[%s0 + $0x30] sm:$0xf]
  %v451 = vld [vmem:[%s0 + $0x34] sm:$0x1]
  %v452 = vld [vmem:[%s0 + $0x38] sm:$0xf]
  %v453 = vld [vmem:[%s0 + $0x3c] sm:$0x1]
  %v454 = vld [vmem:[%s0 + $0x48] sm:$0xf]
  %v455 = vld [vmem:[%s0 + $0x4c] sm:$0x1]
  %v456 = vld [vmem:[%s0 + $0x50] sm:$0xf]
  %v457 = vld [vmem:[%s0 + $0x54] sm:$0x1]
  %v458 = vld [vmem:[%s0 + $0x58] sm:$0xf]
  %v459 = vld [vmem:[%s0 + $0x5c] sm:$0x1]
  %v460 = vld [vmem:[%s0 + $0x60] sm:$0xf]
  %v461 = vld [vmem:[%s0 + $0x64] sm:$0x1]
  %v462 = vld [vmem:[%s0 + $0x68] sm:$0xf]
  %v463 = vld [vmem:[%s0 + $0x6c] sm:$0x1]
  %v464 = vld [vmem:[%s0 + $0x70] sm:$0xf]
  %v465 = vld [vmem:[%s0 + $0x74] sm:$0x1]
  %v466 = vld [vmem:[%s0 + $0x78] sm:$0xf]
  %v467 = vld [vmem:[%s0 + $0x7c] sm:$0x1]
  %v468 = vld [vmem:[%s0 + $0x80] sm:$0xf]
  %v469 = vld [vmem:[%s0 + $0x84] sm:$0x1]
  %vm470 = vsmask.f32 3328
  %vm471 = vsmask.f32 7440
  %vm472 = vmor %vm470, %vm471
  %v474 = vshrl.u32 %v438, 16
  %v476 = vrot.slane %v474, 4
  %v477 = vshll.u32 %v438, 16
  %v479 = vrot.slane %v477, 5
  %v480 = vor.u32 %v476, %v479
  %v481 = vrot.slane %v480, 4
  %v483 = vshll.u32 %v439, 16
  %v485 = vrot.slane %v483, 5
  %v486 = vsel %vm472, %v481, %v485
  %v488 = vshrl.u32 %v440, 16
  %v490 = vrot.slane %v488, 4
  %v491 = vshll.u32 %v440, 16
  %v493 = vrot.slane %v491, 5
  %v494 = vor.u32 %v490, %v493
  %v495 = vrot.slane %v494, 4
  %v497 = vshll.u32 %v441, 16
  %v499 = vrot.slane %v497, 5
  %v500 = vsel %vm472, %v495, %v499
  %v502 = vshrl.u32 %v442, 16
  %v504 = vrot.slane %v502, 4
  %v505 = vshll.u32 %v442, 16
  %v507 = vrot.slane %v505, 5
  %v508 = vor.u32 %v504, %v507
  %v509 = vrot.slane %v508, 4
  %v511 = vshll.u32 %v443, 16
  %v513 = vrot.slane %v511, 5
  %v514 = vsel %vm472, %v509, %v513
  %v516 = vshrl.u32 %v444, 16
  %v518 = vrot.slane %v516, 4
  %v519 = vshll.u32 %v444, 16
  %v521 = vrot.slane %v519, 5
  %v522 = vor.u32 %v518, %v521
  %v523 = vrot.slane %v522, 4
  %v525 = vshll.u32 %v445, 16
  %v527 = vrot.slane %v525, 5
  %v528 = vsel %vm472, %v523, %v527
  %v530 = vshrl.u32 %v446, 16
  %v532 = vrot.slane %v530, 4
  %v533 = vshll.u32 %v446, 16
  %v535 = vrot.slane %v533, 5
  %v536 = vor.u32 %v532, %v535
  %v537 = vrot.slane %v536, 4
  %v539 = vshll.u32 %v447, 16
  %v541 = vrot.slane %v539, 5
  %v542 = vsel %vm472, %v537, %v541
  %v544 = vshrl.u32 %v448, 16
  %v546 = vrot.slane %v544, 4
  %v547 = vshll.u32 %v448, 16
  %v549 = vrot.slane %v547, 5
  %v550 = vor.u32 %v546, %v549
  %v551 = vrot.slane %v550, 4
  %v553 = vshll.u32 %v449, 16
  %v555 = vrot.slane %v553, 5
  %v556 = vsel %vm472, %v551, %v555
  %v558 = vshrl.u32 %v450, 16
  %v560 = vrot.slane %v558, 4
  %v561 = vshll.u32 %v450, 16
  %v563 = vrot.slane %v561, 5
  %v564 = vor.u32 %v560, %v563
  %v565 = vrot.slane %v564, 4
  %v567 = vshll.u32 %v451, 16
  %v569 = vrot.slane %v567, 5
  %v570 = vsel %vm472, %v565, %v569
  %v572 = vshrl.u32 %v452, 16
  %v574 = vrot.slane %v572, 4
  %v575 = vshll.u32 %v452, 16
  %v577 = vrot.slane %v575, 5
  %v578 = vor.u32 %v574, %v577
  %v579 = vrot.slane %v578, 4
  %v581 = vshll.u32 %v453, 16
  %v583 = vrot.slane %v581, 5
  %v584 = vsel %vm472, %v579, %v583
  %v586 = vshrl.u32 %v454, 16
  %v588 = vrot.slane %v586, 4
  %v589 = vshll.u32 %v454, 16
  %v591 = vrot.slane %v589, 5
  %v592 = vor.u32 %v588, %v591
  %v593 = vrot.slane %v592, 4
  %v595 = vshll.u32 %v455, 16
  %v597 = vrot.slane %v595, 5
  %v598 = vsel %vm472, %v593, %v597
  %v600 = vshrl.u32 %v456, 16
  %v602 = vrot.slane %v600, 4
  %v603 = vshll.u32 %v456, 16
  %v605 = vrot.slane %v603, 5
  %v606 = vor.u32 %v602, %v605
  %v607 = vrot.slane %v606, 4
  %v609 = vshll.u32 %v457, 16
  %v611 = vrot.slane %v609, 5
  %v612 = vsel %vm472, %v607, %v611
  %v614 = vshrl.u32 %v458, 16
  %v616 = vrot.slane %v614, 4
  %v617 = vshll.u32 %v458, 16
  %v619 = vrot.slane %v617, 5
  %v620 = vor.u32 %v616, %v619
  %v621 = vrot.slane %v620, 4
  %v623 = vshll.u32 %v459, 16
  %v625 = vrot.slane %v623, 5
  %v626 = vsel %vm472, %v621, %v625
  %v628 = vshrl.u32 %v460, 16
  %v630 = vrot.slane %v628, 4
  %v631 = vshll.u32 %v460, 16
  %v633 = vrot.slane %v631, 5
  %v634 = vor.u32 %v630, %v633
  %v635 = vrot.slane %v634, 4
  %v637 = vshll.u32 %v461, 16
  %v639 = vrot.slane %v637, 5
  %v640 = vsel %vm472, %v635, %v639
  %v642 = vshrl.u32 %v462, 16
  %v644 = vrot.slane %v642, 4
  %v645 = vshll.u32 %v462, 16
  %v647 = vrot.slane %v645, 5
  %v648 = vor.u32 %v644, %v647
  %v649 = vrot.slane %v648, 4
  %v651 = vshll.u32 %v463, 16
  %v653 = vrot.slane %v651, 5
  %v654 = vsel %vm472, %v649, %v653
  %v656 = vshrl.u32 %v464, 16
  %v658 = vrot.slane %v656, 4
  %v659 = vshll.u32 %v464, 16
  %v661 = vrot.slane %v659, 5
  %v662 = vor.u32 %v658, %v661
  %v663 = vrot.slane %v662, 4
  %v665 = vshll.u32 %v465, 16
  %v667 = vrot.slane %v665, 5
  %v668 = vsel %vm472, %v663, %v667
  %v670 = vshrl.u32 %v466, 16
  %v672 = vrot.slane %v670, 4
  %v673 = vshll.u32 %v466, 16
  %v675 = vrot.slane %v673, 5
  %v676 = vor.u32 %v672, %v675
  %v677 = vrot.slane %v676, 4
  %v679 = vshll.u32 %v467, 16
  %v681 = vrot.slane %v679, 5
  %v682 = vsel %vm472, %v677, %v681
  %v684 = vshrl.u32 %v468, 16
  %v686 = vrot.slane %v684, 4
  %v687 = vshll.u32 %v468, 16
  %v689 = vrot.slane %v687, 5
  %v690 = vor.u32 %v686, %v689
  %v691 = vrot.slane %v690, 4
  %v693 = vshll.u32 %v469, 16
  %v695 = vrot.slane %v693, 5
  %v696 = vsel %vm472, %v691, %v695
  %v697 = vld [vmem:[%s1 + $0x40] sm:$0xf]
  %v698 = vld [vmem:[%s1 + $0x44] sm:$0xf]
  %v699 = vld [vmem:[%s1 + $0x48] sm:$0xf]
  %v700 = vld [vmem:[%s1 + $0x4c] sm:$0xf]
  %v701 = vld [vmem:[%s1 + $0x50] sm:$0xf]
  %v702 = vld [vmem:[%s1 + $0x54] sm:$0xf]
  %v703 = vld [vmem:[%s1 + $0x58] sm:$0xf]
  %v704 = vld [vmem:[%s1 + $0x5c] sm:$0xf]
  %v705 = vunpack.c.l.b16 %v486
  %v706 = vunpack.c.l.b16 %v500
  %v707 = vunpack.c.l.b16 %v514
  %v708 = vunpack.c.l.b16 %v528
  %v709 = vunpack.c.l.b16 %v542
  %v710 = vunpack.c.l.b16 %v556
  %v711 = vunpack.c.l.b16 %v570
  %v712 = vunpack.c.l.b16 %v584
  %v713 = vunpack.c.l.b16 %v598
  %v714 = vunpack.c.l.b16 %v612
  %v715 = vunpack.c.l.b16 %v626
  %v716 = vunpack.c.l.b16 %v640
  %v717 = vunpack.c.l.b16 %v654
  %v718 = vunpack.c.l.b16 %v668
  %v719 = vunpack.c.l.b16 %v682
  %v720 = vunpack.c.l.b16 %v696
  %v721 = vpack.c.b16 %v706, %v705
  %v722 = vpack.c.b16 %v708, %v707
  %v723 = vpack.c.b16 %v710, %v709
  %v724 = vpack.c.b16 %v712, %v711
  %v725 = vpack.c.b16 %v714, %v713
  %v726 = vpack.c.b16 %v716, %v715
  %v727 = vpack.c.b16 %v718, %v717
  %v728 = vpack.c.b16 %v720, %v719
  %v737 = vunpack.c.l.b16 %v697
  %v738 = vunpack.c.l.b16 %v698
  %v739 = vunpack.c.l.b16 %v699
  %v740 = vunpack.c.l.b16 %v700
  %v741 = vunpack.c.l.b16 %v701
  %v742 = vunpack.c.l.b16 %v702
  %v743 = vunpack.c.l.b16 %v703
  %v744 = vunpack.c.l.b16 %v704
  %v745 = vpack.c.b16 %v738, %v737
  %v746 = vpack.c.b16 %v740, %v739
  %v747 = vpack.c.b16 %v742, %v741
  %v748 = vpack.c.b16 %v744, %v743
  %v754 = vsel %vm131, %v721, 0
  %v757 = vsel %vm131, %v722, 0
  %v760 = vsel %vm131, %v723, 0
  %v763 = vsel %vm131, %v724, 0
  %v766 = vsel %vm131, %v725, 0
  %v769 = vsel %vm131, %v726, 0
  %v772 = vsel %vm131, %v727, 0
  %v775 = vsel %vm131, %v728, 0
  %777 = vmatprep.subr.bf16.mxu0 0
  %778 = vmatpush1.bf16.msra.mxu0 0
  %779 = vmatprep.subr.bf16.mxu0 0
  %780 = vmatpush1.bf16.msra.mxu0 0
  %781 = vmatprep.subr.bf16.mxu0 0
  %782 = vmatpush1.bf16.msra.mxu0 0
  %783 = vmatprep.subr.bf16.mxu0 0
  %784 = vmatpush1.bf16.msra.mxu0 0
  %785 = vmatprep.subr.bf16.mxu0 0
  %786 = vmatpush1.bf16.msra.mxu0 %v748
  %787 = vmatprep.subr.bf16.mxu0 0
  %788 = vmatpush1.bf16.msra.mxu0 %v747
  %789 = vmatprep.subr.bf16.mxu0 0
  %790 = vmatpush1.bf16.msra.mxu0 %v746
  %791 = vmatprep.subr.bf16.mxu0 0
  %792 = vmatpush1.bf16.msra.mxu0 %v745
  %793 = vmatprep.subr.bf16.mxu0 0
  %794 = vmatpush2.bf16.msra.mxu0 0
  %795 = vmatprep.subr.bf16.mxu0 0
  %796 = vmatpush2.bf16.msra.mxu0 0
  %797 = vmatprep.subr.bf16.mxu0 0
  %798 = vmatpush2.bf16.msra.mxu0 0
  %799 = vmatprep.subr.bf16.mxu0 0
  %800 = vmatpush2.bf16.msra.mxu0 0
  %801 = vmatprep.subr.bf16.mxu0 0
  %802 = vmatpush2.bf16.msra.mxu0 0
  %803 = vmatprep.subr.bf16.mxu0 0
  %804 = vmatpush2.bf16.msra.mxu0 0
  %805 = vmatprep.subr.bf16.mxu0 0
  %806 = vmatpush2.bf16.msra.mxu0 0
  %807 = vmatprep.subr.bf16.mxu0 0
  %808 = vmatpush2.bf16.msra.mxu0 0
  %809 = vmatprep.mubr.bf16.mxu0 0
  %810 = vmatmul.mubr.bf16.gmra.mxu0 %v754
  %v811 = vpop.f32.mrf.mxu0
  %v812 = vadd.f32 0.0, %v811
  %v813 = vpop.f32.mrf.mxu0
  %v814 = vpop.f32.mrf.mxu0
  %v815 = vadd.f32 0.0, %v814
  %v816 = vpop.f32.mrf.mxu0
  %817 = vmatprep.mubr.bf16.mxu0 0
  %818 = vmatmul.mubr.bf16.gmra.mxu0 %v757
  %v819 = vpop.f32.mrf.mxu0
  %v820 = vadd.f32 0.0, %v819
  %v821 = vpop.f32.mrf.mxu0
  %v822 = vpop.f32.mrf.mxu0
  %v823 = vadd.f32 0.0, %v822
  %v824 = vpop.f32.mrf.mxu0
  %825 = vmatprep.mubr.bf16.mxu0 0
  %826 = vmatmul.mubr.bf16.gmra.mxu0 %v760
  %v827 = vpop.f32.mrf.mxu0
  %v828 = vadd.f32 0.0, %v827
  %v829 = vpop.f32.mrf.mxu0
  %v830 = vpop.f32.mrf.mxu0
  %v831 = vadd.f32 0.0, %v830
  %v832 = vpop.f32.mrf.mxu0
  %833 = vmatprep.mubr.bf16.mxu0 0
  %834 = vmatmul.mubr.bf16.gmra.mxu0 %v763
  %v835 = vpop.f32.mrf.mxu0
  %v836 = vadd.f32 0.0, %v835
  %v837 = vpop.f32.mrf.mxu0
  %v838 = vpop.f32.mrf.mxu0
  %v839 = vadd.f32 0.0, %v838
  %v840 = vpop.f32.mrf.mxu0
  %841 = vmatprep.mubr.bf16.mxu0 0
  %842 = vmatmul.mubr.bf16.gmra.mxu0 %v766
  %v843 = vpop.f32.mrf.mxu0
  %v844 = vadd.f32 0.0, %v843
  %v845 = vpop.f32.mrf.mxu0
  %v846 = vpop.f32.mrf.mxu0
  %v847 = vadd.f32 0.0, %v846
  %v848 = vpop.f32.mrf.mxu0
  %849 = vmatprep.mubr.bf16.mxu0 0
  %850 = vmatmul.mubr.bf16.gmra.mxu0 %v769
  %v851 = vpop.f32.mrf.mxu0
  %v852 = vadd.f32 0.0, %v851
  %v853 = vpop.f32.mrf.mxu0
  %v854 = vpop.f32.mrf.mxu0
  %v855 = vadd.f32 0.0, %v854
  %v856 = vpop.f32.mrf.mxu0
  %857 = vmatprep.mubr.bf16.mxu0 0
  %858 = vmatmul.mubr.bf16.gmra.mxu0 %v772
  %v859 = vpop.f32.mrf.mxu0
  %v860 = vadd.f32 0.0, %v859
  %v861 = vpop.f32.mrf.mxu0
  %v862 = vpop.f32.mrf.mxu0
  %v863 = vadd.f32 0.0, %v862
  %v864 = vpop.f32.mrf.mxu0
  %865 = vmatprep.mubr.bf16.mxu0 0
  %866 = vmatmul.mubr.bf16.gmra.mxu0 %v775
  %v867 = vpop.f32.mrf.mxu0
  %v868 = vadd.f32 0.0, %v867
  %v869 = vpop.f32.mrf.mxu0
  %v870 = vpop.f32.mrf.mxu0
  %v871 = vadd.f32 0.0, %v870
  %v872 = vpop.f32.mrf.mxu0
  %873 = vdwg.mxu0
  %v874 = vadd.f32 %v376, %v812
  %v875 = vadd.f32 %v379, %v815
  %v876 = vadd.f32 %v384, %v820
  %v877 = vadd.f32 %v387, %v823
  %v878 = vadd.f32 %v392, %v828
  %v879 = vadd.f32 %v395, %v831
  %v880 = vadd.f32 %v400, %v836
  %v881 = vadd.f32 %v403, %v839
  %v882 = vadd.f32 %v408, %v844
  %v883 = vadd.f32 %v411, %v847
  %v884 = vadd.f32 %v416, %v852
  %v885 = vadd.f32 %v419, %v855
  %v886 = vadd.f32 %v424, %v860
  %v887 = vadd.f32 %v427, %v863
  %v888 = vadd.f32 %v432, %v868
  %v889 = vadd.f32 %v435, %v871
  %s890 = scalar_lea.vmem %s0, 288
  %v891 = vld [vmem:[%s890] sm:$0xf]
  %v892 = vld [vmem:[%s890 + $0x8] sm:$0xf]
  %v893 = vld [vmem:[%s890 + $0x10] sm:$0xf]
  %v894 = vld [vmem:[%s890 + $0x18] sm:$0xf]
  %v895 = vld [vmem:[%s890 + $0x20] sm:$0xf]
  %v896 = vld [vmem:[%s890 + $0x28] sm:$0xf]
  %v897 = vld [vmem:[%s890 + $0x30] sm:$0xf]
  %v898 = vld [vmem:[%s890 + $0x38] sm:$0xf]
  %v899 = vld [vmem:[%s890 + $0x48] sm:$0xf]
  %v900 = vld [vmem:[%s890 + $0x50] sm:$0xf]
  %v901 = vld [vmem:[%s890 + $0x58] sm:$0xf]
  %v902 = vld [vmem:[%s890 + $0x60] sm:$0xf]
  %v903 = vld [vmem:[%s890 + $0x68] sm:$0xf]
  %v904 = vld [vmem:[%s890 + $0x70] sm:$0xf]
  %v905 = vld [vmem:[%s890 + $0x78] sm:$0xf]
  %v906 = vld [vmem:[%s890 + $0x80] sm:$0xf]
  %v907 = vld [vmem:[%s1 + $0x60] sm:$0xf]
  %v908 = vld [vmem:[%s1 + $0x64] sm:$0xf]
  %v909 = vld [vmem:[%s1 + $0x68] sm:$0xf]
  %v910 = vld [vmem:[%s1 + $0x6c] sm:$0xf]
  %v911 = vld [vmem:[%s1 + $0x70] sm:$0xf]
  %v912 = vld [vmem:[%s1 + $0x74] sm:$0xf]
  %v913 = vld [vmem:[%s1 + $0x78] sm:$0xf]
  %v914 = vld [vmem:[%s1 + $0x7c] sm:$0xf]
  %v931 = vunpack.c.l.b16 %v891
  %v932 = vunpack.c.l.b16 %v892
  %v933 = vunpack.c.l.b16 %v893
  %v934 = vunpack.c.l.b16 %v894
  %v935 = vunpack.c.l.b16 %v895
  %v936 = vunpack.c.l.b16 %v896
  %v937 = vunpack.c.l.b16 %v897
  %v938 = vunpack.c.l.b16 %v898
  %v939 = vunpack.c.l.b16 %v899
  %v940 = vunpack.c.l.b16 %v900
  %v941 = vunpack.c.l.b16 %v901
  %v942 = vunpack.c.l.b16 %v902
  %v943 = vunpack.c.l.b16 %v903
  %v944 = vunpack.c.l.b16 %v904
  %v945 = vunpack.c.l.b16 %v905
  %v946 = vunpack.c.l.b16 %v906
  %v947 = vpack.c.b16 %v932, %v931
  %v948 = vpack.c.b16 %v934, %v933
  %v949 = vpack.c.b16 %v936, %v935
  %v950 = vpack.c.b16 %v938, %v937
  %v951 = vpack.c.b16 %v940, %v939
  %v952 = vpack.c.b16 %v942, %v941
  %v953 = vpack.c.b16 %v944, %v943
  %v954 = vpack.c.b16 %v946, %v945
  %v963 = vunpack.c.l.b16 %v907
  %v964 = vunpack.c.l.b16 %v908
  %v965 = vunpack.c.l.b16 %v909
  %v966 = vunpack.c.l.b16 %v910
  %v967 = vunpack.c.l.b16 %v911
  %v968 = vunpack.c.l.b16 %v912
  %v969 = vunpack.c.l.b16 %v913
  %v970 = vunpack.c.l.b16 %v914
  %v971 = vpack.c.b16 %v964, %v963
  %v972 = vpack.c.b16 %v966, %v965
  %v973 = vpack.c.b16 %v968, %v967
  %v974 = vpack.c.b16 %v970, %v969
  %v980 = vsel %vm131, %v947, 0
  %v983 = vsel %vm131, %v948, 0
  %v986 = vsel %vm131, %v949, 0
  %v989 = vsel %vm131, %v950, 0
  %v992 = vsel %vm131, %v951, 0
  %v995 = vsel %vm131, %v952, 0
  %v998 = vsel %vm131, %v953, 0
  %v1001 = vsel %vm131, %v954, 0
  %1003 = vmatprep.subr.bf16.mxu0 0
  %1004 = vmatpush1.bf16.msra.mxu0 0
  %1005 = vmatprep.subr.bf16.mxu0 0
  %1006 = vmatpush1.bf16.msra.mxu0 0
  %1007 = vmatprep.subr.bf16.mxu0 0
  %1008 = vmatpush1.bf16.msra.mxu0 0
  %1009 = vmatprep.subr.bf16.mxu0 0
  %1010 = vmatpush1.bf16.msra.mxu0 0
  %1011 = vmatprep.subr.bf16.mxu0 0
  %1012 = vmatpush1.bf16.msra.mxu0 %v974
  %1013 = vmatprep.subr.bf16.mxu0 0
  %1014 = vmatpush1.bf16.msra.mxu0 %v973
  %1015 = vmatprep.subr.bf16.mxu0 0
  %1016 = vmatpush1.bf16.msra.mxu0 %v972
  %1017 = vmatprep.subr.bf16.mxu0 0
  %1018 = vmatpush1.bf16.msra.mxu0 %v971
  %1019 = vmatprep.subr.bf16.mxu0 0
  %1020 = vmatpush2.bf16.msra.mxu0 0
  %1021 = vmatprep.subr.bf16.mxu0 0
  %1022 = vmatpush2.bf16.msra.mxu0 0
  %1023 = vmatprep.subr.bf16.mxu0 0
  %1024 = vmatpush2.bf16.msra.mxu0 0
  %1025 = vmatprep.subr.bf16.mxu0 0
  %1026 = vmatpush2.bf16.msra.mxu0 0
  %1027 = vmatprep.subr.bf16.mxu0 0
  %1028 = vmatpush2.bf16.msra.mxu0 0
  %1029 = vmatprep.subr.bf16.mxu0 0
  %1030 = vmatpush2.bf16.msra.mxu0 0
  %1031 = vmatprep.subr.bf16.mxu0 0
  %1032 = vmatpush2.bf16.msra.mxu0 0
  %1033 = vmatprep.subr.bf16.mxu0 0
  %1034 = vmatpush2.bf16.msra.mxu0 0
  %1035 = vmatprep.mubr.bf16.mxu0 0
  %1036 = vmatmul.mubr.bf16.gmra.mxu0 %v980
  %v1037 = vpop.f32.mrf.mxu0
  %v1038 = vadd.f32 0.0, %v1037
  %v1039 = vpop.f32.mrf.mxu0
  %v1040 = vpop.f32.mrf.mxu0
  %v1041 = vadd.f32 0.0, %v1040
  %v1042 = vpop.f32.mrf.mxu0
  %1043 = vmatprep.mubr.bf16.mxu0 0
  %1044 = vmatmul.mubr.bf16.gmra.mxu0 %v983
  %v1045 = vpop.f32.mrf.mxu0
  %v1046 = vadd.f32 0.0, %v1045
  %v1047 = vpop.f32.mrf.mxu0
  %v1048 = vpop.f32.mrf.mxu0
  %v1049 = vadd.f32 0.0, %v1048
  %v1050 = vpop.f32.mrf.mxu0
  %1051 = vmatprep.mubr.bf16.mxu0 0
  %1052 = vmatmul.mubr.bf16.gmra.mxu0 %v986
  %v1053 = vpop.f32.mrf.mxu0
  %v1054 = vadd.f32 0.0, %v1053
  %v1055 = vpop.f32.mrf.mxu0
  %v1056 = vpop.f32.mrf.mxu0
  %v1057 = vadd.f32 0.0, %v1056
  %v1058 = vpop.f32.mrf.mxu0
  %1059 = vmatprep.mubr.bf16.mxu0 0
  %1060 = vmatmul.mubr.bf16.gmra.mxu0 %v989
  %v1061 = vpop.f32.mrf.mxu0
  %v1062 = vadd.f32 0.0, %v1061
  %v1063 = vpop.f32.mrf.mxu0
  %v1064 = vpop.f32.mrf.mxu0
  %v1065 = vadd.f32 0.0, %v1064
  %v1066 = vpop.f32.mrf.mxu0
  %1067 = vmatprep.mubr.bf16.mxu0 0
  %1068 = vmatmul.mubr.bf16.gmra.mxu0 %v992
  %v1069 = vpop.f32.mrf.mxu0
  %v1070 = vadd.f32 0.0, %v1069
  %v1071 = vpop.f32.mrf.mxu0
  %v1072 = vpop.f32.mrf.mxu0
  %v1073 = vadd.f32 0.0, %v1072
  %v1074 = vpop.f32.mrf.mxu0
  %1075 = vmatprep.mubr.bf16.mxu0 0
  %1076 = vmatmul.mubr.bf16.gmra.mxu0 %v995
  %v1077 = vpop.f32.mrf.mxu0
  %v1078 = vadd.f32 0.0, %v1077
  %v1079 = vpop.f32.mrf.mxu0
  %v1080 = vpop.f32.mrf.mxu0
  %v1081 = vadd.f32 0.0, %v1080
  %v1082 = vpop.f32.mrf.mxu0
  %1083 = vmatprep.mubr.bf16.mxu0 0
  %1084 = vmatmul.mubr.bf16.gmra.mxu0 %v998
  %v1085 = vpop.f32.mrf.mxu0
  %v1086 = vadd.f32 0.0, %v1085
  %v1087 = vpop.f32.mrf.mxu0
  %v1088 = vpop.f32.mrf.mxu0
  %v1089 = vadd.f32 0.0, %v1088
  %v1090 = vpop.f32.mrf.mxu0
  %1091 = vmatprep.mubr.bf16.mxu0 0
  %1092 = vmatmul.mubr.bf16.gmra.mxu0 %v1001
  %v1093 = vpop.f32.mrf.mxu0
  %v1094 = vadd.f32 0.0, %v1093
  %v1095 = vpop.f32.mrf.mxu0
  %v1096 = vpop.f32.mrf.mxu0
  %v1097 = vadd.f32 0.0, %v1096
  %v1098 = vpop.f32.mrf.mxu0
  %1099 = vdwg.mxu0
  %v1100 = vadd.f32 %v874, %v1038
  %v1101 = vadd.f32 %v875, %v1041
  %v1102 = vadd.f32 %v876, %v1046
  %v1103 = vadd.f32 %v877, %v1049
  %v1104 = vadd.f32 %v878, %v1054
  %v1105 = vadd.f32 %v879, %v1057
  %v1106 = vadd.f32 %v880, %v1062
  %v1107 = vadd.f32 %v881, %v1065
  %v1108 = vadd.f32 %v882, %v1070
  %v1109 = vadd.f32 %v883, %v1073
  %v1110 = vadd.f32 %v884, %v1078
  %v1111 = vadd.f32 %v885, %v1081
  %v1112 = vadd.f32 %v886, %v1086
  %v1113 = vadd.f32 %v887, %v1089
  %v1114 = vadd.f32 %v888, %v1094
  %v1115 = vadd.f32 %v889, %v1097
  %s1116 = scalar_lea.vmem %s0, 432
  %v1117 = vld [vmem:[%s1116] sm:$0xf]
  %v1118 = vld [vmem:[%s1116 + $0x8] sm:$0xf]
  %v1119 = vld [vmem:[%s1116 + $0x10] sm:$0xf]
  %v1120 = vld [vmem:[%s1116 + $0x18] sm:$0xf]
  %v1121 = vld [vmem:[%s1116 + $0x20] sm:$0xf]
  %v1122 = vld [vmem:[%s1116 + $0x28] sm:$0xf]
  %v1123 = vld [vmem:[%s1116 + $0x30] sm:$0xf]
  %v1124 = vld [vmem:[%s1116 + $0x38] sm:$0xf]
  %v1125 = vld [vmem:[%s1116 + $0x48] sm:$0xf]
  %v1126 = vld [vmem:[%s1116 + $0x50] sm:$0xf]
  %v1127 = vld [vmem:[%s1116 + $0x58] sm:$0xf]
  %v1128 = vld [vmem:[%s1116 + $0x60] sm:$0xf]
  %v1129 = vld [vmem:[%s1116 + $0x68] sm:$0xf]
  %v1130 = vld [vmem:[%s1116 + $0x70] sm:$0xf]
  %v1131 = vld [vmem:[%s1116 + $0x78] sm:$0xf]
  %v1132 = vld [vmem:[%s1116 + $0x80] sm:$0xf]
  %v1133 = vld [vmem:[%s1 + $0x80] sm:$0xf]
  %v1134 = vld [vmem:[%s1 + $0x84] sm:$0xf]
  %v1135 = vld [vmem:[%s1 + $0x88] sm:$0xf]
  %v1136 = vld [vmem:[%s1 + $0x8c] sm:$0xf]
  %v1137 = vld [vmem:[%s1 + $0x90] sm:$0xf]
  %v1138 = vld [vmem:[%s1 + $0x94] sm:$0xf]
  %v1139 = vld [vmem:[%s1 + $0x98] sm:$0xf]
  %v1140 = vld [vmem:[%s1 + $0x9c] sm:$0xf]
  %v1157 = vunpack.c.l.b16 %v1117
  %v1158 = vunpack.c.l.b16 %v1118
  %v1159 = vunpack.c.l.b16 %v1119
  %v1160 = vunpack.c.l.b16 %v1120
  %v1161 = vunpack.c.l.b16 %v1121
  %v1162 = vunpack.c.l.b16 %v1122
  %v1163 = vunpack.c.l.b16 %v1123
  %v1164 = vunpack.c.l.b16 %v1124
  %v1165 = vunpack.c.l.b16 %v1125
  %v1166 = vunpack.c.l.b16 %v1126
  %v1167 = vunpack.c.l.b16 %v1127
  %v1168 = vunpack.c.l.b16 %v1128
  %v1169 = vunpack.c.l.b16 %v1129
  %v1170 = vunpack.c.l.b16 %v1130
  %v1171 = vunpack.c.l.b16 %v1131
  %v1172 = vunpack.c.l.b16 %v1132
  %v1173 = vpack.c.b16 %v1158, %v1157
  %v1174 = vpack.c.b16 %v1160, %v1159
  %v1175 = vpack.c.b16 %v1162, %v1161
  %v1176 = vpack.c.b16 %v1164, %v1163
  %v1177 = vpack.c.b16 %v1166, %v1165
  %v1178 = vpack.c.b16 %v1168, %v1167
  %v1179 = vpack.c.b16 %v1170, %v1169
  %v1180 = vpack.c.b16 %v1172, %v1171
  %v1189 = vunpack.c.l.b16 %v1133
  %v1190 = vunpack.c.l.b16 %v1134
  %v1191 = vunpack.c.l.b16 %v1135
  %v1192 = vunpack.c.l.b16 %v1136
  %v1193 = vunpack.c.l.b16 %v1137
  %v1194 = vunpack.c.l.b16 %v1138
  %v1195 = vunpack.c.l.b16 %v1139
  %v1196 = vunpack.c.l.b16 %v1140
  %v1197 = vpack.c.b16 %v1190, %v1189
  %v1198 = vpack.c.b16 %v1192, %v1191
  %v1199 = vpack.c.b16 %v1194, %v1193
  %v1200 = vpack.c.b16 %v1196, %v1195
  %v1206 = vsel %vm131, %v1173, 0
  %v1209 = vsel %vm131, %v1174, 0
  %v1212 = vsel %vm131, %v1175, 0
  %v1215 = vsel %vm131, %v1176, 0
  %v1218 = vsel %vm131, %v1177, 0
  %v1221 = vsel %vm131, %v1178, 0
  %v1224 = vsel %vm131, %v1179, 0
  %v1227 = vsel %vm131, %v1180, 0
  %1229 = vmatprep.subr.bf16.mxu0 0
  %1230 = vmatpush1.bf16.msra.mxu0 0
  %1231 = vmatprep.subr.bf16.mxu0 0
  %1232 = vmatpush1.bf16.msra.mxu0 0
  %1233 = vmatprep.subr.bf16.mxu0 0
  %1234 = vmatpush1.bf16.msra.mxu0 0
  %1235 = vmatprep.subr.bf16.mxu0 0
  %1236 = vmatpush1.bf16.msra.mxu0 0
  %1237 = vmatprep.subr.bf16.mxu0 0
  %1238 = vmatpush1.bf16.msra.mxu0 %v1200
  %1239 = vmatprep.subr.bf16.mxu0 0
  %1240 = vmatpush1.bf16.msra.mxu0 %v1199
  %1241 = vmatprep.subr.bf16.mxu0 0
  %1242 = vmatpush1.bf16.msra.mxu0 %v1198
  %1243 = vmatprep.subr.bf16.mxu0 0
  %1244 = vmatpush1.bf16.msra.mxu0 %v1197
  %1245 = vmatprep.subr.bf16.mxu0 0
  %1246 = vmatpush2.bf16.msra.mxu0 0
  %1247 = vmatprep.subr.bf16.mxu0 0
  %1248 = vmatpush2.bf16.msra.mxu0 0
  %1249 = vmatprep.subr.bf16.mxu0 0
  %1250 = vmatpush2.bf16.msra.mxu0 0
  %1251 = vmatprep.subr.bf16.mxu0 0
  %1252 = vmatpush2.bf16.msra.mxu0 0
  %1253 = vmatprep.subr.bf16.mxu0 0
  %1254 = vmatpush2.bf16.msra.mxu0 0
  %1255 = vmatprep.subr.bf16.mxu0 0
  %1256 = vmatpush2.bf16.msra.mxu0 0
  %1257 = vmatprep.subr.bf16.mxu0 0
  %1258 = vmatpush2.bf16.msra.mxu0 0
  %1259 = vmatprep.subr.bf16.mxu0 0
  %1260 = vmatpush2.bf16.msra.mxu0 0
  %1261 = vmatprep.mubr.bf16.mxu0 0
  %1262 = vmatmul.mubr.bf16.gmra.mxu0 %v1206
  %v1263 = vpop.f32.mrf.mxu0
  %v1264 = vadd.f32 0.0, %v1263
  %v1265 = vpop.f32.mrf.mxu0
  %v1266 = vpop.f32.mrf.mxu0
  %v1267 = vadd.f32 0.0, %v1266
  %v1268 = vpop.f32.mrf.mxu0
  %1269 = vmatprep.mubr.bf16.mxu0 0
  %1270 = vmatmul.mubr.bf16.gmra.mxu0 %v1209
  %v1271 = vpop.f32.mrf.mxu0
  %v1272 = vadd.f32 0.0, %v1271
  %v1273 = vpop.f32.mrf.mxu0
  %v1274 = vpop.f32.mrf.mxu0
  %v1275 = vadd.f32 0.0, %v1274
  %v1276 = vpop.f32.mrf.mxu0
  %1277 = vmatprep.mubr.bf16.mxu0 0
  %1278 = vmatmul.mubr.bf16.gmra.mxu0 %v1212
  %v1279 = vpop.f32.mrf.mxu0
  %v1280 = vadd.f32 0.0, %v1279
  %v1281 = vpop.f32.mrf.mxu0
  %v1282 = vpop.f32.mrf.mxu0
  %v1283 = vadd.f32 0.0, %v1282
  %v1284 = vpop.f32.mrf.mxu0
  %1285 = vmatprep.mubr.bf16.mxu0 0
  %1286 = vmatmul.mubr.bf16.gmra.mxu0 %v1215
  %v1287 = vpop.f32.mrf.mxu0
  %v1288 = vadd.f32 0.0, %v1287
  %v1289 = vpop.f32.mrf.mxu0
  %v1290 = vpop.f32.mrf.mxu0
  %v1291 = vadd.f32 0.0, %v1290
  %v1292 = vpop.f32.mrf.mxu0
  %1293 = vmatprep.mubr.bf16.mxu0 0
  %1294 = vmatmul.mubr.bf16.gmra.mxu0 %v1218
  %v1295 = vpop.f32.mrf.mxu0
  %v1296 = vadd.f32 0.0, %v1295
  %v1297 = vpop.f32.mrf.mxu0
  %v1298 = vpop.f32.mrf.mxu0
  %v1299 = vadd.f32 0.0, %v1298
  %v1300 = vpop.f32.mrf.mxu0
  %1301 = vmatprep.mubr.bf16.mxu0 0
  %1302 = vmatmul.mubr.bf16.gmra.mxu0 %v1221
  %v1303 = vpop.f32.mrf.mxu0
  %v1304 = vadd.f32 0.0, %v1303
  %v1305 = vpop.f32.mrf.mxu0
  %v1306 = vpop.f32.mrf.mxu0
  %v1307 = vadd.f32 0.0, %v1306
  %v1308 = vpop.f32.mrf.mxu0
  %1309 = vmatprep.mubr.bf16.mxu0 0
  %1310 = vmatmul.mubr.bf16.gmra.mxu0 %v1224
  %v1311 = vpop.f32.mrf.mxu0
  %v1312 = vadd.f32 0.0, %v1311
  %v1313 = vpop.f32.mrf.mxu0
  %v1314 = vpop.f32.mrf.mxu0
  %v1315 = vadd.f32 0.0, %v1314
  %v1316 = vpop.f32.mrf.mxu0
  %1317 = vmatprep.mubr.bf16.mxu0 0
  %1318 = vmatmul.mubr.bf16.gmra.mxu0 %v1227
  %v1319 = vpop.f32.mrf.mxu0
  %v1320 = vadd.f32 0.0, %v1319
  %v1321 = vpop.f32.mrf.mxu0
  %v1322 = vpop.f32.mrf.mxu0
  %v1323 = vadd.f32 0.0, %v1322
  %v1324 = vpop.f32.mrf.mxu0
  %1325 = vdwg.mxu0
  %v1326 = vadd.f32 %v1100, %v1264
  %v1327 = vadd.f32 %v1101, %v1267
  %v1328 = vadd.f32 %v1102, %v1272
  %v1329 = vadd.f32 %v1103, %v1275
  %v1330 = vadd.f32 %v1104, %v1280
  %v1331 = vadd.f32 %v1105, %v1283
  %v1332 = vadd.f32 %v1106, %v1288
  %v1333 = vadd.f32 %v1107, %v1291
  %v1334 = vadd.f32 %v1108, %v1296
  %v1335 = vadd.f32 %v1109, %v1299
  %v1336 = vadd.f32 %v1110, %v1304
  %v1337 = vadd.f32 %v1111, %v1307
  %v1338 = vadd.f32 %v1112, %v1312
  %v1339 = vadd.f32 %v1113, %v1315
  %v1340 = vadd.f32 %v1114, %v1320
  %v1341 = vadd.f32 %v1115, %v1323
  %v1342 = vld [vmem:[%s890] sm:$0xf]
  %v1343 = vld [vmem:[%s890 + $0x4] sm:$0x1]
  %v1344 = vld [vmem:[%s890 + $0x8] sm:$0xf]
  %v1345 = vld [vmem:[%s890 + $0xc] sm:$0x1]
  %v1346 = vld [vmem:[%s890 + $0x10] sm:$0xf]
  %v1347 = vld [vmem:[%s890 + $0x14] sm:$0x1]
  %v1348 = vld [vmem:[%s890 + $0x18] sm:$0xf]
  %v1349 = vld [vmem:[%s890 + $0x1c] sm:$0x1]
  %v1350 = vld [vmem:[%s890 + $0x20] sm:$0xf]
  %v1351 = vld [vmem:[%s890 + $0x24] sm:$0x1]
  %v1352 = vld [vmem:[%s890 + $0x28] sm:$0xf]
  %v1353 = vld [vmem:[%s890 + $0x2c] sm:$0x1]
  %v1354 = vld [vmem:[%s890 + $0x30] sm:$0xf]
  %v1355 = vld [vmem:[%s890 + $0x34] sm:$0x1]
  %v1356 = vld [vmem:[%s890 + $0x38] sm:$0xf]
  %v1357 = vld [vmem:[%s890 + $0x3c] sm:$0x1]
  %v1358 = vld [vmem:[%s890 + $0x48] sm:$0xf]
  %v1359 = vld [vmem:[%s890 + $0x4c] sm:$0x1]
  %v1360 = vld [vmem:[%s890 + $0x50] sm:$0xf]
  %v1361 = vld [vmem:[%s890 + $0x54] sm:$0x1]
  %v1362 = vld [vmem:[%s890 + $0x58] sm:$0xf]
  %v1363 = vld [vmem:[%s890 + $0x5c] sm:$0x1]
  %v1364 = vld [vmem:[%s890 + $0x60] sm:$0xf]
  %v1365 = vld [vmem:[%s890 + $0x64] sm:$0x1]
  %v1366 = vld [vmem:[%s890 + $0x68] sm:$0xf]
  %v1367 = vld [vmem:[%s890 + $0x6c] sm:$0x1]
  %v1368 = vld [vmem:[%s890 + $0x70] sm:$0xf]
  %v1369 = vld [vmem:[%s890 + $0x74] sm:$0x1]
  %v1370 = vld [vmem:[%s890 + $0x78] sm:$0xf]
  %v1371 = vld [vmem:[%s890 + $0x7c] sm:$0x1]
  %v1372 = vld [vmem:[%s890 + $0x80] sm:$0xf]
  %v1373 = vld [vmem:[%s890 + $0x84] sm:$0x1]
  %v1375 = vshrl.u32 %v1342, 16
  %v1377 = vrot.slane %v1375, 4
  %v1378 = vshll.u32 %v1342, 16
  %v1380 = vrot.slane %v1378, 5
  %v1381 = vor.u32 %v1377, %v1380
  %v1382 = vrot.slane %v1381, 4
  %v1384 = vshll.u32 %v1343, 16
  %v1386 = vrot.slane %v1384, 5
  %v1387 = vsel %vm472, %v1382, %v1386
  %v1389 = vshrl.u32 %v1344, 16
  %v1391 = vrot.slane %v1389, 4
  %v1392 = vshll.u32 %v1344, 16
  %v1394 = vrot.slane %v1392, 5
  %v1395 = vor.u32 %v1391, %v1394
  %v1396 = vrot.slane %v1395, 4
  %v1398 = vshll.u32 %v1345, 16
  %v1400 = vrot.slane %v1398, 5
  %v1401 = vsel %vm472, %v1396, %v1400
  %v1403 = vshrl.u32 %v1346, 16
  %v1405 = vrot.slane %v1403, 4
  %v1406 = vshll.u32 %v1346, 16
  %v1408 = vrot.slane %v1406, 5
  %v1409 = vor.u32 %v1405, %v1408
  %v1410 = vrot.slane %v1409, 4
  %v1412 = vshll.u32 %v1347, 16
  %v1414 = vrot.slane %v1412, 5
  %v1415 = vsel %vm472, %v1410, %v1414
  %v1417 = vshrl.u32 %v1348, 16
  %v1419 = vrot.slane %v1417, 4
  %v1420 = vshll.u32 %v1348, 16
  %v1422 = vrot.slane %v1420, 5
  %v1423 = vor.u32 %v1419, %v1422
  %v1424 = vrot.slane %v1423, 4
  %v1426 = vshll.u32 %v1349, 16
  %v1428 = vrot.slane %v1426, 5
  %v1429 = vsel %vm472, %v1424, %v1428
  %v1431 = vshrl.u32 %v1350, 16
  %v1433 = vrot.slane %v1431, 4
  %v1434 = vshll.u32 %v1350, 16
  %v1436 = vrot.slane %v1434, 5
  %v1437 = vor.u32 %v1433, %v1436
  %v1438 = vrot.slane %v1437, 4
  %v1440 = vshll.u32 %v1351, 16
  %v1442 = vrot.slane %v1440, 5
  %v1443 = vsel %vm472, %v1438, %v1442
  %v1445 = vshrl.u32 %v1352, 16
  %v1447 = vrot.slane %v1445, 4
  %v1448 = vshll.u32 %v1352, 16
  %v1450 = vrot.slane %v1448, 5
  %v1451 = vor.u32 %v1447, %v1450
  %v1452 = vrot.slane %v1451, 4
  %v1454 = vshll.u32 %v1353, 16
  %v1456 = vrot.slane %v1454, 5
  %v1457 = vsel %vm472, %v1452, %v1456
  %v1459 = vshrl.u32 %v1354, 16
  %v1461 = vrot.slane %v1459, 4
  %v1462 = vshll.u32 %v1354, 16
  %v1464 = vrot.slane %v1462, 5
  %v1465 = vor.u32 %v1461, %v1464
  %v1466 = vrot.slane %v1465, 4
  %v1468 = vshll.u32 %v1355, 16
  %v1470 = vrot.slane %v1468, 5
  %v1471 = vsel %vm472, %v1466, %v1470
  %v1473 = vshrl.u32 %v1356, 16
  %v1475 = vrot.slane %v1473, 4
  %v1476 = vshll.u32 %v1356, 16
  %v1478 = vrot.slane %v1476, 5
  %v1479 = vor.u32 %v1475, %v1478
  %v1480 = vrot.slane %v1479, 4
  %v1482 = vshll.u32 %v1357, 16
  %v1484 = vrot.slane %v1482, 5
  %v1485 = vsel %vm472, %v1480, %v1484
  %v1487 = vshrl.u32 %v1358, 16
  %v1489 = vrot.slane %v1487, 4
  %v1490 = vshll.u32 %v1358, 16
  %v1492 = vrot.slane %v1490, 5
  %v1493 = vor.u32 %v1489, %v1492
  %v1494 = vrot.slane %v1493, 4
  %v1496 = vshll.u32 %v1359, 16
  %v1498 = vrot.slane %v1496, 5
  %v1499 = vsel %vm472, %v1494, %v1498
  %v1501 = vshrl.u32 %v1360, 16
  %v1503 = vrot.slane %v1501, 4
  %v1504 = vshll.u32 %v1360, 16
  %v1506 = vrot.slane %v1504, 5
  %v1507 = vor.u32 %v1503, %v1506
  %v1508 = vrot.slane %v1507, 4
  %v1510 = vshll.u32 %v1361, 16
  %v1512 = vrot.slane %v1510, 5
  %v1513 = vsel %vm472, %v1508, %v1512
  %v1515 = vshrl.u32 %v1362, 16
  %v1517 = vrot.slane %v1515, 4
  %v1518 = vshll.u32 %v1362, 16
  %v1520 = vrot.slane %v1518, 5
  %v1521 = vor.u32 %v1517, %v1520
  %v1522 = vrot.slane %v1521, 4
  %v1524 = vshll.u32 %v1363, 16
  %v1526 = vrot.slane %v1524, 5
  %v1527 = vsel %vm472, %v1522, %v1526
  %v1529 = vshrl.u32 %v1364, 16
  %v1531 = vrot.slane %v1529, 4
  %v1532 = vshll.u32 %v1364, 16
  %v1534 = vrot.slane %v1532, 5
  %v1535 = vor.u32 %v1531, %v1534
  %v1536 = vrot.slane %v1535, 4
  %v1538 = vshll.u32 %v1365, 16
  %v1540 = vrot.slane %v1538, 5
  %v1541 = vsel %vm472, %v1536, %v1540
  %v1543 = vshrl.u32 %v1366, 16
  %v1545 = vrot.slane %v1543, 4
  %v1546 = vshll.u32 %v1366, 16
  %v1548 = vrot.slane %v1546, 5
  %v1549 = vor.u32 %v1545, %v1548
  %v1550 = vrot.slane %v1549, 4
  %v1552 = vshll.u32 %v1367, 16
  %v1554 = vrot.slane %v1552, 5
  %v1555 = vsel %vm472, %v1550, %v1554
  %v1557 = vshrl.u32 %v1368, 16
  %v1559 = vrot.slane %v1557, 4
  %v1560 = vshll.u32 %v1368, 16
  %v1562 = vrot.slane %v1560, 5
  %v1563 = vor.u32 %v1559, %v1562
  %v1564 = vrot.slane %v1563, 4
  %v1566 = vshll.u32 %v1369, 16
  %v1568 = vrot.slane %v1566, 5
  %v1569 = vsel %vm472, %v1564, %v1568
  %v1571 = vshrl.u32 %v1370, 16
  %v1573 = vrot.slane %v1571, 4
  %v1574 = vshll.u32 %v1370, 16
  %v1576 = vrot.slane %v1574, 5
  %v1577 = vor.u32 %v1573, %v1576
  %v1578 = vrot.slane %v1577, 4
  %v1580 = vshll.u32 %v1371, 16
  %v1582 = vrot.slane %v1580, 5
  %v1583 = vsel %vm472, %v1578, %v1582
  %v1585 = vshrl.u32 %v1372, 16
  %v1587 = vrot.slane %v1585, 4
  %v1588 = vshll.u32 %v1372, 16
  %v1590 = vrot.slane %v1588, 5
  %v1591 = vor.u32 %v1587, %v1590
  %v1592 = vrot.slane %v1591, 4
  %v1594 = vshll.u32 %v1373, 16
  %v1596 = vrot.slane %v1594, 5
  %v1597 = vsel %vm472, %v1592, %v1596
  %v1598 = vld [vmem:[%s1 + $0xa0] sm:$0xf]
  %v1599 = vld [vmem:[%s1 + $0xa4] sm:$0xf]
  %v1600 = vld [vmem:[%s1 + $0xa8] sm:$0xf]
  %v1601 = vld [vmem:[%s1 + $0xac] sm:$0xf]
  %v1602 = vld [vmem:[%s1 + $0xb0] sm:$0xf]
  %v1603 = vld [vmem:[%s1 + $0xb4] sm:$0xf]
  %v1604 = vld [vmem:[%s1 + $0xb8] sm:$0xf]
  %v1605 = vld [vmem:[%s1 + $0xbc] sm:$0xf]
  %v1606 = vunpack.c.l.b16 %v1387
  %v1607 = vunpack.c.l.b16 %v1401
  %v1608 = vunpack.c.l.b16 %v1415
  %v1609 = vunpack.c.l.b16 %v1429
  %v1610 = vunpack.c.l.b16 %v1443
  %v1611 = vunpack.c.l.b16 %v1457
  %v1612 = vunpack.c.l.b16 %v1471
  %v1613 = vunpack.c.l.b16 %v1485
  %v1614 = vunpack.c.l.b16 %v1499
  %v1615 = vunpack.c.l.b16 %v1513
  %v1616 = vunpack.c.l.b16 %v1527
  %v1617 = vunpack.c.l.b16 %v1541
  %v1618 = vunpack.c.l.b16 %v1555
  %v1619 = vunpack.c.l.b16 %v1569
  %v1620 = vunpack.c.l.b16 %v1583
  %v1621 = vunpack.c.l.b16 %v1597
  %v1622 = vpack.c.b16 %v1607, %v1606
  %v1623 = vpack.c.b16 %v1609, %v1608
  %v1624 = vpack.c.b16 %v1611, %v1610
  %v1625 = vpack.c.b16 %v1613, %v1612
  %v1626 = vpack.c.b16 %v1615, %v1614
  %v1627 = vpack.c.b16 %v1617, %v1616
  %v1628 = vpack.c.b16 %v1619, %v1618
  %v1629 = vpack.c.b16 %v1621, %v1620
  %v1638 = vunpack.c.l.b16 %v1598
  %v1639 = vunpack.c.l.b16 %v1599
  %v1640 = vunpack.c.l.b16 %v1600
  %v1641 = vunpack.c.l.b16 %v1601
  %v1642 = vunpack.c.l.b16 %v1602
  %v1643 = vunpack.c.l.b16 %v1603
  %v1644 = vunpack.c.l.b16 %v1604
  %v1645 = vunpack.c.l.b16 %v1605
  %v1646 = vpack.c.b16 %v1639, %v1638
  %v1647 = vpack.c.b16 %v1641, %v1640
  %v1648 = vpack.c.b16 %v1643, %v1642
  %v1649 = vpack.c.b16 %v1645, %v1644
  %v1655 = vsel %vm131, %v1622, 0
  %v1658 = vsel %vm131, %v1623, 0
  %v1661 = vsel %vm131, %v1624, 0
  %v1664 = vsel %vm131, %v1625, 0
  %v1667 = vsel %vm131, %v1626, 0
  %v1670 = vsel %vm131, %v1627, 0
  %v1673 = vsel %vm131, %v1628, 0
  %v1676 = vsel %vm131, %v1629, 0
  %1678 = vmatprep.subr.bf16.mxu0 0
  %1679 = vmatpush1.bf16.msra.mxu0 0
  %1680 = vmatprep.subr.bf16.mxu0 0
  %1681 = vmatpush1.bf16.msra.mxu0 0
  %1682 = vmatprep.subr.bf16.mxu0 0
  %1683 = vmatpush1.bf16.msra.mxu0 0
  %1684 = vmatprep.subr.bf16.mxu0 0
  %1685 = vmatpush1.bf16.msra.mxu0 0
  %1686 = vmatprep.subr.bf16.mxu0 0
  %1687 = vmatpush1.bf16.msra.mxu0 %v1649
  %1688 = vmatprep.subr.bf16.mxu0 0
  %1689 = vmatpush1.bf16.msra.mxu0 %v1648
  %1690 = vmatprep.subr.bf16.mxu0 0
  %1691 = vmatpush1.bf16.msra.mxu0 %v1647
  %1692 = vmatprep.subr.bf16.mxu0 0
  %1693 = vmatpush1.bf16.msra.mxu0 %v1646
  %1694 = vmatprep.subr.bf16.mxu0 0
  %1695 = vmatpush2.bf16.msra.mxu0 0
  %1696 = vmatprep.subr.bf16.mxu0 0
  %1697 = vmatpush2.bf16.msra.mxu0 0
  %1698 = vmatprep.subr.bf16.mxu0 0
  %1699 = vmatpush2.bf16.msra.mxu0 0
  %1700 = vmatprep.subr.bf16.mxu0 0
  %1701 = vmatpush2.bf16.msra.mxu0 0
  %1702 = vmatprep.subr.bf16.mxu0 0
  %1703 = vmatpush2.bf16.msra.mxu0 0
  %1704 = vmatprep.subr.bf16.mxu0 0
  %1705 = vmatpush2.bf16.msra.mxu0 0
  %1706 = vmatprep.subr.bf16.mxu0 0
  %1707 = vmatpush2.bf16.msra.mxu0 0
  %1708 = vmatprep.subr.bf16.mxu0 0
  %1709 = vmatpush2.bf16.msra.mxu0 0
  %1710 = vmatprep.mubr.bf16.mxu0 0
  %1711 = vmatmul.mubr.bf16.gmra.mxu0 %v1655
  %v1712 = vpop.f32.mrf.mxu0
  %v1713 = vadd.f32 0.0, %v1712
  %v1714 = vpop.f32.mrf.mxu0
  %v1715 = vpop.f32.mrf.mxu0
  %v1716 = vadd.f32 0.0, %v1715
  %v1717 = vpop.f32.mrf.mxu0
  %1718 = vmatprep.mubr.bf16.mxu0 0
  %1719 = vmatmul.mubr.bf16.gmra.mxu0 %v1658
  %v1720 = vpop.f32.mrf.mxu0
  %v1721 = vadd.f32 0.0, %v1720
  %v1722 = vpop.f32.mrf.mxu0
  %v1723 = vpop.f32.mrf.mxu0
  %v1724 = vadd.f32 0.0, %v1723
  %v1725 = vpop.f32.mrf.mxu0
  %1726 = vmatprep.mubr.bf16.mxu0 0
  %1727 = vmatmul.mubr.bf16.gmra.mxu0 %v1661
  %v1728 = vpop.f32.mrf.mxu0
  %v1729 = vadd.f32 0.0, %v1728
  %v1730 = vpop.f32.mrf.mxu0
  %v1731 = vpop.f32.mrf.mxu0
  %v1732 = vadd.f32 0.0, %v1731
  %v1733 = vpop.f32.mrf.mxu0
  %1734 = vmatprep.mubr.bf16.mxu0 0
  %1735 = vmatmul.mubr.bf16.gmra.mxu0 %v1664
  %v1736 = vpop.f32.mrf.mxu0
  %v1737 = vadd.f32 0.0, %v1736
  %v1738 = vpop.f32.mrf.mxu0
  %v1739 = vpop.f32.mrf.mxu0
  %v1740 = vadd.f32 0.0, %v1739
  %v1741 = vpop.f32.mrf.mxu0
  %1742 = vmatprep.mubr.bf16.mxu0 0
  %1743 = vmatmul.mubr.bf16.gmra.mxu0 %v1667
  %v1744 = vpop.f32.mrf.mxu0
  %v1745 = vadd.f32 0.0, %v1744
  %v1746 = vpop.f32.mrf.mxu0
  %v1747 = vpop.f32.mrf.mxu0
  %v1748 = vadd.f32 0.0, %v1747
  %v1749 = vpop.f32.mrf.mxu0
  %1750 = vmatprep.mubr.bf16.mxu0 0
  %1751 = vmatmul.mubr.bf16.gmra.mxu0 %v1670
  %v1752 = vpop.f32.mrf.mxu0
  %v1753 = vadd.f32 0.0, %v1752
  %v1754 = vpop.f32.mrf.mxu0
  %v1755 = vpop.f32.mrf.mxu0
  %v1756 = vadd.f32 0.0, %v1755
  %v1757 = vpop.f32.mrf.mxu0
  %1758 = vmatprep.mubr.bf16.mxu0 0
  %1759 = vmatmul.mubr.bf16.gmra.mxu0 %v1673
  %v1760 = vpop.f32.mrf.mxu0
  %v1761 = vadd.f32 0.0, %v1760
  %v1762 = vpop.f32.mrf.mxu0
  %v1763 = vpop.f32.mrf.mxu0
  %v1764 = vadd.f32 0.0, %v1763
  %v1765 = vpop.f32.mrf.mxu0
  %1766 = vmatprep.mubr.bf16.mxu0 0
  %1767 = vmatmul.mubr.bf16.gmra.mxu0 %v1676
  %v1768 = vpop.f32.mrf.mxu0
  %v1769 = vadd.f32 0.0, %v1768
  %v1770 = vpop.f32.mrf.mxu0
  %v1771 = vpop.f32.mrf.mxu0
  %v1772 = vadd.f32 0.0, %v1771
  %v1773 = vpop.f32.mrf.mxu0
  %1774 = vdwg.mxu0
  %v1775 = vadd.f32 %v1326, %v1713
  %v1776 = vadd.f32 %v1327, %v1716
  %v1777 = vadd.f32 %v1328, %v1721
  %v1778 = vadd.f32 %v1329, %v1724
  %v1779 = vadd.f32 %v1330, %v1729
  %v1780 = vadd.f32 %v1331, %v1732
  %v1781 = vadd.f32 %v1332, %v1737
  %v1782 = vadd.f32 %v1333, %v1740
  %v1783 = vadd.f32 %v1334, %v1745
  %v1784 = vadd.f32 %v1335, %v1748
  %v1785 = vadd.f32 %v1336, %v1753
  %v1786 = vadd.f32 %v1337, %v1756
  %v1787 = vadd.f32 %v1338, %v1761
  %v1788 = vadd.f32 %v1339, %v1764
  %v1789 = vadd.f32 %v1340, %v1769
  %v1790 = vadd.f32 %v1341, %v1772
  %s1791 = scalar_lea.vmem %s0, 8
  %v1792 = vld [vmem:[%s1791] sm:$0xf]
  %v1793 = vld [vmem:[%s1791 + $0x8] sm:$0xf]
  %v1794 = vld [vmem:[%s1791 + $0x10] sm:$0xf]
  %v1795 = vld [vmem:[%s1791 + $0x18] sm:$0xf]
  %v1796 = vld [vmem:[%s1791 + $0x20] sm:$0xf]
  %v1797 = vld [vmem:[%s1791 + $0x28] sm:$0xf]
  %v1798 = vld [vmem:[%s1791 + $0x30] sm:$0xf]
  %v1799 = vld [vmem:[%s1791 + $0x38] sm:$0xf]
  %v1800 = vld [vmem:[%s1791 + $0x48] sm:$0xf]
  %v1801 = vld [vmem:[%s1791 + $0x50] sm:$0xf]
  %v1802 = vld [vmem:[%s1791 + $0x58] sm:$0xf]
  %v1803 = vld [vmem:[%s1791 + $0x60] sm:$0xf]
  %v1804 = vld [vmem:[%s1791 + $0x68] sm:$0xf]
  %v1805 = vld [vmem:[%s1791 + $0x70] sm:$0xf]
  %v1806 = vld [vmem:[%s1791 + $0x78] sm:$0xf]
  %v1807 = vld [vmem:[%s1791 + $0x80] sm:$0xf]
  %v1808 = vld [vmem:[%s1 + $0xc0] sm:$0xf]
  %v1809 = vld [vmem:[%s1 + $0xc4] sm:$0xf]
  %v1810 = vld [vmem:[%s1 + $0xc8] sm:$0xf]
  %v1811 = vld [vmem:[%s1 + $0xcc] sm:$0xf]
  %v1812 = vld [vmem:[%s1 + $0xd0] sm:$0xf]
  %v1813 = vld [vmem:[%s1 + $0xd4] sm:$0xf]
  %v1814 = vld [vmem:[%s1 + $0xd8] sm:$0xf]
  %v1815 = vld [vmem:[%s1 + $0xdc] sm:$0xf]
  %v1832 = vunpack.c.l.b16 %v1792
  %v1833 = vunpack.c.l.b16 %v1793
  %v1834 = vunpack.c.l.b16 %v1794
  %v1835 = vunpack.c.l.b16 %v1795
  %v1836 = vunpack.c.l.b16 %v1796
  %v1837 = vunpack.c.l.b16 %v1797
  %v1838 = vunpack.c.l.b16 %v1798
  %v1839 = vunpack.c.l.b16 %v1799
  %v1840 = vunpack.c.l.b16 %v1800
  %v1841 = vunpack.c.l.b16 %v1801
  %v1842 = vunpack.c.l.b16 %v1802
  %v1843 = vunpack.c.l.b16 %v1803
  %v1844 = vunpack.c.l.b16 %v1804
  %v1845 = vunpack.c.l.b16 %v1805
  %v1846 = vunpack.c.l.b16 %v1806
  %v1847 = vunpack.c.l.b16 %v1807
  %v1848 = vpack.c.b16 %v1833, %v1832
  %v1849 = vpack.c.b16 %v1835, %v1834
  %v1850 = vpack.c.b16 %v1837, %v1836
  %v1851 = vpack.c.b16 %v1839, %v1838
  %v1852 = vpack.c.b16 %v1841, %v1840
  %v1853 = vpack.c.b16 %v1843, %v1842
  %v1854 = vpack.c.b16 %v1845, %v1844
  %v1855 = vpack.c.b16 %v1847, %v1846
  %v1864 = vunpack.c.l.b16 %v1808
  %v1865 = vunpack.c.l.b16 %v1809
  %v1866 = vunpack.c.l.b16 %v1810
  %v1867 = vunpack.c.l.b16 %v1811
  %v1868 = vunpack.c.l.b16 %v1812
  %v1869 = vunpack.c.l.b16 %v1813
  %v1870 = vunpack.c.l.b16 %v1814
  %v1871 = vunpack.c.l.b16 %v1815
  %v1872 = vpack.c.b16 %v1865, %v1864
  %v1873 = vpack.c.b16 %v1867, %v1866
  %v1874 = vpack.c.b16 %v1869, %v1868
  %v1875 = vpack.c.b16 %v1871, %v1870
  %v1881 = vsel %vm131, %v1848, 0
  %v1884 = vsel %vm131, %v1849, 0
  %v1887 = vsel %vm131, %v1850, 0
  %v1890 = vsel %vm131, %v1851, 0
  %v1893 = vsel %vm131, %v1852, 0
  %v1896 = vsel %vm131, %v1853, 0
  %v1899 = vsel %vm131, %v1854, 0
  %v1902 = vsel %vm131, %v1855, 0
  %1904 = vmatprep.subr.bf16.mxu0 0
  %1905 = vmatpush1.bf16.msra.mxu0 0
  %1906 = vmatprep.subr.bf16.mxu0 0
  %1907 = vmatpush1.bf16.msra.mxu0 0
  %1908 = vmatprep.subr.bf16.mxu0 0
  %1909 = vmatpush1.bf16.msra.mxu0 0
  %1910 = vmatprep.subr.bf16.mxu0 0
  %1911 = vmatpush1.bf16.msra.mxu0 0
  %1912 = vmatprep.subr.bf16.mxu0 0
  %1913 = vmatpush1.bf16.msra.mxu0 %v1875
  %1914 = vmatprep.subr.bf16.mxu0 0
  %1915 = vmatpush1.bf16.msra.mxu0 %v1874
  %1916 = vmatprep.subr.bf16.mxu0 0
  %1917 = vmatpush1.bf16.msra.mxu0 %v1873
  %1918 = vmatprep.subr.bf16.mxu0 0
  %1919 = vmatpush1.bf16.msra.mxu0 %v1872
  %1920 = vmatprep.subr.bf16.mxu0 0
  %1921 = vmatpush2.bf16.msra.mxu0 0
  %1922 = vmatprep.subr.bf16.mxu0 0
  %1923 = vmatpush2.bf16.msra.mxu0 0
  %1924 = vmatprep.subr.bf16.mxu0 0
  %1925 = vmatpush2.bf16.msra.mxu0 0
  %1926 = vmatprep.subr.bf16.mxu0 0
  %1927 = vmatpush2.bf16.msra.mxu0 0
  %1928 = vmatprep.subr.bf16.mxu0 0
  %1929 = vmatpush2.bf16.msra.mxu0 0
  %1930 = vmatprep.subr.bf16.mxu0 0
  %1931 = vmatpush2.bf16.msra.mxu0 0
  %1932 = vmatprep.subr.bf16.mxu0 0
  %1933 = vmatpush2.bf16.msra.mxu0 0
  %1934 = vmatprep.subr.bf16.mxu0 0
  %1935 = vmatpush2.bf16.msra.mxu0 0
  %1936 = vmatprep.mubr.bf16.mxu0 0
  %1937 = vmatmul.mubr.bf16.gmra.mxu0 %v1881
  %v1938 = vpop.f32.mrf.mxu0
  %v1939 = vadd.f32 0.0, %v1938
  %v1940 = vpop.f32.mrf.mxu0
  %v1941 = vpop.f32.mrf.mxu0
  %v1942 = vadd.f32 0.0, %v1941
  %v1943 = vpop.f32.mrf.mxu0
  %1944 = vmatprep.mubr.bf16.mxu0 0
  %1945 = vmatmul.mubr.bf16.gmra.mxu0 %v1884
  %v1946 = vpop.f32.mrf.mxu0
  %v1947 = vadd.f32 0.0, %v1946
  %v1948 = vpop.f32.mrf.mxu0
  %v1949 = vpop.f32.mrf.mxu0
  %v1950 = vadd.f32 0.0, %v1949
  %v1951 = vpop.f32.mrf.mxu0
  %1952 = vmatprep.mubr.bf16.mxu0 0
  %1953 = vmatmul.mubr.bf16.gmra.mxu0 %v1887
  %v1954 = vpop.f32.mrf.mxu0
  %v1955 = vadd.f32 0.0, %v1954
  %v1956 = vpop.f32.mrf.mxu0
  %v1957 = vpop.f32.mrf.mxu0
  %v1958 = vadd.f32 0.0, %v1957
  %v1959 = vpop.f32.mrf.mxu0
  %1960 = vmatprep.mubr.bf16.mxu0 0
  %1961 = vmatmul.mubr.bf16.gmra.mxu0 %v1890
  %v1962 = vpop.f32.mrf.mxu0
  %v1963 = vadd.f32 0.0, %v1962
  %v1964 = vpop.f32.mrf.mxu0
  %v1965 = vpop.f32.mrf.mxu0
  %v1966 = vadd.f32 0.0, %v1965
  %v1967 = vpop.f32.mrf.mxu0
  %1968 = vmatprep.mubr.bf16.mxu0 0
  %1969 = vmatmul.mubr.bf16.gmra.mxu0 %v1893
  %v1970 = vpop.f32.mrf.mxu0
  %v1971 = vadd.f32 0.0, %v1970
  %v1972 = vpop.f32.mrf.mxu0
  %v1973 = vpop.f32.mrf.mxu0
  %v1974 = vadd.f32 0.0, %v1973
  %v1975 = vpop.f32.mrf.mxu0
  %1976 = vmatprep.mubr.bf16.mxu0 0
  %1977 = vmatmul.mubr.bf16.gmra.mxu0 %v1896
  %v1978 = vpop.f32.mrf.mxu0
  %v1979 = vadd.f32 0.0, %v1978
  %v1980 = vpop.f32.mrf.mxu0
  %v1981 = vpop.f32.mrf.mxu0
  %v1982 = vadd.f32 0.0, %v1981
  %v1983 = vpop.f32.mrf.mxu0
  %1984 = vmatprep.mubr.bf16.mxu0 0
  %1985 = vmatmul.mubr.bf16.gmra.mxu0 %v1899
  %v1986 = vpop.f32.mrf.mxu0
  %v1987 = vadd.f32 0.0, %v1986
  %v1988 = vpop.f32.mrf.mxu0
  %v1989 = vpop.f32.mrf.mxu0
  %v1990 = vadd.f32 0.0, %v1989
  %v1991 = vpop.f32.mrf.mxu0
  %1992 = vmatprep.mubr.bf16.mxu0 0
  %1993 = vmatmul.mubr.bf16.gmra.mxu0 %v1902
  %v1994 = vpop.f32.mrf.mxu0
  %v1995 = vadd.f32 0.0, %v1994
  %v1996 = vpop.f32.mrf.mxu0
  %v1997 = vpop.f32.mrf.mxu0
  %v1998 = vadd.f32 0.0, %v1997
  %v1999 = vpop.f32.mrf.mxu0
  %2000 = vdwg.mxu0
  %v2001 = vadd.f32 %v1775, %v1939
  %v2002 = vadd.f32 %v1776, %v1942
  %v2003 = vadd.f32 %v1777, %v1947
  %v2004 = vadd.f32 %v1778, %v1950
  %v2005 = vadd.f32 %v1779, %v1955
  %v2006 = vadd.f32 %v1780, %v1958
  %v2007 = vadd.f32 %v1781, %v1963
  %v2008 = vadd.f32 %v1782, %v1966
  %v2009 = vadd.f32 %v1783, %v1971
  %v2010 = vadd.f32 %v1784, %v1974
  %v2011 = vadd.f32 %v1785, %v1979
  %v2012 = vadd.f32 %v1786, %v1982
  %v2013 = vadd.f32 %v1787, %v1987
  %v2014 = vadd.f32 %v1788, %v1990
  %v2015 = vadd.f32 %v1789, %v1995
  %v2016 = vadd.f32 %v1790, %v1998
  %s2017 = scalar_lea.vmem %s0, 152
  %v2018 = vld [vmem:[%s2017] sm:$0xf]
  %v2019 = vld [vmem:[%s2017 + $0x8] sm:$0xf]
  %v2020 = vld [vmem:[%s2017 + $0x10] sm:$0xf]
  %v2021 = vld [vmem:[%s2017 + $0x18] sm:$0xf]
  %v2022 = vld [vmem:[%s2017 + $0x20] sm:$0xf]
  %v2023 = vld [vmem:[%s2017 + $0x28] sm:$0xf]
  %v2024 = vld [vmem:[%s2017 + $0x30] sm:$0xf]
  %v2025 = vld [vmem:[%s2017 + $0x38] sm:$0xf]
  %v2026 = vld [vmem:[%s2017 + $0x48] sm:$0xf]
  %v2027 = vld [vmem:[%s2017 + $0x50] sm:$0xf]
  %v2028 = vld [vmem:[%s2017 + $0x58] sm:$0xf]
  %v2029 = vld [vmem:[%s2017 + $0x60] sm:$0xf]
  %v2030 = vld [vmem:[%s2017 + $0x68] sm:$0xf]
  %v2031 = vld [vmem:[%s2017 + $0x70] sm:$0xf]
  %v2032 = vld [vmem:[%s2017 + $0x78] sm:$0xf]
  %v2033 = vld [vmem:[%s2017 + $0x80] sm:$0xf]
  %v2034 = vld [vmem:[%s1 + $0xe0] sm:$0xf]
  %v2035 = vld [vmem:[%s1 + $0xe4] sm:$0xf]
  %v2036 = vld [vmem:[%s1 + $0xe8] sm:$0xf]
  %v2037 = vld [vmem:[%s1 + $0xec] sm:$0xf]
  %v2038 = vld [vmem:[%s1 + $0xf0] sm:$0xf]
  %v2039 = vld [vmem:[%s1 + $0xf4] sm:$0xf]
  %v2040 = vld [vmem:[%s1 + $0xf8] sm:$0xf]
  %v2041 = vld [vmem:[%s1 + $0xfc] sm:$0xf]
  %v2058 = vunpack.c.l.b16 %v2018
  %v2059 = vunpack.c.l.b16 %v2019
  %v2060 = vunpack.c.l.b16 %v2020
  %v2061 = vunpack.c.l.b16 %v2021
  %v2062 = vunpack.c.l.b16 %v2022
  %v2063 = vunpack.c.l.b16 %v2023
  %v2064 = vunpack.c.l.b16 %v2024
  %v2065 = vunpack.c.l.b16 %v2025
  %v2066 = vunpack.c.l.b16 %v2026
  %v2067 = vunpack.c.l.b16 %v2027
  %v2068 = vunpack.c.l.b16 %v2028
  %v2069 = vunpack.c.l.b16 %v2029
  %v2070 = vunpack.c.l.b16 %v2030
  %v2071 = vunpack.c.l.b16 %v2031
  %v2072 = vunpack.c.l.b16 %v2032
  %v2073 = vunpack.c.l.b16 %v2033
  %v2074 = vpack.c.b16 %v2059, %v2058
  %v2075 = vpack.c.b16 %v2061, %v2060
  %v2076 = vpack.c.b16 %v2063, %v2062
  %v2077 = vpack.c.b16 %v2065, %v2064
  %v2078 = vpack.c.b16 %v2067, %v2066
  %v2079 = vpack.c.b16 %v2069, %v2068
  %v2080 = vpack.c.b16 %v2071, %v2070
  %v2081 = vpack.c.b16 %v2073, %v2072
  %v2090 = vunpack.c.l.b16 %v2034
  %v2091 = vunpack.c.l.b16 %v2035
  %v2092 = vunpack.c.l.b16 %v2036
  %v2093 = vunpack.c.l.b16 %v2037
  %v2094 = vunpack.c.l.b16 %v2038
  %v2095 = vunpack.c.l.b16 %v2039
  %v2096 = vunpack.c.l.b16 %v2040
  %v2097 = vunpack.c.l.b16 %v2041
  %v2098 = vpack.c.b16 %v2091, %v2090
  %v2099 = vpack.c.b16 %v2093, %v2092
  %v2100 = vpack.c.b16 %v2095, %v2094
  %v2101 = vpack.c.b16 %v2097, %v2096
  %v2107 = vsel %vm131, %v2074, 0
  %v2110 = vsel %vm131, %v2075, 0
  %v2113 = vsel %vm131, %v2076, 0
  %v2116 = vsel %vm131, %v2077, 0
  %v2119 = vsel %vm131, %v2078, 0
  %v2122 = vsel %vm131, %v2079, 0
  %v2125 = vsel %vm131, %v2080, 0
  %v2128 = vsel %vm131, %v2081, 0
  %2130 = vmatprep.subr.bf16.mxu0 0
  %2131 = vmatpush1.bf16.msra.mxu0 0
  %2132 = vmatprep.subr.bf16.mxu0 0
  %2133 = vmatpush1.bf16.msra.mxu0 0
  %2134 = vmatprep.subr.bf16.mxu0 0
  %2135 = vmatpush1.bf16.msra.mxu0 0
  %2136 = vmatprep.subr.bf16.mxu0 0
  %2137 = vmatpush1.bf16.msra.mxu0 0
  %2138 = vmatprep.subr.bf16.mxu0 0
  %2139 = vmatpush1.bf16.msra.mxu0 %v2101
  %2140 = vmatprep.subr.bf16.mxu0 0
  %2141 = vmatpush1.bf16.msra.mxu0 %v2100
  %2142 = vmatprep.subr.bf16.mxu0 0
  %2143 = vmatpush1.bf16.msra.mxu0 %v2099
  %2144 = vmatprep.subr.bf16.mxu0 0
  %2145 = vmatpush1.bf16.msra.mxu0 %v2098
  %2146 = vmatprep.subr.bf16.mxu0 0
  %2147 = vmatpush2.bf16.msra.mxu0 0
  %2148 = vmatprep.subr.bf16.mxu0 0
  %2149 = vmatpush2.bf16.msra.mxu0 0
  %2150 = vmatprep.subr.bf16.mxu0 0
  %2151 = vmatpush2.bf16.msra.mxu0 0
  %2152 = vmatprep.subr.bf16.mxu0 0
  %2153 = vmatpush2.bf16.msra.mxu0 0
  %2154 = vmatprep.subr.bf16.mxu0 0
  %2155 = vmatpush2.bf16.msra.mxu0 0
  %2156 = vmatprep.subr.bf16.mxu0 0
  %2157 = vmatpush2.bf16.msra.mxu0 0
  %2158 = vmatprep.subr.bf16.mxu0 0
  %2159 = vmatpush2.bf16.msra.mxu0 0
  %2160 = vmatprep.subr.bf16.mxu0 0
  %2161 = vmatpush2.bf16.msra.mxu0 0
  %2162 = vmatprep.mubr.bf16.mxu0 0
  %2163 = vmatmul.mubr.bf16.gmra.mxu0 %v2107
  %v2164 = vpop.f32.mrf.mxu0
  %v2165 = vadd.f32 0.0, %v2164
  %v2166 = vpop.f32.mrf.mxu0
  %v2167 = vpop.f32.mrf.mxu0
  %v2168 = vadd.f32 0.0, %v2167
  %v2169 = vpop.f32.mrf.mxu0
  %2170 = vmatprep.mubr.bf16.mxu0 0
  %2171 = vmatmul.mubr.bf16.gmra.mxu0 %v2110
  %v2172 = vpop.f32.mrf.mxu0
  %v2173 = vadd.f32 0.0, %v2172
  %v2174 = vpop.f32.mrf.mxu0
  %v2175 = vpop.f32.mrf.mxu0
  %v2176 = vadd.f32 0.0, %v2175
  %v2177 = vpop.f32.mrf.mxu0
  %2178 = vmatprep.mubr.bf16.mxu0 0
  %2179 = vmatmul.mubr.bf16.gmra.mxu0 %v2113
  %v2180 = vpop.f32.mrf.mxu0
  %v2181 = vadd.f32 0.0, %v2180
  %v2182 = vpop.f32.mrf.mxu0
  %v2183 = vpop.f32.mrf.mxu0
  %v2184 = vadd.f32 0.0, %v2183
  %v2185 = vpop.f32.mrf.mxu0
  %2186 = vmatprep.mubr.bf16.mxu0 0
  %2187 = vmatmul.mubr.bf16.gmra.mxu0 %v2116
  %v2188 = vpop.f32.mrf.mxu0
  %v2189 = vadd.f32 0.0, %v2188
  %v2190 = vpop.f32.mrf.mxu0
  %v2191 = vpop.f32.mrf.mxu0
  %v2192 = vadd.f32 0.0, %v2191
  %v2193 = vpop.f32.mrf.mxu0
  %2194 = vmatprep.mubr.bf16.mxu0 0
  %2195 = vmatmul.mubr.bf16.gmra.mxu0 %v2119
  %v2196 = vpop.f32.mrf.mxu0
  %v2197 = vadd.f32 0.0, %v2196
  %v2198 = vpop.f32.mrf.mxu0
  %v2199 = vpop.f32.mrf.mxu0
  %v2200 = vadd.f32 0.0, %v2199
  %v2201 = vpop.f32.mrf.mxu0
  %2202 = vmatprep.mubr.bf16.mxu0 0
  %2203 = vmatmul.mubr.bf16.gmra.mxu0 %v2122
  %v2204 = vpop.f32.mrf.mxu0
  %v2205 = vadd.f32 0.0, %v2204
  %v2206 = vpop.f32.mrf.mxu0
  %v2207 = vpop.f32.mrf.mxu0
  %v2208 = vadd.f32 0.0, %v2207
  %v2209 = vpop.f32.mrf.mxu0
  %2210 = vmatprep.mubr.bf16.mxu0 0
  %2211 = vmatmul.mubr.bf16.gmra.mxu0 %v2125
  %v2212 = vpop.f32.mrf.mxu0
  %v2213 = vadd.f32 0.0, %v2212
  %v2214 = vpop.f32.mrf.mxu0
  %v2215 = vpop.f32.mrf.mxu0
  %v2216 = vadd.f32 0.0, %v2215
  %v2217 = vpop.f32.mrf.mxu0
  %2218 = vmatprep.mubr.bf16.mxu0 0
  %2219 = vmatmul.mubr.bf16.gmra.mxu0 %v2128
  %v2220 = vpop.f32.mrf.mxu0
  %v2221 = vadd.f32 0.0, %v2220
  %v2222 = vpop.f32.mrf.mxu0
  %v2223 = vpop.f32.mrf.mxu0
  %v2224 = vadd.f32 0.0, %v2223
  %v2225 = vpop.f32.mrf.mxu0
  %2226 = vdwg.mxu0
  %v2227 = vadd.f32 %v2001, %v2165
  %v2228 = vadd.f32 %v2002, %v2168
  %v2229 = vadd.f32 %v2003, %v2173
  %v2230 = vadd.f32 %v2004, %v2176
  %v2231 = vadd.f32 %v2005, %v2181
  %v2232 = vadd.f32 %v2006, %v2184
  %v2233 = vadd.f32 %v2007, %v2189
  %v2234 = vadd.f32 %v2008, %v2192
  %v2235 = vadd.f32 %v2009, %v2197
  %v2236 = vadd.f32 %v2010, %v2200
  %v2237 = vadd.f32 %v2011, %v2205
  %v2238 = vadd.f32 %v2012, %v2208
  %v2239 = vadd.f32 %v2013, %v2213
  %v2240 = vadd.f32 %v2014, %v2216
  %v2241 = vadd.f32 %v2015, %v2221
  %v2242 = vadd.f32 %v2016, %v2224
  %v2243 = vld [vmem:[%s1791] sm:$0xf]
  %v2244 = vld [vmem:[%s1791 + $0x4] sm:$0x1]
  %v2245 = vld [vmem:[%s1791 + $0x8] sm:$0xf]
  %v2246 = vld [vmem:[%s1791 + $0xc] sm:$0x1]
  %v2247 = vld [vmem:[%s1791 + $0x10] sm:$0xf]
  %v2248 = vld [vmem:[%s1791 + $0x14] sm:$0x1]
  %v2249 = vld [vmem:[%s1791 + $0x18] sm:$0xf]
  %v2250 = vld [vmem:[%s1791 + $0x1c] sm:$0x1]
  %v2251 = vld [vmem:[%s1791 + $0x20] sm:$0xf]
  %v2252 = vld [vmem:[%s1791 + $0x24] sm:$0x1]
  %v2253 = vld [vmem:[%s1791 + $0x28] sm:$0xf]
  %v2254 = vld [vmem:[%s1791 + $0x2c] sm:$0x1]
  %v2255 = vld [vmem:[%s1791 + $0x30] sm:$0xf]
  %v2256 = vld [vmem:[%s1791 + $0x34] sm:$0x1]
  %v2257 = vld [vmem:[%s1791 + $0x38] sm:$0xf]
  %v2258 = vld [vmem:[%s1791 + $0x3c] sm:$0x1]
  %v2259 = vld [vmem:[%s1791 + $0x48] sm:$0xf]
  %v2260 = vld [vmem:[%s1791 + $0x4c] sm:$0x1]
  %v2261 = vld [vmem:[%s1791 + $0x50] sm:$0xf]
  %v2262 = vld [vmem:[%s1791 + $0x54] sm:$0x1]
  %v2263 = vld [vmem:[%s1791 + $0x58] sm:$0xf]
  %v2264 = vld [vmem:[%s1791 + $0x5c] sm:$0x1]
  %v2265 = vld [vmem:[%s1791 + $0x60] sm:$0xf]
  %v2266 = vld [vmem:[%s1791 + $0x64] sm:$0x1]
  %v2267 = vld [vmem:[%s1791 + $0x68] sm:$0xf]
  %v2268 = vld [vmem:[%s1791 + $0x6c] sm:$0x1]
  %v2269 = vld [vmem:[%s1791 + $0x70] sm:$0xf]
  %v2270 = vld [vmem:[%s1791 + $0x74] sm:$0x1]
  %v2271 = vld [vmem:[%s1791 + $0x78] sm:$0xf]
  %v2272 = vld [vmem:[%s1791 + $0x7c] sm:$0x1]
  %v2273 = vld [vmem:[%s1791 + $0x80] sm:$0xf]
  %v2274 = vld [vmem:[%s1791 + $0x84] sm:$0x1]
  %v2276 = vshrl.u32 %v2243, 16
  %v2278 = vrot.slane %v2276, 4
  %v2279 = vshll.u32 %v2243, 16
  %v2281 = vrot.slane %v2279, 5
  %v2282 = vor.u32 %v2278, %v2281
  %v2283 = vrot.slane %v2282, 4
  %v2285 = vshll.u32 %v2244, 16
  %v2287 = vrot.slane %v2285, 5
  %v2288 = vsel %vm472, %v2283, %v2287
  %v2290 = vshrl.u32 %v2245, 16
  %v2292 = vrot.slane %v2290, 4
  %v2293 = vshll.u32 %v2245, 16
  %v2295 = vrot.slane %v2293, 5
  %v2296 = vor.u32 %v2292, %v2295
  %v2297 = vrot.slane %v2296, 4
  %v2299 = vshll.u32 %v2246, 16
  %v2301 = vrot.slane %v2299, 5
  %v2302 = vsel %vm472, %v2297, %v2301
  %v2304 = vshrl.u32 %v2247, 16
  %v2306 = vrot.slane %v2304, 4
  %v2307 = vshll.u32 %v2247, 16
  %v2309 = vrot.slane %v2307, 5
  %v2310 = vor.u32 %v2306, %v2309
  %v2311 = vrot.slane %v2310, 4
  %v2313 = vshll.u32 %v2248, 16
  %v2315 = vrot.slane %v2313, 5
  %v2316 = vsel %vm472, %v2311, %v2315
  %v2318 = vshrl.u32 %v2249, 16
  %v2320 = vrot.slane %v2318, 4
  %v2321 = vshll.u32 %v2249, 16
  %v2323 = vrot.slane %v2321, 5
  %v2324 = vor.u32 %v2320, %v2323
  %v2325 = vrot.slane %v2324, 4
  %v2327 = vshll.u32 %v2250, 16
  %v2329 = vrot.slane %v2327, 5
  %v2330 = vsel %vm472, %v2325, %v2329
  %v2332 = vshrl.u32 %v2251, 16
  %v2334 = vrot.slane %v2332, 4
  %v2335 = vshll.u32 %v2251, 16
  %v2337 = vrot.slane %v2335, 5
  %v2338 = vor.u32 %v2334, %v2337
  %v2339 = vrot.slane %v2338, 4
  %v2341 = vshll.u32 %v2252, 16
  %v2343 = vrot.slane %v2341, 5
  %v2344 = vsel %vm472, %v2339, %v2343
  %v2346 = vshrl.u32 %v2253, 16
  %v2348 = vrot.slane %v2346, 4
  %v2349 = vshll.u32 %v2253, 16
  %v2351 = vrot.slane %v2349, 5
  %v2352 = vor.u32 %v2348, %v2351
  %v2353 = vrot.slane %v2352, 4
  %v2355 = vshll.u32 %v2254, 16
  %v2357 = vrot.slane %v2355, 5
  %v2358 = vsel %vm472, %v2353, %v2357
  %v2360 = vshrl.u32 %v2255, 16
  %v2362 = vrot.slane %v2360, 4
  %v2363 = vshll.u32 %v2255, 16
  %v2365 = vrot.slane %v2363, 5
  %v2366 = vor.u32 %v2362, %v2365
  %v2367 = vrot.slane %v2366, 4
  %v2369 = vshll.u32 %v2256, 16
  %v2371 = vrot.slane %v2369, 5
  %v2372 = vsel %vm472, %v2367, %v2371
  %v2374 = vshrl.u32 %v2257, 16
  %v2376 = vrot.slane %v2374, 4
  %v2377 = vshll.u32 %v2257, 16
  %v2379 = vrot.slane %v2377, 5
  %v2380 = vor.u32 %v2376, %v2379
  %v2381 = vrot.slane %v2380, 4
  %v2383 = vshll.u32 %v2258, 16
  %v2385 = vrot.slane %v2383, 5
  %v2386 = vsel %vm472, %v2381, %v2385
  %v2388 = vshrl.u32 %v2259, 16
  %v2390 = vrot.slane %v2388, 4
  %v2391 = vshll.u32 %v2259, 16
  %v2393 = vrot.slane %v2391, 5
  %v2394 = vor.u32 %v2390, %v2393
  %v2395 = vrot.slane %v2394, 4
  %v2397 = vshll.u32 %v2260, 16
  %v2399 = vrot.slane %v2397, 5
  %v2400 = vsel %vm472, %v2395, %v2399
  %v2402 = vshrl.u32 %v2261, 16
  %v2404 = vrot.slane %v2402, 4
  %v2405 = vshll.u32 %v2261, 16
  %v2407 = vrot.slane %v2405, 5
  %v2408 = vor.u32 %v2404, %v2407
  %v2409 = vrot.slane %v2408, 4
  %v2411 = vshll.u32 %v2262, 16
  %v2413 = vrot.slane %v2411, 5
  %v2414 = vsel %vm472, %v2409, %v2413
  %v2416 = vshrl.u32 %v2263, 16
  %v2418 = vrot.slane %v2416, 4
  %v2419 = vshll.u32 %v2263, 16
  %v2421 = vrot.slane %v2419, 5
  %v2422 = vor.u32 %v2418, %v2421
  %v2423 = vrot.slane %v2422, 4
  %v2425 = vshll.u32 %v2264, 16
  %v2427 = vrot.slane %v2425, 5
  %v2428 = vsel %vm472, %v2423, %v2427
  %v2430 = vshrl.u32 %v2265, 16
  %v2432 = vrot.slane %v2430, 4
  %v2433 = vshll.u32 %v2265, 16
  %v2435 = vrot.slane %v2433, 5
  %v2436 = vor.u32 %v2432, %v2435
  %v2437 = vrot.slane %v2436, 4
  %v2439 = vshll.u32 %v2266, 16
  %v2441 = vrot.slane %v2439, 5
  %v2442 = vsel %vm472, %v2437, %v2441
  %v2444 = vshrl.u32 %v2267, 16
  %v2446 = vrot.slane %v2444, 4
  %v2447 = vshll.u32 %v2267, 16
  %v2449 = vrot.slane %v2447, 5
  %v2450 = vor.u32 %v2446, %v2449
  %v2451 = vrot.slane %v2450, 4
  %v2453 = vshll.u32 %v2268, 16
  %v2455 = vrot.slane %v2453, 5
  %v2456 = vsel %vm472, %v2451, %v2455
  %v2458 = vshrl.u32 %v2269, 16
  %v2460 = vrot.slane %v2458, 4
  %v2461 = vshll.u32 %v2269, 16
  %v2463 = vrot.slane %v2461, 5
  %v2464 = vor.u32 %v2460, %v2463
  %v2465 = vrot.slane %v2464, 4
  %v2467 = vshll.u32 %v2270, 16
  %v2469 = vrot.slane %v2467, 5
  %v2470 = vsel %vm472, %v2465, %v2469
  %v2472 = vshrl.u32 %v2271, 16
  %v2474 = vrot.slane %v2472, 4
  %v2475 = vshll.u32 %v2271, 16
  %v2477 = vrot.slane %v2475, 5
  %v2478 = vor.u32 %v2474, %v2477
  %v2479 = vrot.slane %v2478, 4
  %v2481 = vshll.u32 %v2272, 16
  %v2483 = vrot.slane %v2481, 5
  %v2484 = vsel %vm472, %v2479, %v2483
  %v2486 = vshrl.u32 %v2273, 16
  %v2488 = vrot.slane %v2486, 4
  %v2489 = vshll.u32 %v2273, 16
  %v2491 = vrot.slane %v2489, 5
  %v2492 = vor.u32 %v2488, %v2491
  %v2493 = vrot.slane %v2492, 4
  %v2495 = vshll.u32 %v2274, 16
  %v2497 = vrot.slane %v2495, 5
  %v2498 = vsel %vm472, %v2493, %v2497
  %v2499 = vld [vmem:[%s1 + $0x100] sm:$0xf]
  %v2500 = vld [vmem:[%s1 + $0x104] sm:$0xf]
  %v2501 = vld [vmem:[%s1 + $0x108] sm:$0xf]
  %v2502 = vld [vmem:[%s1 + $0x10c] sm:$0xf]
  %v2503 = vld [vmem:[%s1 + $0x110] sm:$0xf]
  %v2504 = vld [vmem:[%s1 + $0x114] sm:$0xf]
  %v2505 = vld [vmem:[%s1 + $0x118] sm:$0xf]
  %v2506 = vld [vmem:[%s1 + $0x11c] sm:$0xf]
  %v2507 = vunpack.c.l.b16 %v2288
  %v2508 = vunpack.c.l.b16 %v2302
  %v2509 = vunpack.c.l.b16 %v2316
  %v2510 = vunpack.c.l.b16 %v2330
  %v2511 = vunpack.c.l.b16 %v2344
  %v2512 = vunpack.c.l.b16 %v2358
  %v2513 = vunpack.c.l.b16 %v2372
  %v2514 = vunpack.c.l.b16 %v2386
  %v2515 = vunpack.c.l.b16 %v2400
  %v2516 = vunpack.c.l.b16 %v2414
  %v2517 = vunpack.c.l.b16 %v2428
  %v2518 = vunpack.c.l.b16 %v2442
  %v2519 = vunpack.c.l.b16 %v2456
  %v2520 = vunpack.c.l.b16 %v2470
  %v2521 = vunpack.c.l.b16 %v2484
  %v2522 = vunpack.c.l.b16 %v2498
  %v2523 = vpack.c.b16 %v2508, %v2507
  %v2524 = vpack.c.b16 %v2510, %v2509
  %v2525 = vpack.c.b16 %v2512, %v2511
  %v2526 = vpack.c.b16 %v2514, %v2513
  %v2527 = vpack.c.b16 %v2516, %v2515
  %v2528 = vpack.c.b16 %v2518, %v2517
  %v2529 = vpack.c.b16 %v2520, %v2519
  %v2530 = vpack.c.b16 %v2522, %v2521
  %v2539 = vunpack.c.l.b16 %v2499
  %v2540 = vunpack.c.l.b16 %v2500
  %v2541 = vunpack.c.l.b16 %v2501
  %v2542 = vunpack.c.l.b16 %v2502
  %v2543 = vunpack.c.l.b16 %v2503
  %v2544 = vunpack.c.l.b16 %v2504
  %v2545 = vunpack.c.l.b16 %v2505
  %v2546 = vunpack.c.l.b16 %v2506
  %v2547 = vpack.c.b16 %v2540, %v2539
  %v2548 = vpack.c.b16 %v2542, %v2541
  %v2549 = vpack.c.b16 %v2544, %v2543
  %v2550 = vpack.c.b16 %v2546, %v2545
  %v2556 = vsel %vm131, %v2523, 0
  %v2559 = vsel %vm131, %v2524, 0
  %v2562 = vsel %vm131, %v2525, 0
  %v2565 = vsel %vm131, %v2526, 0
  %v2568 = vsel %vm131, %v2527, 0
  %v2571 = vsel %vm131, %v2528, 0
  %v2574 = vsel %vm131, %v2529, 0
  %v2577 = vsel %vm131, %v2530, 0
  %2579 = vmatprep.subr.bf16.mxu0 0
  %2580 = vmatpush1.bf16.msra.mxu0 0
  %2581 = vmatprep.subr.bf16.mxu0 0
  %2582 = vmatpush1.bf16.msra.mxu0 0
  %2583 = vmatprep.subr.bf16.mxu0 0
  %2584 = vmatpush1.bf16.msra.mxu0 0
  %2585 = vmatprep.subr.bf16.mxu0 0
  %2586 = vmatpush1.bf16.msra.mxu0 0
  %2587 = vmatprep.subr.bf16.mxu0 0
  %2588 = vmatpush1.bf16.msra.mxu0 %v2550
  %2589 = vmatprep.subr.bf16.mxu0 0
  %2590 = vmatpush1.bf16.msra.mxu0 %v2549
  %2591 = vmatprep.subr.bf16.mxu0 0
  %2592 = vmatpush1.bf16.msra.mxu0 %v2548
  %2593 = vmatprep.subr.bf16.mxu0 0
  %2594 = vmatpush1.bf16.msra.mxu0 %v2547
  %2595 = vmatprep.subr.bf16.mxu0 0
  %2596 = vmatpush2.bf16.msra.mxu0 0
  %2597 = vmatprep.subr.bf16.mxu0 0
  %2598 = vmatpush2.bf16.msra.mxu0 0
  %2599 = vmatprep.subr.bf16.mxu0 0
  %2600 = vmatpush2.bf16.msra.mxu0 0
  %2601 = vmatprep.subr.bf16.mxu0 0
  %2602 = vmatpush2.bf16.msra.mxu0 0
  %2603 = vmatprep.subr.bf16.mxu0 0
  %2604 = vmatpush2.bf16.msra.mxu0 0
  %2605 = vmatprep.subr.bf16.mxu0 0
  %2606 = vmatpush2.bf16.msra.mxu0 0
  %2607 = vmatprep.subr.bf16.mxu0 0
  %2608 = vmatpush2.bf16.msra.mxu0 0
  %2609 = vmatprep.subr.bf16.mxu0 0
  %2610 = vmatpush2.bf16.msra.mxu0 0
  %2611 = vmatprep.mubr.bf16.mxu0 0
  %2612 = vmatmul.mubr.bf16.gmra.mxu0 %v2556
  %v2613 = vpop.f32.mrf.mxu0
  %v2614 = vadd.f32 0.0, %v2613
  %v2615 = vpop.f32.mrf.mxu0
  %v2616 = vpop.f32.mrf.mxu0
  %v2617 = vadd.f32 0.0, %v2616
  %v2618 = vpop.f32.mrf.mxu0
  %2619 = vmatprep.mubr.bf16.mxu0 0
  %2620 = vmatmul.mubr.bf16.gmra.mxu0 %v2559
  %v2621 = vpop.f32.mrf.mxu0
  %v2622 = vadd.f32 0.0, %v2621
  %v2623 = vpop.f32.mrf.mxu0
  %v2624 = vpop.f32.mrf.mxu0
  %v2625 = vadd.f32 0.0, %v2624
  %v2626 = vpop.f32.mrf.mxu0
  %2627 = vmatprep.mubr.bf16.mxu0 0
  %2628 = vmatmul.mubr.bf16.gmra.mxu0 %v2562
  %v2629 = vpop.f32.mrf.mxu0
  %v2630 = vadd.f32 0.0, %v2629
  %v2631 = vpop.f32.mrf.mxu0
  %v2632 = vpop.f32.mrf.mxu0
  %v2633 = vadd.f32 0.0, %v2632
  %v2634 = vpop.f32.mrf.mxu0
  %2635 = vmatprep.mubr.bf16.mxu0 0
  %2636 = vmatmul.mubr.bf16.gmra.mxu0 %v2565
  %v2637 = vpop.f32.mrf.mxu0
  %v2638 = vadd.f32 0.0, %v2637
  %v2639 = vpop.f32.mrf.mxu0
  %v2640 = vpop.f32.mrf.mxu0
  %v2641 = vadd.f32 0.0, %v2640
  %v2642 = vpop.f32.mrf.mxu0
  %2643 = vmatprep.mubr.bf16.mxu0 0
  %2644 = vmatmul.mubr.bf16.gmra.mxu0 %v2568
  %v2645 = vpop.f32.mrf.mxu0
  %v2646 = vadd.f32 0.0, %v2645
  %v2647 = vpop.f32.mrf.mxu0
  %v2648 = vpop.f32.mrf.mxu0
  %v2649 = vadd.f32 0.0, %v2648
  %v2650 = vpop.f32.mrf.mxu0
  %2651 = vmatprep.mubr.bf16.mxu0 0
  %2652 = vmatmul.mubr.bf16.gmra.mxu0 %v2571
  %v2653 = vpop.f32.mrf.mxu0
  %v2654 = vadd.f32 0.0, %v2653
  %v2655 = vpop.f32.mrf.mxu0
  %v2656 = vpop.f32.mrf.mxu0
  %v2657 = vadd.f32 0.0, %v2656
  %v2658 = vpop.f32.mrf.mxu0
  %2659 = vmatprep.mubr.bf16.mxu0 0
  %2660 = vmatmul.mubr.bf16.gmra.mxu0 %v2574
  %v2661 = vpop.f32.mrf.mxu0
  %v2662 = vadd.f32 0.0, %v2661
  %v2663 = vpop.f32.mrf.mxu0
  %v2664 = vpop.f32.mrf.mxu0
  %v2665 = vadd.f32 0.0, %v2664
  %v2666 = vpop.f32.mrf.mxu0
  %2667 = vmatprep.mubr.bf16.mxu0 0
  %2668 = vmatmul.mubr.bf16.gmra.mxu0 %v2577
  %v2669 = vpop.f32.mrf.mxu0
  %v2670 = vadd.f32 0.0, %v2669
  %v2671 = vpop.f32.mrf.mxu0
  %v2672 = vpop.f32.mrf.mxu0
  %v2673 = vadd.f32 0.0, %v2672
  %v2674 = vpop.f32.mrf.mxu0
  %2675 = vdwg.mxu0
  %v2676 = vadd.f32 %v2227, %v2614
  %v2677 = vadd.f32 %v2228, %v2617
  %v2678 = vadd.f32 %v2229, %v2622
  %v2679 = vadd.f32 %v2230, %v2625
  %v2680 = vadd.f32 %v2231, %v2630
  %v2681 = vadd.f32 %v2232, %v2633
  %v2682 = vadd.f32 %v2233, %v2638
  %v2683 = vadd.f32 %v2234, %v2641
  %v2684 = vadd.f32 %v2235, %v2646
  %v2685 = vadd.f32 %v2236, %v2649
  %v2686 = vadd.f32 %v2237, %v2654
  %v2687 = vadd.f32 %v2238, %v2657
  %v2688 = vadd.f32 %v2239, %v2662
  %v2689 = vadd.f32 %v2240, %v2665
  %v2690 = vadd.f32 %v2241, %v2670
  %v2691 = vadd.f32 %v2242, %v2673
  %v2692 = vadd.f32 %v2676, %v2677
  %v2693 = vadd.f32 %v2692, %v2678
  %v2694 = vadd.f32 %v2693, %v2679
  %v2695 = vadd.f32 %v2694, %v2680
  %v2696 = vadd.f32 %v2695, %v2681
  %v2697 = vadd.f32 %v2696, %v2682
  %v2698 = vadd.f32 %v2697, %v2683
  %v2699 = vadd.f32 %v2698, %v2684
  %v2700 = vadd.f32 %v2699, %v2685
  %v2701 = vadd.f32 %v2700, %v2686
  %v2702 = vadd.f32 %v2701, %v2687
  %v2703 = vadd.f32 %v2702, %v2688
  %v2704 = vadd.f32 %v2703, %v2689
  %v2705 = vadd.f32 %v2704, %v2690
  %v2706 = vadd.f32 %v2705, %v2691
  %v2707 = vrot.slane %v2706, 4
  %v2708 = vadd.f32 %v2706, %v2707
  %v2709 = vrot.slane %v2708, 2
  %v2710 = vadd.f32 %v2708, %v2709
  %v2711 = vrot.slane %v2710, 1
  %v2712 = vadd.f32 %v2710, %v2711
  %v2713 = vmul.f32 %v2712, 0.0078125
  %v2714 = vsub.f32 %v2676, %v2713
  %v2715 = vsub.f32 %v2677, %v2713
  %v2716 = vsub.f32 %v2678, %v2713
  %v2717 = vsub.f32 %v2679, %v2713
  %v2718 = vsub.f32 %v2680, %v2713
  %v2719 = vsub.f32 %v2681, %v2713
  %v2720 = vsub.f32 %v2682, %v2713
  %v2721 = vsub.f32 %v2683, %v2713
  %v2722 = vsub.f32 %v2684, %v2713
  %v2723 = vsub.f32 %v2685, %v2713
  %v2724 = vsub.f32 %v2686, %v2713
  %v2725 = vsub.f32 %v2687, %v2713
  %v2726 = vsub.f32 %v2688, %v2713
  %v2727 = vsub.f32 %v2689, %v2713
  %v2728 = vsub.f32 %v2690, %v2713
  %v2729 = vsub.f32 %v2691, %v2713
  %v2730 = vmul.f32 %v2714, %v2714
  %v2731 = vmul.f32 %v2715, %v2715
  %v2732 = vmul.f32 %v2716, %v2716
  %v2733 = vmul.f32 %v2717, %v2717
  %v2734 = vmul.f32 %v2718, %v2718
  %v2735 = vmul.f32 %v2719, %v2719
  %v2736 = vmul.f32 %v2720, %v2720
  %v2737 = vmul.f32 %v2721, %v2721
  %v2738 = vmul.f32 %v2722, %v2722
  %v2739 = vmul.f32 %v2723, %v2723
  %v2740 = vmul.f32 %v2724, %v2724
  %v2741 = vmul.f32 %v2725, %v2725
  %v2742 = vmul.f32 %v2726, %v2726
  %v2743 = vmul.f32 %v2727, %v2727
  %v2744 = vmul.f32 %v2728, %v2728
  %v2745 = vmul.f32 %v2729, %v2729
  %v2746 = vadd.f32 %v2730, %v2731
  %v2747 = vadd.f32 %v2746, %v2732
  %v2748 = vadd.f32 %v2747, %v2733
  %v2749 = vadd.f32 %v2748, %v2734
  %v2750 = vadd.f32 %v2749, %v2735
  %v2751 = vadd.f32 %v2750, %v2736
  %v2752 = vadd.f32 %v2751, %v2737
  %v2753 = vadd.f32 %v2752, %v2738
  %v2754 = vadd.f32 %v2753, %v2739
  %v2755 = vadd.f32 %v2754, %v2740
  %v2756 = vadd.f32 %v2755, %v2741
  %v2757 = vadd.f32 %v2756, %v2742
  %v2758 = vadd.f32 %v2757, %v2743
  %v2759 = vadd.f32 %v2758, %v2744
  %v2760 = vadd.f32 %v2759, %v2745
  %v2761 = vrot.slane %v2760, 4
  %v2762 = vadd.f32 %v2760, %v2761
  %v2763 = vrot.slane %v2762, 2
  %v2764 = vadd.f32 %v2762, %v2763
  %v2765 = vrot.slane %v2764, 1
  %v2766 = vadd.f32 %v2764, %v2765
  %v2767 = vmul.f32 %v2766, 0.0078125
  %v2768 = vadd.f32 %v2767, 1e-05
  %v2769 = vrsqrt.pop %v2768
  %v2770 = vmul.f32 %v2714, %v2769
  %v2771 = vmul.f32 %v2715, %v2769
  %v2772 = vmul.f32 %v2716, %v2769
  %v2773 = vmul.f32 %v2717, %v2769
  %v2774 = vmul.f32 %v2718, %v2769
  %v2775 = vmul.f32 %v2719, %v2769
  %v2776 = vmul.f32 %v2720, %v2769
  %v2777 = vmul.f32 %v2721, %v2769
  %v2778 = vmul.f32 %v2722, %v2769
  %v2779 = vmul.f32 %v2723, %v2769
  %v2780 = vmul.f32 %v2724, %v2769
  %v2781 = vmul.f32 %v2725, %v2769
  %v2782 = vmul.f32 %v2726, %v2769
  %v2783 = vmul.f32 %v2727, %v2769
  %v2784 = vmul.f32 %v2728, %v2769
  %v2785 = vmul.f32 %v2729, %v2769
  %v2786 = vld [vmem:[%s2] sm:$0x1]
  %v2788 = vlaneseq
  %v2789 = vshrl.u32 %v2788, 7
  %v2790 = vsub.s32 0, %v2789
  %v2791 = vrot.slane %v2786, %v2790
  %v2793 = vmul.f32 %v2770, %v2791
  %v2794 = vmul.f32 %v2771, %v2791
  %v2795 = vmul.f32 %v2772, %v2791
  %v2796 = vmul.f32 %v2773, %v2791
  %v2797 = vmul.f32 %v2774, %v2791
  %v2798 = vmul.f32 %v2775, %v2791
  %v2799 = vmul.f32 %v2776, %v2791
  %v2800 = vmul.f32 %v2777, %v2791
  %v2801 = vmul.f32 %v2778, %v2791
  %v2802 = vmul.f32 %v2779, %v2791
  %v2803 = vmul.f32 %v2780, %v2791
  %v2804 = vmul.f32 %v2781, %v2791
  %v2805 = vmul.f32 %v2782, %v2791
  %v2806 = vmul.f32 %v2783, %v2791
  %v2807 = vmul.f32 %v2784, %v2791
  %v2808 = vmul.f32 %v2785, %v2791
  %v2809 = vld [vmem:[%s3] sm:$0x1]
  %v2811 = vlaneseq
  %v2812 = vshrl.u32 %v2811, 7
  %v2813 = vsub.s32 0, %v2812
  %v2814 = vrot.slane %v2809, %v2813
  %v2816 = vadd.f32 %v2793, %v2814
  %v2817 = vadd.f32 %v2794, %v2814
  %v2818 = vadd.f32 %v2795, %v2814
  %v2819 = vadd.f32 %v2796, %v2814
  %v2820 = vadd.f32 %v2797, %v2814
  %v2821 = vadd.f32 %v2798, %v2814
  %v2822 = vadd.f32 %v2799, %v2814
  %v2823 = vadd.f32 %v2800, %v2814
  %v2824 = vadd.f32 %v2801, %v2814
  %v2825 = vadd.f32 %v2802, %v2814
  %v2826 = vadd.f32 %v2803, %v2814
  %v2827 = vadd.f32 %v2804, %v2814
  %v2828 = vadd.f32 %v2805, %v2814
  %v2829 = vadd.f32 %v2806, %v2814
  %v2830 = vadd.f32 %v2807, %v2814
  %v2831 = vadd.f32 %v2808, %v2814
  %v2832 = vmax.f32 %v2816, 0.0
  %v2833 = vmax.f32 %v2817, 0.0
  %v2834 = vmax.f32 %v2818, 0.0
  %v2835 = vmax.f32 %v2819, 0.0
  %v2836 = vmax.f32 %v2820, 0.0
  %v2837 = vmax.f32 %v2821, 0.0
  %v2838 = vmax.f32 %v2822, 0.0
  %v2839 = vmax.f32 %v2823, 0.0
  %v2840 = vmax.f32 %v2824, 0.0
  %v2841 = vmax.f32 %v2825, 0.0
  %v2842 = vmax.f32 %v2826, 0.0
  %v2843 = vmax.f32 %v2827, 0.0
  %v2844 = vmax.f32 %v2828, 0.0
  %v2845 = vmax.f32 %v2829, 0.0
  %v2846 = vmax.f32 %v2830, 0.0
  %v2847 = vmax.f32 %v2831, 0.0
  %v2848 = vpack.c.bf16 %v2833, %v2832
  %v2849 = vpack.c.bf16 %v2835, %v2834
  %v2850 = vpack.c.bf16 %v2837, %v2836
  %v2851 = vpack.c.bf16 %v2839, %v2838
  %v2852 = vpack.c.bf16 %v2841, %v2840
  %v2853 = vpack.c.bf16 %v2843, %v2842
  %v2854 = vpack.c.bf16 %v2845, %v2844
  %v2855 = vpack.c.bf16 %v2847, %v2846
  %v2864 = vunpack.c.l.b16 %v2848
  %v2865 = vunpack.c.h.b16 %v2848
  %v2866 = vunpack.c.l.b16 %v2849
  %v2867 = vunpack.c.h.b16 %v2849
  %v2868 = vunpack.c.l.b16 %v2850
  %v2869 = vunpack.c.h.b16 %v2850
  %v2870 = vunpack.c.l.b16 %v2851
  %v2871 = vunpack.c.h.b16 %v2851
  %v2872 = vunpack.c.l.b16 %v2852
  %v2873 = vunpack.c.h.b16 %v2852
  %v2874 = vunpack.c.l.b16 %v2853
  %v2875 = vunpack.c.h.b16 %v2853
  %v2876 = vunpack.c.l.b16 %v2854
  %v2877 = vunpack.c.h.b16 %v2854
  %v2878 = vunpack.c.l.b16 %v2855
  %v2879 = vunpack.c.h.b16 %v2855
  %v2880 = vpack.c.b16 %v2864, %v2864
  %v2881 = vpack.c.b16 %v2865, %v2865
  %v2882 = vpack.c.b16 %v2866, %v2866
  %v2883 = vpack.c.b16 %v2867, %v2867
  %v2884 = vpack.c.b16 %v2868, %v2868
  %v2885 = vpack.c.b16 %v2869, %v2869
  %v2886 = vpack.c.b16 %v2870, %v2870
  %v2887 = vpack.c.b16 %v2871, %v2871
  %v2888 = vpack.c.b16 %v2872, %v2872
  %v2889 = vpack.c.b16 %v2873, %v2873
  %v2890 = vpack.c.b16 %v2874, %v2874
  %v2891 = vpack.c.b16 %v2875, %v2875
  %v2892 = vpack.c.b16 %v2876, %v2876
  %v2893 = vpack.c.b16 %v2877, %v2877
  %v2894 = vpack.c.b16 %v2878, %v2878
  %v2895 = vpack.c.b16 %v2879, %v2879
  %2912 = vst [vmem:[%s4] sm:$0xf] %v2880
  %2913 = vst [vmem:[%s4 + $0x4] sm:$0xf] %v2881
  %2914 = vst [vmem:[%s4 + $0x8] sm:$0xf] %v2882
  %2915 = vst [vmem:[%s4 + $0xc] sm:$0xf] %v2883
  %2916 = vst [vmem:[%s4 + $0x10] sm:$0xf] %v2884
  %2917 = vst [vmem:[%s4 + $0x14] sm:$0xf] %v2885
  %2918 = vst [vmem:[%s4 + $0x18] sm:$0xf] %v2886
  %2919 = vst [vmem:[%s4 + $0x1c] sm:$0xf] %v2887
  %2920 = vst [vmem:[%s4 + $0x20] sm:$0xf] %v2888
  %2921 = vst [vmem:[%s4 + $0x24] sm:$0xf] %v2889
  %2922 = vst [vmem:[%s4 + $0x28] sm:$0xf] %v2890
  %2923 = vst [vmem:[%s4 + $0x2c] sm:$0xf] %v2891
  %2924 = vst [vmem:[%s4 + $0x30] sm:$0xf] %v2892
  %2925 = vst [vmem:[%s4 + $0x34] sm:$0xf] %v2893
  %2926 = vst [vmem:[%s4 + $0x38] sm:$0xf] %v2894
  %2927 = vst [vmem:[%s4 + $0x3c] sm:$0xf] %v2895
  // Predicated region
  $region18: #{residual_block_forward.3} parent=0 // pred_check
    _
  $region19: #{residual_block_forward.3} parent=0 // pred_check_branch
    %2929 = sbr.rel (0) target = $region21
  $region20: #{residual_block_forward.3} parent=0 // pred_region
    _
  $region21: #{residual_block_forward.3} parent=0 // pred_fallthru
    _
  // Predicated region
  $region22: #{residual_block_forward.3} parent=0 // pred_check
    _
  $region23: #{residual_block_forward.3} parent=0 // pred_check_branch
    %2931 = sbr.rel (0) target = $region25
  $region24: #{residual_block_forward.3} parent=0 // pred_region
    _
  $region25: #{residual_block_forward.3} parent=0 // pred_fallthru
    _

// kernel: residual_block_forward.4
$region0: #{residual_block_forward.4}
  #allocation0 [shape = 'u32[]', space=smem, size = 0x4, offset = 0x4, fixed_abs, tag = 'smem constant byte address 0x4 - core index']
  #allocation1 [shape = 'u32[144,128]{1,0:T(1,128)}', space=vmem, size = 0x12000, scoped, tag = 'internal scratch']
  %s0 = inlined_call_operand.vmem [shape: bf16[4,2,9,9,64], index: 0, kind: input, shape index: {}]
  %s1 = inlined_call_operand.vmem [shape: bf16[576,128], index: 1, kind: input, shape index: {}]
  %s2 = inlined_call_operand.vmem [shape: f32[1,128], index: 2, kind: input, shape index: {}]
  %s3 = inlined_call_operand.vmem [shape: f32[1,128], index: 3, kind: input, shape index: {}]
  %s4 = inlined_call_operand.vmem [shape: bf16[128,128], index: 4, kind: output, shape index: {}]
  %s5 = sld [smem:[#allocation0]]
  $region26: #{residual_block_forward.4} parent=0
    _
  %s7 = ssub.s32 1, %s5
  %s8 = scalar_select 0, %s7, %s5
  // Predicated region
  $region2: #{residual_block_forward.4} parent=0 // pred_check
    _
  $region3: #{residual_block_forward.4} parent=0 // pred_check_branch
    %10 = sbr.rel (0) target = $region5
  $region4: #{residual_block_forward.4} parent=0 // pred_region
    _
  $region5: #{residual_block_forward.4} parent=0 // pred_fallthru
    _
  // Predicated region
  $region6: #{residual_block_forward.4} parent=0 // pred_check
    _
  $region7: #{residual_block_forward.4} parent=0 // pred_check_branch
    %12 = sbr.rel (0) target = $region9
  $region8: #{residual_block_forward.4} parent=0 // pred_region
    _
  $region9: #{residual_block_forward.4} parent=0 // pred_fallthru
    _
  // Predicated region
  $region10: #{residual_block_forward.4} parent=0 // pred_check
    _
  $region11: #{residual_block_forward.4} parent=0 // pred_check_branch
    %14 = sbr.rel (0) target = $region13
  $region12: #{residual_block_forward.4} parent=0 // pred_region
    _
  $region13: #{residual_block_forward.4} parent=0 // pred_fallthru
    _
  // Predicated region
  $region14: #{residual_block_forward.4} parent=0 // pred_check
    _
  $region15: #{residual_block_forward.4} parent=0 // pred_check_branch
    %16 = sbr.rel (0) target = $region17
  $region16: #{residual_block_forward.4} parent=0 // pred_region
    _
  $region17: #{residual_block_forward.4} parent=0 // pred_fallthru
    _
  %v18 = vld [vmem:[%s0] sm:$0xf]
  %v19 = vld [vmem:[%s0 + $0x8] sm:$0xf]
  %v20 = vld [vmem:[%s0 + $0x10] sm:$0xf]
  %v21 = vld [vmem:[%s0 + $0x18] sm:$0xf]
  %v22 = vld [vmem:[%s0 + $0x20] sm:$0xf]
  %v23 = vld [vmem:[%s0 + $0x28] sm:$0xf]
  %v24 = vld [vmem:[%s0 + $0x30] sm:$0xf]
  %v25 = vld [vmem:[%s0 + $0x38] sm:$0xf]
  %v26 = vld [vmem:[%s0 + $0x48] sm:$0xf]
  %v27 = vld [vmem:[%s0 + $0x50] sm:$0xf]
  %v28 = vld [vmem:[%s0 + $0x58] sm:$0xf]
  %v29 = vld [vmem:[%s0 + $0x60] sm:$0xf]
  %v30 = vld [vmem:[%s0 + $0x68] sm:$0xf]
  %v31 = vld [vmem:[%s0 + $0x70] sm:$0xf]
  %v32 = vld [vmem:[%s0 + $0x78] sm:$0xf]
  %v33 = vld [vmem:[%s0 + $0x80] sm:$0xf]
  %v34 = vld [vmem:[%s1] sm:$0xf]
  %v35 = vld [vmem:[%s1 + $0x4] sm:$0xf]
  %v36 = vld [vmem:[%s1 + $0x8] sm:$0xf]
  %v37 = vld [vmem:[%s1 + $0xc] sm:$0xf]
  %v38 = vld [vmem:[%s1 + $0x10] sm:$0xf]
  %v39 = vld [vmem:[%s1 + $0x14] sm:$0xf]
  %v40 = vld [vmem:[%s1 + $0x18] sm:$0xf]
  %v41 = vld [vmem:[%s1 + $0x1c] sm:$0xf]
  %s42 = scalar_lea.vmem %s0, 144
  %v43 = vld [vmem:[%s42] sm:$0xf]
  %v44 = vld [vmem:[%s42 + $0x8] sm:$0xf]
  %v45 = vld [vmem:[%s42 + $0x10] sm:$0xf]
  %v46 = vld [vmem:[%s42 + $0x18] sm:$0xf]
  %v47 = vld [vmem:[%s42 + $0x20] sm:$0xf]
  %v48 = vld [vmem:[%s42 + $0x28] sm:$0xf]
  %v49 = vld [vmem:[%s42 + $0x30] sm:$0xf]
  %v50 = vld [vmem:[%s42 + $0x38] sm:$0xf]
  %v51 = vld [vmem:[%s42 + $0x48] sm:$0xf]
  %v52 = vld [vmem:[%s42 + $0x50] sm:$0xf]
  %v53 = vld [vmem:[%s42 + $0x58] sm:$0xf]
  %v54 = vld [vmem:[%s42 + $0x60] sm:$0xf]
  %v55 = vld [vmem:[%s42 + $0x68] sm:$0xf]
  %v56 = vld [vmem:[%s42 + $0x70] sm:$0xf]
  %v57 = vld [vmem:[%s42 + $0x78] sm:$0xf]
  %v58 = vld [vmem:[%s42 + $0x80] sm:$0xf]
  %v59 = vld [vmem:[%s1 + $0x20] sm:$0xf]
  %v60 = vld [vmem:[%s1 + $0x24] sm:$0xf]
  %v61 = vld [vmem:[%s1 + $0x28] sm:$0xf]
  %v62 = vld [vmem:[%s1 + $0x2c] sm:$0xf]
  %v63 = vld [vmem:[%s1 + $0x30] sm:$0xf]
  %v64 = vld [vmem:[%s1 + $0x34] sm:$0xf]
  %v65 = vld [vmem:[%s1 + $0x38] sm:$0xf]
  %v66 = vld [vmem:[%s1 + $0x3c] sm:$0xf]
  %v83 = vunpack.c.l.b16 %v43
  %v84 = vunpack.c.l.b16 %v44
  %v85 = vunpack.c.l.b16 %v45
  %v86 = vunpack.c.l.b16 %v46
  %v87 = vunpack.c.l.b16 %v47
  %v88 = vunpack.c.l.b16 %v48
  %v89 = vunpack.c.l.b16 %v49
  %v90 = vunpack.c.l.b16 %v50
  %v91 = vunpack.c.l.b16 %v51
  %v92 = vunpack.c.l.b16 %v52
  %v93 = vunpack.c.l.b16 %v53
  %v94 = vunpack.c.l.b16 %v54
  %v95 = vunpack.c.l.b16 %v55
  %v96 = vunpack.c.l.b16 %v56
  %v97 = vunpack.c.l.b16 %v57
  %v98 = vunpack.c.l.b16 %v58
  %v99 = vpack.c.b16 %v84, %v83
  %v100 = vpack.c.b16 %v86, %v85
  %v101 = vpack.c.b16 %v88, %v87
  %v102 = vpack.c.b16 %v90, %v89
  %v103 = vpack.c.b16 %v92, %v91
  %v104 = vpack.c.b16 %v94, %v93
  %v105 = vpack.c.b16 %v96, %v95
  %v106 = vpack.c.b16 %v98, %v97
  %v115 = vunpack.c.l.b16 %v59
  %v116 = vunpack.c.l.b16 %v60
  %v117 = vunpack.c.l.b16 %v61
  %v118 = vunpack.c.l.b16 %v62
  %v119 = vunpack.c.l.b16 %v63
  %v120 = vunpack.c.l.b16 %v64
  %v121 = vunpack.c.l.b16 %v65
  %v122 = vunpack.c.l.b16 %v66
  %v123 = vpack.c.b16 %v116, %v115
  %v124 = vpack.c.b16 %v118, %v117
  %v125 = vpack.c.b16 %v120, %v119
  %v126 = vpack.c.b16 %v122, %v121
  %vm131 = vcmask 523264
  %v133 = vsel %vm131, %v99, 0
  %v136 = vsel %vm131, %v100, 0
  %v139 = vsel %vm131, %v101, 0
  %v142 = vsel %vm131, %v102, 0
  %v145 = vsel %vm131, %v103, 0
  %v148 = vsel %vm131, %v104, 0
  %v151 = vsel %vm131, %v105, 0
  %v154 = vsel %vm131, %v106, 0
  %156 = vmatprep.subr.bf16.mxu0 0
  %157 = vmatpush1.bf16.msra.mxu0 0
  %158 = vmatprep.subr.bf16.mxu0 0
  %159 = vmatpush1.bf16.msra.mxu0 0
  %160 = vmatprep.subr.bf16.mxu0 0
  %161 = vmatpush1.bf16.msra.mxu0 0
  %162 = vmatprep.subr.bf16.mxu0 0
  %163 = vmatpush1.bf16.msra.mxu0 0
  %164 = vmatprep.subr.bf16.mxu0 0
  %165 = vmatpush1.bf16.msra.mxu0 %v126
  %166 = vmatprep.subr.bf16.mxu0 0
  %167 = vmatpush1.bf16.msra.mxu0 %v125
  %168 = vmatprep.subr.bf16.mxu0 0
  %169 = vmatpush1.bf16.msra.mxu0 %v124
  %170 = vmatprep.subr.bf16.mxu0 0
  %171 = vmatpush1.bf16.msra.mxu0 %v123
  %172 = vmatprep.subr.bf16.mxu0 0
  %173 = vmatpush2.bf16.msra.mxu0 0
  %174 = vmatprep.subr.bf16.mxu0 0
  %175 = vmatpush2.bf16.msra.mxu0 0
  %176 = vmatprep.subr.bf16.mxu0 0
  %177 = vmatpush2.bf16.msra.mxu0 0
  %178 = vmatprep.subr.bf16.mxu0 0
  %179 = vmatpush2.bf16.msra.mxu0 0
  %180 = vmatprep.subr.bf16.mxu0 0
  %181 = vmatpush2.bf16.msra.mxu0 0
  %182 = vmatprep.subr.bf16.mxu0 0
  %183 = vmatpush2.bf16.msra.mxu0 0
  %184 = vmatprep.subr.bf16.mxu0 0
  %185 = vmatpush2.bf16.msra.mxu0 0
  %186 = vmatprep.subr.bf16.mxu0 0
  %187 = vmatpush2.bf16.msra.mxu0 0
  %188 = vmatprep.mubr.bf16.mxu0 0
  %189 = vmatmul.mubr.bf16.gmra.mxu0 %v133
  %v190 = vpop.f32.mrf.mxu0
  %v191 = vadd.f32 0.0, %v190
  %v192 = vpop.f32.mrf.mxu0
  %v193 = vpop.f32.mrf.mxu0
  %v194 = vadd.f32 0.0, %v193
  %v195 = vpop.f32.mrf.mxu0
  %196 = vmatprep.mubr.bf16.mxu0 0
  %197 = vmatmul.mubr.bf16.gmra.mxu0 %v136
  %v198 = vpop.f32.mrf.mxu0
  %v199 = vadd.f32 0.0, %v198
  %v200 = vpop.f32.mrf.mxu0
  %v201 = vpop.f32.mrf.mxu0
  %v202 = vadd.f32 0.0, %v201
  %v203 = vpop.f32.mrf.mxu0
  %204 = vmatprep.mubr.bf16.mxu0 0
  %205 = vmatmul.mubr.bf16.gmra.mxu0 %v139
  %v206 = vpop.f32.mrf.mxu0
  %v207 = vadd.f32 0.0, %v206
  %v208 = vpop.f32.mrf.mxu0
  %v209 = vpop.f32.mrf.mxu0
  %v210 = vadd.f32 0.0, %v209
  %v211 = vpop.f32.mrf.mxu0
  %212 = vmatprep.mubr.bf16.mxu0 0
  %213 = vmatmul.mubr.bf16.gmra.mxu0 %v142
  %v214 = vpop.f32.mrf.mxu0
  %v215 = vadd.f32 0.0, %v214
  %v216 = vpop.f32.mrf.mxu0
  %v217 = vpop.f32.mrf.mxu0
  %v218 = vadd.f32 0.0, %v217
  %v219 = vpop.f32.mrf.mxu0
  %220 = vmatprep.mubr.bf16.mxu0 0
  %221 = vmatmul.mubr.bf16.gmra.mxu0 %v145
  %v222 = vpop.f32.mrf.mxu0
  %v223 = vadd.f32 0.0, %v222
  %v224 = vpop.f32.mrf.mxu0
  %v225 = vpop.f32.mrf.mxu0
  %v226 = vadd.f32 0.0, %v225
  %v227 = vpop.f32.mrf.mxu0
  %228 = vmatprep.mubr.bf16.mxu0 0
  %229 = vmatmul.mubr.bf16.gmra.mxu0 %v148
  %v230 = vpop.f32.mrf.mxu0
  %v231 = vadd.f32 0.0, %v230
  %v232 = vpop.f32.mrf.mxu0
  %v233 = vpop.f32.mrf.mxu0
  %v234 = vadd.f32 0.0, %v233
  %v235 = vpop.f32.mrf.mxu0
  %236 = vmatprep.mubr.bf16.mxu0 0
  %237 = vmatmul.mubr.bf16.gmra.mxu0 %v151
  %v238 = vpop.f32.mrf.mxu0
  %v239 = vadd.f32 0.0, %v238
  %v240 = vpop.f32.mrf.mxu0
  %v241 = vpop.f32.mrf.mxu0
  %v242 = vadd.f32 0.0, %v241
  %v243 = vpop.f32.mrf.mxu0
  %244 = vmatprep.mubr.bf16.mxu0 0
  %245 = vmatmul.mubr.bf16.gmra.mxu0 %v154
  %v246 = vpop.f32.mrf.mxu0
  %v247 = vadd.f32 0.0, %v246
  %v248 = vpop.f32.mrf.mxu0
  %v249 = vpop.f32.mrf.mxu0
  %v250 = vadd.f32 0.0, %v249
  %v251 = vpop.f32.mrf.mxu0
  %252 = vdwg.mxu0
  %v269 = vunpack.c.l.b16 %v18
  %v270 = vunpack.c.l.b16 %v19
  %v271 = vunpack.c.l.b16 %v20
  %v272 = vunpack.c.l.b16 %v21
  %v273 = vunpack.c.l.b16 %v22
  %v274 = vunpack.c.l.b16 %v23
  %v275 = vunpack.c.l.b16 %v24
  %v276 = vunpack.c.l.b16 %v25
  %v277 = vunpack.c.l.b16 %v26
  %v278 = vunpack.c.l.b16 %v27
  %v279 = vunpack.c.l.b16 %v28
  %v280 = vunpack.c.l.b16 %v29
  %v281 = vunpack.c.l.b16 %v30
  %v282 = vunpack.c.l.b16 %v31
  %v283 = vunpack.c.l.b16 %v32
  %v284 = vunpack.c.l.b16 %v33
  %v285 = vpack.c.b16 %v270, %v269
  %v286 = vpack.c.b16 %v272, %v271
  %v287 = vpack.c.b16 %v274, %v273
  %v288 = vpack.c.b16 %v276, %v275
  %v289 = vpack.c.b16 %v278, %v277
  %v290 = vpack.c.b16 %v280, %v279
  %v291 = vpack.c.b16 %v282, %v281
  %v292 = vpack.c.b16 %v284, %v283
  %v301 = vunpack.c.l.b16 %v34
  %v302 = vunpack.c.l.b16 %v35
  %v303 = vunpack.c.l.b16 %v36
  %v304 = vunpack.c.l.b16 %v37
  %v305 = vunpack.c.l.b16 %v38
  %v306 = vunpack.c.l.b16 %v39
  %v307 = vunpack.c.l.b16 %v40
  %v308 = vunpack.c.l.b16 %v41
  %v309 = vpack.c.b16 %v302, %v301
  %v310 = vpack.c.b16 %v304, %v303
  %v311 = vpack.c.b16 %v306, %v305
  %v312 = vpack.c.b16 %v308, %v307
  %v318 = vsel %vm131, %v285, 0
  %v321 = vsel %vm131, %v286, 0
  %v324 = vsel %vm131, %v287, 0
  %v327 = vsel %vm131, %v288, 0
  %v330 = vsel %vm131, %v289, 0
  %v333 = vsel %vm131, %v290, 0
  %v336 = vsel %vm131, %v291, 0
  %v339 = vsel %vm131, %v292, 0
  %341 = vmatprep.subr.bf16.mxu0 0
  %342 = vmatpush1.bf16.msra.mxu0 0
  %343 = vmatprep.subr.bf16.mxu0 0
  %344 = vmatpush1.bf16.msra.mxu0 0
  %345 = vmatprep.subr.bf16.mxu0 0
  %346 = vmatpush1.bf16.msra.mxu0 0
  %347 = vmatprep.subr.bf16.mxu0 0
  %348 = vmatpush1.bf16.msra.mxu0 0
  %349 = vmatprep.subr.bf16.mxu0 0
  %350 = vmatpush1.bf16.msra.mxu0 %v312
  %351 = vmatprep.subr.bf16.mxu0 0
  %352 = vmatpush1.bf16.msra.mxu0 %v311
  %353 = vmatprep.subr.bf16.mxu0 0
  %354 = vmatpush1.bf16.msra.mxu0 %v310
  %355 = vmatprep.subr.bf16.mxu0 0
  %356 = vmatpush1.bf16.msra.mxu0 %v309
  %357 = vmatprep.subr.bf16.mxu0 0
  %358 = vmatpush2.bf16.msra.mxu0 0
  %359 = vmatprep.subr.bf16.mxu0 0
  %360 = vmatpush2.bf16.msra.mxu0 0
  %361 = vmatprep.subr.bf16.mxu0 0
  %362 = vmatpush2.bf16.msra.mxu0 0
  %363 = vmatprep.subr.bf16.mxu0 0
  %364 = vmatpush2.bf16.msra.mxu0 0
  %365 = vmatprep.subr.bf16.mxu0 0
  %366 = vmatpush2.bf16.msra.mxu0 0
  %367 = vmatprep.subr.bf16.mxu0 0
  %368 = vmatpush2.bf16.msra.mxu0 0
  %369 = vmatprep.subr.bf16.mxu0 0
  %370 = vmatpush2.bf16.msra.mxu0 0
  %371 = vmatprep.subr.bf16.mxu0 0
  %372 = vmatpush2.bf16.msra.mxu0 0
  %373 = vmatprep.mubr.bf16.mxu0 0
  %374 = vmatmul.mubr.bf16.gmra.mxu0 %v318
  %v375 = vpop.f32.mrf.mxu0
  %v376 = vadd.f32 %v191, %v375
  %v377 = vpop.f32.mrf.mxu0
  %v378 = vpop.f32.mrf.mxu0
  %v379 = vadd.f32 %v194, %v378
  %v380 = vpop.f32.mrf.mxu0
  %381 = vmatprep.mubr.bf16.mxu0 0
  %382 = vmatmul.mubr.bf16.gmra.mxu0 %v321
  %v383 = vpop.f32.mrf.mxu0
  %v384 = vadd.f32 %v199, %v383
  %v385 = vpop.f32.mrf.mxu0
  %v386 = vpop.f32.mrf.mxu0
  %v387 = vadd.f32 %v202, %v386
  %v388 = vpop.f32.mrf.mxu0
  %389 = vmatprep.mubr.bf16.mxu0 0
  %390 = vmatmul.mubr.bf16.gmra.mxu0 %v324
  %v391 = vpop.f32.mrf.mxu0
  %v392 = vadd.f32 %v207, %v391
  %v393 = vpop.f32.mrf.mxu0
  %v394 = vpop.f32.mrf.mxu0
  %v395 = vadd.f32 %v210, %v394
  %v396 = vpop.f32.mrf.mxu0
  %397 = vmatprep.mubr.bf16.mxu0 0
  %398 = vmatmul.mubr.bf16.gmra.mxu0 %v327
  %v399 = vpop.f32.mrf.mxu0
  %v400 = vadd.f32 %v215, %v399
  %v401 = vpop.f32.mrf.mxu0
  %v402 = vpop.f32.mrf.mxu0
  %v403 = vadd.f32 %v218, %v402
  %v404 = vpop.f32.mrf.mxu0
  %405 = vmatprep.mubr.bf16.mxu0 0
  %406 = vmatmul.mubr.bf16.gmra.mxu0 %v330
  %v407 = vpop.f32.mrf.mxu0
  %v408 = vadd.f32 %v223, %v407
  %v409 = vpop.f32.mrf.mxu0
  %v410 = vpop.f32.mrf.mxu0
  %v411 = vadd.f32 %v226, %v410
  %v412 = vpop.f32.mrf.mxu0
  %413 = vmatprep.mubr.bf16.mxu0 0
  %414 = vmatmul.mubr.bf16.gmra.mxu0 %v333
  %v415 = vpop.f32.mrf.mxu0
  %v416 = vadd.f32 %v231, %v415
  %v417 = vpop.f32.mrf.mxu0
  %v418 = vpop.f32.mrf.mxu0
  %v419 = vadd.f32 %v234, %v418
  %v420 = vpop.f32.mrf.mxu0
  %421 = vmatprep.mubr.bf16.mxu0 0
  %422 = vmatmul.mubr.bf16.gmra.mxu0 %v336
  %v423 = vpop.f32.mrf.mxu0
  %v424 = vadd.f32 %v239, %v423
  %v425 = vpop.f32.mrf.mxu0
  %v426 = vpop.f32.mrf.mxu0
  %v427 = vadd.f32 %v242, %v426
  %v428 = vpop.f32.mrf.mxu0
  %429 = vmatprep.mubr.bf16.mxu0 0
  %430 = vmatmul.mubr.bf16.gmra.mxu0 %v339
  %v431 = vpop.f32.mrf.mxu0
  %v432 = vadd.f32 %v247, %v431
  %v433 = vpop.f32.mrf.mxu0
  %v434 = vpop.f32.mrf.mxu0
  %v435 = vadd.f32 %v250, %v434
  %v436 = vpop.f32.mrf.mxu0
  %437 = vdwg.mxu0
  %v438 = vld [vmem:[%s0] sm:$0xf]
  %v439 = vld [vmem:[%s0 + $0x4] sm:$0x1]
  %v440 = vld [vmem:[%s0 + $0x8] sm:$0xf]
  %v441 = vld [vmem:[%s0 + $0xc] sm:$0x1]
  %v442 = vld [vmem:[%s0 + $0x10] sm:$0xf]
  %v443 = vld [vmem:[%s0 + $0x14] sm:$0x1]
  %v444 = vld [vmem:[%s0 + $0x18] sm:$0xf]
  %v445 = vld [vmem:[%s0 + $0x1c] sm:$0x1]
  %v446 = vld [vmem:[%s0 + $0x20] sm:$0xf]
  %v447 = vld [vmem:[%s0 + $0x24] sm:$0x1]
  %v448 = vld [vmem:[%s0 + $0x28] sm:$0xf]
  %v449 = vld [vmem:[%s0 + $0x2c] sm:$0x1]
  %v450 = vld [vmem:[%s0 + $0x30] sm:$0xf]
  %v451 = vld [vmem:[%s0 + $0x34] sm:$0x1]
  %v452 = vld [vmem:[%s0 + $0x38] sm:$0xf]
  %v453 = vld [vmem:[%s0 + $0x3c] sm:$0x1]
  %v454 = vld [vmem:[%s0 + $0x48] sm:$0xf]
  %v455 = vld [vmem:[%s0 + $0x4c] sm:$0x1]
  %v456 = vld [vmem:[%s0 + $0x50] sm:$0xf]
  %v457 = vld [vmem:[%s0 + $0x54] sm:$0x1]
  %v458 = vld [vmem:[%s0 + $0x58] sm:$0xf]
  %v459 = vld [vmem:[%s0 + $0x5c] sm:$0x1]
  %v460 = vld [vmem:[%s0 + $0x60] sm:$0xf]
  %v461 = vld [vmem:[%s0 + $0x64] sm:$0x1]
  %v462 = vld [vmem:[%s0 + $0x68] sm:$0xf]
  %v463 = vld [vmem:[%s0 + $0x6c] sm:$0x1]
  %v464 = vld [vmem:[%s0 + $0x70] sm:$0xf]
  %v465 = vld [vmem:[%s0 + $0x74] sm:$0x1]
  %v466 = vld [vmem:[%s0 + $0x78] sm:$0xf]
  %v467 = vld [vmem:[%s0 + $0x7c] sm:$0x1]
  %v468 = vld [vmem:[%s0 + $0x80] sm:$0xf]
  %v469 = vld [vmem:[%s0 + $0x84] sm:$0x1]
  %vm470 = vsmask.f32 3328
  %vm471 = vsmask.f32 7440
  %vm472 = vmor %vm470, %vm471
  %v474 = vshrl.u32 %v438, 16
  %v476 = vrot.slane %v474, 4
  %v477 = vshll.u32 %v438, 16
  %v479 = vrot.slane %v477, 5
  %v480 = vor.u32 %v476, %v479
  %v481 = vrot.slane %v480, 4
  %v483 = vshll.u32 %v439, 16
  %v485 = vrot.slane %v483, 5
  %v486 = vsel %vm472, %v481, %v485
  %v488 = vshrl.u32 %v440, 16
  %v490 = vrot.slane %v488, 4
  %v491 = vshll.u32 %v440, 16
  %v493 = vrot.slane %v491, 5
  %v494 = vor.u32 %v490, %v493
  %v495 = vrot.slane %v494, 4
  %v497 = vshll.u32 %v441, 16
  %v499 = vrot.slane %v497, 5
  %v500 = vsel %vm472, %v495, %v499
  %v502 = vshrl.u32 %v442, 16
  %v504 = vrot.slane %v502, 4
  %v505 = vshll.u32 %v442, 16
  %v507 = vrot.slane %v505, 5
  %v508 = vor.u32 %v504, %v507
  %v509 = vrot.slane %v508, 4
  %v511 = vshll.u32 %v443, 16
  %v513 = vrot.slane %v511, 5
  %v514 = vsel %vm472, %v509, %v513
  %v516 = vshrl.u32 %v444, 16
  %v518 = vrot.slane %v516, 4
  %v519 = vshll.u32 %v444, 16
  %v521 = vrot.slane %v519, 5
  %v522 = vor.u32 %v518, %v521
  %v523 = vrot.slane %v522, 4
  %v525 = vshll.u32 %v445, 16
  %v527 = vrot.slane %v525, 5
  %v528 = vsel %vm472, %v523, %v527
  %v530 = vshrl.u32 %v446, 16
  %v532 = vrot.slane %v530, 4
  %v533 = vshll.u32 %v446, 16
  %v535 = vrot.slane %v533, 5
  %v536 = vor.u32 %v532, %v535
  %v537 = vrot.slane %v536, 4
  %v539 = vshll.u32 %v447, 16
  %v541 = vrot.slane %v539, 5
  %v542 = vsel %vm472, %v537, %v541
  %v544 = vshrl.u32 %v448, 16
  %v546 = vrot.slane %v544, 4
  %v547 = vshll.u32 %v448, 16
  %v549 = vrot.slane %v547, 5
  %v550 = vor.u32 %v546, %v549
  %v551 = vrot.slane %v550, 4
  %v553 = vshll.u32 %v449, 16
  %v555 = vrot.slane %v553, 5
  %v556 = vsel %vm472, %v551, %v555
  %v558 = vshrl.u32 %v450, 16
  %v560 = vrot.slane %v558, 4
  %v561 = vshll.u32 %v450, 16
  %v563 = vrot.slane %v561, 5
  %v564 = vor.u32 %v560, %v563
  %v565 = vrot.slane %v564, 4
  %v567 = vshll.u32 %v451, 16
  %v569 = vrot.slane %v567, 5
  %v570 = vsel %vm472, %v565, %v569
  %v572 = vshrl.u32 %v452, 16
  %v574 = vrot.slane %v572, 4
  %v575 = vshll.u32 %v452, 16
  %v577 = vrot.slane %v575, 5
  %v578 = vor.u32 %v574, %v577
  %v579 = vrot.slane %v578, 4
  %v581 = vshll.u32 %v453, 16
  %v583 = vrot.slane %v581, 5
  %v584 = vsel %vm472, %v579, %v583
  %v586 = vshrl.u32 %v454, 16
  %v588 = vrot.slane %v586, 4
  %v589 = vshll.u32 %v454, 16
  %v591 = vrot.slane %v589, 5
  %v592 = vor.u32 %v588, %v591
  %v593 = vrot.slane %v592, 4
  %v595 = vshll.u32 %v455, 16
  %v597 = vrot.slane %v595, 5
  %v598 = vsel %vm472, %v593, %v597
  %v600 = vshrl.u32 %v456, 16
  %v602 = vrot.slane %v600, 4
  %v603 = vshll.u32 %v456, 16
  %v605 = vrot.slane %v603, 5
  %v606 = vor.u32 %v602, %v605
  %v607 = vrot.slane %v606, 4
  %v609 = vshll.u32 %v457, 16
  %v611 = vrot.slane %v609, 5
  %v612 = vsel %vm472, %v607, %v611
  %v614 = vshrl.u32 %v458, 16
  %v616 = vrot.slane %v614, 4
  %v617 = vshll.u32 %v458, 16
  %v619 = vrot.slane %v617, 5
  %v620 = vor.u32 %v616, %v619
  %v621 = vrot.slane %v620, 4
  %v623 = vshll.u32 %v459, 16
  %v625 = vrot.slane %v623, 5
  %v626 = vsel %vm472, %v621, %v625
  %v628 = vshrl.u32 %v460, 16
  %v630 = vrot.slane %v628, 4
  %v631 = vshll.u32 %v460, 16
  %v633 = vrot.slane %v631, 5
  %v634 = vor.u32 %v630, %v633
  %v635 = vrot.slane %v634, 4
  %v637 = vshll.u32 %v461, 16
  %v639 = vrot.slane %v637, 5
  %v640 = vsel %vm472, %v635, %v639
  %v642 = vshrl.u32 %v462, 16
  %v644 = vrot.slane %v642, 4
  %v645 = vshll.u32 %v462, 16
  %v647 = vrot.slane %v645, 5
  %v648 = vor.u32 %v644, %v647
  %v649 = vrot.slane %v648, 4
  %v651 = vshll.u32 %v463, 16
  %v653 = vrot.slane %v651, 5
  %v654 = vsel %vm472, %v649, %v653
  %v656 = vshrl.u32 %v464, 16
  %v658 = vrot.slane %v656, 4
  %v659 = vshll.u32 %v464, 16
  %v661 = vrot.slane %v659, 5
  %v662 = vor.u32 %v658, %v661
  %v663 = vrot.slane %v662, 4
  %v665 = vshll.u32 %v465, 16
  %v667 = vrot.slane %v665, 5
  %v668 = vsel %vm472, %v663, %v667
  %v670 = vshrl.u32 %v466, 16
  %v672 = vrot.slane %v670, 4
  %v673 = vshll.u32 %v466, 16
  %v675 = vrot.slane %v673, 5
  %v676 = vor.u32 %v672, %v675
  %v677 = vrot.slane %v676, 4
  %v679 = vshll.u32 %v467, 16
  %v681 = vrot.slane %v679, 5
  %v682 = vsel %vm472, %v677, %v681
  %v684 = vshrl.u32 %v468, 16
  %v686 = vrot.slane %v684, 4
  %v687 = vshll.u32 %v468, 16
  %v689 = vrot.slane %v687, 5
  %v690 = vor.u32 %v686, %v689
  %v691 = vrot.slane %v690, 4
  %v693 = vshll.u32 %v469, 16
  %v695 = vrot.slane %v693, 5
  %v696 = vsel %vm472, %v691, %v695
  %v697 = vld [vmem:[%s1 + $0x40] sm:$0xf]
  %v698 = vld [vmem:[%s1 + $0x44] sm:$0xf]
  %v699 = vld [vmem:[%s1 + $0x48] sm:$0xf]
  %v700 = vld [vmem:[%s1 + $0x4c] sm:$0xf]
  %v701 = vld [vmem:[%s1 + $0x50] sm:$0xf]
  %v702 = vld [vmem:[%s1 + $0x54] sm:$0xf]
  %v703 = vld [vmem:[%s1 + $0x58] sm:$0xf]
  %v704 = vld [vmem:[%s1 + $0x5c] sm:$0xf]
  %v705 = vunpack.c.l.b16 %v486
  %v706 = vunpack.c.l.b16 %v500
  %v707 = vunpack.c.l.b16 %v514
  %v708 = vunpack.c.l.b16 %v528
  %v709 = vunpack.c.l.b16 %v542
  %v710 = vunpack.c.l.b16 %v556
  %v711 = vunpack.c.l.b16 %v570
  %v712 = vunpack.c.l.b16 %v584
  %v713 = vunpack.c.l.b16 %v598
  %v714 = vunpack.c.l.b16 %v612
  %v715 = vunpack.c.l.b16 %v626
  %v716 = vunpack.c.l.b16 %v640
  %v717 = vunpack.c.l.b16 %v654
  %v718 = vunpack.c.l.b16 %v668
  %v719 = vunpack.c.l.b16 %v682
  %v720 = vunpack.c.l.b16 %v696
  %v721 = vpack.c.b16 %v706, %v705
  %v722 = vpack.c.b16 %v708, %v707
  %v723 = vpack.c.b16 %v710, %v709
  %v724 = vpack.c.b16 %v712, %v711
  %v725 = vpack.c.b16 %v714, %v713
  %v726 = vpack.c.b16 %v716, %v715
  %v727 = vpack.c.b16 %v718, %v717
  %v728 = vpack.c.b16 %v720, %v719
  %v737 = vunpack.c.l.b16 %v697
  %v738 = vunpack.c.l.b16 %v698
  %v739 = vunpack.c.l.b16 %v699
  %v740 = vunpack.c.l.b16 %v700
  %v741 = vunpack.c.l.b16 %v701
  %v742 = vunpack.c.l.b16 %v702
  %v743 = vunpack.c.l.b16 %v703
  %v744 = vunpack.c.l.b16 %v704
  %v745 = vpack.c.b16 %v738, %v737
  %v746 = vpack.c.b16 %v740, %v739
  %v747 = vpack.c.b16 %v742, %v741
  %v748 = vpack.c.b16 %v744, %v743
  %v754 = vsel %vm131, %v721, 0
  %v757 = vsel %vm131, %v722, 0
  %v760 = vsel %vm131, %v723, 0
  %v763 = vsel %vm131, %v724, 0
  %v766 = vsel %vm131, %v725, 0
  %v769 = vsel %vm131, %v726, 0
  %v772 = vsel %vm131, %v727, 0
  %v775 = vsel %vm131, %v728, 0
  %777 = vmatprep.subr.bf16.mxu0 0
  %778 = vmatpush1.bf16.msra.mxu0 0
  %779 = vmatprep.subr.bf16.mxu0 0
  %780 = vmatpush1.bf16.msra.mxu0 0
  %781 = vmatprep.subr.bf16.mxu0 0
  %782 = vmatpush1.bf16.msra.mxu0 0
  %783 = vmatprep.subr.bf16.mxu0 0
  %784 = vmatpush1.bf16.msra.mxu0 0
  %785 = vmatprep.subr.bf16.mxu0 0
  %786 = vmatpush1.bf16.msra.mxu0 %v748
  %787 = vmatprep.subr.bf16.mxu0 0
  %788 = vmatpush1.bf16.msra.mxu0 %v747
  %789 = vmatprep.subr.bf16.mxu0 0
  %790 = vmatpush1.bf16.msra.mxu0 %v746
  %791 = vmatprep.subr.bf16.mxu0 0
  %792 = vmatpush1.bf16.msra.mxu0 %v745
  %793 = vmatprep.subr.bf16.mxu0 0
  %794 = vmatpush2.bf16.msra.mxu0 0
  %795 = vmatprep.subr.bf16.mxu0 0
  %796 = vmatpush2.bf16.msra.mxu0 0
  %797 = vmatprep.subr.bf16.mxu0 0
  %798 = vmatpush2.bf16.msra.mxu0 0
  %799 = vmatprep.subr.bf16.mxu0 0
  %800 = vmatpush2.bf16.msra.mxu0 0
  %801 = vmatprep.subr.bf16.mxu0 0
  %802 = vmatpush2.bf16.msra.mxu0 0
  %803 = vmatprep.subr.bf16.mxu0 0
  %804 = vmatpush2.bf16.msra.mxu0 0
  %805 = vmatprep.subr.bf16.mxu0 0
  %806 = vmatpush2.bf16.msra.mxu0 0
  %807 = vmatprep.subr.bf16.mxu0 0
  %808 = vmatpush2.bf16.msra.mxu0 0
  %809 = vmatprep.mubr.bf16.mxu0 0
  %810 = vmatmul.mubr.bf16.gmra.mxu0 %v754
  %v811 = vpop.f32.mrf.mxu0
  %v812 = vadd.f32 0.0, %v811
  %v813 = vpop.f32.mrf.mxu0
  %v814 = vpop.f32.mrf.mxu0
  %v815 = vadd.f32 0.0, %v814
  %v816 = vpop.f32.mrf.mxu0
  %817 = vmatprep.mubr.bf16.mxu0 0
  %818 = vmatmul.mubr.bf16.gmra.mxu0 %v757
  %v819 = vpop.f32.mrf.mxu0
  %v820 = vadd.f32 0.0, %v819
  %v821 = vpop.f32.mrf.mxu0
  %v822 = vpop.f32.mrf.mxu0
  %v823 = vadd.f32 0.0, %v822
  %v824 = vpop.f32.mrf.mxu0
  %825 = vmatprep.mubr.bf16.mxu0 0
  %826 = vmatmul.mubr.bf16.gmra.mxu0 %v760
  %v827 = vpop.f32.mrf.mxu0
  %v828 = vadd.f32 0.0, %v827
  %v829 = vpop.f32.mrf.mxu0
  %v830 = vpop.f32.mrf.mxu0
  %v831 = vadd.f32 0.0, %v830
  %v832 = vpop.f32.mrf.mxu0
  %833 = vmatprep.mubr.bf16.mxu0 0
  %834 = vmatmul.mubr.bf16.gmra.mxu0 %v763
  %v835 = vpop.f32.mrf.mxu0
  %v836 = vadd.f32 0.0, %v835
  %v837 = vpop.f32.mrf.mxu0
  %v838 = vpop.f32.mrf.mxu0
  %v839 = vadd.f32 0.0, %v838
  %v840 = vpop.f32.mrf.mxu0
  %841 = vmatprep.mubr.bf16.mxu0 0
  %842 = vmatmul.mubr.bf16.gmra.mxu0 %v766
  %v843 = vpop.f32.mrf.mxu0
  %v844 = vadd.f32 0.0, %v843
  %v845 = vpop.f32.mrf.mxu0
  %v846 = vpop.f32.mrf.mxu0
  %v847 = vadd.f32 0.0, %v846
  %v848 = vpop.f32.mrf.mxu0
  %849 = vmatprep.mubr.bf16.mxu0 0
  %850 = vmatmul.mubr.bf16.gmra.mxu0 %v769
  %v851 = vpop.f32.mrf.mxu0
  %v852 = vadd.f32 0.0, %v851
  %v853 = vpop.f32.mrf.mxu0
  %v854 = vpop.f32.mrf.mxu0
  %v855 = vadd.f32 0.0, %v854
  %v856 = vpop.f32.mrf.mxu0
  %857 = vmatprep.mubr.bf16.mxu0 0
  %858 = vmatmul.mubr.bf16.gmra.mxu0 %v772
  %v859 = vpop.f32.mrf.mxu0
  %v860 = vadd.f32 0.0, %v859
  %v861 = vpop.f32.mrf.mxu0
  %v862 = vpop.f32.mrf.mxu0
  %v863 = vadd.f32 0.0, %v862
  %v864 = vpop.f32.mrf.mxu0
  %865 = vmatprep.mubr.bf16.mxu0 0
  %866 = vmatmul.mubr.bf16.gmra.mxu0 %v775
  %v867 = vpop.f32.mrf.mxu0
  %v868 = vadd.f32 0.0, %v867
  %v869 = vpop.f32.mrf.mxu0
  %v870 = vpop.f32.mrf.mxu0
  %v871 = vadd.f32 0.0, %v870
  %v872 = vpop.f32.mrf.mxu0
  %873 = vdwg.mxu0
  %v874 = vadd.f32 %v376, %v812
  %v875 = vadd.f32 %v379, %v815
  %v876 = vadd.f32 %v384, %v820
  %v877 = vadd.f32 %v387, %v823
  %v878 = vadd.f32 %v392, %v828
  %v879 = vadd.f32 %v395, %v831
  %v880 = vadd.f32 %v400, %v836
  %v881 = vadd.f32 %v403, %v839
  %v882 = vadd.f32 %v408, %v844
  %v883 = vadd.f32 %v411, %v847
  %v884 = vadd.f32 %v416, %v852
  %v885 = vadd.f32 %v419, %v855
  %v886 = vadd.f32 %v424, %v860
  %v887 = vadd.f32 %v427, %v863
  %v888 = vadd.f32 %v432, %v868
  %v889 = vadd.f32 %v435, %v871
  %s890 = scalar_lea.vmem %s0, 288
  %v891 = vld [vmem:[%s890] sm:$0xf]
  %v892 = vld [vmem:[%s890 + $0x8] sm:$0xf]
  %v893 = vld [vmem:[%s890 + $0x10] sm:$0xf]
  %v894 = vld [vmem:[%s890 + $0x18] sm:$0xf]
  %v895 = vld [vmem:[%s890 + $0x20] sm:$0xf]
  %v896 = vld [vmem:[%s890 + $0x28] sm:$0xf]
  %v897 = vld [vmem:[%s890 + $0x30] sm:$0xf]
  %v898 = vld [vmem:[%s890 + $0x38] sm:$0xf]
  %v899 = vld [vmem:[%s890 + $0x48] sm:$0xf]
  %v900 = vld [vmem:[%s890 + $0x50] sm:$0xf]
  %v901 = vld [vmem:[%s890 + $0x58] sm:$0xf]
  %v902 = vld [vmem:[%s890 + $0x60] sm:$0xf]
  %v903 = vld [vmem:[%s890 + $0x68] sm:$0xf]
  %v904 = vld [vmem:[%s890 + $0x70] sm:$0xf]
  %v905 = vld [vmem:[%s890 + $0x78] sm:$0xf]
  %v906 = vld [vmem:[%s890 + $0x80] sm:$0xf]
  %v907 = vld [vmem:[%s1 + $0x60] sm:$0xf]
  %v908 = vld [vmem:[%s1 + $0x64] sm:$0xf]
  %v909 = vld [vmem:[%s1 + $0x68] sm:$0xf]
  %v910 = vld [vmem:[%s1 + $0x6c] sm:$0xf]
  %v911 = vld [vmem:[%s1 + $0x70] sm:$0xf]
  %v912 = vld [vmem:[%s1 + $0x74] sm:$0xf]
  %v913 = vld [vmem:[%s1 + $0x78] sm:$0xf]
  %v914 = vld [vmem:[%s1 + $0x7c] sm:$0xf]
  %v931 = vunpack.c.l.b16 %v891
  %v932 = vunpack.c.l.b16 %v892
  %v933 = vunpack.c.l.b16 %v893
  %v934 = vunpack.c.l.b16 %v894
  %v935 = vunpack.c.l.b16 %v895
  %v936 = vunpack.c.l.b16 %v896
  %v937 = vunpack.c.l.b16 %v897
  %v938 = vunpack.c.l.b16 %v898
  %v939 = vunpack.c.l.b16 %v899
  %v940 = vunpack.c.l.b16 %v900
  %v941 = vunpack.c.l.b16 %v901
  %v942 = vunpack.c.l.b16 %v902
  %v943 = vunpack.c.l.b16 %v903
  %v944 = vunpack.c.l.b16 %v904
  %v945 = vunpack.c.l.b16 %v905
  %v946 = vunpack.c.l.b16 %v906
  %v947 = vpack.c.b16 %v932, %v931
  %v948 = vpack.c.b16 %v934, %v933
  %v949 = vpack.c.b16 %v936, %v935
  %v950 = vpack.c.b16 %v938, %v937
  %v951 = vpack.c.b16 %v940, %v939
  %v952 = vpack.c.b16 %v942, %v941
  %v953 = vpack.c.b16 %v944, %v943
  %v954 = vpack.c.b16 %v946, %v945
  %v963 = vunpack.c.l.b16 %v907
  %v964 = vunpack.c.l.b16 %v908
  %v965 = vunpack.c.l.b16 %v909
  %v966 = vunpack.c.l.b16 %v910
  %v967 = vunpack.c.l.b16 %v911
  %v968 = vunpack.c.l.b16 %v912
  %v969 = vunpack.c.l.b16 %v913
  %v970 = vunpack.c.l.b16 %v914
  %v971 = vpack.c.b16 %v964, %v963
  %v972 = vpack.c.b16 %v966, %v965
  %v973 = vpack.c.b16 %v968, %v967
  %v974 = vpack.c.b16 %v970, %v969
  %v980 = vsel %vm131, %v947, 0
  %v983 = vsel %vm131, %v948, 0
  %v986 = vsel %vm131, %v949, 0
  %v989 = vsel %vm131, %v950, 0
  %v992 = vsel %vm131, %v951, 0
  %v995 = vsel %vm131, %v952, 0
  %v998 = vsel %vm131, %v953, 0
  %v1001 = vsel %vm131, %v954, 0
  %1003 = vmatprep.subr.bf16.mxu0 0
  %1004 = vmatpush1.bf16.msra.mxu0 0
  %1005 = vmatprep.subr.bf16.mxu0 0
  %1006 = vmatpush1.bf16.msra.mxu0 0
  %1007 = vmatprep.subr.bf16.mxu0 0
  %1008 = vmatpush1.bf16.msra.mxu0 0
  %1009 = vmatprep.subr.bf16.mxu0 0
  %1010 = vmatpush1.bf16.msra.mxu0 0
  %1011 = vmatprep.subr.bf16.mxu0 0
  %1012 = vmatpush1.bf16.msra.mxu0 %v974
  %1013 = vmatprep.subr.bf16.mxu0 0
  %1014 = vmatpush1.bf16.msra.mxu0 %v973
  %1015 = vmatprep.subr.bf16.mxu0 0
  %1016 = vmatpush1.bf16.msra.mxu0 %v972
  %1017 = vmatprep.subr.bf16.mxu0 0
  %1018 = vmatpush1.bf16.msra.mxu0 %v971
  %1019 = vmatprep.subr.bf16.mxu0 0
  %1020 = vmatpush2.bf16.msra.mxu0 0
  %1021 = vmatprep.subr.bf16.mxu0 0
  %1022 = vmatpush2.bf16.msra.mxu0 0
  %1023 = vmatprep.subr.bf16.mxu0 0
  %1024 = vmatpush2.bf16.msra.mxu0 0
  %1025 = vmatprep.subr.bf16.mxu0 0
  %1026 = vmatpush2.bf16.msra.mxu0 0
  %1027 = vmatprep.subr.bf16.mxu0 0
  %1028 = vmatpush2.bf16.msra.mxu0 0
  %1029 = vmatprep.subr.bf16.mxu0 0
  %1030 = vmatpush2.bf16.msra.mxu0 0
  %1031 = vmatprep.subr.bf16.mxu0 0
  %1032 = vmatpush2.bf16.msra.mxu0 0
  %1033 = vmatprep.subr.bf16.mxu0 0
  %1034 = vmatpush2.bf16.msra.mxu0 0
  %1035 = vmatprep.mubr.bf16.mxu0 0
  %1036 = vmatmul.mubr.bf16.gmra.mxu0 %v980
  %v1037 = vpop.f32.mrf.mxu0
  %v1038 = vadd.f32 0.0, %v1037
  %v1039 = vpop.f32.mrf.mxu0
  %v1040 = vpop.f32.mrf.mxu0
  %v1041 = vadd.f32 0.0, %v1040
  %v1042 = vpop.f32.mrf.mxu0
  %1043 = vmatprep.mubr.bf16.mxu0 0
  %1044 = vmatmul.mubr.bf16.gmra.mxu0 %v983
  %v1045 = vpop.f32.mrf.mxu0
  %v1046 = vadd.f32 0.0, %v1045
  %v1047 = vpop.f32.mrf.mxu0
  %v1048 = vpop.f32.mrf.mxu0
  %v1049 = vadd.f32 0.0, %v1048
  %v1050 = vpop.f32.mrf.mxu0
  %1051 = vmatprep.mubr.bf16.mxu0 0
  %1052 = vmatmul.mubr.bf16.gmra.mxu0 %v986
  %v1053 = vpop.f32.mrf.mxu0
  %v1054 = vadd.f32 0.0, %v1053
  %v1055 = vpop.f32.mrf.mxu0
  %v1056 = vpop.f32.mrf.mxu0
  %v1057 = vadd.f32 0.0, %v1056
  %v1058 = vpop.f32.mrf.mxu0
  %1059 = vmatprep.mubr.bf16.mxu0 0
  %1060 = vmatmul.mubr.bf16.gmra.mxu0 %v989
  %v1061 = vpop.f32.mrf.mxu0
  %v1062 = vadd.f32 0.0, %v1061
  %v1063 = vpop.f32.mrf.mxu0
  %v1064 = vpop.f32.mrf.mxu0
  %v1065 = vadd.f32 0.0, %v1064
  %v1066 = vpop.f32.mrf.mxu0
  %1067 = vmatprep.mubr.bf16.mxu0 0
  %1068 = vmatmul.mubr.bf16.gmra.mxu0 %v992
  %v1069 = vpop.f32.mrf.mxu0
  %v1070 = vadd.f32 0.0, %v1069
  %v1071 = vpop.f32.mrf.mxu0
  %v1072 = vpop.f32.mrf.mxu0
  %v1073 = vadd.f32 0.0, %v1072
  %v1074 = vpop.f32.mrf.mxu0
  %1075 = vmatprep.mubr.bf16.mxu0 0
  %1076 = vmatmul.mubr.bf16.gmra.mxu0 %v995
  %v1077 = vpop.f32.mrf.mxu0
  %v1078 = vadd.f32 0.0, %v1077
  %v1079 = vpop.f32.mrf.mxu0
  %v1080 = vpop.f32.mrf.mxu0
  %v1081 = vadd.f32 0.0, %v1080
  %v1082 = vpop.f32.mrf.mxu0
  %1083 = vmatprep.mubr.bf16.mxu0 0
  %1084 = vmatmul.mubr.bf16.gmra.mxu0 %v998
  %v1085 = vpop.f32.mrf.mxu0
  %v1086 = vadd.f32 0.0, %v1085
  %v1087 = vpop.f32.mrf.mxu0
  %v1088 = vpop.f32.mrf.mxu0
  %v1089 = vadd.f32 0.0, %v1088
  %v1090 = vpop.f32.mrf.mxu0
  %1091 = vmatprep.mubr.bf16.mxu0 0
  %1092 = vmatmul.mubr.bf16.gmra.mxu0 %v1001
  %v1093 = vpop.f32.mrf.mxu0
  %v1094 = vadd.f32 0.0, %v1093
  %v1095 = vpop.f32.mrf.mxu0
  %v1096 = vpop.f32.mrf.mxu0
  %v1097 = vadd.f32 0.0, %v1096
  %v1098 = vpop.f32.mrf.mxu0
  %1099 = vdwg.mxu0
  %v1100 = vadd.f32 %v874, %v1038
  %v1101 = vadd.f32 %v875, %v1041
  %v1102 = vadd.f32 %v876, %v1046
  %v1103 = vadd.f32 %v877, %v1049
  %v1104 = vadd.f32 %v878, %v1054
  %v1105 = vadd.f32 %v879, %v1057
  %v1106 = vadd.f32 %v880, %v1062
  %v1107 = vadd.f32 %v881, %v1065
  %v1108 = vadd.f32 %v882, %v1070
  %v1109 = vadd.f32 %v883, %v1073
  %v1110 = vadd.f32 %v884, %v1078
  %v1111 = vadd.f32 %v885, %v1081
  %v1112 = vadd.f32 %v886, %v1086
  %v1113 = vadd.f32 %v887, %v1089
  %v1114 = vadd.f32 %v888, %v1094
  %v1115 = vadd.f32 %v889, %v1097
  %s1116 = scalar_lea.vmem %s0, 432
  %v1117 = vld [vmem:[%s1116] sm:$0xf]
  %v1118 = vld [vmem:[%s1116 + $0x8] sm:$0xf]
  %v1119 = vld [vmem:[%s1116 + $0x10] sm:$0xf]
  %v1120 = vld [vmem:[%s1116 + $0x18] sm:$0xf]
  %v1121 = vld [vmem:[%s1116 + $0x20] sm:$0xf]
  %v1122 = vld [vmem:[%s1116 + $0x28] sm:$0xf]
  %v1123 = vld [vmem:[%s1116 + $0x30] sm:$0xf]
  %v1124 = vld [vmem:[%s1116 + $0x38] sm:$0xf]
  %v1125 = vld [vmem:[%s1116 + $0x48] sm:$0xf]
  %v1126 = vld [vmem:[%s1116 + $0x50] sm:$0xf]
  %v1127 = vld [vmem:[%s1116 + $0x58] sm:$0xf]
  %v1128 = vld [vmem:[%s1116 + $0x60] sm:$0xf]
  %v1129 = vld [vmem:[%s1116 + $0x68] sm:$0xf]
  %v1130 = vld [vmem:[%s1116 + $0x70] sm:$0xf]
  %v1131 = vld [vmem:[%s1116 + $0x78] sm:$0xf]
  %v1132 = vld [vmem:[%s1116 + $0x80] sm:$0xf]
  %v1133 = vld [vmem:[%s1 + $0x80] sm:$0xf]
  %v1134 = vld [vmem:[%s1 + $0x84] sm:$0xf]
  %v1135 = vld [vmem:[%s1 + $0x88] sm:$0xf]
  %v1136 = vld [vmem:[%s1 + $0x8c] sm:$0xf]
  %v1137 = vld [vmem:[%s1 + $0x90] sm:$0xf]
  %v1138 = vld [vmem:[%s1 + $0x94] sm:$0xf]
  %v1139 = vld [vmem:[%s1 + $0x98] sm:$0xf]
  %v1140 = vld [vmem:[%s1 + $0x9c] sm:$0xf]
  %v1157 = vunpack.c.l.b16 %v1117
  %v1158 = vunpack.c.l.b16 %v1118
  %v1159 = vunpack.c.l.b16 %v1119
  %v1160 = vunpack.c.l.b16 %v1120
  %v1161 = vunpack.c.l.b16 %v1121
  %v1162 = vunpack.c.l.b16 %v1122
  %v1163 = vunpack.c.l.b16 %v1123
  %v1164 = vunpack.c.l.b16 %v1124
  %v1165 = vunpack.c.l.b16 %v1125
  %v1166 = vunpack.c.l.b16 %v1126
  %v1167 = vunpack.c.l.b16 %v1127
  %v1168 = vunpack.c.l.b16 %v1128
  %v1169 = vunpack.c.l.b16 %v1129
  %v1170 = vunpack.c.l.b16 %v1130
  %v1171 = vunpack.c.l.b16 %v1131
  %v1172 = vunpack.c.l.b16 %v1132
  %v1173 = vpack.c.b16 %v1158, %v1157
  %v1174 = vpack.c.b16 %v1160, %v1159
  %v1175 = vpack.c.b16 %v1162, %v1161
  %v1176 = vpack.c.b16 %v1164, %v1163
  %v1177 = vpack.c.b16 %v1166, %v1165
  %v1178 = vpack.c.b16 %v1168, %v1167
  %v1179 = vpack.c.b16 %v1170, %v1169
  %v1180 = vpack.c.b16 %v1172, %v1171
  %v1189 = vunpack.c.l.b16 %v1133
  %v1190 = vunpack.c.l.b16 %v1134
  %v1191 = vunpack.c.l.b16 %v1135
  %v1192 = vunpack.c.l.b16 %v1136
  %v1193 = vunpack.c.l.b16 %v1137
  %v1194 = vunpack.c.l.b16 %v1138
  %v1195 = vunpack.c.l.b16 %v1139
  %v1196 = vunpack.c.l.b16 %v1140
  %v1197 = vpack.c.b16 %v1190, %v1189
  %v1198 = vpack.c.b16 %v1192, %v1191
  %v1199 = vpack.c.b16 %v1194, %v1193
  %v1200 = vpack.c.b16 %v1196, %v1195
  %v1206 = vsel %vm131, %v1173, 0
  %v1209 = vsel %vm131, %v1174, 0
  %v1212 = vsel %vm131, %v1175, 0
  %v1215 = vsel %vm131, %v1176, 0
  %v1218 = vsel %vm131, %v1177, 0
  %v1221 = vsel %vm131, %v1178, 0
  %v1224 = vsel %vm131, %v1179, 0
  %v1227 = vsel %vm131, %v1180, 0
  %1229 = vmatprep.subr.bf16.mxu0 0
  %1230 = vmatpush1.bf16.msra.mxu0 0
  %1231 = vmatprep.subr.bf16.mxu0 0
  %1232 = vmatpush1.bf16.msra.mxu0 0
  %1233 = vmatprep.subr.bf16.mxu0 0
  %1234 = vmatpush1.bf16.msra.mxu0 0
  %1235 = vmatprep.subr.bf16.mxu0 0
  %1236 = vmatpush1.bf16.msra.mxu0 0
  %1237 = vmatprep.subr.bf16.mxu0 0
  %1238 = vmatpush1.bf16.msra.mxu0 %v1200
  %1239 = vmatprep.subr.bf16.mxu0 0
  %1240 = vmatpush1.bf16.msra.mxu0 %v1199
  %1241 = vmatprep.subr.bf16.mxu0 0
  %1242 = vmatpush1.bf16.msra.mxu0 %v1198
  %1243 = vmatprep.subr.bf16.mxu0 0
  %1244 = vmatpush1.bf16.msra.mxu0 %v1197
  %1245 = vmatprep.subr.bf16.mxu0 0
  %1246 = vmatpush2.bf16.msra.mxu0 0
  %1247 = vmatprep.subr.bf16.mxu0 0
  %1248 = vmatpush2.bf16.msra.mxu0 0
  %1249 = vmatprep.subr.bf16.mxu0 0
  %1250 = vmatpush2.bf16.msra.mxu0 0
  %1251 = vmatprep.subr.bf16.mxu0 0
  %1252 = vmatpush2.bf16.msra.mxu0 0
  %1253 = vmatprep.subr.bf16.mxu0 0
  %1254 = vmatpush2.bf16.msra.mxu0 0
  %1255 = vmatprep.subr.bf16.mxu0 0
  %1256 = vmatpush2.bf16.msra.mxu0 0
  %1257 = vmatprep.subr.bf16.mxu0 0
  %1258 = vmatpush2.bf16.msra.mxu0 0
  %1259 = vmatprep.subr.bf16.mxu0 0
  %1260 = vmatpush2.bf16.msra.mxu0 0
  %1261 = vmatprep.mubr.bf16.mxu0 0
  %1262 = vmatmul.mubr.bf16.gmra.mxu0 %v1206
  %v1263 = vpop.f32.mrf.mxu0
  %v1264 = vadd.f32 0.0, %v1263
  %v1265 = vpop.f32.mrf.mxu0
  %v1266 = vpop.f32.mrf.mxu0
  %v1267 = vadd.f32 0.0, %v1266
  %v1268 = vpop.f32.mrf.mxu0
  %1269 = vmatprep.mubr.bf16.mxu0 0
  %1270 = vmatmul.mubr.bf16.gmra.mxu0 %v1209
  %v1271 = vpop.f32.mrf.mxu0
  %v1272 = vadd.f32 0.0, %v1271
  %v1273 = vpop.f32.mrf.mxu0
  %v1274 = vpop.f32.mrf.mxu0
  %v1275 = vadd.f32 0.0, %v1274
  %v1276 = vpop.f32.mrf.mxu0
  %1277 = vmatprep.mubr.bf16.mxu0 0
  %1278 = vmatmul.mubr.bf16.gmra.mxu0 %v1212
  %v1279 = vpop.f32.mrf.mxu0
  %v1280 = vadd.f32 0.0, %v1279
  %v1281 = vpop.f32.mrf.mxu0
  %v1282 = vpop.f32.mrf.mxu0
  %v1283 = vadd.f32 0.0, %v1282
  %v1284 = vpop.f32.mrf.mxu0
  %1285 = vmatprep.mubr.bf16.mxu0 0
  %1286 = vmatmul.mubr.bf16.gmra.mxu0 %v1215
  %v1287 = vpop.f32.mrf.mxu0
  %v1288 = vadd.f32 0.0, %v1287
  %v1289 = vpop.f32.mrf.mxu0
  %v1290 = vpop.f32.mrf.mxu0
  %v1291 = vadd.f32 0.0, %v1290
  %v1292 = vpop.f32.mrf.mxu0
  %1293 = vmatprep.mubr.bf16.mxu0 0
  %1294 = vmatmul.mubr.bf16.gmra.mxu0 %v1218
  %v1295 = vpop.f32.mrf.mxu0
  %v1296 = vadd.f32 0.0, %v1295
  %v1297 = vpop.f32.mrf.mxu0
  %v1298 = vpop.f32.mrf.mxu0
  %v1299 = vadd.f32 0.0, %v1298
  %v1300 = vpop.f32.mrf.mxu0
  %1301 = vmatprep.mubr.bf16.mxu0 0
  %1302 = vmatmul.mubr.bf16.gmra.mxu0 %v1221
  %v1303 = vpop.f32.mrf.mxu0
  %v1304 = vadd.f32 0.0, %v1303
  %v1305 = vpop.f32.mrf.mxu0
  %v1306 = vpop.f32.mrf.mxu0
  %v1307 = vadd.f32 0.0, %v1306
  %v1308 = vpop.f32.mrf.mxu0
  %1309 = vmatprep.mubr.bf16.mxu0 0
  %1310 = vmatmul.mubr.bf16.gmra.mxu0 %v1224
  %v1311 = vpop.f32.mrf.mxu0
  %v1312 = vadd.f32 0.0, %v1311
  %v1313 = vpop.f32.mrf.mxu0
  %v1314 = vpop.f32.mrf.mxu0
  %v1315 = vadd.f32 0.0, %v1314
  %v1316 = vpop.f32.mrf.mxu0
  %1317 = vmatprep.mubr.bf16.mxu0 0
  %1318 = vmatmul.mubr.bf16.gmra.mxu0 %v1227
  %v1319 = vpop.f32.mrf.mxu0
  %v1320 = vadd.f32 0.0, %v1319
  %v1321 = vpop.f32.mrf.mxu0
  %v1322 = vpop.f32.mrf.mxu0
  %v1323 = vadd.f32 0.0, %v1322
  %v1324 = vpop.f32.mrf.mxu0
  %1325 = vdwg.mxu0
  %v1326 = vadd.f32 %v1100, %v1264
  %v1327 = vadd.f32 %v1101, %v1267
  %v1328 = vadd.f32 %v1102, %v1272
  %v1329 = vadd.f32 %v1103, %v1275
  %v1330 = vadd.f32 %v1104, %v1280
  %v1331 = vadd.f32 %v1105, %v1283
  %v1332 = vadd.f32 %v1106, %v1288
  %v1333 = vadd.f32 %v1107, %v1291
  %v1334 = vadd.f32 %v1108, %v1296
  %v1335 = vadd.f32 %v1109, %v1299
  %v1336 = vadd.f32 %v1110, %v1304
  %v1337 = vadd.f32 %v1111, %v1307
  %v1338 = vadd.f32 %v1112, %v1312
  %v1339 = vadd.f32 %v1113, %v1315
  %v1340 = vadd.f32 %v1114, %v1320
  %v1341 = vadd.f32 %v1115, %v1323
  %v1342 = vld [vmem:[%s890] sm:$0xf]
  %v1343 = vld [vmem:[%s890 + $0x4] sm:$0x1]
  %v1344 = vld [vmem:[%s890 + $0x8] sm:$0xf]
  %v1345 = vld [vmem:[%s890 + $0xc] sm:$0x1]
  %v1346 = vld [vmem:[%s890 + $0x10] sm:$0xf]
  %v1347 = vld [vmem:[%s890 + $0x14] sm:$0x1]
  %v1348 = vld [vmem:[%s890 + $0x18] sm:$0xf]
  %v1349 = vld [vmem:[%s890 + $0x1c] sm:$0x1]
  %v1350 = vld [vmem:[%s890 + $0x20] sm:$0xf]
  %v1351 = vld [vmem:[%s890 + $0x24] sm:$0x1]
  %v1352 = vld [vmem:[%s890 + $0x28] sm:$0xf]
  %v1353 = vld [vmem:[%s890 + $0x2c] sm:$0x1]
  %v1354 = vld [vmem:[%s890 + $0x30] sm:$0xf]
  %v1355 = vld [vmem:[%s890 + $0x34] sm:$0x1]
  %v1356 = vld [vmem:[%s890 + $0x38] sm:$0xf]
  %v1357 = vld [vmem:[%s890 + $0x3c] sm:$0x1]
  %v1358 = vld [vmem:[%s890 + $0x48] sm:$0xf]
  %v1359 = vld [vmem:[%s890 + $0x4c] sm:$0x1]
  %v1360 = vld [vmem:[%s890 + $0x50] sm:$0xf]
  %v1361 = vld [vmem:[%s890 + $0x54] sm:$0x1]
  %v1362 = vld [vmem:[%s890 + $0x58] sm:$0xf]
  %v1363 = vld [vmem:[%s890 + $0x5c] sm:$0x1]
  %v1364 = vld [vmem:[%s890 + $0x60] sm:$0xf]
  %v1365 = vld [vmem:[%s890 + $0x64] sm:$0x1]
  %v1366 = vld [vmem:[%s890 + $0x68] sm:$0xf]
  %v1367 = vld [vmem:[%s890 + $0x6c] sm:$0x1]
  %v1368 = vld [vmem:[%s890 + $0x70] sm:$0xf]
  %v1369 = vld [vmem:[%s890 + $0x74] sm:$0x1]
  %v1370 = vld [vmem:[%s890 + $0x78] sm:$0xf]
  %v1371 = vld [vmem:[%s890 + $0x7c] sm:$0x1]
  %v1372 = vld [vmem:[%s890 + $0x80] sm:$0xf]
  %v1373 = vld [vmem:[%s890 + $0x84] sm:$0x1]
  %v1375 = vshrl.u32 %v1342, 16
  %v1377 = vrot.slane %v1375, 4
  %v1378 = vshll.u32 %v1342, 16
  %v1380 = vrot.slane %v1378, 5
  %v1381 = vor.u32 %v1377, %v1380
  %v1382 = vrot.slane %v1381, 4
  %v1384 = vshll.u32 %v1343, 16
  %v1386 = vrot.slane %v1384, 5
  %v1387 = vsel %vm472, %v1382, %v1386
  %v1389 = vshrl.u32 %v1344, 16
  %v1391 = vrot.slane %v1389, 4
  %v1392 = vshll.u32 %v1344, 16
  %v1394 = vrot.slane %v1392, 5
  %v1395 = vor.u32 %v1391, %v1394
  %v1396 = vrot.slane %v1395, 4
  %v1398 = vshll.u32 %v1345, 16
  %v1400 = vrot.slane %v1398, 5
  %v1401 = vsel %vm472, %v1396, %v1400
  %v1403 = vshrl.u32 %v1346, 16
  %v1405 = vrot.slane %v1403, 4
  %v1406 = vshll.u32 %v1346, 16
  %v1408 = vrot.slane %v1406, 5
  %v1409 = vor.u32 %v1405, %v1408
  %v1410 = vrot.slane %v1409, 4
  %v1412 = vshll.u32 %v1347, 16
  %v1414 = vrot.slane %v1412, 5
  %v1415 = vsel %vm472, %v1410, %v1414
  %v1417 = vshrl.u32 %v1348, 16
  %v1419 = vrot.slane %v1417, 4
  %v1420 = vshll.u32 %v1348, 16
  %v1422 = vrot.slane %v1420, 5
  %v1423 = vor.u32 %v1419, %v1422
  %v1424 = vrot.slane %v1423, 4
  %v1426 = vshll.u32 %v1349, 16
  %v1428 = vrot.slane %v1426, 5
  %v1429 = vsel %vm472, %v1424, %v1428
  %v1431 = vshrl.u32 %v1350, 16
  %v1433 = vrot.slane %v1431, 4
  %v1434 = vshll.u32 %v1350, 16
  %v1436 = vrot.slane %v1434, 5
  %v1437 = vor.u32 %v1433, %v1436
  %v1438 = vrot.slane %v1437, 4
  %v1440 = vshll.u32 %v1351, 16
  %v1442 = vrot.slane %v1440, 5
  %v1443 = vsel %vm472, %v1438, %v1442
  %v1445 = vshrl.u32 %v1352, 16
  %v1447 = vrot.slane %v1445, 4
  %v1448 = vshll.u32 %v1352, 16
  %v1450 = vrot.slane %v1448, 5
  %v1451 = vor.u32 %v1447, %v1450
  %v1452 = vrot.slane %v1451, 4
  %v1454 = vshll.u32 %v1353, 16
  %v1456 = vrot.slane %v1454, 5
  %v1457 = vsel %vm472, %v1452, %v1456
  %v1459 = vshrl.u32 %v1354, 16
  %v1461 = vrot.slane %v1459, 4
  %v1462 = vshll.u32 %v1354, 16
  %v1464 = vrot.slane %v1462, 5
  %v1465 = vor.u32 %v1461, %v1464
  %v1466 = vrot.slane %v1465, 4
  %v1468 = vshll.u32 %v1355, 16
  %v1470 = vrot.slane %v1468, 5
  %v1471 = vsel %vm472, %v1466, %v1470
  %v1473 = vshrl.u32 %v1356, 16
  %v1475 = vrot.slane %v1473, 4
  %v1476 = vshll.u32 %v1356, 16
  %v1478 = vrot.slane %v1476, 5
  %v1479 = vor.u32 %v1475, %v1478
  %v1480 = vrot.slane %v1479, 4
  %v1482 = vshll.u32 %v1357, 16
  %v1484 = vrot.slane %v1482, 5
  %v1485 = vsel %vm472, %v1480, %v1484
  %v1487 = vshrl.u32 %v1358, 16
  %v1489 = vrot.slane %v1487, 4
  %v1490 = vshll.u32 %v1358, 16
  %v1492 = vrot.slane %v1490, 5
  %v1493 = vor.u32 %v1489, %v1492
  %v1494 = vrot.slane %v1493, 4
  %v1496 = vshll.u32 %v1359, 16
  %v1498 = vrot.slane %v1496, 5
  %v1499 = vsel %vm472, %v1494, %v1498
  %v1501 = vshrl.u32 %v1360, 16
  %v1503 = vrot.slane %v1501, 4
  %v1504 = vshll.u32 %v1360, 16
  %v1506 = vrot.slane %v1504, 5
  %v1507 = vor.u32 %v1503, %v1506
  %v1508 = vrot.slane %v1507, 4
  %v1510 = vshll.u32 %v1361, 16
  %v1512 = vrot.slane %v1510, 5
  %v1513 = vsel %vm472, %v1508, %v1512
  %v1515 = vshrl.u32 %v1362, 16
  %v1517 = vrot.slane %v1515, 4
  %v1518 = vshll.u32 %v1362, 16
  %v1520 = vrot.slane %v1518, 5
  %v1521 = vor.u32 %v1517, %v1520
  %v1522 = vrot.slane %v1521, 4
  %v1524 = vshll.u32 %v1363, 16
  %v1526 = vrot.slane %v1524, 5
  %v1527 = vsel %vm472, %v1522, %v1526
  %v1529 = vshrl.u32 %v1364, 16
  %v1531 = vrot.slane %v1529, 4
  %v1532 = vshll.u32 %v1364, 16
  %v1534 = vrot.slane %v1532, 5
  %v1535 = vor.u32 %v1531, %v1534
  %v1536 = vrot.slane %v1535, 4
  %v1538 = vshll.u32 %v1365, 16
  %v1540 = vrot.slane %v1538, 5
  %v1541 = vsel %vm472, %v1536, %v1540
  %v1543 = vshrl.u32 %v1366, 16
  %v1545 = vrot.slane %v1543, 4
  %v1546 = vshll.u32 %v1366, 16
  %v1548 = vrot.slane %v1546, 5
  %v1549 = vor.u32 %v1545, %v1548
  %v1550 = vrot.slane %v1549, 4
  %v1552 = vshll.u32 %v1367, 16
  %v1554 = vrot.slane %v1552, 5
  %v1555 = vsel %vm472, %v1550, %v1554
  %v1557 = vshrl.u32 %v1368, 16
  %v1559 = vrot.slane %v1557, 4
  %v1560 = vshll.u32 %v1368, 16
  %v1562 = vrot.slane %v1560, 5
  %v1563 = vor.u32 %v1559, %v1562
  %v1564 = vrot.slane %v1563, 4
  %v1566 = vshll.u32 %v1369, 16
  %v1568 = vrot.slane %v1566, 5
  %v1569 = vsel %vm472, %v1564, %v1568
  %v1571 = vshrl.u32 %v1370, 16
  %v1573 = vrot.slane %v1571, 4
  %v1574 = vshll.u32 %v1370, 16
  %v1576 = vrot.slane %v1574, 5
  %v1577 = vor.u32 %v1573, %v1576
  %v1578 = vrot.slane %v1577, 4
  %v1580 = vshll.u32 %v1371, 16
  %v1582 = vrot.slane %v1580, 5
  %v1583 = vsel %vm472, %v1578, %v1582
  %v1585 = vshrl.u32 %v1372, 16
  %v1587 = vrot.slane %v1585, 4
  %v1588 = vshll.u32 %v1372, 16
  %v1590 = vrot.slane %v1588, 5
  %v1591 = vor.u32 %v1587, %v1590
  %v1592 = vrot.slane %v1591, 4
  %v1594 = vshll.u32 %v1373, 16
  %v1596 = vrot.slane %v1594, 5
  %v1597 = vsel %vm472, %v1592, %v1596
  %v1598 = vld [vmem:[%s1 + $0xa0] sm:$0xf]
  %v1599 = vld [vmem:[%s1 + $0xa4] sm:$0xf]
  %v1600 = vld [vmem:[%s1 + $0xa8] sm:$0xf]
  %v1601 = vld [vmem:[%s1 + $0xac] sm:$0xf]
  %v1602 = vld [vmem:[%s1 + $0xb0] sm:$0xf]
  %v1603 = vld [vmem:[%s1 + $0xb4] sm:$0xf]
  %v1604 = vld [vmem:[%s1 + $0xb8] sm:$0xf]
  %v1605 = vld [vmem:[%s1 + $0xbc] sm:$0xf]
  %v1606 = vunpack.c.l.b16 %v1387
  %v1607 = vunpack.c.l.b16 %v1401
  %v1608 = vunpack.c.l.b16 %v1415
  %v1609 = vunpack.c.l.b16 %v1429
  %v1610 = vunpack.c.l.b16 %v1443
  %v1611 = vunpack.c.l.b16 %v1457
  %v1612 = vunpack.c.l.b16 %v1471
  %v1613 = vunpack.c.l.b16 %v1485
  %v1614 = vunpack.c.l.b16 %v1499
  %v1615 = vunpack.c.l.b16 %v1513
  %v1616 = vunpack.c.l.b16 %v1527
  %v1617 = vunpack.c.l.b16 %v1541
  %v1618 = vunpack.c.l.b16 %v1555
  %v1619 = vunpack.c.l.b16 %v1569
  %v1620 = vunpack.c.l.b16 %v1583
  %v1621 = vunpack.c.l.b16 %v1597
  %v1622 = vpack.c.b16 %v1607, %v1606
  %v1623 = vpack.c.b16 %v1609, %v1608
  %v1624 = vpack.c.b16 %v1611, %v1610
  %v1625 = vpack.c.b16 %v1613, %v1612
  %v1626 = vpack.c.b16 %v1615, %v1614
  %v1627 = vpack.c.b16 %v1617, %v1616
  %v1628 = vpack.c.b16 %v1619, %v1618
  %v1629 = vpack.c.b16 %v1621, %v1620
  %v1638 = vunpack.c.l.b16 %v1598
  %v1639 = vunpack.c.l.b16 %v1599
  %v1640 = vunpack.c.l.b16 %v1600
  %v1641 = vunpack.c.l.b16 %v1601
  %v1642 = vunpack.c.l.b16 %v1602
  %v1643 = vunpack.c.l.b16 %v1603
  %v1644 = vunpack.c.l.b16 %v1604
  %v1645 = vunpack.c.l.b16 %v1605
  %v1646 = vpack.c.b16 %v1639, %v1638
  %v1647 = vpack.c.b16 %v1641, %v1640
  %v1648 = vpack.c.b16 %v1643, %v1642
  %v1649 = vpack.c.b16 %v1645, %v1644
  %v1655 = vsel %vm131, %v1622, 0
  %v1658 = vsel %vm131, %v1623, 0
  %v1661 = vsel %vm131, %v1624, 0
  %v1664 = vsel %vm131, %v1625, 0
  %v1667 = vsel %vm131, %v1626, 0
  %v1670 = vsel %vm131, %v1627, 0
  %v1673 = vsel %vm131, %v1628, 0
  %v1676 = vsel %vm131, %v1629, 0
  %1678 = vmatprep.subr.bf16.mxu0 0
  %1679 = vmatpush1.bf16.msra.mxu0 0
  %1680 = vmatprep.subr.bf16.mxu0 0
  %1681 = vmatpush1.bf16.msra.mxu0 0
  %1682 = vmatprep.subr.bf16.mxu0 0
  %1683 = vmatpush1.bf16.msra.mxu0 0
  %1684 = vmatprep.subr.bf16.mxu0 0
  %1685 = vmatpush1.bf16.msra.mxu0 0
  %1686 = vmatprep.subr.bf16.mxu0 0
  %1687 = vmatpush1.bf16.msra.mxu0 %v1649
  %1688 = vmatprep.subr.bf16.mxu0 0
  %1689 = vmatpush1.bf16.msra.mxu0 %v1648
  %1690 = vmatprep.subr.bf16.mxu0 0
  %1691 = vmatpush1.bf16.msra.mxu0 %v1647
  %1692 = vmatprep.subr.bf16.mxu0 0
  %1693 = vmatpush1.bf16.msra.mxu0 %v1646
  %1694 = vmatprep.subr.bf16.mxu0 0
  %1695 = vmatpush2.bf16.msra.mxu0 0
  %1696 = vmatprep.subr.bf16.mxu0 0
  %1697 = vmatpush2.bf16.msra.mxu0 0
  %1698 = vmatprep.subr.bf16.mxu0 0
  %1699 = vmatpush2.bf16.msra.mxu0 0
  %1700 = vmatprep.subr.bf16.mxu0 0
  %1701 = vmatpush2.bf16.msra.mxu0 0
  %1702 = vmatprep.subr.bf16.mxu0 0
  %1703 = vmatpush2.bf16.msra.mxu0 0
  %1704 = vmatprep.subr.bf16.mxu0 0
  %1705 = vmatpush2.bf16.msra.mxu0 0
  %1706 = vmatprep.subr.bf16.mxu0 0
  %1707 = vmatpush2.bf16.msra.mxu0 0
  %1708 = vmatprep.subr.bf16.mxu0 0
  %1709 = vmatpush2.bf16.msra.mxu0 0
  %1710 = vmatprep.mubr.bf16.mxu0 0
  %1711 = vmatmul.mubr.bf16.gmra.mxu0 %v1655
  %v1712 = vpop.f32.mrf.mxu0
  %v1713 = vadd.f32 0.0, %v1712
  %v1714 = vpop.f32.mrf.mxu0
  %v1715 = vpop.f32.mrf.mxu0
  %v1716 = vadd.f32 0.0, %v1715
  %v1717 = vpop.f32.mrf.mxu0
  %1718 = vmatprep.mubr.bf16.mxu0 0
  %1719 = vmatmul.mubr.bf16.gmra.mxu0 %v1658
  %v1720 = vpop.f32.mrf.mxu0
  %v1721 = vadd.f32 0.0, %v1720
  %v1722 = vpop.f32.mrf.mxu0
  %v1723 = vpop.f32.mrf.mxu0
  %v1724 = vadd.f32 0.0, %v1723
  %v1725 = vpop.f32.mrf.mxu0
  %1726 = vmatprep.mubr.bf16.mxu0 0
  %1727 = vmatmul.mubr.bf16.gmra.mxu0 %v1661
  %v1728 = vpop.f32.mrf.mxu0
  %v1729 = vadd.f32 0.0, %v1728
  %v1730 = vpop.f32.mrf.mxu0
  %v1731 = vpop.f32.mrf.mxu0
  %v1732 = vadd.f32 0.0, %v1731
  %v1733 = vpop.f32.mrf.mxu0
  %1734 = vmatprep.mubr.bf16.mxu0 0
  %1735 = vmatmul.mubr.bf16.gmra.mxu0 %v1664
  %v1736 = vpop.f32.mrf.mxu0
  %v1737 = vadd.f32 0.0, %v1736
  %v1738 = vpop.f32.mrf.mxu0
  %v1739 = vpop.f32.mrf.mxu0
  %v1740 = vadd.f32 0.0, %v1739
  %v1741 = vpop.f32.mrf.mxu0
  %1742 = vmatprep.mubr.bf16.mxu0 0
  %1743 = vmatmul.mubr.bf16.gmra.mxu0 %v1667
  %v1744 = vpop.f32.mrf.mxu0
  %v1745 = vadd.f32 0.0, %v1744
  %v1746 = vpop.f32.mrf.mxu0
  %v1747 = vpop.f32.mrf.mxu0
  %v1748 = vadd.f32 0.0, %v1747
  %v1749 = vpop.f32.mrf.mxu0
  %1750 = vmatprep.mubr.bf16.mxu0 0
  %1751 = vmatmul.mubr.bf16.gmra.mxu0 %v1670
  %v1752 = vpop.f32.mrf.mxu0
  %v1753 = vadd.f32 0.0, %v1752
  %v1754 = vpop.f32.mrf.mxu0
  %v1755 = vpop.f32.mrf.mxu0
  %v1756 = vadd.f32 0.0, %v1755
  %v1757 = vpop.f32.mrf.mxu0
  %1758 = vmatprep.mubr.bf16.mxu0 0
  %1759 = vmatmul.mubr.bf16.gmra.mxu0 %v1673
  %v1760 = vpop.f32.mrf.mxu0
  %v1761 = vadd.f32 0.0, %v1760
  %v1762 = vpop.f32.mrf.mxu0
  %v1763 = vpop.f32.mrf.mxu0
  %v1764 = vadd.f32 0.0, %v1763
  %v1765 = vpop.f32.mrf.mxu0
  %1766 = vmatprep.mubr.bf16.mxu0 0
  %1767 = vmatmul.mubr.bf16.gmra.mxu0 %v1676
  %v1768 = vpop.f32.mrf.mxu0
  %v1769 = vadd.f32 0.0, %v1768
  %v1770 = vpop.f32.mrf.mxu0
  %v1771 = vpop.f32.mrf.mxu0
  %v1772 = vadd.f32 0.0, %v1771
  %v1773 = vpop.f32.mrf.mxu0
  %1774 = vdwg.mxu0
  %v1775 = vadd.f32 %v1326, %v1713
  %v1776 = vadd.f32 %v1327, %v1716
  %v1777 = vadd.f32 %v1328, %v1721
  %v1778 = vadd.f32 %v1329, %v1724
  %v1779 = vadd.f32 %v1330, %v1729
  %v1780 = vadd.f32 %v1331, %v1732
  %v1781 = vadd.f32 %v1332, %v1737
  %v1782 = vadd.f32 %v1333, %v1740
  %v1783 = vadd.f32 %v1334, %v1745
  %v1784 = vadd.f32 %v1335, %v1748
  %v1785 = vadd.f32 %v1336, %v1753
  %v1786 = vadd.f32 %v1337, %v1756
  %v1787 = vadd.f32 %v1338, %v1761
  %v1788 = vadd.f32 %v1339, %v1764
  %v1789 = vadd.f32 %v1340, %v1769
  %v1790 = vadd.f32 %v1341, %v1772
  %s1791 = scalar_lea.vmem %s0, 8
  %v1792 = vld [vmem:[%s1791] sm:$0xf]
  %v1793 = vld [vmem:[%s1791 + $0x8] sm:$0xf]
  %v1794 = vld [vmem:[%s1791 + $0x10] sm:$0xf]
  %v1795 = vld [vmem:[%s1791 + $0x18] sm:$0xf]
  %v1796 = vld [vmem:[%s1791 + $0x20] sm:$0xf]
  %v1797 = vld [vmem:[%s1791 + $0x28] sm:$0xf]
  %v1798 = vld [vmem:[%s1791 + $0x30] sm:$0xf]
  %v1799 = vld [vmem:[%s1791 + $0x38] sm:$0xf]
  %v1800 = vld [vmem:[%s1791 + $0x48] sm:$0xf]
  %v1801 = vld [vmem:[%s1791 + $0x50] sm:$0xf]
  %v1802 = vld [vmem:[%s1791 + $0x58] sm:$0xf]
  %v1803 = vld [vmem:[%s1791 + $0x60] sm:$0xf]
  %v1804 = vld [vmem:[%s1791 + $0x68] sm:$0xf]
  %v1805 = vld [vmem:[%s1791 + $0x70] sm:$0xf]
  %v1806 = vld [vmem:[%s1791 + $0x78] sm:$0xf]
  %v1807 = vld [vmem:[%s1791 + $0x80] sm:$0xf]
  %v1808 = vld [vmem:[%s1 + $0xc0] sm:$0xf]
  %v1809 = vld [vmem:[%s1 + $0xc4] sm:$0xf]
  %v1810 = vld [vmem:[%s1 + $0xc8] sm:$0xf]
  %v1811 = vld [vmem:[%s1 + $0xcc] sm:$0xf]
  %v1812 = vld [vmem:[%s1 + $0xd0] sm:$0xf]
  %v1813 = vld [vmem:[%s1 + $0xd4] sm:$0xf]
  %v1814 = vld [vmem:[%s1 + $0xd8] sm:$0xf]
  %v1815 = vld [vmem:[%s1 + $0xdc] sm:$0xf]
  %v1832 = vunpack.c.l.b16 %v1792
  %v1833 = vunpack.c.l.b16 %v1793
  %v1834 = vunpack.c.l.b16 %v1794
  %v1835 = vunpack.c.l.b16 %v1795
  %v1836 = vunpack.c.l.b16 %v1796
  %v1837 = vunpack.c.l.b16 %v1797
  %v1838 = vunpack.c.l.b16 %v1798
  %v1839 = vunpack.c.l.b16 %v1799
  %v1840 = vunpack.c.l.b16 %v1800
  %v1841 = vunpack.c.l.b16 %v1801
  %v1842 = vunpack.c.l.b16 %v1802
  %v1843 = vunpack.c.l.b16 %v1803
  %v1844 = vunpack.c.l.b16 %v1804
  %v1845 = vunpack.c.l.b16 %v1805
  %v1846 = vunpack.c.l.b16 %v1806
  %v1847 = vunpack.c.l.b16 %v1807
  %v1848 = vpack.c.b16 %v1833, %v1832
  %v1849 = vpack.c.b16 %v1835, %v1834
  %v1850 = vpack.c.b16 %v1837, %v1836
  %v1851 = vpack.c.b16 %v1839, %v1838
  %v1852 = vpack.c.b16 %v1841, %v1840
  %v1853 = vpack.c.b16 %v1843, %v1842
  %v1854 = vpack.c.b16 %v1845, %v1844
  %v1855 = vpack.c.b16 %v1847, %v1846
  %v1864 = vunpack.c.l.b16 %v1808
  %v1865 = vunpack.c.l.b16 %v1809
  %v1866 = vunpack.c.l.b16 %v1810
  %v1867 = vunpack.c.l.b16 %v1811
  %v1868 = vunpack.c.l.b16 %v1812
  %v1869 = vunpack.c.l.b16 %v1813
  %v1870 = vunpack.c.l.b16 %v1814
  %v1871 = vunpack.c.l.b16 %v1815
  %v1872 = vpack.c.b16 %v1865, %v1864
  %v1873 = vpack.c.b16 %v1867, %v1866
  %v1874 = vpack.c.b16 %v1869, %v1868
  %v1875 = vpack.c.b16 %v1871, %v1870
  %v1881 = vsel %vm131, %v1848, 0
  %v1884 = vsel %vm131, %v1849, 0
  %v1887 = vsel %vm131, %v1850, 0
  %v1890 = vsel %vm131, %v1851, 0
  %v1893 = vsel %vm131, %v1852, 0
  %v1896 = vsel %vm131, %v1853, 0
  %v1899 = vsel %vm131, %v1854, 0
  %v1902 = vsel %vm131, %v1855, 0
  %1904 = vmatprep.subr.bf16.mxu0 0
  %1905 = vmatpush1.bf16.msra.mxu0 0
  %1906 = vmatprep.subr.bf16.mxu0 0
  %1907 = vmatpush1.bf16.msra.mxu0 0
  %1908 = vmatprep.subr.bf16.mxu0 0
  %1909 = vmatpush1.bf16.msra.mxu0 0
  %1910 = vmatprep.subr.bf16.mxu0 0
  %1911 = vmatpush1.bf16.msra.mxu0 0
  %1912 = vmatprep.subr.bf16.mxu0 0
  %1913 = vmatpush1.bf16.msra.mxu0 %v1875
  %1914 = vmatprep.subr.bf16.mxu0 0
  %1915 = vmatpush1.bf16.msra.mxu0 %v1874
  %1916 = vmatprep.subr.bf16.mxu0 0
  %1917 = vmatpush1.bf16.msra.mxu0 %v1873
  %1918 = vmatprep.subr.bf16.mxu0 0
  %1919 = vmatpush1.bf16.msra.mxu0 %v1872
  %1920 = vmatprep.subr.bf16.mxu0 0
  %1921 = vmatpush2.bf16.msra.mxu0 0
  %1922 = vmatprep.subr.bf16.mxu0 0
  %1923 = vmatpush2.bf16.msra.mxu0 0
  %1924 = vmatprep.subr.bf16.mxu0 0
  %1925 = vmatpush2.bf16.msra.mxu0 0
  %1926 = vmatprep.subr.bf16.mxu0 0
  %1927 = vmatpush2.bf16.msra.mxu0 0
  %1928 = vmatprep.subr.bf16.mxu0 0
  %1929 = vmatpush2.bf16.msra.mxu0 0
  %1930 = vmatprep.subr.bf16.mxu0 0
  %1931 = vmatpush2.bf16.msra.mxu0 0
  %1932 = vmatprep.subr.bf16.mxu0 0
  %1933 = vmatpush2.bf16.msra.mxu0 0
  %1934 = vmatprep.subr.bf16.mxu0 0
  %1935 = vmatpush2.bf16.msra.mxu0 0
  %1936 = vmatprep.mubr.bf16.mxu0 0
  %1937 = vmatmul.mubr.bf16.gmra.mxu0 %v1881
  %v1938 = vpop.f32.mrf.mxu0
  %v1939 = vadd.f32 0.0, %v1938
  %v1940 = vpop.f32.mrf.mxu0
  %v1941 = vpop.f32.mrf.mxu0
  %v1942 = vadd.f32 0.0, %v1941
  %v1943 = vpop.f32.mrf.mxu0
  %1944 = vmatprep.mubr.bf16.mxu0 0
  %1945 = vmatmul.mubr.bf16.gmra.mxu0 %v1884
  %v1946 = vpop.f32.mrf.mxu0
  %v1947 = vadd.f32 0.0, %v1946
  %v1948 = vpop.f32.mrf.mxu0
  %v1949 = vpop.f32.mrf.mxu0
  %v1950 = vadd.f32 0.0, %v1949
  %v1951 = vpop.f32.mrf.mxu0
  %1952 = vmatprep.mubr.bf16.mxu0 0
  %1953 = vmatmul.mubr.bf16.gmra.mxu0 %v1887
  %v1954 = vpop.f32.mrf.mxu0
  %v1955 = vadd.f32 0.0, %v1954
  %v1956 = vpop.f32.mrf.mxu0
  %v1957 = vpop.f32.mrf.mxu0
  %v1958 = vadd.f32 0.0, %v1957
  %v1959 = vpop.f32.mrf.mxu0
  %1960 = vmatprep.mubr.bf16.mxu0 0
  %1961 = vmatmul.mubr.bf16.gmra.mxu0 %v1890
  %v1962 = vpop.f32.mrf.mxu0
  %v1963 = vadd.f32 0.0, %v1962
  %v1964 = vpop.f32.mrf.mxu0
  %v1965 = vpop.f32.mrf.mxu0
  %v1966 = vadd.f32 0.0, %v1965
  %v1967 = vpop.f32.mrf.mxu0
  %1968 = vmatprep.mubr.bf16.mxu0 0
  %1969 = vmatmul.mubr.bf16.gmra.mxu0 %v1893
  %v1970 = vpop.f32.mrf.mxu0
  %v1971 = vadd.f32 0.0, %v1970
  %v1972 = vpop.f32.mrf.mxu0
  %v1973 = vpop.f32.mrf.mxu0
  %v1974 = vadd.f32 0.0, %v1973
  %v1975 = vpop.f32.mrf.mxu0
  %1976 = vmatprep.mubr.bf16.mxu0 0
  %1977 = vmatmul.mubr.bf16.gmra.mxu0 %v1896
  %v1978 = vpop.f32.mrf.mxu0
  %v1979 = vadd.f32 0.0, %v1978
  %v1980 = vpop.f32.mrf.mxu0
  %v1981 = vpop.f32.mrf.mxu0
  %v1982 = vadd.f32 0.0, %v1981
  %v1983 = vpop.f32.mrf.mxu0
  %1984 = vmatprep.mubr.bf16.mxu0 0
  %1985 = vmatmul.mubr.bf16.gmra.mxu0 %v1899
  %v1986 = vpop.f32.mrf.mxu0
  %v1987 = vadd.f32 0.0, %v1986
  %v1988 = vpop.f32.mrf.mxu0
  %v1989 = vpop.f32.mrf.mxu0
  %v1990 = vadd.f32 0.0, %v1989
  %v1991 = vpop.f32.mrf.mxu0
  %1992 = vmatprep.mubr.bf16.mxu0 0
  %1993 = vmatmul.mubr.bf16.gmra.mxu0 %v1902
  %v1994 = vpop.f32.mrf.mxu0
  %v1995 = vadd.f32 0.0, %v1994
  %v1996 = vpop.f32.mrf.mxu0
  %v1997 = vpop.f32.mrf.mxu0
  %v1998 = vadd.f32 0.0, %v1997
  %v1999 = vpop.f32.mrf.mxu0
  %2000 = vdwg.mxu0
  %v2001 = vadd.f32 %v1775, %v1939
  %v2002 = vadd.f32 %v1776, %v1942
  %v2003 = vadd.f32 %v1777, %v1947
  %v2004 = vadd.f32 %v1778, %v1950
  %v2005 = vadd.f32 %v1779, %v1955
  %v2006 = vadd.f32 %v1780, %v1958
  %v2007 = vadd.f32 %v1781, %v1963
  %v2008 = vadd.f32 %v1782, %v1966
  %v2009 = vadd.f32 %v1783, %v1971
  %v2010 = vadd.f32 %v1784, %v1974
  %v2011 = vadd.f32 %v1785, %v1979
  %v2012 = vadd.f32 %v1786, %v1982
  %v2013 = vadd.f32 %v1787, %v1987
  %v2014 = vadd.f32 %v1788, %v1990
  %v2015 = vadd.f32 %v1789, %v1995
  %v2016 = vadd.f32 %v1790, %v1998
  %s2017 = scalar_lea.vmem %s0, 152
  %v2018 = vld [vmem:[%s2017] sm:$0xf]
  %v2019 = vld [vmem:[%s2017 + $0x8] sm:$0xf]
  %v2020 = vld [vmem:[%s2017 + $0x10] sm:$0xf]
  %v2021 = vld [vmem:[%s2017 + $0x18] sm:$0xf]
  %v2022 = vld [vmem:[%s2017 + $0x20] sm:$0xf]
  %v2023 = vld [vmem:[%s2017 + $0x28] sm:$0xf]
  %v2024 = vld [vmem:[%s2017 + $0x30] sm:$0xf]
  %v2025 = vld [vmem:[%s2017 + $0x38] sm:$0xf]
  %v2026 = vld [vmem:[%s2017 + $0x48] sm:$0xf]
  %v2027 = vld [vmem:[%s2017 + $0x50] sm:$0xf]
  %v2028 = vld [vmem:[%s2017 + $0x58] sm:$0xf]
  %v2029 = vld [vmem:[%s2017 + $0x60] sm:$0xf]
  %v2030 = vld [vmem:[%s2017 + $0x68] sm:$0xf]
  %v2031 = vld [vmem:[%s2017 + $0x70] sm:$0xf]
  %v2032 = vld [vmem:[%s2017 + $0x78] sm:$0xf]
  %v2033 = vld [vmem:[%s2017 + $0x80] sm:$0xf]
  %v2034 = vld [vmem:[%s1 + $0xe0] sm:$0xf]
  %v2035 = vld [vmem:[%s1 + $0xe4] sm:$0xf]
  %v2036 = vld [vmem:[%s1 + $0xe8] sm:$0xf]
  %v2037 = vld [vmem:[%s1 + $0xec] sm:$0xf]
  %v2038 = vld [vmem:[%s1 + $0xf0] sm:$0xf]
  %v2039 = vld [vmem:[%s1 + $0xf4] sm:$0xf]
  %v2040 = vld [vmem:[%s1 + $0xf8] sm:$0xf]
  %v2041 = vld [vmem:[%s1 + $0xfc] sm:$0xf]
  %v2058 = vunpack.c.l.b16 %v2018
  %v2059 = vunpack.c.l.b16 %v2019
  %v2060 = vunpack.c.l.b16 %v2020
  %v2061 = vunpack.c.l.b16 %v2021
  %v2062 = vunpack.c.l.b16 %v2022
  %v2063 = vunpack.c.l.b16 %v2023
  %v2064 = vunpack.c.l.b16 %v2024
  %v2065 = vunpack.c.l.b16 %v2025
  %v2066 = vunpack.c.l.b16 %v2026
  %v2067 = vunpack.c.l.b16 %v2027
  %v2068 = vunpack.c.l.b16 %v2028
  %v2069 = vunpack.c.l.b16 %v2029
  %v2070 = vunpack.c.l.b16 %v2030
  %v2071 = vunpack.c.l.b16 %v2031
  %v2072 = vunpack.c.l.b16 %v2032
  %v2073 = vunpack.c.l.b16 %v2033
  %v2074 = vpack.c.b16 %v2059, %v2058
  %v2075 = vpack.c.b16 %v2061, %v2060
  %v2076 = vpack.c.b16 %v2063, %v2062
  %v2077 = vpack.c.b16 %v2065, %v2064
  %v2078 = vpack.c.b16 %v2067, %v2066
  %v2079 = vpack.c.b16 %v2069, %v2068
  %v2080 = vpack.c.b16 %v2071, %v2070
  %v2081 = vpack.c.b16 %v2073, %v2072
  %v2090 = vunpack.c.l.b16 %v2034
  %v2091 = vunpack.c.l.b16 %v2035
  %v2092 = vunpack.c.l.b16 %v2036
  %v2093 = vunpack.c.l.b16 %v2037
  %v2094 = vunpack.c.l.b16 %v2038
  %v2095 = vunpack.c.l.b16 %v2039
  %v2096 = vunpack.c.l.b16 %v2040
  %v2097 = vunpack.c.l.b16 %v2041
  %v2098 = vpack.c.b16 %v2091, %v2090
  %v2099 = vpack.c.b16 %v2093, %v2092
  %v2100 = vpack.c.b16 %v2095, %v2094
  %v2101 = vpack.c.b16 %v2097, %v2096
  %v2107 = vsel %vm131, %v2074, 0
  %v2110 = vsel %vm131, %v2075, 0
  %v2113 = vsel %vm131, %v2076, 0
  %v2116 = vsel %vm131, %v2077, 0
  %v2119 = vsel %vm131, %v2078, 0
  %v2122 = vsel %vm131, %v2079, 0
  %v2125 = vsel %vm131, %v2080, 0
  %v2128 = vsel %vm131, %v2081, 0
  %2130 = vmatprep.subr.bf16.mxu0 0
  %2131 = vmatpush1.bf16.msra.mxu0 0
  %2132 = vmatprep.subr.bf16.mxu0 0
  %2133 = vmatpush1.bf16.msra.mxu0 0
  %2134 = vmatprep.subr.bf16.mxu0 0
  %2135 = vmatpush1.bf16.msra.mxu0 0
  %2136 = vmatprep.subr.bf16.mxu0 0
  %2137 = vmatpush1.bf16.msra.mxu0 0
  %2138 = vmatprep.subr.bf16.mxu0 0
  %2139 = vmatpush1.bf16.msra.mxu0 %v2101
  %2140 = vmatprep.subr.bf16.mxu0 0
  %2141 = vmatpush1.bf16.msra.mxu0 %v2100
  %2142 = vmatprep.subr.bf16.mxu0 0
  %2143 = vmatpush1.bf16.msra.mxu0 %v2099
  %2144 = vmatprep.subr.bf16.mxu0 0
  %2145 = vmatpush1.bf16.msra.mxu0 %v2098
  %2146 = vmatprep.subr.bf16.mxu0 0
  %2147 = vmatpush2.bf16.msra.mxu0 0
  %2148 = vmatprep.subr.bf16.mxu0 0
  %2149 = vmatpush2.bf16.msra.mxu0 0
  %2150 = vmatprep.subr.bf16.mxu0 0
  %2151 = vmatpush2.bf16.msra.mxu0 0
  %2152 = vmatprep.subr.bf16.mxu0 0
  %2153 = vmatpush2.bf16.msra.mxu0 0
  %2154 = vmatprep.subr.bf16.mxu0 0
  %2155 = vmatpush2.bf16.msra.mxu0 0
  %2156 = vmatprep.subr.bf16.mxu0 0
  %2157 = vmatpush2.bf16.msra.mxu0 0
  %2158 = vmatprep.subr.bf16.mxu0 0
  %2159 = vmatpush2.bf16.msra.mxu0 0
  %2160 = vmatprep.subr.bf16.mxu0 0
  %2161 = vmatpush2.bf16.msra.mxu0 0
  %2162 = vmatprep.mubr.bf16.mxu0 0
  %2163 = vmatmul.mubr.bf16.gmra.mxu0 %v2107
  %v2164 = vpop.f32.mrf.mxu0
  %v2165 = vadd.f32 0.0, %v2164
  %v2166 = vpop.f32.mrf.mxu0
  %v2167 = vpop.f32.mrf.mxu0
  %v2168 = vadd.f32 0.0, %v2167
  %v2169 = vpop.f32.mrf.mxu0
  %2170 = vmatprep.mubr.bf16.mxu0 0
  %2171 = vmatmul.mubr.bf16.gmra.mxu0 %v2110
  %v2172 = vpop.f32.mrf.mxu0
  %v2173 = vadd.f32 0.0, %v2172
  %v2174 = vpop.f32.mrf.mxu0
  %v2175 = vpop.f32.mrf.mxu0
  %v2176 = vadd.f32 0.0, %v2175
  %v2177 = vpop.f32.mrf.mxu0
  %2178 = vmatprep.mubr.bf16.mxu0 0
  %2179 = vmatmul.mubr.bf16.gmra.mxu0 %v2113
  %v2180 = vpop.f32.mrf.mxu0
  %v2181 = vadd.f32 0.0, %v2180
  %v2182 = vpop.f32.mrf.mxu0
  %v2183 = vpop.f32.mrf.mxu0
  %v2184 = vadd.f32 0.0, %v2183
  %v2185 = vpop.f32.mrf.mxu0
  %2186 = vmatprep.mubr.bf16.mxu0 0
  %2187 = vmatmul.mubr.bf16.gmra.mxu0 %v2116
  %v2188 = vpop.f32.mrf.mxu0
  %v2189 = vadd.f32 0.0, %v2188
  %v2190 = vpop.f32.mrf.mxu0
  %v2191 = vpop.f32.mrf.mxu0
  %v2192 = vadd.f32 0.0, %v2191
  %v2193 = vpop.f32.mrf.mxu0
  %2194 = vmatprep.mubr.bf16.mxu0 0
  %2195 = vmatmul.mubr.bf16.gmra.mxu0 %v2119
  %v2196 = vpop.f32.mrf.mxu0
  %v2197 = vadd.f32 0.0, %v2196
  %v2198 = vpop.f32.mrf.mxu0
  %v2199 = vpop.f32.mrf.mxu0
  %v2200 = vadd.f32 0.0, %v2199
  %v2201 = vpop.f32.mrf.mxu0
  %2202 = vmatprep.mubr.bf16.mxu0 0
  %2203 = vmatmul.mubr.bf16.gmra.mxu0 %v2122
  %v2204 = vpop.f32.mrf.mxu0
  %v2205 = vadd.f32 0.0, %v2204
  %v2206 = vpop.f32.mrf.mxu0
  %v2207 = vpop.f32.mrf.mxu0
  %v2208 = vadd.f32 0.0, %v2207
  %v2209 = vpop.f32.mrf.mxu0
  %2210 = vmatprep.mubr.bf16.mxu0 0
  %2211 = vmatmul.mubr.bf16.gmra.mxu0 %v2125
  %v2212 = vpop.f32.mrf.mxu0
  %v2213 = vadd.f32 0.0, %v2212
  %v2214 = vpop.f32.mrf.mxu0
  %v2215 = vpop.f32.mrf.mxu0
  %v2216 = vadd.f32 0.0, %v2215
  %v2217 = vpop.f32.mrf.mxu0
  %2218 = vmatprep.mubr.bf16.mxu0 0
  %2219 = vmatmul.mubr.bf16.gmra.mxu0 %v2128
  %v2220 = vpop.f32.mrf.mxu0
  %v2221 = vadd.f32 0.0, %v2220
  %v2222 = vpop.f32.mrf.mxu0
  %v2223 = vpop.f32.mrf.mxu0
  %v2224 = vadd.f32 0.0, %v2223
  %v2225 = vpop.f32.mrf.mxu0
  %2226 = vdwg.mxu0
  %v2227 = vadd.f32 %v2001, %v2165
  %v2228 = vadd.f32 %v2002, %v2168
  %v2229 = vadd.f32 %v2003, %v2173
  %v2230 = vadd.f32 %v2004, %v2176
  %v2231 = vadd.f32 %v2005, %v2181
  %v2232 = vadd.f32 %v2006, %v2184
  %v2233 = vadd.f32 %v2007, %v2189
  %v2234 = vadd.f32 %v2008, %v2192
  %v2235 = vadd.f32 %v2009, %v2197
  %v2236 = vadd.f32 %v2010, %v2200
  %v2237 = vadd.f32 %v2011, %v2205
  %v2238 = vadd.f32 %v2012, %v2208
  %v2239 = vadd.f32 %v2013, %v2213
  %v2240 = vadd.f32 %v2014, %v2216
  %v2241 = vadd.f32 %v2015, %v2221
  %v2242 = vadd.f32 %v2016, %v2224
  %v2243 = vld [vmem:[%s1791] sm:$0xf]
  %v2244 = vld [vmem:[%s1791 + $0x4] sm:$0x1]
  %v2245 = vld [vmem:[%s1791 + $0x8] sm:$0xf]
  %v2246 = vld [vmem:[%s1791 + $0xc] sm:$0x1]
  %v2247 = vld [vmem:[%s1791 + $0x10] sm:$0xf]
  %v2248 = vld [vmem:[%s1791 + $0x14] sm:$0x1]
  %v2249 = vld [vmem:[%s1791 + $0x18] sm:$0xf]
  %v2250 = vld [vmem:[%s1791 + $0x1c] sm:$0x1]
  %v2251 = vld [vmem:[%s1791 + $0x20] sm:$0xf]
  %v2252 = vld [vmem:[%s1791 + $0x24] sm:$0x1]
  %v2253 = vld [vmem:[%s1791 + $0x28] sm:$0xf]
  %v2254 = vld [vmem:[%s1791 + $0x2c] sm:$0x1]
  %v2255 = vld [vmem:[%s1791 + $0x30] sm:$0xf]
  %v2256 = vld [vmem:[%s1791 + $0x34] sm:$0x1]
  %v2257 = vld [vmem:[%s1791 + $0x38] sm:$0xf]
  %v2258 = vld [vmem:[%s1791 + $0x3c] sm:$0x1]
  %v2259 = vld [vmem:[%s1791 + $0x48] sm:$0xf]
  %v2260 = vld [vmem:[%s1791 + $0x4c] sm:$0x1]
  %v2261 = vld [vmem:[%s1791 + $0x50] sm:$0xf]
  %v2262 = vld [vmem:[%s1791 + $0x54] sm:$0x1]
  %v2263 = vld [vmem:[%s1791 + $0x58] sm:$0xf]
  %v2264 = vld [vmem:[%s1791 + $0x5c] sm:$0x1]
  %v2265 = vld [vmem:[%s1791 + $0x60] sm:$0xf]
  %v2266 = vld [vmem:[%s1791 + $0x64] sm:$0x1]
  %v2267 = vld [vmem:[%s1791 + $0x68] sm:$0xf]
  %v2268 = vld [vmem:[%s1791 + $0x6c] sm:$0x1]
  %v2269 = vld [vmem:[%s1791 + $0x70] sm:$0xf]
  %v2270 = vld [vmem:[%s1791 + $0x74] sm:$0x1]
  %v2271 = vld [vmem:[%s1791 + $0x78] sm:$0xf]
  %v2272 = vld [vmem:[%s1791 + $0x7c] sm:$0x1]
  %v2273 = vld [vmem:[%s1791 + $0x80] sm:$0xf]
  %v2274 = vld [vmem:[%s1791 + $0x84] sm:$0x1]
  %v2276 = vshrl.u32 %v2243, 16
  %v2278 = vrot.slane %v2276, 4
  %v2279 = vshll.u32 %v2243, 16
  %v2281 = vrot.slane %v2279, 5
  %v2282 = vor.u32 %v2278, %v2281
  %v2283 = vrot.slane %v2282, 4
  %v2285 = vshll.u32 %v2244, 16
  %v2287 = vrot.slane %v2285, 5
  %v2288 = vsel %vm472, %v2283, %v2287
  %v2290 = vshrl.u32 %v2245, 16
  %v2292 = vrot.slane %v2290, 4
  %v2293 = vshll.u32 %v2245, 16
  %v2295 = vrot.slane %v2293, 5
  %v2296 = vor.u32 %v2292, %v2295
  %v2297 = vrot.slane %v2296, 4
  %v2299 = vshll.u32 %v2246, 16
  %v2301 = vrot.slane %v2299, 5
  %v2302 = vsel %vm472, %v2297, %v2301
  %v2304 = vshrl.u32 %v2247, 16
  %v2306 = vrot.slane %v2304, 4
  %v2307 = vshll.u32 %v2247, 16
  %v2309 = vrot.slane %v2307, 5
  %v2310 = vor.u32 %v2306, %v2309
  %v2311 = vrot.slane %v2310, 4
  %v2313 = vshll.u32 %v2248, 16
  %v2315 = vrot.slane %v2313, 5
  %v2316 = vsel %vm472, %v2311, %v2315
  %v2318 = vshrl.u32 %v2249, 16
  %v2320 = vrot.slane %v2318, 4
  %v2321 = vshll.u32 %v2249, 16
  %v2323 = vrot.slane %v2321, 5
  %v2324 = vor.u32 %v2320, %v2323
  %v2325 = vrot.slane %v2324, 4
  %v2327 = vshll.u32 %v2250, 16
  %v2329 = vrot.slane %v2327, 5
  %v2330 = vsel %vm472, %v2325, %v2329
  %v2332 = vshrl.u32 %v2251, 16
  %v2334 = vrot.slane %v2332, 4
  %v2335 = vshll.u32 %v2251, 16
  %v2337 = vrot.slane %v2335, 5
  %v2338 = vor.u32 %v2334, %v2337
  %v2339 = vrot.slane %v2338, 4
  %v2341 = vshll.u32 %v2252, 16
  %v2343 = vrot.slane %v2341, 5
  %v2344 = vsel %vm472, %v2339, %v2343
  %v2346 = vshrl.u32 %v2253, 16
  %v2348 = vrot.slane %v2346, 4
  %v2349 = vshll.u32 %v2253, 16
  %v2351 = vrot.slane %v2349, 5
  %v2352 = vor.u32 %v2348, %v2351
  %v2353 = vrot.slane %v2352, 4
  %v2355 = vshll.u32 %v2254, 16
  %v2357 = vrot.slane %v2355, 5
  %v2358 = vsel %vm472, %v2353, %v2357
  %v2360 = vshrl.u32 %v2255, 16
  %v2362 = vrot.slane %v2360, 4
  %v2363 = vshll.u32 %v2255, 16
  %v2365 = vrot.slane %v2363, 5
  %v2366 = vor.u32 %v2362, %v2365
  %v2367 = vrot.slane %v2366, 4
  %v2369 = vshll.u32 %v2256, 16
  %v2371 = vrot.slane %v2369, 5
  %v2372 = vsel %vm472, %v2367, %v2371
  %v2374 = vshrl.u32 %v2257, 16
  %v2376 = vrot.slane %v2374, 4
  %v2377 = vshll.u32 %v2257, 16
  %v2379 = vrot.slane %v2377, 5
  %v2380 = vor.u32 %v2376, %v2379
  %v2381 = vrot.slane %v2380, 4
  %v2383 = vshll.u32 %v2258, 16
  %v2385 = vrot.slane %v2383, 5
  %v2386 = vsel %vm472, %v2381, %v2385
  %v2388 = vshrl.u32 %v2259, 16
  %v2390 = vrot.slane %v2388, 4
  %v2391 = vshll.u32 %v2259, 16
  %v2393 = vrot.slane %v2391, 5
  %v2394 = vor.u32 %v2390, %v2393
  %v2395 = vrot.slane %v2394, 4
  %v2397 = vshll.u32 %v2260, 16
  %v2399 = vrot.slane %v2397, 5
  %v2400 = vsel %vm472, %v2395, %v2399
  %v2402 = vshrl.u32 %v2261, 16
  %v2404 = vrot.slane %v2402, 4
  %v2405 = vshll.u32 %v2261, 16
  %v2407 = vrot.slane %v2405, 5
  %v2408 = vor.u32 %v2404, %v2407
  %v2409 = vrot.slane %v2408, 4
  %v2411 = vshll.u32 %v2262, 16
  %v2413 = vrot.slane %v2411, 5
  %v2414 = vsel %vm472, %v2409, %v2413
  %v2416 = vshrl.u32 %v2263, 16
  %v2418 = vrot.slane %v2416, 4
  %v2419 = vshll.u32 %v2263, 16
  %v2421 = vrot.slane %v2419, 5
  %v2422 = vor.u32 %v2418, %v2421
  %v2423 = vrot.slane %v2422, 4
  %v2425 = vshll.u32 %v2264, 16
  %v2427 = vrot.slane %v2425, 5
  %v2428 = vsel %vm472, %v2423, %v2427
  %v2430 = vshrl.u32 %v2265, 16
  %v2432 = vrot.slane %v2430, 4
  %v2433 = vshll.u32 %v2265, 16
  %v2435 = vrot.slane %v2433, 5
  %v2436 = vor.u32 %v2432, %v2435
  %v2437 = vrot.slane %v2436, 4
  %v2439 = vshll.u32 %v2266, 16
  %v2441 = vrot.slane %v2439, 5
  %v2442 = vsel %vm472, %v2437, %v2441
  %v2444 = vshrl.u32 %v2267, 16
  %v2446 = vrot.slane %v2444, 4
  %v2447 = vshll.u32 %v2267, 16
  %v2449 = vrot.slane %v2447, 5
  %v2450 = vor.u32 %v2446, %v2449
  %v2451 = vrot.slane %v2450, 4
  %v2453 = vshll.u32 %v2268, 16
  %v2455 = vrot.slane %v2453, 5
  %v2456 = vsel %vm472, %v2451, %v2455
  %v2458 = vshrl.u32 %v2269, 16
  %v2460 = vrot.slane %v2458, 4
  %v2461 = vshll.u32 %v2269, 16
  %v2463 = vrot.slane %v2461, 5
  %v2464 = vor.u32 %v2460, %v2463
  %v2465 = vrot.slane %v2464, 4
  %v2467 = vshll.u32 %v2270, 16
  %v2469 = vrot.slane %v2467, 5
  %v2470 = vsel %vm472, %v2465, %v2469
  %v2472 = vshrl.u32 %v2271, 16
  %v2474 = vrot.slane %v2472, 4
  %v2475 = vshll.u32 %v2271, 16
  %v2477 = vrot.slane %v2475, 5
  %v2478 = vor.u32 %v2474, %v2477
  %v2479 = vrot.slane %v2478, 4
  %v2481 = vshll.u32 %v2272, 16
  %v2483 = vrot.slane %v2481, 5
  %v2484 = vsel %vm472, %v2479, %v2483
  %v2486 = vshrl.u32 %v2273, 16
  %v2488 = vrot.slane %v2486, 4
  %v2489 = vshll.u32 %v2273, 16
  %v2491 = vrot.slane %v2489, 5
  %v2492 = vor.u32 %v2488, %v2491
  %v2493 = vrot.slane %v2492, 4
  %v2495 = vshll.u32 %v2274, 16
  %v2497 = vrot.slane %v2495, 5
  %v2498 = vsel %vm472, %v2493, %v2497
  %v2499 = vld [vmem:[%s1 + $0x100] sm:$0xf]
  %v2500 = vld [vmem:[%s1 + $0x104] sm:$0xf]
  %v2501 = vld [vmem:[%s1 + $0x108] sm:$0xf]
  %v2502 = vld [vmem:[%s1 + $0x10c] sm:$0xf]
  %v2503 = vld [vmem:[%s1 + $0x110] sm:$0xf]
  %v2504 = vld [vmem:[%s1 + $0x114] sm:$0xf]
  %v2505 = vld [vmem:[%s1 + $0x118] sm:$0xf]
  %v2506 = vld [vmem:[%s1 + $0x11c] sm:$0xf]
  %v2507 = vunpack.c.l.b16 %v2288
  %v2508 = vunpack.c.l.b16 %v2302
  %v2509 = vunpack.c.l.b16 %v2316
  %v2510 = vunpack.c.l.b16 %v2330
  %v2511 = vunpack.c.l.b16 %v2344
  %v2512 = vunpack.c.l.b16 %v2358
  %v2513 = vunpack.c.l.b16 %v2372
  %v2514 = vunpack.c.l.b16 %v2386
  %v2515 = vunpack.c.l.b16 %v2400
  %v2516 = vunpack.c.l.b16 %v2414
  %v2517 = vunpack.c.l.b16 %v2428
  %v2518 = vunpack.c.l.b16 %v2442
  %v2519 = vunpack.c.l.b16 %v2456
  %v2520 = vunpack.c.l.b16 %v2470
  %v2521 = vunpack.c.l.b16 %v2484
  %v2522 = vunpack.c.l.b16 %v2498
  %v2523 = vpack.c.b16 %v2508, %v2507
  %v2524 = vpack.c.b16 %v2510, %v2509
  %v2525 = vpack.c.b16 %v2512, %v2511
  %v2526 = vpack.c.b16 %v2514, %v2513
  %v2527 = vpack.c.b16 %v2516, %v2515
  %v2528 = vpack.c.b16 %v2518, %v2517
  %v2529 = vpack.c.b16 %v2520, %v2519
  %v2530 = vpack.c.b16 %v2522, %v2521
  %v2539 = vunpack.c.l.b16 %v2499
  %v2540 = vunpack.c.l.b16 %v2500
  %v2541 = vunpack.c.l.b16 %v2501
  %v2542 = vunpack.c.l.b16 %v2502
  %v2543 = vunpack.c.l.b16 %v2503
  %v2544 = vunpack.c.l.b16 %v2504
  %v2545 = vunpack.c.l.b16 %v2505
  %v2546 = vunpack.c.l.b16 %v2506
  %v2547 = vpack.c.b16 %v2540, %v2539
  %v2548 = vpack.c.b16 %v2542, %v2541
  %v2549 = vpack.c.b16 %v2544, %v2543
  %v2550 = vpack.c.b16 %v2546, %v2545
  %v2556 = vsel %vm131, %v2523, 0
  %v2559 = vsel %vm131, %v2524, 0
  %v2562 = vsel %vm131, %v2525, 0
  %v2565 = vsel %vm131, %v2526, 0
  %v2568 = vsel %vm131, %v2527, 0
  %v2571 = vsel %vm131, %v2528, 0
  %v2574 = vsel %vm131, %v2529, 0
  %v2577 = vsel %vm131, %v2530, 0
  %2579 = vmatprep.subr.bf16.mxu0 0
  %2580 = vmatpush1.bf16.msra.mxu0 0
  %2581 = vmatprep.subr.bf16.mxu0 0
  %2582 = vmatpush1.bf16.msra.mxu0 0
  %2583 = vmatprep.subr.bf16.mxu0 0
  %2584 = vmatpush1.bf16.msra.mxu0 0
  %2585 = vmatprep.subr.bf16.mxu0 0
  %2586 = vmatpush1.bf16.msra.mxu0 0
  %2587 = vmatprep.subr.bf16.mxu0 0
  %2588 = vmatpush1.bf16.msra.mxu0 %v2550
  %2589 = vmatprep.subr.bf16.mxu0 0
  %2590 = vmatpush1.bf16.msra.mxu0 %v2549
  %2591 = vmatprep.subr.bf16.mxu0 0
  %2592 = vmatpush1.bf16.msra.mxu0 %v2548
  %2593 = vmatprep.subr.bf16.mxu0 0
  %2594 = vmatpush1.bf16.msra.mxu0 %v2547
  %2595 = vmatprep.subr.bf16.mxu0 0
  %2596 = vmatpush2.bf16.msra.mxu0 0
  %2597 = vmatprep.subr.bf16.mxu0 0
  %2598 = vmatpush2.bf16.msra.mxu0 0
  %2599 = vmatprep.subr.bf16.mxu0 0
  %2600 = vmatpush2.bf16.msra.mxu0 0
  %2601 = vmatprep.subr.bf16.mxu0 0
  %2602 = vmatpush2.bf16.msra.mxu0 0
  %2603 = vmatprep.subr.bf16.mxu0 0
  %2604 = vmatpush2.bf16.msra.mxu0 0
  %2605 = vmatprep.subr.bf16.mxu0 0
  %2606 = vmatpush2.bf16.msra.mxu0 0
  %2607 = vmatprep.subr.bf16.mxu0 0
  %2608 = vmatpush2.bf16.msra.mxu0 0
  %2609 = vmatprep.subr.bf16.mxu0 0
  %2610 = vmatpush2.bf16.msra.mxu0 0
  %2611 = vmatprep.mubr.bf16.mxu0 0
  %2612 = vmatmul.mubr.bf16.gmra.mxu0 %v2556
  %v2613 = vpop.f32.mrf.mxu0
  %v2614 = vadd.f32 0.0, %v2613
  %v2615 = vpop.f32.mrf.mxu0
  %v2616 = vpop.f32.mrf.mxu0
  %v2617 = vadd.f32 0.0, %v2616
  %v2618 = vpop.f32.mrf.mxu0
  %2619 = vmatprep.mubr.bf16.mxu0 0
  %2620 = vmatmul.mubr.bf16.gmra.mxu0 %v2559
  %v2621 = vpop.f32.mrf.mxu0
  %v2622 = vadd.f32 0.0, %v2621
  %v2623 = vpop.f32.mrf.mxu0
  %v2624 = vpop.f32.mrf.mxu0
  %v2625 = vadd.f32 0.0, %v2624
  %v2626 = vpop.f32.mrf.mxu0
  %2627 = vmatprep.mubr.bf16.mxu0 0
  %2628 = vmatmul.mubr.bf16.gmra.mxu0 %v2562
  %v2629 = vpop.f32.mrf.mxu0
  %v2630 = vadd.f32 0.0, %v2629
  %v2631 = vpop.f32.mrf.mxu0
  %v2632 = vpop.f32.mrf.mxu0
  %v2633 = vadd.f32 0.0, %v2632
  %v2634 = vpop.f32.mrf.mxu0
  %2635 = vmatprep.mubr.bf16.mxu0 0
  %2636 = vmatmul.mubr.bf16.gmra.mxu0 %v2565
  %v2637 = vpop.f32.mrf.mxu0
  %v2638 = vadd.f32 0.0, %v2637
  %v2639 = vpop.f32.mrf.mxu0
  %v2640 = vpop.f32.mrf.mxu0
  %v2641 = vadd.f32 0.0, %v2640
  %v2642 = vpop.f32.mrf.mxu0
  %2643 = vmatprep.mubr.bf16.mxu0 0
  %2644 = vmatmul.mubr.bf16.gmra.mxu0 %v2568
  %v2645 = vpop.f32.mrf.mxu0
  %v2646 = vadd.f32 0.0, %v2645
  %v2647 = vpop.f32.mrf.mxu0
  %v2648 = vpop.f32.mrf.mxu0
  %v2649 = vadd.f32 0.0, %v2648
  %v2650 = vpop.f32.mrf.mxu0
  %2651 = vmatprep.mubr.bf16.mxu0 0
  %2652 = vmatmul.mubr.bf16.gmra.mxu0 %v2571
  %v2653 = vpop.f32.mrf.mxu0
  %v2654 = vadd.f32 0.0, %v2653
  %v2655 = vpop.f32.mrf.mxu0
  %v2656 = vpop.f32.mrf.mxu0
  %v2657 = vadd.f32 0.0, %v2656
  %v2658 = vpop.f32.mrf.mxu0
  %2659 = vmatprep.mubr.bf16.mxu0 0
  %2660 = vmatmul.mubr.bf16.gmra.mxu0 %v2574
  %v2661 = vpop.f32.mrf.mxu0
  %v2662 = vadd.f32 0.0, %v2661
  %v2663 = vpop.f32.mrf.mxu0
  %v2664 = vpop.f32.mrf.mxu0
  %v2665 = vadd.f32 0.0, %v2664
  %v2666 = vpop.f32.mrf.mxu0
  %2667 = vmatprep.mubr.bf16.mxu0 0
  %2668 = vmatmul.mubr.bf16.gmra.mxu0 %v2577
  %v2669 = vpop.f32.mrf.mxu0
  %v2670 = vadd.f32 0.0, %v2669
  %v2671 = vpop.f32.mrf.mxu0
  %v2672 = vpop.f32.mrf.mxu0
  %v2673 = vadd.f32 0.0, %v2672
  %v2674 = vpop.f32.mrf.mxu0
  %2675 = vdwg.mxu0
  %v2676 = vadd.f32 %v2227, %v2614
  %v2677 = vadd.f32 %v2228, %v2617
  %v2678 = vadd.f32 %v2229, %v2622
  %v2679 = vadd.f32 %v2230, %v2625
  %v2680 = vadd.f32 %v2231, %v2630
  %v2681 = vadd.f32 %v2232, %v2633
  %v2682 = vadd.f32 %v2233, %v2638
  %v2683 = vadd.f32 %v2234, %v2641
  %v2684 = vadd.f32 %v2235, %v2646
  %v2685 = vadd.f32 %v2236, %v2649
  %v2686 = vadd.f32 %v2237, %v2654
  %v2687 = vadd.f32 %v2238, %v2657
  %v2688 = vadd.f32 %v2239, %v2662
  %v2689 = vadd.f32 %v2240, %v2665
  %v2690 = vadd.f32 %v2241, %v2670
  %v2691 = vadd.f32 %v2242, %v2673
  %v2692 = vadd.f32 %v2676, %v2677
  %v2693 = vadd.f32 %v2692, %v2678
  %v2694 = vadd.f32 %v2693, %v2679
  %v2695 = vadd.f32 %v2694, %v2680
  %v2696 = vadd.f32 %v2695, %v2681
  %v2697 = vadd.f32 %v2696, %v2682
  %v2698 = vadd.f32 %v2697, %v2683
  %v2699 = vadd.f32 %v2698, %v2684
  %v2700 = vadd.f32 %v2699, %v2685
  %v2701 = vadd.f32 %v2700, %v2686
  %v2702 = vadd.f32 %v2701, %v2687
  %v2703 = vadd.f32 %v2702, %v2688
  %v2704 = vadd.f32 %v2703, %v2689
  %v2705 = vadd.f32 %v2704, %v2690
  %v2706 = vadd.f32 %v2705, %v2691
  %v2707 = vrot.slane %v2706, 4
  %v2708 = vadd.f32 %v2706, %v2707
  %v2709 = vrot.slane %v2708, 2
  %v2710 = vadd.f32 %v2708, %v2709
  %v2711 = vrot.slane %v2710, 1
  %v2712 = vadd.f32 %v2710, %v2711
  %v2713 = vmul.f32 %v2712, 0.0078125
  %v2714 = vsub.f32 %v2676, %v2713
  %v2715 = vsub.f32 %v2677, %v2713
  %v2716 = vsub.f32 %v2678, %v2713
  %v2717 = vsub.f32 %v2679, %v2713
  %v2718 = vsub.f32 %v2680, %v2713
  %v2719 = vsub.f32 %v2681, %v2713
  %v2720 = vsub.f32 %v2682, %v2713
  %v2721 = vsub.f32 %v2683, %v2713
  %v2722 = vsub.f32 %v2684, %v2713
  %v2723 = vsub.f32 %v2685, %v2713
  %v2724 = vsub.f32 %v2686, %v2713
  %v2725 = vsub.f32 %v2687, %v2713
  %v2726 = vsub.f32 %v2688, %v2713
  %v2727 = vsub.f32 %v2689, %v2713
  %v2728 = vsub.f32 %v2690, %v2713
  %v2729 = vsub.f32 %v2691, %v2713
  %v2730 = vmul.f32 %v2714, %v2714
  %v2731 = vmul.f32 %v2715, %v2715
  %v2732 = vmul.f32 %v2716, %v2716
  %v2733 = vmul.f32 %v2717, %v2717
  %v2734 = vmul.f32 %v2718, %v2718
  %v2735 = vmul.f32 %v2719, %v2719
  %v2736 = vmul.f32 %v2720, %v2720
  %v2737 = vmul.f32 %v2721, %v2721
  %v2738 = vmul.f32 %v2722, %v2722
  %v2739 = vmul.f32 %v2723, %v2723
  %v2740 = vmul.f32 %v2724, %v2724
  %v2741 = vmul.f32 %v2725, %v2725
  %v2742 = vmul.f32 %v2726, %v2726
  %v2743 = vmul.f32 %v2727, %v2727
  %v2744 = vmul.f32 %v2728, %v2728
  %v2745 = vmul.f32 %v2729, %v2729
  %v2746 = vadd.f32 %v2730, %v2731
  %v2747 = vadd.f32 %v2746, %v2732
  %v2748 = vadd.f32 %v2747, %v2733
  %v2749 = vadd.f32 %v2748, %v2734
  %v2750 = vadd.f32 %v2749, %v2735
  %v2751 = vadd.f32 %v2750, %v2736
  %v2752 = vadd.f32 %v2751, %v2737
  %v2753 = vadd.f32 %v2752, %v2738
  %v2754 = vadd.f32 %v2753, %v2739
  %v2755 = vadd.f32 %v2754, %v2740
  %v2756 = vadd.f32 %v2755, %v2741
  %v2757 = vadd.f32 %v2756, %v2742
  %v2758 = vadd.f32 %v2757, %v2743
  %v2759 = vadd.f32 %v2758, %v2744
  %v2760 = vadd.f32 %v2759, %v2745
  %v2761 = vrot.slane %v2760, 4
  %v2762 = vadd.f32 %v2760, %v2761
  %v2763 = vrot.slane %v2762, 2
  %v2764 = vadd.f32 %v2762, %v2763
  %v2765 = vrot.slane %v2764, 1
  %v2766 = vadd.f32 %v2764, %v2765
  %v2767 = vmul.f32 %v2766, 0.0078125
  %v2768 = vadd.f32 %v2767, 1e-05
  %v2769 = vrsqrt.pop %v2768
  %v2770 = vmul.f32 %v2714, %v2769
  %v2771 = vmul.f32 %v2715, %v2769
  %v2772 = vmul.f32 %v2716, %v2769
  %v2773 = vmul.f32 %v2717, %v2769
  %v2774 = vmul.f32 %v2718, %v2769
  %v2775 = vmul.f32 %v2719, %v2769
  %v2776 = vmul.f32 %v2720, %v2769
  %v2777 = vmul.f32 %v2721, %v2769
  %v2778 = vmul.f32 %v2722, %v2769
  %v2779 = vmul.f32 %v2723, %v2769
  %v2780 = vmul.f32 %v2724, %v2769
  %v2781 = vmul.f32 %v2725, %v2769
  %v2782 = vmul.f32 %v2726, %v2769
  %v2783 = vmul.f32 %v2727, %v2769
  %v2784 = vmul.f32 %v2728, %v2769
  %v2785 = vmul.f32 %v2729, %v2769
  %v2786 = vld [vmem:[%s2] sm:$0x1]
  %v2788 = vlaneseq
  %v2789 = vshrl.u32 %v2788, 7
  %v2790 = vsub.s32 0, %v2789
  %v2791 = vrot.slane %v2786, %v2790
  %v2793 = vmul.f32 %v2770, %v2791
  %v2794 = vmul.f32 %v2771, %v2791
  %v2795 = vmul.f32 %v2772, %v2791
  %v2796 = vmul.f32 %v2773, %v2791
  %v2797 = vmul.f32 %v2774, %v2791
  %v2798 = vmul.f32 %v2775, %v2791
  %v2799 = vmul.f32 %v2776, %v2791
  %v2800 = vmul.f32 %v2777, %v2791
  %v2801 = vmul.f32 %v2778, %v2791
  %v2802 = vmul.f32 %v2779, %v2791
  %v2803 = vmul.f32 %v2780, %v2791
  %v2804 = vmul.f32 %v2781, %v2791
  %v2805 = vmul.f32 %v2782, %v2791
  %v2806 = vmul.f32 %v2783, %v2791
  %v2807 = vmul.f32 %v2784, %v2791
  %v2808 = vmul.f32 %v2785, %v2791
  %v2809 = vld [vmem:[%s3] sm:$0x1]
  %v2811 = vlaneseq
  %v2812 = vshrl.u32 %v2811, 7
  %v2813 = vsub.s32 0, %v2812
  %v2814 = vrot.slane %v2809, %v2813
  %v2816 = vadd.f32 %v2793, %v2814
  %v2817 = vadd.f32 %v2794, %v2814
  %v2818 = vadd.f32 %v2795, %v2814
  %v2819 = vadd.f32 %v2796, %v2814
  %v2820 = vadd.f32 %v2797, %v2814
  %v2821 = vadd.f32 %v2798, %v2814
  %v2822 = vadd.f32 %v2799, %v2814
  %v2823 = vadd.f32 %v2800, %v2814
  %v2824 = vadd.f32 %v2801, %v2814
  %v2825 = vadd.f32 %v2802, %v2814
  %v2826 = vadd.f32 %v2803, %v2814
  %v2827 = vadd.f32 %v2804, %v2814
  %v2828 = vadd.f32 %v2805, %v2814
  %v2829 = vadd.f32 %v2806, %v2814
  %v2830 = vadd.f32 %v2807, %v2814
  %v2831 = vadd.f32 %v2808, %v2814
  %v2832 = vpack.c.bf16 %v2817, %v2816
  %v2833 = vpack.c.bf16 %v2819, %v2818
  %v2834 = vpack.c.bf16 %v2821, %v2820
  %v2835 = vpack.c.bf16 %v2823, %v2822
  %v2836 = vpack.c.bf16 %v2825, %v2824
  %v2837 = vpack.c.bf16 %v2827, %v2826
  %v2838 = vpack.c.bf16 %v2829, %v2828
  %v2839 = vpack.c.bf16 %v2831, %v2830
  %v2848 = vunpack.c.l.b16 %v2832
  %v2849 = vunpack.c.h.b16 %v2832
  %v2850 = vunpack.c.l.b16 %v2833
  %v2851 = vunpack.c.h.b16 %v2833
  %v2852 = vunpack.c.l.b16 %v2834
  %v2853 = vunpack.c.h.b16 %v2834
  %v2854 = vunpack.c.l.b16 %v2835
  %v2855 = vunpack.c.h.b16 %v2835
  %v2856 = vunpack.c.l.b16 %v2836
  %v2857 = vunpack.c.h.b16 %v2836
  %v2858 = vunpack.c.l.b16 %v2837
  %v2859 = vunpack.c.h.b16 %v2837
  %v2860 = vunpack.c.l.b16 %v2838
  %v2861 = vunpack.c.h.b16 %v2838
  %v2862 = vunpack.c.l.b16 %v2839
  %v2863 = vunpack.c.h.b16 %v2839
  %v2864 = vpack.c.b16 %v2848, %v2848
  %v2865 = vpack.c.b16 %v2849, %v2849
  %v2866 = vpack.c.b16 %v2850, %v2850
  %v2867 = vpack.c.b16 %v2851, %v2851
  %v2868 = vpack.c.b16 %v2852, %v2852
  %v2869 = vpack.c.b16 %v2853, %v2853
  %v2870 = vpack.c.b16 %v2854, %v2854
  %v2871 = vpack.c.b16 %v2855, %v2855
  %v2872 = vpack.c.b16 %v2856, %v2856
  %v2873 = vpack.c.b16 %v2857, %v2857
  %v2874 = vpack.c.b16 %v2858, %v2858
  %v2875 = vpack.c.b16 %v2859, %v2859
  %v2876 = vpack.c.b16 %v2860, %v2860
  %v2877 = vpack.c.b16 %v2861, %v2861
  %v2878 = vpack.c.b16 %v2862, %v2862
  %v2879 = vpack.c.b16 %v2863, %v2863
  %2896 = vst [vmem:[%s4] sm:$0xf] %v2864
  %2897 = vst [vmem:[%s4 + $0x4] sm:$0xf] %v2865
  %2898 = vst [vmem:[%s4 + $0x8] sm:$0xf] %v2866
  %2899 = vst [vmem:[%s4 + $0xc] sm:$0xf] %v2867
  %2900 = vst [vmem:[%s4 + $0x10] sm:$0xf] %v2868
  %2901 = vst [vmem:[%s4 + $0x14] sm:$0xf] %v2869
  %2902 = vst [vmem:[%s4 + $0x18] sm:$0xf] %v2870
  %2903 = vst [vmem:[%s4 + $0x1c] sm:$0xf] %v2871
  %2904 = vst [vmem:[%s4 + $0x20] sm:$0xf] %v2872
  %2905 = vst [vmem:[%s4 + $0x24] sm:$0xf] %v2873
  %2906 = vst [vmem:[%s4 + $0x28] sm:$0xf] %v2874
  %2907 = vst [vmem:[%s4 + $0x2c] sm:$0xf] %v2875
  %2908 = vst [vmem:[%s4 + $0x30] sm:$0xf] %v2876
  %2909 = vst [vmem:[%s4 + $0x34] sm:$0xf] %v2877
  %2910 = vst [vmem:[%s4 + $0x38] sm:$0xf] %v2878
  %2911 = vst [vmem:[%s4 + $0x3c] sm:$0xf] %v2879
  // Predicated region
  $region18: #{residual_block_forward.4} parent=0 // pred_check
    _
  $region19: #{residual_block_forward.4} parent=0 // pred_check_branch
    %2913 = sbr.rel (0) target = $region21
  $region20: #{residual_block_forward.4} parent=0 // pred_region
    _
  $region21: #{residual_block_forward.4} parent=0 // pred_fallthru
    _
  // Predicated region
  $region22: #{residual_block_forward.4} parent=0 // pred_check
    _
  $region23: #{residual_block_forward.4} parent=0 // pred_check_branch
    %2915 = sbr.rel (0) target = $region25
  $region24: #{residual_block_forward.4} parent=0 // pred_region
    _
  $region25: #{residual_block_forward.4} parent=0 // pred_fallthru
    _

// kernel: residual_block_forward.5
$region0: #{residual_block_forward.5}
  #allocation0 [shape = 'u32[]', space=smem, size = 0x4, offset = 0x4, fixed_abs, tag = 'smem constant byte address 0x4 - core index']
  #allocation1 [shape = 'u32[144,128]{1,0:T(1,128)}', space=vmem, size = 0x12000, scoped, tag = 'internal scratch']
  %s0 = inlined_call_operand.vmem [shape: bf16[2,10,10,128], index: 0, kind: input, shape index: {}]
  %s1 = inlined_call_operand.vmem [shape: bf16[1152,128], index: 1, kind: input, shape index: {}]
  %s2 = inlined_call_operand.vmem [shape: f32[1,128], index: 2, kind: input, shape index: {}]
  %s3 = inlined_call_operand.vmem [shape: f32[1,128], index: 3, kind: input, shape index: {}]
  %s4 = inlined_call_operand.vmem [shape: bf16[128,128], index: 4, kind: input, shape index: {}]
  %s5 = inlined_call_operand.hbm [shape: bf16[128,128], index: 5, kind: output, shape index: {}]
  %s6 = sld [smem:[#allocation0]]
  $region30: #{residual_block_forward.5} parent=0
    _
  %s8 = ssub.s32 1, %s6
  %s9 = scalar_select 0, %s8, %s6
  $region1: #{residual_block_forward.5} parent=0
    #allocation2 [shape = 'u8[32768]{0}', space=vmem, size = 0x8000, scoped, tag = 'output window, operand 0, single buffered']
    #allocation3 [shape = 's32[1]{0}', space=sflag, size = 0x4, scoped, tag = 'scoped memory for residual_block_forward.5']
    %10 = vsyncpa [#allocation3], 0
    // Predicated region
    $region2: #{residual_block_forward.5} parent=1 // pred_check
      _
    $region3: #{residual_block_forward.5} parent=1 // pred_check_branch
      %12 = sbr.rel (0) target = $region5
    $region4: #{residual_block_forward.5} parent=1 // pred_region
      _
    $region5: #{residual_block_forward.5} parent=1 // pred_fallthru
      _
    // Predicated region
    $region6: #{residual_block_forward.5} parent=1 // pred_check
      _
    $region7: #{residual_block_forward.5} parent=1 // pred_check_branch
      %14 = sbr.rel (0) target = $region9
    $region8: #{residual_block_forward.5} parent=1 // pred_region
      _
    $region9: #{residual_block_forward.5} parent=1 // pred_fallthru
      _
    // Predicated region
    $region10: #{residual_block_forward.5} parent=1 // pred_check
      _
    $region11: #{residual_block_forward.5} parent=1 // pred_check_branch
      %16 = sbr.rel (0) target = $region13
    $region12: #{residual_block_forward.5} parent=1 // pred_region
      _
    $region13: #{residual_block_forward.5} parent=1 // pred_fallthru
      _
    // Predicated region
    $region14: #{residual_block_forward.5} parent=1 // pred_check
      _
    $region15: #{residual_block_forward.5} parent=1 // pred_check_branch
      %18 = sbr.rel (0) target = $region17
    $region16: #{residual_block_forward.5} parent=1 // pred_region
      _
    $region17: #{residual_block_forward.5} parent=1 // pred_fallthru
      _
    // Predicated region
    $region18: #{residual_block_forward.5} parent=1 // pred_check
      _
    $region19: #{residual_block_forward.5} parent=1 // pred_check_branch
      %20 = sbr.rel (0) target = $region21
    $region20: #{residual_block_forward.5} parent=1 // pred_region
      _
    $region21: #{residual_block_forward.5} parent=1 // pred_fallthru
      _
    %v22 = vld [vmem:[%s0] sm:$0xf]
    %v23 = vld [vmem:[%s0 + $0x8] sm:$0xf]
    %v24 = vld [vmem:[%s0 + $0x10] sm:$0xf]
    %v25 = vld [vmem:[%s0 + $0x18] sm:$0xf]
    %v26 = vld [vmem:[%s0 + $0x20] sm:$0xf]
    %v27 = vld [vmem:[%s0 + $0x28] sm:$0xf]
    %v28 = vld [vmem:[%s0 + $0x30] sm:$0xf]
    %v29 = vld [vmem:[%s0 + $0x38] sm:$0xf]
    %v30 = vld [vmem:[%s0 + $0x50] sm:$0xf]
    %v31 = vld [vmem:[%s0 + $0x58] sm:$0xf]
    %v32 = vld [vmem:[%s0 + $0x60] sm:$0xf]
    %v33 = vld [vmem:[%s0 + $0x68] sm:$0xf]
    %v34 = vld [vmem:[%s0 + $0x70] sm:$0xf]
    %v35 = vld [vmem:[%s0 + $0x78] sm:$0xf]
    %v36 = vld [vmem:[%s0 + $0x80] sm:$0xf]
    %v37 = vld [vmem:[%s0 + $0x88] sm:$0xf]
    %v38 = vld [vmem:[%s0 + $0x4] sm:$0x1]
    %v39 = vld [vmem:[%s0 + $0xc] sm:$0x1]
    %v40 = vld [vmem:[%s0 + $0x14] sm:$0x1]
    %v41 = vld [vmem:[%s0 + $0x1c] sm:$0x1]
    %v42 = vld [vmem:[%s0 + $0x24] sm:$0x1]
    %v43 = vld [vmem:[%s0 + $0x2c] sm:$0x1]
    %v44 = vld [vmem:[%s0 + $0x34] sm:$0x1]
    %v45 = vld [vmem:[%s0 + $0x3c] sm:$0x1]
    %v46 = vld [vmem:[%s0 + $0x54] sm:$0x1]
    %v47 = vld [vmem:[%s0 + $0x5c] sm:$0x1]
    %v48 = vld [vmem:[%s0 + $0x64] sm:$0x1]
    %v49 = vld [vmem:[%s0 + $0x6c] sm:$0x1]
    %v50 = vld [vmem:[%s0 + $0x74] sm:$0x1]
    %v51 = vld [vmem:[%s0 + $0x7c] sm:$0x1]
    %v52 = vld [vmem:[%s0 + $0x84] sm:$0x1]
    %v53 = vld [vmem:[%s0 + $0x8c] sm:$0x1]
    %vm54 = vsmask.f32 3328
    %vm55 = vsmask.f32 7440
    %vm56 = vmor %vm54, %vm55
    %v58 = vshrl.u32 %v22, 16
    %v60 = vrot.slane %v58, 4
    %v61 = vshll.u32 %v22, 16
    %v63 = vrot.slane %v61, 5
    %v64 = vor.u32 %v60, %v63
    %v65 = vrot.slane %v64, 4
    %v67 = vshll.u32 %v38, 16
    %v69 = vrot.slane %v67, 5
    %v70 = vsel %vm56, %v65, %v69
    %v72 = vshrl.u32 %v23, 16
    %v74 = vrot.slane %v72, 4
    %v75 = vshll.u32 %v23, 16
    %v77 = vrot.slane %v75, 5
    %v78 = vor.u32 %v74, %v77
    %v79 = vrot.slane %v78, 4
    %v81 = vshll.u32 %v39, 16
    %v83 = vrot.slane %v81, 5
    %v84 = vsel %vm56, %v79, %v83
    %v86 = vshrl.u32 %v24, 16
    %v88 = vrot.slane %v86, 4
    %v89 = vshll.u32 %v24, 16
    %v91 = vrot.slane %v89, 5
    %v92 = vor.u32 %v88, %v91
    %v93 = vrot.slane %v92, 4
    %v95 = vshll.u32 %v40, 16
    %v97 = vrot.slane %v95, 5
    %v98 = vsel %vm56, %v93, %v97
    %v100 = vshrl.u32 %v25, 16
    %v102 = vrot.slane %v100, 4
    %v103 = vshll.u32 %v25, 16
    %v105 = vrot.slane %v103, 5
    %v106 = vor.u32 %v102, %v105
    %v107 = vrot.slane %v106, 4
    %v109 = vshll.u32 %v41, 16
    %v111 = vrot.slane %v109, 5
    %v112 = vsel %vm56, %v107, %v111
    %v114 = vshrl.u32 %v26, 16
    %v116 = vrot.slane %v114, 4
    %v117 = vshll.u32 %v26, 16
    %v119 = vrot.slane %v117, 5
    %v120 = vor.u32 %v116, %v119
    %v121 = vrot.slane %v120, 4
    %v123 = vshll.u32 %v42, 16
    %v125 = vrot.slane %v123, 5
    %v126 = vsel %vm56, %v121, %v125
    %v128 = vshrl.u32 %v27, 16
    %v130 = vrot.slane %v128, 4
    %v131 = vshll.u32 %v27, 16
    %v133 = vrot.slane %v131, 5
    %v134 = vor.u32 %v130, %v133
    %v135 = vrot.slane %v134, 4
    %v137 = vshll.u32 %v43, 16
    %v139 = vrot.slane %v137, 5
    %v140 = vsel %vm56, %v135, %v139
    %v142 = vshrl.u32 %v28, 16
    %v144 = vrot.slane %v142, 4
    %v145 = vshll.u32 %v28, 16
    %v147 = vrot.slane %v145, 5
    %v148 = vor.u32 %v144, %v147
    %v149 = vrot.slane %v148, 4
    %v151 = vshll.u32 %v44, 16
    %v153 = vrot.slane %v151, 5
    %v154 = vsel %vm56, %v149, %v153
    %v156 = vshrl.u32 %v29, 16
    %v158 = vrot.slane %v156, 4
    %v159 = vshll.u32 %v29, 16
    %v161 = vrot.slane %v159, 5
    %v162 = vor.u32 %v158, %v161
    %v163 = vrot.slane %v162, 4
    %v165 = vshll.u32 %v45, 16
    %v167 = vrot.slane %v165, 5
    %v168 = vsel %vm56, %v163, %v167
    %v170 = vshrl.u32 %v30, 16
    %v172 = vrot.slane %v170, 4
    %v173 = vshll.u32 %v30, 16
    %v175 = vrot.slane %v173, 5
    %v176 = vor.u32 %v172, %v175
    %v177 = vrot.slane %v176, 4
    %v179 = vshll.u32 %v46, 16
    %v181 = vrot.slane %v179, 5
    %v182 = vsel %vm56, %v177, %v181
    %v184 = vshrl.u32 %v31, 16
    %v186 = vrot.slane %v184, 4
    %v187 = vshll.u32 %v31, 16
    %v189 = vrot.slane %v187, 5
    %v190 = vor.u32 %v186, %v189
    %v191 = vrot.slane %v190, 4
    %v193 = vshll.u32 %v47, 16
    %v195 = vrot.slane %v193, 5
    %v196 = vsel %vm56, %v191, %v195
    %v198 = vshrl.u32 %v32, 16
    %v200 = vrot.slane %v198, 4
    %v201 = vshll.u32 %v32, 16
    %v203 = vrot.slane %v201, 5
    %v204 = vor.u32 %v200, %v203
    %v205 = vrot.slane %v204, 4
    %v207 = vshll.u32 %v48, 16
    %v209 = vrot.slane %v207, 5
    %v210 = vsel %vm56, %v205, %v209
    %v212 = vshrl.u32 %v33, 16
    %v214 = vrot.slane %v212, 4
    %v215 = vshll.u32 %v33, 16
    %v217 = vrot.slane %v215, 5
    %v218 = vor.u32 %v214, %v217
    %v219 = vrot.slane %v218, 4
    %v221 = vshll.u32 %v49, 16
    %v223 = vrot.slane %v221, 5
    %v224 = vsel %vm56, %v219, %v223
    %v226 = vshrl.u32 %v34, 16
    %v228 = vrot.slane %v226, 4
    %v229 = vshll.u32 %v34, 16
    %v231 = vrot.slane %v229, 5
    %v232 = vor.u32 %v228, %v231
    %v233 = vrot.slane %v232, 4
    %v235 = vshll.u32 %v50, 16
    %v237 = vrot.slane %v235, 5
    %v238 = vsel %vm56, %v233, %v237
    %v240 = vshrl.u32 %v35, 16
    %v242 = vrot.slane %v240, 4
    %v243 = vshll.u32 %v35, 16
    %v245 = vrot.slane %v243, 5
    %v246 = vor.u32 %v242, %v245
    %v247 = vrot.slane %v246, 4
    %v249 = vshll.u32 %v51, 16
    %v251 = vrot.slane %v249, 5
    %v252 = vsel %vm56, %v247, %v251
    %v254 = vshrl.u32 %v36, 16
    %v256 = vrot.slane %v254, 4
    %v257 = vshll.u32 %v36, 16
    %v259 = vrot.slane %v257, 5
    %v260 = vor.u32 %v256, %v259
    %v261 = vrot.slane %v260, 4
    %v263 = vshll.u32 %v52, 16
    %v265 = vrot.slane %v263, 5
    %v266 = vsel %vm56, %v261, %v265
    %v268 = vshrl.u32 %v37, 16
    %v270 = vrot.slane %v268, 4
    %v271 = vshll.u32 %v37, 16
    %v273 = vrot.slane %v271, 5
    %v274 = vor.u32 %v270, %v273
    %v275 = vrot.slane %v274, 4
    %v277 = vshll.u32 %v53, 16
    %v279 = vrot.slane %v277, 5
    %v280 = vsel %vm56, %v275, %v279
    %v281 = vld [vmem:[%s0] sm:$0xe]
    %v282 = vld [vmem:[%s0 + $0x8] sm:$0xe]
    %v283 = vld [vmem:[%s0 + $0x10] sm:$0xe]
    %v284 = vld [vmem:[%s0 + $0x18] sm:$0xe]
    %v285 = vld [vmem:[%s0 + $0x20] sm:$0xe]
    %v286 = vld [vmem:[%s0 + $0x28] sm:$0xe]
    %v287 = vld [vmem:[%s0 + $0x30] sm:$0xe]
    %v288 = vld [vmem:[%s0 + $0x38] sm:$0xe]
    %v289 = vld [vmem:[%s0 + $0x50] sm:$0xe]
    %v290 = vld [vmem:[%s0 + $0x58] sm:$0xe]
    %v291 = vld [vmem:[%s0 + $0x60] sm:$0xe]
    %v292 = vld [vmem:[%s0 + $0x68] sm:$0xe]
    %v293 = vld [vmem:[%s0 + $0x70] sm:$0xe]
    %v294 = vld [vmem:[%s0 + $0x78] sm:$0xe]
    %v295 = vld [vmem:[%s0 + $0x80] sm:$0xe]
    %v296 = vld [vmem:[%s0 + $0x88] sm:$0xe]
    %vm329 = vcmask 1042432
    %vm330 = vcmask 1046532
    %vm331 = vmor %vm329, %vm330
    %v332 = vrot.slane %v281, 5
    %v333 = vrot.slane %v332, 4
    %v334 = vrot.slane %v38, 5
    %v335 = vsel %vm331, %v333, %v334
    %v336 = vrot.slane %v282, 5
    %v337 = vrot.slane %v336, 4
    %v338 = vrot.slane %v39, 5
    %v339 = vsel %vm331, %v337, %v338
    %v340 = vrot.slane %v283, 5
    %v341 = vrot.slane %v340, 4
    %v342 = vrot.slane %v40, 5
    %v343 = vsel %vm331, %v341, %v342
    %v344 = vrot.slane %v284, 5
    %v345 = vrot.slane %v344, 4
    %v346 = vrot.slane %v41, 5
    %v347 = vsel %vm331, %v345, %v346
    %v348 = vrot.slane %v285, 5
    %v349 = vrot.slane %v348, 4
    %v350 = vrot.slane %v42, 5
    %v351 = vsel %vm331, %v349, %v350
    %v352 = vrot.slane %v286, 5
    %v353 = vrot.slane %v352, 4
    %v354 = vrot.slane %v43, 5
    %v355 = vsel %vm331, %v353, %v354
    %v356 = vrot.slane %v287, 5
    %v357 = vrot.slane %v356, 4
    %v358 = vrot.slane %v44, 5
    %v359 = vsel %vm331, %v357, %v358
    %v360 = vrot.slane %v288, 5
    %v361 = vrot.slane %v360, 4
    %v362 = vrot.slane %v45, 5
    %v363 = vsel %vm331, %v361, %v362
    %v364 = vrot.slane %v289, 5
    %v365 = vrot.slane %v364, 4
    %v366 = vrot.slane %v46, 5
    %v367 = vsel %vm331, %v365, %v366
    %v368 = vrot.slane %v290, 5
    %v369 = vrot.slane %v368, 4
    %v370 = vrot.slane %v47, 5
    %v371 = vsel %vm331, %v369, %v370
    %v372 = vrot.slane %v291, 5
    %v373 = vrot.slane %v372, 4
    %v374 = vrot.slane %v48, 5
    %v375 = vsel %vm331, %v373, %v374
    %v376 = vrot.slane %v292, 5
    %v377 = vrot.slane %v376, 4
    %v378 = vrot.slane %v49, 5
    %v379 = vsel %vm331, %v377, %v378
    %v380 = vrot.slane %v293, 5
    %v381 = vrot.slane %v380, 4
    %v382 = vrot.slane %v50, 5
    %v383 = vsel %vm331, %v381, %v382
    %v384 = vrot.slane %v294, 5
    %v385 = vrot.slane %v384, 4
    %v386 = vrot.slane %v51, 5
    %v387 = vsel %vm331, %v385, %v386
    %v388 = vrot.slane %v295, 5
    %v389 = vrot.slane %v388, 4
    %v390 = vrot.slane %v52, 5
    %v391 = vsel %vm331, %v389, %v390
    %v392 = vrot.slane %v296, 5
    %v393 = vrot.slane %v392, 4
    %v394 = vrot.slane %v53, 5
    %v395 = vsel %vm331, %v393, %v394
    %s396 = scalar_lea.vmem %s0, 8
    %v397 = vld [vmem:[%s396] sm:$0xf]
    %v398 = vld [vmem:[%s396 + $0x8] sm:$0xf]
    %v399 = vld [vmem:[%s396 + $0x10] sm:$0xf]
    %v400 = vld [vmem:[%s396 + $0x18] sm:$0xf]
    %v401 = vld [vmem:[%s396 + $0x20] sm:$0xf]
    %v402 = vld [vmem:[%s396 + $0x28] sm:$0xf]
    %v403 = vld [vmem:[%s396 + $0x30] sm:$0xf]
    %v404 = vld [vmem:[%s396 + $0x38] sm:$0xf]
    %v405 = vld [vmem:[%s396 + $0x50] sm:$0xf]
    %v406 = vld [vmem:[%s396 + $0x58] sm:$0xf]
    %v407 = vld [vmem:[%s396 + $0x60] sm:$0xf]
    %v408 = vld [vmem:[%s396 + $0x68] sm:$0xf]
    %v409 = vld [vmem:[%s396 + $0x70] sm:$0xf]
    %v410 = vld [vmem:[%s396 + $0x78] sm:$0xf]
    %v411 = vld [vmem:[%s396 + $0x80] sm:$0xf]
    %v412 = vld [vmem:[%s396 + $0x88] sm:$0xf]
    %v413 = vld [vmem:[%s396 + $0x4] sm:$0x1]
    %v414 = vld [vmem:[%s396 + $0xc] sm:$0x1]
    %v415 = vld [vmem:[%s396 + $0x14] sm:$0x1]
    %v416 = vld [vmem:[%s396 + $0x1c] sm:$0x1]
    %v417 = vld [vmem:[%s396 + $0x24] sm:$0x1]
    %v418 = vld [vmem:[%s396 + $0x2c] sm:$0x1]
    %v419 = vld [vmem:[%s396 + $0x34] sm:$0x1]
    %v420 = vld [vmem:[%s396 + $0x3c] sm:$0x1]
    %v421 = vld [vmem:[%s396 + $0x54] sm:$0x1]
    %v422 = vld [vmem:[%s396 + $0x5c] sm:$0x1]
    %v423 = vld [vmem:[%s396 + $0x64] sm:$0x1]
    %v424 = vld [vmem:[%s396 + $0x6c] sm:$0x1]
    %v425 = vld [vmem:[%s396 + $0x74] sm:$0x1]
    %v426 = vld [vmem:[%s396 + $0x7c] sm:$0x1]
    %v427 = vld [vmem:[%s396 + $0x84] sm:$0x1]
    %v428 = vld [vmem:[%s396 + $0x8c] sm:$0x1]
    %v430 = vshrl.u32 %v397, 16
    %v432 = vrot.slane %v430, 4
    %v433 = vshll.u32 %v397, 16
    %v435 = vrot.slane %v433, 5
    %v436 = vor.u32 %v432, %v435
    %v437 = vrot.slane %v436, 4
    %v439 = vshll.u32 %v413, 16
    %v441 = vrot.slane %v439, 5
    %v442 = vsel %vm56, %v437, %v441
    %v444 = vshrl.u32 %v398, 16
    %v446 = vrot.slane %v444, 4
    %v447 = vshll.u32 %v398, 16
    %v449 = vrot.slane %v447, 5
    %v450 = vor.u32 %v446, %v449
    %v451 = vrot.slane %v450, 4
    %v453 = vshll.u32 %v414, 16
    %v455 = vrot.slane %v453, 5
    %v456 = vsel %vm56, %v451, %v455
    %v458 = vshrl.u32 %v399, 16
    %v460 = vrot.slane %v458, 4
    %v461 = vshll.u32 %v399, 16
    %v463 = vrot.slane %v461, 5
    %v464 = vor.u32 %v460, %v463
    %v465 = vrot.slane %v464, 4
    %v467 = vshll.u32 %v415, 16
    %v469 = vrot.slane %v467, 5
    %v470 = vsel %vm56, %v465, %v469
    %v472 = vshrl.u32 %v400, 16
    %v474 = vrot.slane %v472, 4
    %v475 = vshll.u32 %v400, 16
    %v477 = vrot.slane %v475, 5
    %v478 = vor.u32 %v474, %v477
    %v479 = vrot.slane %v478, 4
    %v481 = vshll.u32 %v416, 16
    %v483 = vrot.slane %v481, 5
    %v484 = vsel %vm56, %v479, %v483
    %v486 = vshrl.u32 %v401, 16
    %v488 = vrot.slane %v486, 4
    %v489 = vshll.u32 %v401, 16
    %v491 = vrot.slane %v489, 5
    %v492 = vor.u32 %v488, %v491
    %v493 = vrot.slane %v492, 4
    %v495 = vshll.u32 %v417, 16
    %v497 = vrot.slane %v495, 5
    %v498 = vsel %vm56, %v493, %v497
    %v500 = vshrl.u32 %v402, 16
    %v502 = vrot.slane %v500, 4
    %v503 = vshll.u32 %v402, 16
    %v505 = vrot.slane %v503, 5
    %v506 = vor.u32 %v502, %v505
    %v507 = vrot.slane %v506, 4
    %v509 = vshll.u32 %v418, 16
    %v511 = vrot.slane %v509, 5
    %v512 = vsel %vm56, %v507, %v511
    %v514 = vshrl.u32 %v403, 16
    %v516 = vrot.slane %v514, 4
    %v517 = vshll.u32 %v403, 16
    %v519 = vrot.slane %v517, 5
    %v520 = vor.u32 %v516, %v519
    %v521 = vrot.slane %v520, 4
    %v523 = vshll.u32 %v419, 16
    %v525 = vrot.slane %v523, 5
    %v526 = vsel %vm56, %v521, %v525
    %v528 = vshrl.u32 %v404, 16
    %v530 = vrot.slane %v528, 4
    %v531 = vshll.u32 %v404, 16
    %v533 = vrot.slane %v531, 5
    %v534 = vor.u32 %v530, %v533
    %v535 = vrot.slane %v534, 4
    %v537 = vshll.u32 %v420, 16
    %v539 = vrot.slane %v537, 5
    %v540 = vsel %vm56, %v535, %v539
    %v542 = vshrl.u32 %v405, 16
    %v544 = vrot.slane %v542, 4
    %v545 = vshll.u32 %v405, 16
    %v547 = vrot.slane %v545, 5
    %v548 = vor.u32 %v544, %v547
    %v549 = vrot.slane %v548, 4
    %v551 = vshll.u32 %v421, 16
    %v553 = vrot.slane %v551, 5
    %v554 = vsel %vm56, %v549, %v553
    %v556 = vshrl.u32 %v406, 16
    %v558 = vrot.slane %v556, 4
    %v559 = vshll.u32 %v406, 16
    %v561 = vrot.slane %v559, 5
    %v562 = vor.u32 %v558, %v561
    %v563 = vrot.slane %v562, 4
    %v565 = vshll.u32 %v422, 16
    %v567 = vrot.slane %v565, 5
    %v568 = vsel %vm56, %v563, %v567
    %v570 = vshrl.u32 %v407, 16
    %v572 = vrot.slane %v570, 4
    %v573 = vshll.u32 %v407, 16
    %v575 = vrot.slane %v573, 5
    %v576 = vor.u32 %v572, %v575
    %v577 = vrot.slane %v576, 4
    %v579 = vshll.u32 %v423, 16
    %v581 = vrot.slane %v579, 5
    %v582 = vsel %vm56, %v577, %v581
    %v584 = vshrl.u32 %v408, 16
    %v586 = vrot.slane %v584, 4
    %v587 = vshll.u32 %v408, 16
    %v589 = vrot.slane %v587, 5
    %v590 = vor.u32 %v586, %v589
    %v591 = vrot.slane %v590, 4
    %v593 = vshll.u32 %v424, 16
    %v595 = vrot.slane %v593, 5
    %v596 = vsel %vm56, %v591, %v595
    %v598 = vshrl.u32 %v409, 16
    %v600 = vrot.slane %v598, 4
    %v601 = vshll.u32 %v409, 16
    %v603 = vrot.slane %v601, 5
    %v604 = vor.u32 %v600, %v603
    %v605 = vrot.slane %v604, 4
    %v607 = vshll.u32 %v425, 16
    %v609 = vrot.slane %v607, 5
    %v610 = vsel %vm56, %v605, %v609
    %v612 = vshrl.u32 %v410, 16
    %v614 = vrot.slane %v612, 4
    %v615 = vshll.u32 %v410, 16
    %v617 = vrot.slane %v615, 5
    %v618 = vor.u32 %v614, %v617
    %v619 = vrot.slane %v618, 4
    %v621 = vshll.u32 %v426, 16
    %v623 = vrot.slane %v621, 5
    %v624 = vsel %vm56, %v619, %v623
    %v626 = vshrl.u32 %v411, 16
    %v628 = vrot.slane %v626, 4
    %v629 = vshll.u32 %v411, 16
    %v631 = vrot.slane %v629, 5
    %v632 = vor.u32 %v628, %v631
    %v633 = vrot.slane %v632, 4
    %v635 = vshll.u32 %v427, 16
    %v637 = vrot.slane %v635, 5
    %v638 = vsel %vm56, %v633, %v637
    %v640 = vshrl.u32 %v412, 16
    %v642 = vrot.slane %v640, 4
    %v643 = vshll.u32 %v412, 16
    %v645 = vrot.slane %v643, 5
    %v646 = vor.u32 %v642, %v645
    %v647 = vrot.slane %v646, 4
    %v649 = vshll.u32 %v428, 16
    %v651 = vrot.slane %v649, 5
    %v652 = vsel %vm56, %v647, %v651
    %v653 = vld [vmem:[%s396] sm:$0xe]
    %v654 = vld [vmem:[%s396 + $0x8] sm:$0xe]
    %v655 = vld [vmem:[%s396 + $0x10] sm:$0xe]
    %v656 = vld [vmem:[%s396 + $0x18] sm:$0xe]
    %v657 = vld [vmem:[%s396 + $0x20] sm:$0xe]
    %v658 = vld [vmem:[%s396 + $0x28] sm:$0xe]
    %v659 = vld [vmem:[%s396 + $0x30] sm:$0xe]
    %v660 = vld [vmem:[%s396 + $0x38] sm:$0xe]
    %v661 = vld [vmem:[%s396 + $0x50] sm:$0xe]
    %v662 = vld [vmem:[%s396 + $0x58] sm:$0xe]
    %v663 = vld [vmem:[%s396 + $0x60] sm:$0xe]
    %v664 = vld [vmem:[%s396 + $0x68] sm:$0xe]
    %v665 = vld [vmem:[%s396 + $0x70] sm:$0xe]
    %v666 = vld [vmem:[%s396 + $0x78] sm:$0xe]
    %v667 = vld [vmem:[%s396 + $0x80] sm:$0xe]
    %v668 = vld [vmem:[%s396 + $0x88] sm:$0xe]
    %v701 = vrot.slane %v653, 5
    %v702 = vrot.slane %v701, 4
    %v703 = vrot.slane %v413, 5
    %v704 = vsel %vm331, %v702, %v703
    %v705 = vrot.slane %v654, 5
    %v706 = vrot.slane %v705, 4
    %v707 = vrot.slane %v414, 5
    %v708 = vsel %vm331, %v706, %v707
    %v709 = vrot.slane %v655, 5
    %v710 = vrot.slane %v709, 4
    %v711 = vrot.slane %v415, 5
    %v712 = vsel %vm331, %v710, %v711
    %v713 = vrot.slane %v656, 5
    %v714 = vrot.slane %v713, 4
    %v715 = vrot.slane %v416, 5
    %v716 = vsel %vm331, %v714, %v715
    %v717 = vrot.slane %v657, 5
    %v718 = vrot.slane %v717, 4
    %v719 = vrot.slane %v417, 5
    %v720 = vsel %vm331, %v718, %v719
    %v721 = vrot.slane %v658, 5
    %v722 = vrot.slane %v721, 4
    %v723 = vrot.slane %v418, 5
    %v724 = vsel %vm331, %v722, %v723
    %v725 = vrot.slane %v659, 5
    %v726 = vrot.slane %v725, 4
    %v727 = vrot.slane %v419, 5
    %v728 = vsel %vm331, %v726, %v727
    %v729 = vrot.slane %v660, 5
    %v730 = vrot.slane %v729, 4
    %v731 = vrot.slane %v420, 5
    %v732 = vsel %vm331, %v730, %v731
    %v733 = vrot.slane %v661, 5
    %v734 = vrot.slane %v733, 4
    %v735 = vrot.slane %v421, 5
    %v736 = vsel %vm331, %v734, %v735
    %v737 = vrot.slane %v662, 5
    %v738 = vrot.slane %v737, 4
    %v739 = vrot.slane %v422, 5
    %v740 = vsel %vm331, %v738, %v739
    %v741 = vrot.slane %v663, 5
    %v742 = vrot.slane %v741, 4
    %v743 = vrot.slane %v423, 5
    %v744 = vsel %vm331, %v742, %v743
    %v745 = vrot.slane %v664, 5
    %v746 = vrot.slane %v745, 4
    %v747 = vrot.slane %v424, 5
    %v748 = vsel %vm331, %v746, %v747
    %v749 = vrot.slane %v665, 5
    %v750 = vrot.slane %v749, 4
    %v751 = vrot.slane %v425, 5
    %v752 = vsel %vm331, %v750, %v751
    %v753 = vrot.slane %v666, 5
    %v754 = vrot.slane %v753, 4
    %v755 = vrot.slane %v426, 5
    %v756 = vsel %vm331, %v754, %v755
    %v757 = vrot.slane %v667, 5
    %v758 = vrot.slane %v757, 4
    %v759 = vrot.slane %v427, 5
    %v760 = vsel %vm331, %v758, %v759
    %v761 = vrot.slane %v668, 5
    %v762 = vrot.slane %v761, 4
    %v763 = vrot.slane %v428, 5
    %v764 = vsel %vm331, %v762, %v763
    %s765 = scalar_lea.vmem %s0, 16
    %v766 = vld [vmem:[%s765] sm:$0xf]
    %v767 = vld [vmem:[%s765 + $0x8] sm:$0xf]
    %v768 = vld [vmem:[%s765 + $0x10] sm:$0xf]
    %v769 = vld [vmem:[%s765 + $0x18] sm:$0xf]
    %v770 = vld [vmem:[%s765 + $0x20] sm:$0xf]
    %v771 = vld [vmem:[%s765 + $0x28] sm:$0xf]
    %v772 = vld [vmem:[%s765 + $0x30] sm:$0xf]
    %v773 = vld [vmem:[%s765 + $0x38] sm:$0xf]
    %v774 = vld [vmem:[%s765 + $0x50] sm:$0xf]
    %v775 = vld [vmem:[%s765 + $0x58] sm:$0xf]
    %v776 = vld [vmem:[%s765 + $0x60] sm:$0xf]
    %v777 = vld [vmem:[%s765 + $0x68] sm:$0xf]
    %v778 = vld [vmem:[%s765 + $0x70] sm:$0xf]
    %v779 = vld [vmem:[%s765 + $0x78] sm:$0xf]
    %v780 = vld [vmem:[%s765 + $0x80] sm:$0xf]
    %v781 = vld [vmem:[%s765 + $0x88] sm:$0xf]
    %v782 = vld [vmem:[%s765 + $0x4] sm:$0x1]
    %v783 = vld [vmem:[%s765 + $0xc] sm:$0x1]
    %v784 = vld [vmem:[%s765 + $0x14] sm:$0x1]
    %v785 = vld [vmem:[%s765 + $0x1c] sm:$0x1]
    %v786 = vld [vmem:[%s765 + $0x24] sm:$0x1]
    %v787 = vld [vmem:[%s765 + $0x2c] sm:$0x1]
    %v788 = vld [vmem:[%s765 + $0x34] sm:$0x1]
    %v789 = vld [vmem:[%s765 + $0x3c] sm:$0x1]
    %v790 = vld [vmem:[%s765 + $0x54] sm:$0x1]
    %v791 = vld [vmem:[%s765 + $0x5c] sm:$0x1]
    %v792 = vld [vmem:[%s765 + $0x64] sm:$0x1]
    %v793 = vld [vmem:[%s765 + $0x6c] sm:$0x1]
    %v794 = vld [vmem:[%s765 + $0x74] sm:$0x1]
    %v795 = vld [vmem:[%s765 + $0x7c] sm:$0x1]
    %v796 = vld [vmem:[%s765 + $0x84] sm:$0x1]
    %v797 = vld [vmem:[%s765 + $0x8c] sm:$0x1]
    %v799 = vshrl.u32 %v766, 16
    %v801 = vrot.slane %v799, 4
    %v802 = vshll.u32 %v766, 16
    %v804 = vrot.slane %v802, 5
    %v805 = vor.u32 %v801, %v804
    %v806 = vrot.slane %v805, 4
    %v808 = vshll.u32 %v782, 16
    %v810 = vrot.slane %v808, 5
    %v811 = vsel %vm56, %v806, %v810
    %v813 = vshrl.u32 %v767, 16
    %v815 = vrot.slane %v813, 4
    %v816 = vshll.u32 %v767, 16
    %v818 = vrot.slane %v816, 5
    %v819 = vor.u32 %v815, %v818
    %v820 = vrot.slane %v819, 4
    %v822 = vshll.u32 %v783, 16
    %v824 = vrot.slane %v822, 5
    %v825 = vsel %vm56, %v820, %v824
    %v827 = vshrl.u32 %v768, 16
    %v829 = vrot.slane %v827, 4
    %v830 = vshll.u32 %v768, 16
    %v832 = vrot.slane %v830, 5
    %v833 = vor.u32 %v829, %v832
    %v834 = vrot.slane %v833, 4
    %v836 = vshll.u32 %v784, 16
    %v838 = vrot.slane %v836, 5
    %v839 = vsel %vm56, %v834, %v838
    %v841 = vshrl.u32 %v769, 16
    %v843 = vrot.slane %v841, 4
    %v844 = vshll.u32 %v769, 16
    %v846 = vrot.slane %v844, 5
    %v847 = vor.u32 %v843, %v846
    %v848 = vrot.slane %v847, 4
    %v850 = vshll.u32 %v785, 16
    %v852 = vrot.slane %v850, 5
    %v853 = vsel %vm56, %v848, %v852
    %v855 = vshrl.u32 %v770, 16
    %v857 = vrot.slane %v855, 4
    %v858 = vshll.u32 %v770, 16
    %v860 = vrot.slane %v858, 5
    %v861 = vor.u32 %v857, %v860
    %v862 = vrot.slane %v861, 4
    %v864 = vshll.u32 %v786, 16
    %v866 = vrot.slane %v864, 5
    %v867 = vsel %vm56, %v862, %v866
    %v869 = vshrl.u32 %v771, 16
    %v871 = vrot.slane %v869, 4
    %v872 = vshll.u32 %v771, 16
    %v874 = vrot.slane %v872, 5
    %v875 = vor.u32 %v871, %v874
    %v876 = vrot.slane %v875, 4
    %v878 = vshll.u32 %v787, 16
    %v880 = vrot.slane %v878, 5
    %v881 = vsel %vm56, %v876, %v880
    %v883 = vshrl.u32 %v772, 16
    %v885 = vrot.slane %v883, 4
    %v886 = vshll.u32 %v772, 16
    %v888 = vrot.slane %v886, 5
    %v889 = vor.u32 %v885, %v888
    %v890 = vrot.slane %v889, 4
    %v892 = vshll.u32 %v788, 16
    %v894 = vrot.slane %v892, 5
    %v895 = vsel %vm56, %v890, %v894
    %v897 = vshrl.u32 %v773, 16
    %v899 = vrot.slane %v897, 4
    %v900 = vshll.u32 %v773, 16
    %v902 = vrot.slane %v900, 5
    %v903 = vor.u32 %v899, %v902
    %v904 = vrot.slane %v903, 4
    %v906 = vshll.u32 %v789, 16
    %v908 = vrot.slane %v906, 5
    %v909 = vsel %vm56, %v904, %v908
    %v911 = vshrl.u32 %v774, 16
    %v913 = vrot.slane %v911, 4
    %v914 = vshll.u32 %v774, 16
    %v916 = vrot.slane %v914, 5
    %v917 = vor.u32 %v913, %v916
    %v918 = vrot.slane %v917, 4
    %v920 = vshll.u32 %v790, 16
    %v922 = vrot.slane %v920, 5
    %v923 = vsel %vm56, %v918, %v922
    %v925 = vshrl.u32 %v775, 16
    %v927 = vrot.slane %v925, 4
    %v928 = vshll.u32 %v775, 16
    %v930 = vrot.slane %v928, 5
    %v931 = vor.u32 %v927, %v930
    %v932 = vrot.slane %v931, 4
    %v934 = vshll.u32 %v791, 16
    %v936 = vrot.slane %v934, 5
    %v937 = vsel %vm56, %v932, %v936
    %v939 = vshrl.u32 %v776, 16
    %v941 = vrot.slane %v939, 4
    %v942 = vshll.u32 %v776, 16
    %v944 = vrot.slane %v942, 5
    %v945 = vor.u32 %v941, %v944
    %v946 = vrot.slane %v945, 4
    %v948 = vshll.u32 %v792, 16
    %v950 = vrot.slane %v948, 5
    %v951 = vsel %vm56, %v946, %v950
    %v953 = vshrl.u32 %v777, 16
    %v955 = vrot.slane %v953, 4
    %v956 = vshll.u32 %v777, 16
    %v958 = vrot.slane %v956, 5
    %v959 = vor.u32 %v955, %v958
    %v960 = vrot.slane %v959, 4
    %v962 = vshll.u32 %v793, 16
    %v964 = vrot.slane %v962, 5
    %v965 = vsel %vm56, %v960, %v964
    %v967 = vshrl.u32 %v778, 16
    %v969 = vrot.slane %v967, 4
    %v970 = vshll.u32 %v778, 16
    %v972 = vrot.slane %v970, 5
    %v973 = vor.u32 %v969, %v972
    %v974 = vrot.slane %v973, 4
    %v976 = vshll.u32 %v794, 16
    %v978 = vrot.slane %v976, 5
    %v979 = vsel %vm56, %v974, %v978
    %v981 = vshrl.u32 %v779, 16
    %v983 = vrot.slane %v981, 4
    %v984 = vshll.u32 %v779, 16
    %v986 = vrot.slane %v984, 5
    %v987 = vor.u32 %v983, %v986
    %v988 = vrot.slane %v987, 4
    %v990 = vshll.u32 %v795, 16
    %v992 = vrot.slane %v990, 5
    %v993 = vsel %vm56, %v988, %v992
    %v995 = vshrl.u32 %v780, 16
    %v997 = vrot.slane %v995, 4
    %v998 = vshll.u32 %v780, 16
    %v1000 = vrot.slane %v998, 5
    %v1001 = vor.u32 %v997, %v1000
    %v1002 = vrot.slane %v1001, 4
    %v1004 = vshll.u32 %v796, 16
    %v1006 = vrot.slane %v1004, 5
    %v1007 = vsel %vm56, %v1002, %v1006
    %v1009 = vshrl.u32 %v781, 16
    %v1011 = vrot.slane %v1009, 4
    %v1012 = vshll.u32 %v781, 16
    %v1014 = vrot.slane %v1012, 5
    %v1015 = vor.u32 %v1011, %v1014
    %v1016 = vrot.slane %v1015, 4
    %v1018 = vshll.u32 %v797, 16
    %v1020 = vrot.slane %v1018, 5
    %v1021 = vsel %vm56, %v1016, %v1020
    %v1022 = vld [vmem:[%s765] sm:$0xe]
    %v1023 = vld [vmem:[%s765 + $0x8] sm:$0xe]
    %v1024 = vld [vmem:[%s765 + $0x10] sm:$0xe]
    %v1025 = vld [vmem:[%s765 + $0x18] sm:$0xe]
    %v1026 = vld [vmem:[%s765 + $0x20] sm:$0xe]
    %v1027 = vld [vmem:[%s765 + $0x28] sm:$0xe]
    %v1028 = vld [vmem:[%s765 + $0x30] sm:$0xe]
    %v1029 = vld [vmem:[%s765 + $0x38] sm:$0xe]
    %v1030 = vld [vmem:[%s765 + $0x50] sm:$0xe]
    %v1031 = vld [vmem:[%s765 + $0x58] sm:$0xe]
    %v1032 = vld [vmem:[%s765 + $0x60] sm:$0xe]
    %v1033 = vld [vmem:[%s765 + $0x68] sm:$0xe]
    %v1034 = vld [vmem:[%s765 + $0x70] sm:$0xe]
    %v1035 = vld [vmem:[%s765 + $0x78] sm:$0xe]
    %v1036 = vld [vmem:[%s765 + $0x80] sm:$0xe]
    %v1037 = vld [vmem:[%s765 + $0x88] sm:$0xe]
    %v1070 = vrot.slane %v1022, 5
    %v1071 = vrot.slane %v1070, 4
    %v1072 = vrot.slane %v782, 5
    %v1073 = vsel %vm331, %v1071, %v1072
    %v1074 = vrot.slane %v1023, 5
    %v1075 = vrot.slane %v1074, 4
    %v1076 = vrot.slane %v783, 5
    %v1077 = vsel %vm331, %v1075, %v1076
    %v1078 = vrot.slane %v1024, 5
    %v1079 = vrot.slane %v1078, 4
    %v1080 = vrot.slane %v784, 5
    %v1081 = vsel %vm331, %v1079, %v1080
    %v1082 = vrot.slane %v1025, 5
    %v1083 = vrot.slane %v1082, 4
    %v1084 = vrot.slane %v785, 5
    %v1085 = vsel %vm331, %v1083, %v1084
    %v1086 = vrot.slane %v1026, 5
    %v1087 = vrot.slane %v1086, 4
    %v1088 = vrot.slane %v786, 5
    %v1089 = vsel %vm331, %v1087, %v1088
    %v1090 = vrot.slane %v1027, 5
    %v1091 = vrot.slane %v1090, 4
    %v1092 = vrot.slane %v787, 5
    %v1093 = vsel %vm331, %v1091, %v1092
    %v1094 = vrot.slane %v1028, 5
    %v1095 = vrot.slane %v1094, 4
    %v1096 = vrot.slane %v788, 5
    %v1097 = vsel %vm331, %v1095, %v1096
    %v1098 = vrot.slane %v1029, 5
    %v1099 = vrot.slane %v1098, 4
    %v1100 = vrot.slane %v789, 5
    %v1101 = vsel %vm331, %v1099, %v1100
    %v1102 = vrot.slane %v1030, 5
    %v1103 = vrot.slane %v1102, 4
    %v1104 = vrot.slane %v790, 5
    %v1105 = vsel %vm331, %v1103, %v1104
    %v1106 = vrot.slane %v1031, 5
    %v1107 = vrot.slane %v1106, 4
    %v1108 = vrot.slane %v791, 5
    %v1109 = vsel %vm331, %v1107, %v1108
    %v1110 = vrot.slane %v1032, 5
    %v1111 = vrot.slane %v1110, 4
    %v1112 = vrot.slane %v792, 5
    %v1113 = vsel %vm331, %v1111, %v1112
    %v1114 = vrot.slane %v1033, 5
    %v1115 = vrot.slane %v1114, 4
    %v1116 = vrot.slane %v793, 5
    %v1117 = vsel %vm331, %v1115, %v1116
    %v1118 = vrot.slane %v1034, 5
    %v1119 = vrot.slane %v1118, 4
    %v1120 = vrot.slane %v794, 5
    %v1121 = vsel %vm331, %v1119, %v1120
    %v1122 = vrot.slane %v1035, 5
    %v1123 = vrot.slane %v1122, 4
    %v1124 = vrot.slane %v795, 5
    %v1125 = vsel %vm331, %v1123, %v1124
    %v1126 = vrot.slane %v1036, 5
    %v1127 = vrot.slane %v1126, 4
    %v1128 = vrot.slane %v796, 5
    %v1129 = vsel %vm331, %v1127, %v1128
    %v1130 = vrot.slane %v1037, 5
    %v1131 = vrot.slane %v1130, 4
    %v1132 = vrot.slane %v797, 5
    %v1133 = vsel %vm331, %v1131, %v1132
    %v1150 = vunpack.c.l.b16 %v22
    %v1151 = vunpack.c.l.b16 %v23
    %v1152 = vunpack.c.l.b16 %v24
    %v1153 = vunpack.c.l.b16 %v25
    %v1154 = vunpack.c.l.b16 %v26
    %v1155 = vunpack.c.l.b16 %v27
    %v1156 = vunpack.c.l.b16 %v28
    %v1157 = vunpack.c.l.b16 %v29
    %v1158 = vunpack.c.l.b16 %v30
    %v1159 = vunpack.c.l.b16 %v31
    %v1160 = vunpack.c.l.b16 %v32
    %v1161 = vunpack.c.l.b16 %v33
    %v1162 = vunpack.c.l.b16 %v34
    %v1163 = vunpack.c.l.b16 %v35
    %v1164 = vunpack.c.l.b16 %v36
    %v1165 = vunpack.c.l.b16 %v37
    %v1166 = vpack.c.b16 %v1151, %v1150
    %v1167 = vpack.c.b16 %v1153, %v1152
    %v1168 = vpack.c.b16 %v1155, %v1154
    %v1169 = vpack.c.b16 %v1157, %v1156
    %v1170 = vpack.c.b16 %v1159, %v1158
    %v1171 = vpack.c.b16 %v1161, %v1160
    %v1172 = vpack.c.b16 %v1163, %v1162
    %v1173 = vpack.c.b16 %v1165, %v1164
    %v1182 = vunpack.c.l.b16 %v70
    %v1183 = vunpack.c.l.b16 %v84
    %v1184 = vunpack.c.l.b16 %v98
    %v1185 = vunpack.c.l.b16 %v112
    %v1186 = vunpack.c.l.b16 %v126
    %v1187 = vunpack.c.l.b16 %v140
    %v1188 = vunpack.c.l.b16 %v154
    %v1189 = vunpack.c.l.b16 %v168
    %v1190 = vunpack.c.l.b16 %v182
    %v1191 = vunpack.c.l.b16 %v196
    %v1192 = vunpack.c.l.b16 %v210
    %v1193 = vunpack.c.l.b16 %v224
    %v1194 = vunpack.c.l.b16 %v238
    %v1195 = vunpack.c.l.b16 %v252
    %v1196 = vunpack.c.l.b16 %v266
    %v1197 = vunpack.c.l.b16 %v280
    %v1198 = vpack.c.b16 %v1183, %v1182
    %v1199 = vpack.c.b16 %v1185, %v1184
    %v1200 = vpack.c.b16 %v1187, %v1186
    %v1201 = vpack.c.b16 %v1189, %v1188
    %v1202 = vpack.c.b16 %v1191, %v1190
    %v1203 = vpack.c.b16 %v1193, %v1192
    %v1204 = vpack.c.b16 %v1195, %v1194
    %v1205 = vpack.c.b16 %v1197, %v1196
    %v1214 = vunpack.c.l.b16 %v335
    %v1215 = vunpack.c.l.b16 %v339
    %v1216 = vunpack.c.l.b16 %v343
    %v1217 = vunpack.c.l.b16 %v347
    %v1218 = vunpack.c.l.b16 %v351
    %v1219 = vunpack.c.l.b16 %v355
    %v1220 = vunpack.c.l.b16 %v359
    %v1221 = vunpack.c.l.b16 %v363
    %v1222 = vunpack.c.l.b16 %v367
    %v1223 = vunpack.c.l.b16 %v371
    %v1224 = vunpack.c.l.b16 %v375
    %v1225 = vunpack.c.l.b16 %v379
    %v1226 = vunpack.c.l.b16 %v383
    %v1227 = vunpack.c.l.b16 %v387
    %v1228 = vunpack.c.l.b16 %v391
    %v1229 = vunpack.c.l.b16 %v395
    %v1230 = vpack.c.b16 %v1215, %v1214
    %v1231 = vpack.c.b16 %v1217, %v1216
    %v1232 = vpack.c.b16 %v1219, %v1218
    %v1233 = vpack.c.b16 %v1221, %v1220
    %v1234 = vpack.c.b16 %v1223, %v1222
    %v1235 = vpack.c.b16 %v1225, %v1224
    %v1236 = vpack.c.b16 %v1227, %v1226
    %v1237 = vpack.c.b16 %v1229, %v1228
    %v1262 = vunpack.c.l.b16 %v397
    %v1263 = vunpack.c.l.b16 %v398
    %v1264 = vunpack.c.l.b16 %v399
    %v1265 = vunpack.c.l.b16 %v400
    %v1266 = vunpack.c.l.b16 %v401
    %v1267 = vunpack.c.l.b16 %v402
    %v1268 = vunpack.c.l.b16 %v403
    %v1269 = vunpack.c.l.b16 %v404
    %v1270 = vunpack.c.l.b16 %v405
    %v1271 = vunpack.c.l.b16 %v406
    %v1272 = vunpack.c.l.b16 %v407
    %v1273 = vunpack.c.l.b16 %v408
    %v1274 = vunpack.c.l.b16 %v409
    %v1275 = vunpack.c.l.b16 %v410
    %v1276 = vunpack.c.l.b16 %v411
    %v1277 = vunpack.c.l.b16 %v412
    %v1278 = vpack.c.b16 %v1263, %v1262
    %v1279 = vpack.c.b16 %v1265, %v1264
    %v1280 = vpack.c.b16 %v1267, %v1266
    %v1281 = vpack.c.b16 %v1269, %v1268
    %v1282 = vpack.c.b16 %v1271, %v1270
    %v1283 = vpack.c.b16 %v1273, %v1272
    %v1284 = vpack.c.b16 %v1275, %v1274
    %v1285 = vpack.c.b16 %v1277, %v1276
    %v1294 = vunpack.c.l.b16 %v442
    %v1295 = vunpack.c.l.b16 %v456
    %v1296 = vunpack.c.l.b16 %v470
    %v1297 = vunpack.c.l.b16 %v484
    %v1298 = vunpack.c.l.b16 %v498
    %v1299 = vunpack.c.l.b16 %v512
    %v1300 = vunpack.c.l.b16 %v526
    %v1301 = vunpack.c.l.b16 %v540
    %v1302 = vunpack.c.l.b16 %v554
    %v1303 = vunpack.c.l.b16 %v568
    %v1304 = vunpack.c.l.b16 %v582
    %v1305 = vunpack.c.l.b16 %v596
    %v1306 = vunpack.c.l.b16 %v610
    %v1307 = vunpack.c.l.b16 %v624
    %v1308 = vunpack.c.l.b16 %v638
    %v1309 = vunpack.c.l.b16 %v652
    %v1310 = vpack.c.b16 %v1295, %v1294
    %v1311 = vpack.c.b16 %v1297, %v1296
    %v1312 = vpack.c.b16 %v1299, %v1298
    %v1313 = vpack.c.b16 %v1301, %v1300
    %v1314 = vpack.c.b16 %v1303, %v1302
    %v1315 = vpack.c.b16 %v1305, %v1304
    %v1316 = vpack.c.b16 %v1307, %v1306
    %v1317 = vpack.c.b16 %v1309, %v1308
    %v1326 = vunpack.c.l.b16 %v704
    %v1327 = vunpack.c.l.b16 %v708
    %v1328 = vunpack.c.l.b16 %v712
    %v1329 = vunpack.c.l.b16 %v716
    %v1330 = vunpack.c.l.b16 %v720
    %v1331 = vunpack.c.l.b16 %v724
    %v1332 = vunpack.c.l.b16 %v728
    %v1333 = vunpack.c.l.b16 %v732
    %v1334 = vunpack.c.l.b16 %v736
    %v1335 = vunpack.c.l.b16 %v740
    %v1336 = vunpack.c.l.b16 %v744
    %v1337 = vunpack.c.l.b16 %v748
    %v1338 = vunpack.c.l.b16 %v752
    %v1339 = vunpack.c.l.b16 %v756
    %v1340 = vunpack.c.l.b16 %v760
    %v1341 = vunpack.c.l.b16 %v764
    %v1342 = vpack.c.b16 %v1327, %v1326
    %v1343 = vpack.c.b16 %v1329, %v1328
    %v1344 = vpack.c.b16 %v1331, %v1330
    %v1345 = vpack.c.b16 %v1333, %v1332
    %v1346 = vpack.c.b16 %v1335, %v1334
    %v1347 = vpack.c.b16 %v1337, %v1336
    %v1348 = vpack.c.b16 %v1339, %v1338
    %v1349 = vpack.c.b16 %v1341, %v1340
    %v1374 = vunpack.c.l.b16 %v766
    %v1375 = vunpack.c.l.b16 %v767
    %v1376 = vunpack.c.l.b16 %v768
    %v1377 = vunpack.c.l.b16 %v769
    %v1378 = vunpack.c.l.b16 %v770
    %v1379 = vunpack.c.l.b16 %v771
    %v1380 = vunpack.c.l.b16 %v772
    %v1381 = vunpack.c.l.b16 %v773
    %v1382 = vunpack.c.l.b16 %v774
    %v1383 = vunpack.c.l.b16 %v775
    %v1384 = vunpack.c.l.b16 %v776
    %v1385 = vunpack.c.l.b16 %v777
    %v1386 = vunpack.c.l.b16 %v778
    %v1387 = vunpack.c.l.b16 %v779
    %v1388 = vunpack.c.l.b16 %v780
    %v1389 = vunpack.c.l.b16 %v781
    %v1390 = vpack.c.b16 %v1375, %v1374
    %v1391 = vpack.c.b16 %v1377, %v1376
    %v1392 = vpack.c.b16 %v1379, %v1378
    %v1393 = vpack.c.b16 %v1381, %v1380
    %v1394 = vpack.c.b16 %v1383, %v1382
    %v1395 = vpack.c.b16 %v1385, %v1384
    %v1396 = vpack.c.b16 %v1387, %v1386
    %v1397 = vpack.c.b16 %v1389, %v1388
    %v1406 = vunpack.c.l.b16 %v811
    %v1407 = vunpack.c.l.b16 %v825
    %v1408 = vunpack.c.l.b16 %v839
    %v1409 = vunpack.c.l.b16 %v853
    %v1410 = vunpack.c.l.b16 %v867
    %v1411 = vunpack.c.l.b16 %v881
    %v1412 = vunpack.c.l.b16 %v895
    %v1413 = vunpack.c.l.b16 %v909
    %v1414 = vunpack.c.l.b16 %v923
    %v1415 = vunpack.c.l.b16 %v937
    %v1416 = vunpack.c.l.b16 %v951
    %v1417 = vunpack.c.l.b16 %v965
    %v1418 = vunpack.c.l.b16 %v979
    %v1419 = vunpack.c.l.b16 %v993
    %v1420 = vunpack.c.l.b16 %v1007
    %v1421 = vunpack.c.l.b16 %v1021
    %v1422 = vpack.c.b16 %v1407, %v1406
    %v1423 = vpack.c.b16 %v1409, %v1408
    %v1424 = vpack.c.b16 %v1411, %v1410
    %v1425 = vpack.c.b16 %v1413, %v1412
    %v1426 = vpack.c.b16 %v1415, %v1414
    %v1427 = vpack.c.b16 %v1417, %v1416
    %v1428 = vpack.c.b16 %v1419, %v1418
    %v1429 = vpack.c.b16 %v1421, %v1420
    %v1438 = vunpack.c.l.b16 %v1073
    %v1439 = vunpack.c.l.b16 %v1077
    %v1440 = vunpack.c.l.b16 %v1081
    %v1441 = vunpack.c.l.b16 %v1085
    %v1442 = vunpack.c.l.b16 %v1089
    %v1443 = vunpack.c.l.b16 %v1093
    %v1444 = vunpack.c.l.b16 %v1097
    %v1445 = vunpack.c.l.b16 %v1101
    %v1446 = vunpack.c.l.b16 %v1105
    %v1447 = vunpack.c.l.b16 %v1109
    %v1448 = vunpack.c.l.b16 %v1113
    %v1449 = vunpack.c.l.b16 %v1117
    %v1450 = vunpack.c.l.b16 %v1121
    %v1451 = vunpack.c.l.b16 %v1125
    %v1452 = vunpack.c.l.b16 %v1129
    %v1453 = vunpack.c.l.b16 %v1133
    %v1454 = vpack.c.b16 %v1439, %v1438
    %v1455 = vpack.c.b16 %v1441, %v1440
    %v1456 = vpack.c.b16 %v1443, %v1442
    %v1457 = vpack.c.b16 %v1445, %v1444
    %v1458 = vpack.c.b16 %v1447, %v1446
    %v1459 = vpack.c.b16 %v1449, %v1448
    %v1460 = vpack.c.b16 %v1451, %v1450
    %v1461 = vpack.c.b16 %v1453, %v1452
    %v1470 = vld [vmem:[%s1] sm:$0xf]
    %v1471 = vld [vmem:[%s1 + $0x4] sm:$0xf]
    %v1472 = vld [vmem:[%s1 + $0x8] sm:$0xf]
    %v1473 = vld [vmem:[%s1 + $0xc] sm:$0xf]
    %v1474 = vld [vmem:[%s1 + $0x10] sm:$0xf]
    %v1475 = vld [vmem:[%s1 + $0x14] sm:$0xf]
    %v1476 = vld [vmem:[%s1 + $0x18] sm:$0xf]
    %v1477 = vld [vmem:[%s1 + $0x1c] sm:$0xf]
    %v1478 = vld [vmem:[%s1 + $0x20] sm:$0xf]
    %v1479 = vld [vmem:[%s1 + $0x24] sm:$0xf]
    %v1480 = vld [vmem:[%s1 + $0x28] sm:$0xf]
    %v1481 = vld [vmem:[%s1 + $0x2c] sm:$0xf]
    %v1482 = vld [vmem:[%s1 + $0x30] sm:$0xf]
    %v1483 = vld [vmem:[%s1 + $0x34] sm:$0xf]
    %v1484 = vld [vmem:[%s1 + $0x38] sm:$0xf]
    %v1485 = vld [vmem:[%s1 + $0x3c] sm:$0xf]
    %v1486 = vld [vmem:[%s1 + $0x40] sm:$0xf]
    %v1487 = vld [vmem:[%s1 + $0x44] sm:$0xf]
    %v1488 = vld [vmem:[%s1 + $0x48] sm:$0xf]
    %v1489 = vld [vmem:[%s1 + $0x4c] sm:$0xf]
    %v1490 = vld [vmem:[%s1 + $0x50] sm:$0xf]
    %v1491 = vld [vmem:[%s1 + $0x54] sm:$0xf]
    %v1492 = vld [vmem:[%s1 + $0x58] sm:$0xf]
    %v1493 = vld [vmem:[%s1 + $0x5c] sm:$0xf]
    %v1494 = vld [vmem:[%s1 + $0x60] sm:$0xf]
    %v1495 = vld [vmem:[%s1 + $0x64] sm:$0xf]
    %v1496 = vld [vmem:[%s1 + $0x68] sm:$0xf]
    %v1497 = vld [vmem:[%s1 + $0x6c] sm:$0xf]
    %v1498 = vld [vmem:[%s1 + $0x70] sm:$0xf]
    %v1499 = vld [vmem:[%s1 + $0x74] sm:$0xf]
    %v1500 = vld [vmem:[%s1 + $0x78] sm:$0xf]
    %v1501 = vld [vmem:[%s1 + $0x7c] sm:$0xf]
    %v1502 = vld [vmem:[%s1 + $0x80] sm:$0xf]
    %v1503 = vld [vmem:[%s1 + $0x84] sm:$0xf]
    %v1504 = vld [vmem:[%s1 + $0x88] sm:$0xf]
    %v1505 = vld [vmem:[%s1 + $0x8c] sm:$0xf]
    %v1506 = vld [vmem:[%s1 + $0x90] sm:$0xf]
    %v1507 = vld [vmem:[%s1 + $0x94] sm:$0xf]
    %v1508 = vld [vmem:[%s1 + $0x98] sm:$0xf]
    %v1509 = vld [vmem:[%s1 + $0x9c] sm:$0xf]
    %v1510 = vld [vmem:[%s1 + $0xa0] sm:$0xf]
    %v1511 = vld [vmem:[%s1 + $0xa4] sm:$0xf]
    %v1512 = vld [vmem:[%s1 + $0xa8] sm:$0xf]
    %v1513 = vld [vmem:[%s1 + $0xac] sm:$0xf]
    %v1514 = vld [vmem:[%s1 + $0xb0] sm:$0xf]
    %v1515 = vld [vmem:[%s1 + $0xb4] sm:$0xf]
    %v1516 = vld [vmem:[%s1 + $0xb8] sm:$0xf]
    %v1517 = vld [vmem:[%s1 + $0xbc] sm:$0xf]
    %v1518 = vld [vmem:[%s1 + $0xc0] sm:$0xf]
    %v1519 = vld [vmem:[%s1 + $0xc4] sm:$0xf]
    %v1520 = vld [vmem:[%s1 + $0xc8] sm:$0xf]
    %v1521 = vld [vmem:[%s1 + $0xcc] sm:$0xf]
    %v1522 = vld [vmem:[%s1 + $0xd0] sm:$0xf]
    %v1523 = vld [vmem:[%s1 + $0xd4] sm:$0xf]
    %v1524 = vld [vmem:[%s1 + $0xd8] sm:$0xf]
    %v1525 = vld [vmem:[%s1 + $0xdc] sm:$0xf]
    %v1526 = vld [vmem:[%s1 + $0xe0] sm:$0xf]
    %v1527 = vld [vmem:[%s1 + $0xe4] sm:$0xf]
    %v1528 = vld [vmem:[%s1 + $0xe8] sm:$0xf]
    %v1529 = vld [vmem:[%s1 + $0xec] sm:$0xf]
    %v1530 = vld [vmem:[%s1 + $0xf0] sm:$0xf]
    %v1531 = vld [vmem:[%s1 + $0xf4] sm:$0xf]
    %v1532 = vld [vmem:[%s1 + $0xf8] sm:$0xf]
    %v1533 = vld [vmem:[%s1 + $0xfc] sm:$0xf]
    %v1534 = vld [vmem:[%s1 + $0x100] sm:$0xf]
    %v1535 = vld [vmem:[%s1 + $0x104] sm:$0xf]
    %v1536 = vld [vmem:[%s1 + $0x108] sm:$0xf]
    %v1537 = vld [vmem:[%s1 + $0x10c] sm:$0xf]
    %v1538 = vld [vmem:[%s1 + $0x110] sm:$0xf]
    %v1539 = vld [vmem:[%s1 + $0x114] sm:$0xf]
    %v1540 = vld [vmem:[%s1 + $0x118] sm:$0xf]
    %v1541 = vld [vmem:[%s1 + $0x11c] sm:$0xf]
    %v1542 = vld [vmem:[%s1 + $0x120] sm:$0xf]
    %v1543 = vld [vmem:[%s1 + $0x124] sm:$0xf]
    %v1544 = vld [vmem:[%s1 + $0x128] sm:$0xf]
    %v1545 = vld [vmem:[%s1 + $0x12c] sm:$0xf]
    %v1546 = vld [vmem:[%s1 + $0x130] sm:$0xf]
    %v1547 = vld [vmem:[%s1 + $0x134] sm:$0xf]
    %v1548 = vld [vmem:[%s1 + $0x138] sm:$0xf]
    %v1549 = vld [vmem:[%s1 + $0x13c] sm:$0xf]
    %v1550 = vld [vmem:[%s1 + $0x140] sm:$0xf]
    %v1551 = vld [vmem:[%s1 + $0x144] sm:$0xf]
    %v1552 = vld [vmem:[%s1 + $0x148] sm:$0xf]
    %v1553 = vld [vmem:[%s1 + $0x14c] sm:$0xf]
    %v1554 = vld [vmem:[%s1 + $0x150] sm:$0xf]
    %v1555 = vld [vmem:[%s1 + $0x154] sm:$0xf]
    %v1556 = vld [vmem:[%s1 + $0x158] sm:$0xf]
    %v1557 = vld [vmem:[%s1 + $0x15c] sm:$0xf]
    %v1558 = vld [vmem:[%s1 + $0x160] sm:$0xf]
    %v1559 = vld [vmem:[%s1 + $0x164] sm:$0xf]
    %v1560 = vld [vmem:[%s1 + $0x168] sm:$0xf]
    %v1561 = vld [vmem:[%s1 + $0x16c] sm:$0xf]
    %v1562 = vld [vmem:[%s1 + $0x170] sm:$0xf]
    %v1563 = vld [vmem:[%s1 + $0x174] sm:$0xf]
    %v1564 = vld [vmem:[%s1 + $0x178] sm:$0xf]
    %v1565 = vld [vmem:[%s1 + $0x17c] sm:$0xf]
    %v1566 = vld [vmem:[%s1 + $0x180] sm:$0xf]
    %v1567 = vld [vmem:[%s1 + $0x184] sm:$0xf]
    %v1568 = vld [vmem:[%s1 + $0x188] sm:$0xf]
    %v1569 = vld [vmem:[%s1 + $0x18c] sm:$0xf]
    %v1570 = vld [vmem:[%s1 + $0x190] sm:$0xf]
    %v1571 = vld [vmem:[%s1 + $0x194] sm:$0xf]
    %v1572 = vld [vmem:[%s1 + $0x198] sm:$0xf]
    %v1573 = vld [vmem:[%s1 + $0x19c] sm:$0xf]
    %v1574 = vld [vmem:[%s1 + $0x1a0] sm:$0xf]
    %v1575 = vld [vmem:[%s1 + $0x1a4] sm:$0xf]
    %v1576 = vld [vmem:[%s1 + $0x1a8] sm:$0xf]
    %v1577 = vld [vmem:[%s1 + $0x1ac] sm:$0xf]
    %v1578 = vld [vmem:[%s1 + $0x1b0] sm:$0xf]
    %v1579 = vld [vmem:[%s1 + $0x1b4] sm:$0xf]
    %v1580 = vld [vmem:[%s1 + $0x1b8] sm:$0xf]
    %v1581 = vld [vmem:[%s1 + $0x1bc] sm:$0xf]
    %v1582 = vld [vmem:[%s1 + $0x1c0] sm:$0xf]
    %v1583 = vld [vmem:[%s1 + $0x1c4] sm:$0xf]
    %v1584 = vld [vmem:[%s1 + $0x1c8] sm:$0xf]
    %v1585 = vld [vmem:[%s1 + $0x1cc] sm:$0xf]
    %v1586 = vld [vmem:[%s1 + $0x1d0] sm:$0xf]
    %v1587 = vld [vmem:[%s1 + $0x1d4] sm:$0xf]
    %v1588 = vld [vmem:[%s1 + $0x1d8] sm:$0xf]
    %v1589 = vld [vmem:[%s1 + $0x1dc] sm:$0xf]
    %v1590 = vld [vmem:[%s1 + $0x1e0] sm:$0xf]
    %v1591 = vld [vmem:[%s1 + $0x1e4] sm:$0xf]
    %v1592 = vld [vmem:[%s1 + $0x1e8] sm:$0xf]
    %v1593 = vld [vmem:[%s1 + $0x1ec] sm:$0xf]
    %v1594 = vld [vmem:[%s1 + $0x1f0] sm:$0xf]
    %v1595 = vld [vmem:[%s1 + $0x1f4] sm:$0xf]
    %v1596 = vld [vmem:[%s1 + $0x1f8] sm:$0xf]
    %v1597 = vld [vmem:[%s1 + $0x1fc] sm:$0xf]
    %v1598 = vld [vmem:[%s1 + $0x200] sm:$0xf]
    %v1599 = vld [vmem:[%s1 + $0x204] sm:$0xf]
    %v1600 = vld [vmem:[%s1 + $0x208] sm:$0xf]
    %v1601 = vld [vmem:[%s1 + $0x20c] sm:$0xf]
    %v1602 = vld [vmem:[%s1 + $0x210] sm:$0xf]
    %v1603 = vld [vmem:[%s1 + $0x214] sm:$0xf]
    %v1604 = vld [vmem:[%s1 + $0x218] sm:$0xf]
    %v1605 = vld [vmem:[%s1 + $0x21c] sm:$0xf]
    %v1606 = vld [vmem:[%s1 + $0x220] sm:$0xf]
    %v1607 = vld [vmem:[%s1 + $0x224] sm:$0xf]
    %v1608 = vld [vmem:[%s1 + $0x228] sm:$0xf]
    %v1609 = vld [vmem:[%s1 + $0x22c] sm:$0xf]
    %v1610 = vld [vmem:[%s1 + $0x230] sm:$0xf]
    %v1611 = vld [vmem:[%s1 + $0x234] sm:$0xf]
    %v1612 = vld [vmem:[%s1 + $0x238] sm:$0xf]
    %v1613 = vld [vmem:[%s1 + $0x23c] sm:$0xf]
    %v1758 = vunpack.c.l.b16 %v1470
    %v1759 = vunpack.c.l.b16 %v1471
    %v1760 = vunpack.c.l.b16 %v1472
    %v1761 = vunpack.c.l.b16 %v1473
    %v1762 = vunpack.c.l.b16 %v1474
    %v1763 = vunpack.c.l.b16 %v1475
    %v1764 = vunpack.c.l.b16 %v1476
    %v1765 = vunpack.c.l.b16 %v1477
    %v1766 = vunpack.c.l.b16 %v1478
    %v1767 = vunpack.c.l.b16 %v1479
    %v1768 = vunpack.c.l.b16 %v1480
    %v1769 = vunpack.c.l.b16 %v1481
    %v1770 = vunpack.c.l.b16 %v1482
    %v1771 = vunpack.c.l.b16 %v1483
    %v1772 = vunpack.c.l.b16 %v1484
    %v1773 = vunpack.c.l.b16 %v1485
    %v1774 = vunpack.c.l.b16 %v1486
    %v1775 = vunpack.c.l.b16 %v1487
    %v1776 = vunpack.c.l.b16 %v1488
    %v1777 = vunpack.c.l.b16 %v1489
    %v1778 = vunpack.c.l.b16 %v1490
    %v1779 = vunpack.c.l.b16 %v1491
    %v1780 = vunpack.c.l.b16 %v1492
    %v1781 = vunpack.c.l.b16 %v1493
    %v1782 = vunpack.c.l.b16 %v1494
    %v1783 = vunpack.c.l.b16 %v1495
    %v1784 = vunpack.c.l.b16 %v1496
    %v1785 = vunpack.c.l.b16 %v1497
    %v1786 = vunpack.c.l.b16 %v1498
    %v1787 = vunpack.c.l.b16 %v1499
    %v1788 = vunpack.c.l.b16 %v1500
    %v1789 = vunpack.c.l.b16 %v1501
    %v1790 = vunpack.c.l.b16 %v1502
    %v1791 = vunpack.c.l.b16 %v1503
    %v1792 = vunpack.c.l.b16 %v1504
    %v1793 = vunpack.c.l.b16 %v1505
    %v1794 = vunpack.c.l.b16 %v1506
    %v1795 = vunpack.c.l.b16 %v1507
    %v1796 = vunpack.c.l.b16 %v1508
    %v1797 = vunpack.c.l.b16 %v1509
    %v1798 = vunpack.c.l.b16 %v1510
    %v1799 = vunpack.c.l.b16 %v1511
    %v1800 = vunpack.c.l.b16 %v1512
    %v1801 = vunpack.c.l.b16 %v1513
    %v1802 = vunpack.c.l.b16 %v1514
    %v1803 = vunpack.c.l.b16 %v1515
    %v1804 = vunpack.c.l.b16 %v1516
    %v1805 = vunpack.c.l.b16 %v1517
    %v1806 = vunpack.c.l.b16 %v1518
    %v1807 = vunpack.c.l.b16 %v1519
    %v1808 = vunpack.c.l.b16 %v1520
    %v1809 = vunpack.c.l.b16 %v1521
    %v1810 = vunpack.c.l.b16 %v1522
    %v1811 = vunpack.c.l.b16 %v1523
    %v1812 = vunpack.c.l.b16 %v1524
    %v1813 = vunpack.c.l.b16 %v1525
    %v1814 = vunpack.c.l.b16 %v1526
    %v1815 = vunpack.c.l.b16 %v1527
    %v1816 = vunpack.c.l.b16 %v1528
    %v1817 = vunpack.c.l.b16 %v1529
    %v1818 = vunpack.c.l.b16 %v1530
    %v1819 = vunpack.c.l.b16 %v1531
    %v1820 = vunpack.c.l.b16 %v1532
    %v1821 = vunpack.c.l.b16 %v1533
    %v1822 = vunpack.c.l.b16 %v1534
    %v1823 = vunpack.c.l.b16 %v1535
    %v1824 = vunpack.c.l.b16 %v1536
    %v1825 = vunpack.c.l.b16 %v1537
    %v1826 = vunpack.c.l.b16 %v1538
    %v1827 = vunpack.c.l.b16 %v1539
    %v1828 = vunpack.c.l.b16 %v1540
    %v1829 = vunpack.c.l.b16 %v1541
    %v1830 = vunpack.c.l.b16 %v1542
    %v1831 = vunpack.c.l.b16 %v1543
    %v1832 = vunpack.c.l.b16 %v1544
    %v1833 = vunpack.c.l.b16 %v1545
    %v1834 = vunpack.c.l.b16 %v1546
    %v1835 = vunpack.c.l.b16 %v1547
    %v1836 = vunpack.c.l.b16 %v1548
    %v1837 = vunpack.c.l.b16 %v1549
    %v1838 = vunpack.c.l.b16 %v1550
    %v1839 = vunpack.c.l.b16 %v1551
    %v1840 = vunpack.c.l.b16 %v1552
    %v1841 = vunpack.c.l.b16 %v1553
    %v1842 = vunpack.c.l.b16 %v1554
    %v1843 = vunpack.c.l.b16 %v1555
    %v1844 = vunpack.c.l.b16 %v1556
    %v1845 = vunpack.c.l.b16 %v1557
    %v1846 = vunpack.c.l.b16 %v1558
    %v1847 = vunpack.c.l.b16 %v1559
    %v1848 = vunpack.c.l.b16 %v1560
    %v1849 = vunpack.c.l.b16 %v1561
    %v1850 = vunpack.c.l.b16 %v1562
    %v1851 = vunpack.c.l.b16 %v1563
    %v1852 = vunpack.c.l.b16 %v1564
    %v1853 = vunpack.c.l.b16 %v1565
    %v1854 = vunpack.c.l.b16 %v1566
    %v1855 = vunpack.c.l.b16 %v1567
    %v1856 = vunpack.c.l.b16 %v1568
    %v1857 = vunpack.c.l.b16 %v1569
    %v1858 = vunpack.c.l.b16 %v1570
    %v1859 = vunpack.c.l.b16 %v1571
    %v1860 = vunpack.c.l.b16 %v1572
    %v1861 = vunpack.c.l.b16 %v1573
    %v1862 = vunpack.c.l.b16 %v1574
    %v1863 = vunpack.c.l.b16 %v1575
    %v1864 = vunpack.c.l.b16 %v1576
    %v1865 = vunpack.c.l.b16 %v1577
    %v1866 = vunpack.c.l.b16 %v1578
    %v1867 = vunpack.c.l.b16 %v1579
    %v1868 = vunpack.c.l.b16 %v1580
    %v1869 = vunpack.c.l.b16 %v1581
    %v1870 = vunpack.c.l.b16 %v1582
    %v1871 = vunpack.c.l.b16 %v1583
    %v1872 = vunpack.c.l.b16 %v1584
    %v1873 = vunpack.c.l.b16 %v1585
    %v1874 = vunpack.c.l.b16 %v1586
    %v1875 = vunpack.c.l.b16 %v1587
    %v1876 = vunpack.c.l.b16 %v1588
    %v1877 = vunpack.c.l.b16 %v1589
    %v1878 = vunpack.c.l.b16 %v1590
    %v1879 = vunpack.c.l.b16 %v1591
    %v1880 = vunpack.c.l.b16 %v1592
    %v1881 = vunpack.c.l.b16 %v1593
    %v1882 = vunpack.c.l.b16 %v1594
    %v1883 = vunpack.c.l.b16 %v1595
    %v1884 = vunpack.c.l.b16 %v1596
    %v1885 = vunpack.c.l.b16 %v1597
    %v1886 = vunpack.c.l.b16 %v1598
    %v1887 = vunpack.c.l.b16 %v1599
    %v1888 = vunpack.c.l.b16 %v1600
    %v1889 = vunpack.c.l.b16 %v1601
    %v1890 = vunpack.c.l.b16 %v1602
    %v1891 = vunpack.c.l.b16 %v1603
    %v1892 = vunpack.c.l.b16 %v1604
    %v1893 = vunpack.c.l.b16 %v1605
    %v1894 = vunpack.c.l.b16 %v1606
    %v1895 = vunpack.c.l.b16 %v1607
    %v1896 = vunpack.c.l.b16 %v1608
    %v1897 = vunpack.c.l.b16 %v1609
    %v1898 = vunpack.c.l.b16 %v1610
    %v1899 = vunpack.c.l.b16 %v1611
    %v1900 = vunpack.c.l.b16 %v1612
    %v1901 = vunpack.c.l.b16 %v1613
    %v1902 = vpack.c.b16 %v1759, %v1758
    %v1903 = vpack.c.b16 %v1761, %v1760
    %v1904 = vpack.c.b16 %v1763, %v1762
    %v1905 = vpack.c.b16 %v1765, %v1764
    %v1906 = vpack.c.b16 %v1767, %v1766
    %v1907 = vpack.c.b16 %v1769, %v1768
    %v1908 = vpack.c.b16 %v1771, %v1770
    %v1909 = vpack.c.b16 %v1773, %v1772
    %v1910 = vpack.c.b16 %v1775, %v1774
    %v1911 = vpack.c.b16 %v1777, %v1776
    %v1912 = vpack.c.b16 %v1779, %v1778
    %v1913 = vpack.c.b16 %v1781, %v1780
    %v1914 = vpack.c.b16 %v1783, %v1782
    %v1915 = vpack.c.b16 %v1785, %v1784
    %v1916 = vpack.c.b16 %v1787, %v1786
    %v1917 = vpack.c.b16 %v1789, %v1788
    %v1918 = vpack.c.b16 %v1791, %v1790
    %v1919 = vpack.c.b16 %v1793, %v1792
    %v1920 = vpack.c.b16 %v1795, %v1794
    %v1921 = vpack.c.b16 %v1797, %v1796
    %v1922 = vpack.c.b16 %v1799, %v1798
    %v1923 = vpack.c.b16 %v1801, %v1800
    %v1924 = vpack.c.b16 %v1803, %v1802
    %v1925 = vpack.c.b16 %v1805, %v1804
    %v1926 = vpack.c.b16 %v1807, %v1806
    %v1927 = vpack.c.b16 %v1809, %v1808
    %v1928 = vpack.c.b16 %v1811, %v1810
    %v1929 = vpack.c.b16 %v1813, %v1812
    %v1930 = vpack.c.b16 %v1815, %v1814
    %v1931 = vpack.c.b16 %v1817, %v1816
    %v1932 = vpack.c.b16 %v1819, %v1818
    %v1933 = vpack.c.b16 %v1821, %v1820
    %v1934 = vpack.c.b16 %v1823, %v1822
    %v1935 = vpack.c.b16 %v1825, %v1824
    %v1936 = vpack.c.b16 %v1827, %v1826
    %v1937 = vpack.c.b16 %v1829, %v1828
    %v1938 = vpack.c.b16 %v1831, %v1830
    %v1939 = vpack.c.b16 %v1833, %v1832
    %v1940 = vpack.c.b16 %v1835, %v1834
    %v1941 = vpack.c.b16 %v1837, %v1836
    %v1942 = vpack.c.b16 %v1839, %v1838
    %v1943 = vpack.c.b16 %v1841, %v1840
    %v1944 = vpack.c.b16 %v1843, %v1842
    %v1945 = vpack.c.b16 %v1845, %v1844
    %v1946 = vpack.c.b16 %v1847, %v1846
    %v1947 = vpack.c.b16 %v1849, %v1848
    %v1948 = vpack.c.b16 %v1851, %v1850
    %v1949 = vpack.c.b16 %v1853, %v1852
    %v1950 = vpack.c.b16 %v1855, %v1854
    %v1951 = vpack.c.b16 %v1857, %v1856
    %v1952 = vpack.c.b16 %v1859, %v1858
    %v1953 = vpack.c.b16 %v1861, %v1860
    %v1954 = vpack.c.b16 %v1863, %v1862
    %v1955 = vpack.c.b16 %v1865, %v1864
    %v1956 = vpack.c.b16 %v1867, %v1866
    %v1957 = vpack.c.b16 %v1869, %v1868
    %v1958 = vpack.c.b16 %v1871, %v1870
    %v1959 = vpack.c.b16 %v1873, %v1872
    %v1960 = vpack.c.b16 %v1875, %v1874
    %v1961 = vpack.c.b16 %v1877, %v1876
    %v1962 = vpack.c.b16 %v1879, %v1878
    %v1963 = vpack.c.b16 %v1881, %v1880
    %v1964 = vpack.c.b16 %v1883, %v1882
    %v1965 = vpack.c.b16 %v1885, %v1884
    %v1966 = vpack.c.b16 %v1887, %v1886
    %v1967 = vpack.c.b16 %v1889, %v1888
    %v1968 = vpack.c.b16 %v1891, %v1890
    %v1969 = vpack.c.b16 %v1893, %v1892
    %v1970 = vpack.c.b16 %v1895, %v1894
    %v1971 = vpack.c.b16 %v1897, %v1896
    %v1972 = vpack.c.b16 %v1899, %v1898
    %v1973 = vpack.c.b16 %v1901, %v1900
    %2046 = vmatprep.subr.bf16.mxu0 0
    %2047 = vmatpush1.bf16.msra.mxu0 %v1909
    %2048 = vmatprep.subr.bf16.mxu0 0
    %2049 = vmatpush1.bf16.msra.mxu0 %v1908
    %2050 = vmatprep.subr.bf16.mxu0 0
    %2051 = vmatpush1.bf16.msra.mxu0 %v1907
    %2052 = vmatprep.subr.bf16.mxu0 0
    %2053 = vmatpush1.bf16.msra.mxu0 %v1906
    %2054 = vmatprep.subr.bf16.mxu0 0
    %2055 = vmatpush1.bf16.msra.mxu0 %v1905
    %2056 = vmatprep.subr.bf16.mxu0 0
    %2057 = vmatpush1.bf16.msra.mxu0 %v1904
    %2058 = vmatprep.subr.bf16.mxu0 0
    %2059 = vmatpush1.bf16.msra.mxu0 %v1903
    %2060 = vmatprep.subr.bf16.mxu0 0
    %2061 = vmatpush1.bf16.msra.mxu0 %v1902
    %2062 = vmatprep.subr.bf16.mxu0 0
    %2063 = vmatpush2.bf16.msra.mxu0 %v1917
    %2064 = vmatprep.subr.bf16.mxu0 0
    %2065 = vmatpush2.bf16.msra.mxu0 %v1916
    %2066 = vmatprep.subr.bf16.mxu0 0
    %2067 = vmatpush2.bf16.msra.mxu0 %v1915
    %2068 = vmatprep.subr.bf16.mxu0 0
    %2069 = vmatpush2.bf16.msra.mxu0 %v1914
    %2070 = vmatprep.subr.bf16.mxu0 0
    %2071 = vmatpush2.bf16.msra.mxu0 %v1913
    %2072 = vmatprep.subr.bf16.mxu0 0
    %2073 = vmatpush2.bf16.msra.mxu0 %v1912
    %2074 = vmatprep.subr.bf16.mxu0 0
    %2075 = vmatpush2.bf16.msra.mxu0 %v1911
    %2076 = vmatprep.subr.bf16.mxu0 0
    %2077 = vmatpush2.bf16.msra.mxu0 %v1910
    %2078 = vmatprep.mubr.bf16.mxu0 %v1198
    %2079 = vmatmul.mubr.bf16.gmra.mxu0 %v1166
    %v2080 = vpop.f32.mrf.mxu0
    %v2081 = vadd.f32 0.0, %v2080
    %v2082 = vpop.f32.mrf.mxu0
    %v2083 = vpop.f32.mrf.mxu0
    %v2084 = vadd.f32 0.0, %v2083
    %v2085 = vpop.f32.mrf.mxu0
    %2086 = vmatprep.mubr.bf16.mxu0 %v1199
    %2087 = vmatmul.mubr.bf16.gmra.mxu0 %v1167
    %v2088 = vpop.f32.mrf.mxu0
    %v2089 = vadd.f32 0.0, %v2088
    %v2090 = vpop.f32.mrf.mxu0
    %v2091 = vpop.f32.mrf.mxu0
    %v2092 = vadd.f32 0.0, %v2091
    %v2093 = vpop.f32.mrf.mxu0
    %2094 = vmatprep.mubr.bf16.mxu0 %v1200
    %2095 = vmatmul.mubr.bf16.gmra.mxu0 %v1168
    %v2096 = vpop.f32.mrf.mxu0
    %v2097 = vadd.f32 0.0, %v2096
    %v2098 = vpop.f32.mrf.mxu0
    %v2099 = vpop.f32.mrf.mxu0
    %v2100 = vadd.f32 0.0, %v2099
    %v2101 = vpop.f32.mrf.mxu0
    %2102 = vmatprep.mubr.bf16.mxu0 %v1201
    %2103 = vmatmul.mubr.bf16.gmra.mxu0 %v1169
    %v2104 = vpop.f32.mrf.mxu0
    %v2105 = vadd.f32 0.0, %v2104
    %v2106 = vpop.f32.mrf.mxu0
    %v2107 = vpop.f32.mrf.mxu0
    %v2108 = vadd.f32 0.0, %v2107
    %v2109 = vpop.f32.mrf.mxu0
    %2110 = vmatprep.mubr.bf16.mxu0 %v1202
    %2111 = vmatmul.mubr.bf16.gmra.mxu0 %v1170
    %v2112 = vpop.f32.mrf.mxu0
    %v2113 = vadd.f32 0.0, %v2112
    %v2114 = vpop.f32.mrf.mxu0
    %v2115 = vpop.f32.mrf.mxu0
    %v2116 = vadd.f32 0.0, %v2115
    %v2117 = vpop.f32.mrf.mxu0
    %2118 = vmatprep.mubr.bf16.mxu0 %v1203
    %2119 = vmatmul.mubr.bf16.gmra.mxu0 %v1171
    %v2120 = vpop.f32.mrf.mxu0
    %v2121 = vadd.f32 0.0, %v2120
    %v2122 = vpop.f32.mrf.mxu0
    %v2123 = vpop.f32.mrf.mxu0
    %v2124 = vadd.f32 0.0, %v2123
    %v2125 = vpop.f32.mrf.mxu0
    %2126 = vmatprep.mubr.bf16.mxu0 %v1204
    %2127 = vmatmul.mubr.bf16.gmra.mxu0 %v1172
    %v2128 = vpop.f32.mrf.mxu0
    %v2129 = vadd.f32 0.0, %v2128
    %v2130 = vpop.f32.mrf.mxu0
    %v2131 = vpop.f32.mrf.mxu0
    %v2132 = vadd.f32 0.0, %v2131
    %v2133 = vpop.f32.mrf.mxu0
    %2134 = vmatprep.mubr.bf16.mxu0 %v1205
    %2135 = vmatmul.mubr.bf16.gmra.mxu0 %v1173
    %v2136 = vpop.f32.mrf.mxu0
    %v2137 = vadd.f32 0.0, %v2136
    %v2138 = vpop.f32.mrf.mxu0
    %v2139 = vpop.f32.mrf.mxu0
    %v2140 = vadd.f32 0.0, %v2139
    %v2141 = vpop.f32.mrf.mxu0
    %2142 = vdwg.mxu0
    %2143 = vmatprep.subr.bf16.mxu0 0
    %2144 = vmatpush1.bf16.msra.mxu0 %v1925
    %2145 = vmatprep.subr.bf16.mxu0 0
    %2146 = vmatpush1.bf16.msra.mxu0 %v1924
    %2147 = vmatprep.subr.bf16.mxu0 0
    %2148 = vmatpush1.bf16.msra.mxu0 %v1923
    %2149 = vmatprep.subr.bf16.mxu0 0
    %2150 = vmatpush1.bf16.msra.mxu0 %v1922
    %2151 = vmatprep.subr.bf16.mxu0 0
    %2152 = vmatpush1.bf16.msra.mxu0 %v1921
    %2153 = vmatprep.subr.bf16.mxu0 0
    %2154 = vmatpush1.bf16.msra.mxu0 %v1920
    %2155 = vmatprep.subr.bf16.mxu0 0
    %2156 = vmatpush1.bf16.msra.mxu0 %v1919
    %2157 = vmatprep.subr.bf16.mxu0 0
    %2158 = vmatpush1.bf16.msra.mxu0 %v1918
    %2159 = vmatprep.subr.bf16.mxu0 0
    %2160 = vmatpush2.bf16.msra.mxu0 %v1933
    %2161 = vmatprep.subr.bf16.mxu0 0
    %2162 = vmatpush2.bf16.msra.mxu0 %v1932
    %2163 = vmatprep.subr.bf16.mxu0 0
    %2164 = vmatpush2.bf16.msra.mxu0 %v1931
    %2165 = vmatprep.subr.bf16.mxu0 0
    %2166 = vmatpush2.bf16.msra.mxu0 %v1930
    %2167 = vmatprep.subr.bf16.mxu0 0
    %2168 = vmatpush2.bf16.msra.mxu0 %v1929
    %2169 = vmatprep.subr.bf16.mxu0 0
    %2170 = vmatpush2.bf16.msra.mxu0 %v1928
    %2171 = vmatprep.subr.bf16.mxu0 0
    %2172 = vmatpush2.bf16.msra.mxu0 %v1927
    %2173 = vmatprep.subr.bf16.mxu0 0
    %2174 = vmatpush2.bf16.msra.mxu0 %v1926
    %2175 = vmatprep.mubr.bf16.mxu0 %v1278
    %2176 = vmatmul.mubr.bf16.gmra.mxu0 %v1230
    %v2177 = vpop.f32.mrf.mxu0
    %v2178 = vadd.f32 %v2081, %v2177
    %v2179 = vpop.f32.mrf.mxu0
    %v2180 = vpop.f32.mrf.mxu0
    %v2181 = vadd.f32 %v2084, %v2180
    %v2182 = vpop.f32.mrf.mxu0
    %2183 = vmatprep.mubr.bf16.mxu0 %v1279
    %2184 = vmatmul.mubr.bf16.gmra.mxu0 %v1231
    %v2185 = vpop.f32.mrf.mxu0
    %v2186 = vadd.f32 %v2089, %v2185
    %v2187 = vpop.f32.mrf.mxu0
    %v2188 = vpop.f32.mrf.mxu0
    %v2189 = vadd.f32 %v2092, %v2188
    %v2190 = vpop.f32.mrf.mxu0
    %2191 = vmatprep.mubr.bf16.mxu0 %v1280
    %2192 = vmatmul.mubr.bf16.gmra.mxu0 %v1232
    %v2193 = vpop.f32.mrf.mxu0
    %v2194 = vadd.f32 %v2097, %v2193
    %v2195 = vpop.f32.mrf.mxu0
    %v2196 = vpop.f32.mrf.mxu0
    %v2197 = vadd.f32 %v2100, %v2196
    %v2198 = vpop.f32.mrf.mxu0
    %2199 = vmatprep.mubr.bf16.mxu0 %v1281
    %2200 = vmatmul.mubr.bf16.gmra.mxu0 %v1233
    %v2201 = vpop.f32.mrf.mxu0
    %v2202 = vadd.f32 %v2105, %v2201
    %v2203 = vpop.f32.mrf.mxu0
    %v2204 = vpop.f32.mrf.mxu0
    %v2205 = vadd.f32 %v2108, %v2204
    %v2206 = vpop.f32.mrf.mxu0
    %2207 = vmatprep.mubr.bf16.mxu0 %v1282
    %2208 = vmatmul.mubr.bf16.gmra.mxu0 %v1234
    %v2209 = vpop.f32.mrf.mxu0
    %v2210 = vadd.f32 %v2113, %v2209
    %v2211 = vpop.f32.mrf.mxu0
    %v2212 = vpop.f32.mrf.mxu0
    %v2213 = vadd.f32 %v2116, %v2212
    %v2214 = vpop.f32.mrf.mxu0
    %2215 = vmatprep.mubr.bf16.mxu0 %v1283
    %2216 = vmatmul.mubr.bf16.gmra.mxu0 %v1235
    %v2217 = vpop.f32.mrf.mxu0
    %v2218 = vadd.f32 %v2121, %v2217
    %v2219 = vpop.f32.mrf.mxu0
    %v2220 = vpop.f32.mrf.mxu0
    %v2221 = vadd.f32 %v2124, %v2220
    %v2222 = vpop.f32.mrf.mxu0
    %2223 = vmatprep.mubr.bf16.mxu0 %v1284
    %2224 = vmatmul.mubr.bf16.gmra.mxu0 %v1236
    %v2225 = vpop.f32.mrf.mxu0
    %v2226 = vadd.f32 %v2129, %v2225
    %v2227 = vpop.f32.mrf.mxu0
    %v2228 = vpop.f32.mrf.mxu0
    %v2229 = vadd.f32 %v2132, %v2228
    %v2230 = vpop.f32.mrf.mxu0
    %2231 = vmatprep.mubr.bf16.mxu0 %v1285
    %2232 = vmatmul.mubr.bf16.gmra.mxu0 %v1237
    %v2233 = vpop.f32.mrf.mxu0
    %v2234 = vadd.f32 %v2137, %v2233
    %v2235 = vpop.f32.mrf.mxu0
    %v2236 = vpop.f32.mrf.mxu0
    %v2237 = vadd.f32 %v2140, %v2236
    %v2238 = vpop.f32.mrf.mxu0
    %2239 = vdwg.mxu0
    %2240 = vmatprep.subr.bf16.mxu0 0
    %2241 = vmatpush1.bf16.msra.mxu0 %v1941
    %2242 = vmatprep.subr.bf16.mxu0 0
    %2243 = vmatpush1.bf16.msra.mxu0 %v1940
    %2244 = vmatprep.subr.bf16.mxu0 0
    %2245 = vmatpush1.bf16.msra.mxu0 %v1939
    %2246 = vmatprep.subr.bf16.mxu0 0
    %2247 = vmatpush1.bf16.msra.mxu0 %v1938
    %2248 = vmatprep.subr.bf16.mxu0 0
    %2249 = vmatpush1.bf16.msra.mxu0 %v1937
    %2250 = vmatprep.subr.bf16.mxu0 0
    %2251 = vmatpush1.bf16.msra.mxu0 %v1936
    %2252 = vmatprep.subr.bf16.mxu0 0
    %2253 = vmatpush1.bf16.msra.mxu0 %v1935
    %2254 = vmatprep.subr.bf16.mxu0 0
    %2255 = vmatpush1.bf16.msra.mxu0 %v1934
    %2256 = vmatprep.subr.bf16.mxu0 0
    %2257 = vmatpush2.bf16.msra.mxu0 %v1949
    %2258 = vmatprep.subr.bf16.mxu0 0
    %2259 = vmatpush2.bf16.msra.mxu0 %v1948
    %2260 = vmatprep.subr.bf16.mxu0 0
    %2261 = vmatpush2.bf16.msra.mxu0 %v1947
    %2262 = vmatprep.subr.bf16.mxu0 0
    %2263 = vmatpush2.bf16.msra.mxu0 %v1946
    %2264 = vmatprep.subr.bf16.mxu0 0
    %2265 = vmatpush2.bf16.msra.mxu0 %v1945
    %2266 = vmatprep.subr.bf16.mxu0 0
    %2267 = vmatpush2.bf16.msra.mxu0 %v1944
    %2268 = vmatprep.subr.bf16.mxu0 0
    %2269 = vmatpush2.bf16.msra.mxu0 %v1943
    %2270 = vmatprep.subr.bf16.mxu0 0
    %2271 = vmatpush2.bf16.msra.mxu0 %v1942
    %2272 = vmatprep.mubr.bf16.mxu0 %v1342
    %2273 = vmatmul.mubr.bf16.gmra.mxu0 %v1310
    %v2274 = vpop.f32.mrf.mxu0
    %v2275 = vadd.f32 %v2178, %v2274
    %v2276 = vpop.f32.mrf.mxu0
    %v2277 = vpop.f32.mrf.mxu0
    %v2278 = vadd.f32 %v2181, %v2277
    %v2279 = vpop.f32.mrf.mxu0
    %2280 = vmatprep.mubr.bf16.mxu0 %v1343
    %2281 = vmatmul.mubr.bf16.gmra.mxu0 %v1311
    %v2282 = vpop.f32.mrf.mxu0
    %v2283 = vadd.f32 %v2186, %v2282
    %v2284 = vpop.f32.mrf.mxu0
    %v2285 = vpop.f32.mrf.mxu0
    %v2286 = vadd.f32 %v2189, %v2285
    %v2287 = vpop.f32.mrf.mxu0
    %2288 = vmatprep.mubr.bf16.mxu0 %v1344
    %2289 = vmatmul.mubr.bf16.gmra.mxu0 %v1312
    %v2290 = vpop.f32.mrf.mxu0
    %v2291 = vadd.f32 %v2194, %v2290
    %v2292 = vpop.f32.mrf.mxu0
    %v2293 = vpop.f32.mrf.mxu0
    %v2294 = vadd.f32 %v2197, %v2293
    %v2295 = vpop.f32.mrf.mxu0
    %2296 = vmatprep.mubr.bf16.mxu0 %v1345
    %2297 = vmatmul.mubr.bf16.gmra.mxu0 %v1313
    %v2298 = vpop.f32.mrf.mxu0
    %v2299 = vadd.f32 %v2202, %v2298
    %v2300 = vpop.f32.mrf.mxu0
    %v2301 = vpop.f32.mrf.mxu0
    %v2302 = vadd.f32 %v2205, %v2301
    %v2303 = vpop.f32.mrf.mxu0
    %2304 = vmatprep.mubr.bf16.mxu0 %v1346
    %2305 = vmatmul.mubr.bf16.gmra.mxu0 %v1314
    %v2306 = vpop.f32.mrf.mxu0
    %v2307 = vadd.f32 %v2210, %v2306
    %v2308 = vpop.f32.mrf.mxu0
    %v2309 = vpop.f32.mrf.mxu0
    %v2310 = vadd.f32 %v2213, %v2309
    %v2311 = vpop.f32.mrf.mxu0
    %2312 = vmatprep.mubr.bf16.mxu0 %v1347
    %2313 = vmatmul.mubr.bf16.gmra.mxu0 %v1315
    %v2314 = vpop.f32.mrf.mxu0
    %v2315 = vadd.f32 %v2218, %v2314
    %v2316 = vpop.f32.mrf.mxu0
    %v2317 = vpop.f32.mrf.mxu0
    %v2318 = vadd.f32 %v2221, %v2317
    %v2319 = vpop.f32.mrf.mxu0
    %2320 = vmatprep.mubr.bf16.mxu0 %v1348
    %2321 = vmatmul.mubr.bf16.gmra.mxu0 %v1316
    %v2322 = vpop.f32.mrf.mxu0
    %v2323 = vadd.f32 %v2226, %v2322
    %v2324 = vpop.f32.mrf.mxu0
    %v2325 = vpop.f32.mrf.mxu0
    %v2326 = vadd.f32 %v2229, %v2325
    %v2327 = vpop.f32.mrf.mxu0
    %2328 = vmatprep.mubr.bf16.mxu0 %v1349
    %2329 = vmatmul.mubr.bf16.gmra.mxu0 %v1317
    %v2330 = vpop.f32.mrf.mxu0
    %v2331 = vadd.f32 %v2234, %v2330
    %v2332 = vpop.f32.mrf.mxu0
    %v2333 = vpop.f32.mrf.mxu0
    %v2334 = vadd.f32 %v2237, %v2333
    %v2335 = vpop.f32.mrf.mxu0
    %2336 = vdwg.mxu0
    %2337 = vmatprep.subr.bf16.mxu0 0
    %2338 = vmatpush1.bf16.msra.mxu0 %v1957
    %2339 = vmatprep.subr.bf16.mxu0 0
    %2340 = vmatpush1.bf16.msra.mxu0 %v1956
    %2341 = vmatprep.subr.bf16.mxu0 0
    %2342 = vmatpush1.bf16.msra.mxu0 %v1955
    %2343 = vmatprep.subr.bf16.mxu0 0
    %2344 = vmatpush1.bf16.msra.mxu0 %v1954
    %2345 = vmatprep.subr.bf16.mxu0 0
    %2346 = vmatpush1.bf16.msra.mxu0 %v1953
    %2347 = vmatprep.subr.bf16.mxu0 0
    %2348 = vmatpush1.bf16.msra.mxu0 %v1952
    %2349 = vmatprep.subr.bf16.mxu0 0
    %2350 = vmatpush1.bf16.msra.mxu0 %v1951
    %2351 = vmatprep.subr.bf16.mxu0 0
    %2352 = vmatpush1.bf16.msra.mxu0 %v1950
    %2353 = vmatprep.subr.bf16.mxu0 0
    %2354 = vmatpush2.bf16.msra.mxu0 %v1965
    %2355 = vmatprep.subr.bf16.mxu0 0
    %2356 = vmatpush2.bf16.msra.mxu0 %v1964
    %2357 = vmatprep.subr.bf16.mxu0 0
    %2358 = vmatpush2.bf16.msra.mxu0 %v1963
    %2359 = vmatprep.subr.bf16.mxu0 0
    %2360 = vmatpush2.bf16.msra.mxu0 %v1962
    %2361 = vmatprep.subr.bf16.mxu0 0
    %2362 = vmatpush2.bf16.msra.mxu0 %v1961
    %2363 = vmatprep.subr.bf16.mxu0 0
    %2364 = vmatpush2.bf16.msra.mxu0 %v1960
    %2365 = vmatprep.subr.bf16.mxu0 0
    %2366 = vmatpush2.bf16.msra.mxu0 %v1959
    %2367 = vmatprep.subr.bf16.mxu0 0
    %2368 = vmatpush2.bf16.msra.mxu0 %v1958
    %2369 = vmatprep.mubr.bf16.mxu0 %v1422
    %2370 = vmatmul.mubr.bf16.gmra.mxu0 %v1390
    %v2371 = vpop.f32.mrf.mxu0
    %v2372 = vadd.f32 %v2275, %v2371
    %v2373 = vpop.f32.mrf.mxu0
    %v2374 = vpop.f32.mrf.mxu0
    %v2375 = vadd.f32 %v2278, %v2374
    %v2376 = vpop.f32.mrf.mxu0
    %2377 = vmatprep.mubr.bf16.mxu0 %v1423
    %2378 = vmatmul.mubr.bf16.gmra.mxu0 %v1391
    %v2379 = vpop.f32.mrf.mxu0
    %v2380 = vadd.f32 %v2283, %v2379
    %v2381 = vpop.f32.mrf.mxu0
    %v2382 = vpop.f32.mrf.mxu0
    %v2383 = vadd.f32 %v2286, %v2382
    %v2384 = vpop.f32.mrf.mxu0
    %2385 = vmatprep.mubr.bf16.mxu0 %v1424
    %2386 = vmatmul.mubr.bf16.gmra.mxu0 %v1392
    %v2387 = vpop.f32.mrf.mxu0
    %v2388 = vadd.f32 %v2291, %v2387
    %v2389 = vpop.f32.mrf.mxu0
    %v2390 = vpop.f32.mrf.mxu0
    %v2391 = vadd.f32 %v2294, %v2390
    %v2392 = vpop.f32.mrf.mxu0
    %2393 = vmatprep.mubr.bf16.mxu0 %v1425
    %2394 = vmatmul.mubr.bf16.gmra.mxu0 %v1393
    %v2395 = vpop.f32.mrf.mxu0
    %v2396 = vadd.f32 %v2299, %v2395
    %v2397 = vpop.f32.mrf.mxu0
    %v2398 = vpop.f32.mrf.mxu0
    %v2399 = vadd.f32 %v2302, %v2398
    %v2400 = vpop.f32.mrf.mxu0
    %2401 = vmatprep.mubr.bf16.mxu0 %v1426
    %2402 = vmatmul.mubr.bf16.gmra.mxu0 %v1394
    %v2403 = vpop.f32.mrf.mxu0
    %v2404 = vadd.f32 %v2307, %v2403
    %v2405 = vpop.f32.mrf.mxu0
    %v2406 = vpop.f32.mrf.mxu0
    %v2407 = vadd.f32 %v2310, %v2406
    %v2408 = vpop.f32.mrf.mxu0
    %2409 = vmatprep.mubr.bf16.mxu0 %v1427
    %2410 = vmatmul.mubr.bf16.gmra.mxu0 %v1395
    %v2411 = vpop.f32.mrf.mxu0
    %v2412 = vadd.f32 %v2315, %v2411
    %v2413 = vpop.f32.mrf.mxu0
    %v2414 = vpop.f32.mrf.mxu0
    %v2415 = vadd.f32 %v2318, %v2414
    %v2416 = vpop.f32.mrf.mxu0
    %2417 = vmatprep.mubr.bf16.mxu0 %v1428
    %2418 = vmatmul.mubr.bf16.gmra.mxu0 %v1396
    %v2419 = vpop.f32.mrf.mxu0
    %v2420 = vadd.f32 %v2323, %v2419
    %v2421 = vpop.f32.mrf.mxu0
    %v2422 = vpop.f32.mrf.mxu0
    %v2423 = vadd.f32 %v2326, %v2422
    %v2424 = vpop.f32.mrf.mxu0
    %2425 = vmatprep.mubr.bf16.mxu0 %v1429
    %2426 = vmatmul.mubr.bf16.gmra.mxu0 %v1397
    %v2427 = vpop.f32.mrf.mxu0
    %v2428 = vadd.f32 %v2331, %v2427
    %v2429 = vpop.f32.mrf.mxu0
    %v2430 = vpop.f32.mrf.mxu0
    %v2431 = vadd.f32 %v2334, %v2430
    %v2432 = vpop.f32.mrf.mxu0
    %2433 = vdwg.mxu0
    %2434 = vmatprep.subr.bf16.mxu0 0
    %2435 = vmatpush1.bf16.msra.mxu0 %v1973
    %2436 = vmatprep.subr.bf16.mxu0 0
    %2437 = vmatpush1.bf16.msra.mxu0 %v1972
    %2438 = vmatprep.subr.bf16.mxu0 0
    %2439 = vmatpush1.bf16.msra.mxu0 %v1971
    %2440 = vmatprep.subr.bf16.mxu0 0
    %2441 = vmatpush1.bf16.msra.mxu0 %v1970
    %2442 = vmatprep.subr.bf16.mxu0 0
    %2443 = vmatpush1.bf16.msra.mxu0 %v1969
    %2444 = vmatprep.subr.bf16.mxu0 0
    %2445 = vmatpush1.bf16.msra.mxu0 %v1968
    %2446 = vmatprep.subr.bf16.mxu0 0
    %2447 = vmatpush1.bf16.msra.mxu0 %v1967
    %2448 = vmatprep.subr.bf16.mxu0 0
    %2449 = vmatpush1.bf16.msra.mxu0 %v1966
    %2450 = vmatprep.subr.bf16.mxu0 0
    %2451 = vmatpush2.bf16.msra.mxu0 0
    %2452 = vmatprep.subr.bf16.mxu0 0
    %2453 = vmatpush2.bf16.msra.mxu0 0
    %2454 = vmatprep.subr.bf16.mxu0 0
    %2455 = vmatpush2.bf16.msra.mxu0 0
    %2456 = vmatprep.subr.bf16.mxu0 0
    %2457 = vmatpush2.bf16.msra.mxu0 0
    %2458 = vmatprep.subr.bf16.mxu0 0
    %2459 = vmatpush2.bf16.msra.mxu0 0
    %2460 = vmatprep.subr.bf16.mxu0 0
    %2461 = vmatpush2.bf16.msra.mxu0 0
    %2462 = vmatprep.subr.bf16.mxu0 0
    %2463 = vmatpush2.bf16.msra.mxu0 0
    %2464 = vmatprep.subr.bf16.mxu0 0
    %2465 = vmatpush2.bf16.msra.mxu0 0
    %2466 = vmatprep.mubr.bf16.mxu0 0
    %2467 = vmatmul.mubr.bf16.gmra.mxu0 %v1454
    %v2468 = vpop.f32.mrf.mxu0
    %v2469 = vadd.f32 %v2372, %v2468
    %v2470 = vpop.f32.mrf.mxu0
    %v2471 = vpop.f32.mrf.mxu0
    %v2472 = vadd.f32 %v2375, %v2471
    %v2473 = vpop.f32.mrf.mxu0
    %2474 = vmatprep.mubr.bf16.mxu0 0
    %2475 = vmatmul.mubr.bf16.gmra.mxu0 %v1455
    %v2476 = vpop.f32.mrf.mxu0
    %v2477 = vadd.f32 %v2380, %v2476
    %v2478 = vpop.f32.mrf.mxu0
    %v2479 = vpop.f32.mrf.mxu0
    %v2480 = vadd.f32 %v2383, %v2479
    %v2481 = vpop.f32.mrf.mxu0
    %2482 = vmatprep.mubr.bf16.mxu0 0
    %2483 = vmatmul.mubr.bf16.gmra.mxu0 %v1456
    %v2484 = vpop.f32.mrf.mxu0
    %v2485 = vadd.f32 %v2388, %v2484
    %v2486 = vpop.f32.mrf.mxu0
    %v2487 = vpop.f32.mrf.mxu0
    %v2488 = vadd.f32 %v2391, %v2487
    %v2489 = vpop.f32.mrf.mxu0
    %2490 = vmatprep.mubr.bf16.mxu0 0
    %2491 = vmatmul.mubr.bf16.gmra.mxu0 %v1457
    %v2492 = vpop.f32.mrf.mxu0
    %v2493 = vadd.f32 %v2396, %v2492
    %v2494 = vpop.f32.mrf.mxu0
    %v2495 = vpop.f32.mrf.mxu0
    %v2496 = vadd.f32 %v2399, %v2495
    %v2497 = vpop.f32.mrf.mxu0
    %2498 = vmatprep.mubr.bf16.mxu0 0
    %2499 = vmatmul.mubr.bf16.gmra.mxu0 %v1458
    %v2500 = vpop.f32.mrf.mxu0
    %v2501 = vadd.f32 %v2404, %v2500
    %v2502 = vpop.f32.mrf.mxu0
    %v2503 = vpop.f32.mrf.mxu0
    %v2504 = vadd.f32 %v2407, %v2503
    %v2505 = vpop.f32.mrf.mxu0
    %2506 = vmatprep.mubr.bf16.mxu0 0
    %2507 = vmatmul.mubr.bf16.gmra.mxu0 %v1459
    %v2508 = vpop.f32.mrf.mxu0
    %v2509 = vadd.f32 %v2412, %v2508
    %v2510 = vpop.f32.mrf.mxu0
    %v2511 = vpop.f32.mrf.mxu0
    %v2512 = vadd.f32 %v2415, %v2511
    %v2513 = vpop.f32.mrf.mxu0
    %2514 = vmatprep.mubr.bf16.mxu0 0
    %2515 = vmatmul.mubr.bf16.gmra.mxu0 %v1460
    %v2516 = vpop.f32.mrf.mxu0
    %v2517 = vadd.f32 %v2420, %v2516
    %v2518 = vpop.f32.mrf.mxu0
    %v2519 = vpop.f32.mrf.mxu0
    %v2520 = vadd.f32 %v2423, %v2519
    %v2521 = vpop.f32.mrf.mxu0
    %2522 = vmatprep.mubr.bf16.mxu0 0
    %2523 = vmatmul.mubr.bf16.gmra.mxu0 %v1461
    %v2524 = vpop.f32.mrf.mxu0
    %v2525 = vadd.f32 %v2428, %v2524
    %v2526 = vpop.f32.mrf.mxu0
    %v2527 = vpop.f32.mrf.mxu0
    %v2528 = vadd.f32 %v2431, %v2527
    %v2529 = vpop.f32.mrf.mxu0
    %2530 = vdwg.mxu0
    %v2531 = vadd.f32 %v2469, %v2472
    %v2532 = vadd.f32 %v2531, %v2477
    %v2533 = vadd.f32 %v2532, %v2480
    %v2534 = vadd.f32 %v2533, %v2485
    %v2535 = vadd.f32 %v2534, %v2488
    %v2536 = vadd.f32 %v2535, %v2493
    %v2537 = vadd.f32 %v2536, %v2496
    %v2538 = vadd.f32 %v2537, %v2501
    %v2539 = vadd.f32 %v2538, %v2504
    %v2540 = vadd.f32 %v2539, %v2509
    %v2541 = vadd.f32 %v2540, %v2512
    %v2542 = vadd.f32 %v2541, %v2517
    %v2543 = vadd.f32 %v2542, %v2520
    %v2544 = vadd.f32 %v2543, %v2525
    %v2545 = vadd.f32 %v2544, %v2528
    %v2546 = vrot.slane %v2545, 4
    %v2547 = vadd.f32 %v2545, %v2546
    %v2548 = vrot.slane %v2547, 2
    %v2549 = vadd.f32 %v2547, %v2548
    %v2550 = vrot.slane %v2549, 1
    %v2551 = vadd.f32 %v2549, %v2550
    %v2552 = vmul.f32 %v2551, 0.0078125
    %v2553 = vsub.f32 %v2469, %v2552
    %v2554 = vsub.f32 %v2472, %v2552
    %v2555 = vsub.f32 %v2477, %v2552
    %v2556 = vsub.f32 %v2480, %v2552
    %v2557 = vsub.f32 %v2485, %v2552
    %v2558 = vsub.f32 %v2488, %v2552
    %v2559 = vsub.f32 %v2493, %v2552
    %v2560 = vsub.f32 %v2496, %v2552
    %v2561 = vsub.f32 %v2501, %v2552
    %v2562 = vsub.f32 %v2504, %v2552
    %v2563 = vsub.f32 %v2509, %v2552
    %v2564 = vsub.f32 %v2512, %v2552
    %v2565 = vsub.f32 %v2517, %v2552
    %v2566 = vsub.f32 %v2520, %v2552
    %v2567 = vsub.f32 %v2525, %v2552
    %v2568 = vsub.f32 %v2528, %v2552
    %v2569 = vmul.f32 %v2553, %v2553
    %v2570 = vmul.f32 %v2554, %v2554
    %v2571 = vmul.f32 %v2555, %v2555
    %v2572 = vmul.f32 %v2556, %v2556
    %v2573 = vmul.f32 %v2557, %v2557
    %v2574 = vmul.f32 %v2558, %v2558
    %v2575 = vmul.f32 %v2559, %v2559
    %v2576 = vmul.f32 %v2560, %v2560
    %v2577 = vmul.f32 %v2561, %v2561
    %v2578 = vmul.f32 %v2562, %v2562
    %v2579 = vmul.f32 %v2563, %v2563
    %v2580 = vmul.f32 %v2564, %v2564
    %v2581 = vmul.f32 %v2565, %v2565
    %v2582 = vmul.f32 %v2566, %v2566
    %v2583 = vmul.f32 %v2567, %v2567
    %v2584 = vmul.f32 %v2568, %v2568
    %v2585 = vadd.f32 %v2569, %v2570
    %v2586 = vadd.f32 %v2585, %v2571
    %v2587 = vadd.f32 %v2586, %v2572
    %v2588 = vadd.f32 %v2587, %v2573
    %v2589 = vadd.f32 %v2588, %v2574
    %v2590 = vadd.f32 %v2589, %v2575
    %v2591 = vadd.f32 %v2590, %v2576
    %v2592 = vadd.f32 %v2591, %v2577
    %v2593 = vadd.f32 %v2592, %v2578
    %v2594 = vadd.f32 %v2593, %v2579
    %v2595 = vadd.f32 %v2594, %v2580
    %v2596 = vadd.f32 %v2595, %v2581
    %v2597 = vadd.f32 %v2596, %v2582
    %v2598 = vadd.f32 %v2597, %v2583
    %v2599 = vadd.f32 %v2598, %v2584
    %v2600 = vrot.slane %v2599, 4
    %v2601 = vadd.f32 %v2599, %v2600
    %v2602 = vrot.slane %v2601, 2
    %v2603 = vadd.f32 %v2601, %v2602
    %v2604 = vrot.slane %v2603, 1
    %v2605 = vadd.f32 %v2603, %v2604
    %v2606 = vmul.f32 %v2605, 0.0078125
    %v2607 = vadd.f32 %v2606, 1e-05
    %v2608 = vrsqrt.pop %v2607
    %v2609 = vmul.f32 %v2553, %v2608
    %v2610 = vmul.f32 %v2554, %v2608
    %v2611 = vmul.f32 %v2555, %v2608
    %v2612 = vmul.f32 %v2556, %v2608
    %v2613 = vmul.f32 %v2557, %v2608
    %v2614 = vmul.f32 %v2558, %v2608
    %v2615 = vmul.f32 %v2559, %v2608
    %v2616 = vmul.f32 %v2560, %v2608
    %v2617 = vmul.f32 %v2561, %v2608
    %v2618 = vmul.f32 %v2562, %v2608
    %v2619 = vmul.f32 %v2563, %v2608
    %v2620 = vmul.f32 %v2564, %v2608
    %v2621 = vmul.f32 %v2565, %v2608
    %v2622 = vmul.f32 %v2566, %v2608
    %v2623 = vmul.f32 %v2567, %v2608
    %v2624 = vmul.f32 %v2568, %v2608
    %v2625 = vld [vmem:[%s2] sm:$0x1]
    %v2627 = vlaneseq
    %v2628 = vshrl.u32 %v2627, 7
    %v2629 = vsub.s32 0, %v2628
    %v2630 = vrot.slane %v2625, %v2629
    %v2632 = vmul.f32 %v2609, %v2630
    %v2633 = vmul.f32 %v2610, %v2630
    %v2634 = vmul.f32 %v2611, %v2630
    %v2635 = vmul.f32 %v2612, %v2630
    %v2636 = vmul.f32 %v2613, %v2630
    %v2637 = vmul.f32 %v2614, %v2630
    %v2638 = vmul.f32 %v2615, %v2630
    %v2639 = vmul.f32 %v2616, %v2630
    %v2640 = vmul.f32 %v2617, %v2630
    %v2641 = vmul.f32 %v2618, %v2630
    %v2642 = vmul.f32 %v2619, %v2630
    %v2643 = vmul.f32 %v2620, %v2630
    %v2644 = vmul.f32 %v2621, %v2630
    %v2645 = vmul.f32 %v2622, %v2630
    %v2646 = vmul.f32 %v2623, %v2630
    %v2647 = vmul.f32 %v2624, %v2630
    %v2648 = vld [vmem:[%s3] sm:$0x1]
    %v2650 = vlaneseq
    %v2651 = vshrl.u32 %v2650, 7
    %v2652 = vsub.s32 0, %v2651
    %v2653 = vrot.slane %v2648, %v2652
    %v2655 = vadd.f32 %v2632, %v2653
    %v2656 = vadd.f32 %v2633, %v2653
    %v2657 = vadd.f32 %v2634, %v2653
    %v2658 = vadd.f32 %v2635, %v2653
    %v2659 = vadd.f32 %v2636, %v2653
    %v2660 = vadd.f32 %v2637, %v2653
    %v2661 = vadd.f32 %v2638, %v2653
    %v2662 = vadd.f32 %v2639, %v2653
    %v2663 = vadd.f32 %v2640, %v2653
    %v2664 = vadd.f32 %v2641, %v2653
    %v2665 = vadd.f32 %v2642, %v2653
    %v2666 = vadd.f32 %v2643, %v2653
    %v2667 = vadd.f32 %v2644, %v2653
    %v2668 = vadd.f32 %v2645, %v2653
    %v2669 = vadd.f32 %v2646, %v2653
    %v2670 = vadd.f32 %v2647, %v2653
    %v2671 = vld [vmem:[%s4] sm:$0xf]
    %v2672 = vld [vmem:[%s4 + $0x4] sm:$0xf]
    %v2673 = vld [vmem:[%s4 + $0x8] sm:$0xf]
    %v2674 = vld [vmem:[%s4 + $0xc] sm:$0xf]
    %v2675 = vld [vmem:[%s4 + $0x10] sm:$0xf]
    %v2676 = vld [vmem:[%s4 + $0x14] sm:$0xf]
    %v2677 = vld [vmem:[%s4 + $0x18] sm:$0xf]
    %v2678 = vld [vmem:[%s4 + $0x1c] sm:$0xf]
    %v2679 = vld [vmem:[%s4 + $0x20] sm:$0xf]
    %v2680 = vld [vmem:[%s4 + $0x24] sm:$0xf]
    %v2681 = vld [vmem:[%s4 + $0x28] sm:$0xf]
    %v2682 = vld [vmem:[%s4 + $0x2c] sm:$0xf]
    %v2683 = vld [vmem:[%s4 + $0x30] sm:$0xf]
    %v2684 = vld [vmem:[%s4 + $0x34] sm:$0xf]
    %v2685 = vld [vmem:[%s4 + $0x38] sm:$0xf]
    %v2686 = vld [vmem:[%s4 + $0x3c] sm:$0xf]
    %v2687 = vunpack.c.l.bf16 %v2671
    %v2688 = vunpack.c.l.bf16 %v2672
    %v2689 = vunpack.c.l.bf16 %v2673
    %v2690 = vunpack.c.l.bf16 %v2674
    %v2691 = vunpack.c.l.bf16 %v2675
    %v2692 = vunpack.c.l.bf16 %v2676
    %v2693 = vunpack.c.l.bf16 %v2677
    %v2694 = vunpack.c.l.bf16 %v2678
    %v2695 = vunpack.c.l.bf16 %v2679
    %v2696 = vunpack.c.l.bf16 %v2680
    %v2697 = vunpack.c.l.bf16 %v2681
    %v2698 = vunpack.c.l.bf16 %v2682
    %v2699 = vunpack.c.l.bf16 %v2683
    %v2700 = vunpack.c.l.bf16 %v2684
    %v2701 = vunpack.c.l.bf16 %v2685
    %v2702 = vunpack.c.l.bf16 %v2686
    %v2703 = vadd.f32 %v2655, %v2687
    %v2704 = vadd.f32 %v2656, %v2688
    %v2705 = vadd.f32 %v2657, %v2689
    %v2706 = vadd.f32 %v2658, %v2690
    %v2707 = vadd.f32 %v2659, %v2691
    %v2708 = vadd.f32 %v2660, %v2692
    %v2709 = vadd.f32 %v2661, %v2693
    %v2710 = vadd.f32 %v2662, %v2694
    %v2711 = vadd.f32 %v2663, %v2695
    %v2712 = vadd.f32 %v2664, %v2696
    %v2713 = vadd.f32 %v2665, %v2697
    %v2714 = vadd.f32 %v2666, %v2698
    %v2715 = vadd.f32 %v2667, %v2699
    %v2716 = vadd.f32 %v2668, %v2700
    %v2717 = vadd.f32 %v2669, %v2701
    %v2718 = vadd.f32 %v2670, %v2702
    %v2719 = vmax.f32 %v2703, 0.0
    %v2720 = vmax.f32 %v2704, 0.0
    %v2721 = vmax.f32 %v2705, 0.0
    %v2722 = vmax.f32 %v2706, 0.0
    %v2723 = vmax.f32 %v2707, 0.0
    %v2724 = vmax.f32 %v2708, 0.0
    %v2725 = vmax.f32 %v2709, 0.0
    %v2726 = vmax.f32 %v2710, 0.0
    %v2727 = vmax.f32 %v2711, 0.0
    %v2728 = vmax.f32 %v2712, 0.0
    %v2729 = vmax.f32 %v2713, 0.0
    %v2730 = vmax.f32 %v2714, 0.0
    %v2731 = vmax.f32 %v2715, 0.0
    %v2732 = vmax.f32 %v2716, 0.0
    %v2733 = vmax.f32 %v2717, 0.0
    %v2734 = vmax.f32 %v2718, 0.0
    %v2735 = vpack.c.bf16 %v2720, %v2719
    %v2736 = vpack.c.bf16 %v2722, %v2721
    %v2737 = vpack.c.bf16 %v2724, %v2723
    %v2738 = vpack.c.bf16 %v2726, %v2725
    %v2739 = vpack.c.bf16 %v2728, %v2727
    %v2740 = vpack.c.bf16 %v2730, %v2729
    %v2741 = vpack.c.bf16 %v2732, %v2731
    %v2742 = vpack.c.bf16 %v2734, %v2733
    %v2751 = vunpack.c.l.b16 %v2735
    %v2752 = vunpack.c.h.b16 %v2735
    %v2753 = vunpack.c.l.b16 %v2736
    %v2754 = vunpack.c.h.b16 %v2736
    %v2755 = vunpack.c.l.b16 %v2737
    %v2756 = vunpack.c.h.b16 %v2737
    %v2757 = vunpack.c.l.b16 %v2738
    %v2758 = vunpack.c.h.b16 %v2738
    %v2759 = vunpack.c.l.b16 %v2739
    %v2760 = vunpack.c.h.b16 %v2739
    %v2761 = vunpack.c.l.b16 %v2740
    %v2762 = vunpack.c.h.b16 %v2740
    %v2763 = vunpack.c.l.b16 %v2741
    %v2764 = vunpack.c.h.b16 %v2741
    %v2765 = vunpack.c.l.b16 %v2742
    %v2766 = vunpack.c.h.b16 %v2742
    %v2767 = vpack.c.b16 %v2751, %v2751
    %v2768 = vpack.c.b16 %v2752, %v2752
    %v2769 = vpack.c.b16 %v2753, %v2753
    %v2770 = vpack.c.b16 %v2754, %v2754
    %v2771 = vpack.c.b16 %v2755, %v2755
    %v2772 = vpack.c.b16 %v2756, %v2756
    %v2773 = vpack.c.b16 %v2757, %v2757
    %v2774 = vpack.c.b16 %v2758, %v2758
    %v2775 = vpack.c.b16 %v2759, %v2759
    %v2776 = vpack.c.b16 %v2760, %v2760
    %v2777 = vpack.c.b16 %v2761, %v2761
    %v2778 = vpack.c.b16 %v2762, %v2762
    %v2779 = vpack.c.b16 %v2763, %v2763
    %v2780 = vpack.c.b16 %v2764, %v2764
    %v2781 = vpack.c.b16 %v2765, %v2765
    %v2782 = vpack.c.b16 %v2766, %v2766
    %2799 = vst [vmem:[#allocation2] sm:$0xf] %v2767
    %2800 = vst [vmem:[#allocation2 + $0x4] sm:$0xf] %v2768
    %2801 = vst [vmem:[#allocation2 + $0x8] sm:$0xf] %v2769
    %2802 = vst [vmem:[#allocation2 + $0xc] sm:$0xf] %v2770
    %2803 = vst [vmem:[#allocation2 + $0x10] sm:$0xf] %v2771
    %2804 = vst [vmem:[#allocation2 + $0x14] sm:$0xf] %v2772
    %2805 = vst [vmem:[#allocation2 + $0x18] sm:$0xf] %v2773
    %2806 = vst [vmem:[#allocation2 + $0x1c] sm:$0xf] %v2774
    %2807 = vst [vmem:[#allocation2 + $0x20] sm:$0xf] %v2775
    %2808 = vst [vmem:[#allocation2 + $0x24] sm:$0xf] %v2776
    %2809 = vst [vmem:[#allocation2 + $0x28] sm:$0xf] %v2777
    %2810 = vst [vmem:[#allocation2 + $0x2c] sm:$0xf] %v2778
    %2811 = vst [vmem:[#allocation2 + $0x30] sm:$0xf] %v2779
    %2812 = vst [vmem:[#allocation2 + $0x34] sm:$0xf] %v2780
    %2813 = vst [vmem:[#allocation2 + $0x38] sm:$0xf] %v2781
    %2814 = vst [vmem:[#allocation2 + $0x3c] sm:$0xf] %v2782
    // Predicated region
    $region22: #{residual_block_forward.5} parent=1 // pred_check
      _
    $region23: #{residual_block_forward.5} parent=1 // pred_check_branch
      %2816 = sbr.rel (0) target = $region25
    $region24: #{residual_block_forward.5} parent=1 // pred_region
      %s2818 = ssub.s32 1024, 1024
      %2819 = vsyncadd [#allocation3], %s2818
      %s2820 = sshll.u32 [#allocation2], 4
      %s2821 = int_to_ptr.vmem [resolvable:$true] %s2820
      %2826 = dma.vmem_to_hbm [thread:$0]  %s2821, 1024, %s5, [#allocation3], 64, 64, 4
    $region25: #{residual_block_forward.5} parent=1 // pred_fallthru
      _
    // Predicated region
    $region26: #{residual_block_forward.5} parent=1 // pred_check
      _
    $region27: #{residual_block_forward.5} parent=1 // pred_check_branch
      %2828 = sbr.rel (0) target = $region29
    $region28: #{residual_block_forward.5} parent=1 // pred_region
      %2829 = dma.done [#allocation3], 1024
    $region29: #{residual_block_forward.5} parent=1 // pred_fallthru
      _
    %2830 = vsyncpa [#allocation3], 1

</llo_original>
